<compile_context>
chip_gen: v7x
topology: tpu7x:2x2x1
jax: 0.10.0
libtpu: 0.0.40
codegen_flags: <defaults>
</compile_context>

<pallas_src>
import math

import jax
import jax.numpy as jnp
import numpy as np
from jax import lax
from jax.experimental import pallas as pl
from jax.experimental.pallas import tpu as pltpu

LANE = 128


def _cdiv(a, b):
    return (a + b - 1) // b


def _round_up(a, b):
    return _cdiv(a, b) * b


def _make_kernel(*, D, Ho, Wo, Hp, Wp, Dsch, KD, KH, KW, dilation,
                 pd, TDo, THo, TBC, use_shift, in_dtype):
    dd, dh, dw = dilation
    back = Dsch - (pd + D)          # depth planes to zero at the back
                                    # (real back pad + ragged Do extension)

    def kernel(x_hbm, w_ref, b_ref, o_ref, *scratch):
        if use_shift:
            xp_ref, xs_ref, dma_sem = scratch
        else:
            xp_ref, dma_sem = scratch
            xs_ref = None

        i = pl.program_id(0)        # batch*channel tile   ("parallel")
        j = pl.program_id(1)        # output-depth chunk   ("arbitrary", inner)

        # ---- once per BC tile: fetch input, zero depth halo, pre-shift ------
        @pl.when(j == 0)
        def _fill():
            # zero only the depth-halo planes (disjoint from the DMA target)
            if pd:
                xp_ref[0:pd, :, :, :] = jnp.zeros((pd, Hp, Wp, TBC), in_dtype)
            if back:
                xp_ref[pd + D:Dsch, :, :, :] = jnp.zeros((back, Hp, Wp, TBC),
                                                         in_dtype)
            # single contiguous HBM -> VMEM DMA, straight into the scratch
            cp = pltpu.make_async_copy(x_hbm.at[i],
                                       xp_ref.at[pd:pd + D],
                                       dma_sem.at[0])
            cp.start()
            cp.wait()

            if use_shift:
                # Pre-shift along W once per BC tile (and upcast to f32 once)
                # so every tap read in the hot loop is an aligned leading-dim
                # slice; amortized over all output-depth chunks.
                def _shift_row(t, carry):
                    for kw in range(KW):
                        xs_ref[kw, t, :, :, :] = (
                            xp_ref[t, :, kw * dw:kw * dw + Wo, :]
                            .astype(jnp.float32))
                    return carry
                lax.fori_loop(0, Dsch, _shift_row, 0)

        # ---- per output-depth chunk: tap accumulate, register-resident acc --
        bias = b_ref[0, :]                                    # (TBC,) f32
        # hoist the per-tap weight rows out of the row/H-chunk loops
        wrow = [[[w_ref[kd, kh, kw, :] for kw in range(KW)]
                 for kh in range(KH)] for kd in range(KD)]
        d_base = j * TDo

        for d in range(TDo):
            for h0 in range(0, Ho, THo):
                th = min(THo, Ho - h0)
                acc = None
                for kd in range(KD):
                    zd = d_base + (d + kd * dd)
                    for kh in range(KH):
                        hs = kh * dh + h0
                        for kw in range(KW):
                            if use_shift:
                                xs = xs_ref[kw, zd, hs:hs + th, :, :]
                            else:
                                xs = (xp_ref[zd, hs:hs + th,
                                             kw * dw:kw * dw + Wo, :]
                                      .astype(jnp.float32))
                            t = xs * wrow[kd][kh][kw]
                            acc = t if acc is None else acc + t
                o_ref[d, h0:h0 + th, :, :] = (acc + bias).astype(o_ref.dtype)

    return kernel


def adaptive_conv3d(x, dynamic_weight, bias,
                    stride=(1, 1, 1), padding=(0, 0, 0), dilation=(1, 1, 1)):
    """Pallas implementation of AdaptiveConv3d.forward (groups = B*C depthwise)."""
    B, C, D, H, W = x.shape
    Bw, Cw, KD, KH, KW = dynamic_weight.shape
    BC = B * C
    assert Bw * Cw == BC, "dynamic_weight must provide one kernel per (batch, channel)"
    assert tuple(stride) == (1, 1, 1), "stride != 1 not implemented"
    # TODO(synk): support stride > 1 (strided output windows).

    pd, ph, pw = padding
    dd, dh, dw = dilation
    Do = D + 2 * pd - dd * (KD - 1)
    Ho = H + 2 * ph - dh * (KH - 1)
    Wo = W + 2 * pw - dw * (KW - 1)
    assert Do > 0 and Ho > 0 and Wo > 0
    Hp, Wp = H + 2 * ph, W + 2 * pw
    isz = jnp.dtype(x.dtype).itemsize

    # ---- chip-aware tile / scratch planning ---------------------------------
    try:
        vmem_cap = int(pltpu.get_tpu_info().vmem_capacity_bytes)
    except Exception:
        vmem_cap = 64 * 2 ** 20                 # conservative (v7x per-core)
    select_budget = int(0.60 * vmem_cap)

    bc128 = _round_up(BC, LANE)
    cands = [c for c in (512, 384, 256, 128) if c <= bc128]
    if bc128 > LANE:
        # keep >= 2 BC tiles so the "parallel" axis can shard across TCs (v7x)
        cands = [c for c in cands if _cdiv(BC, c) >= 2] or [LANE]
    if not cands:
        cands = [LANE]

    ACC_BUDGET = 32 * 1024                      # per-chunk f32 acc (~8 vregs)

    def plan(tbc, shift):
        tho = max(1, min(Ho, ACC_BUDGET // max(1, Wo * tbc * 4)))
        n_h = _cdiv(Ho, tho)
        tdo = max(1, min(Do, max(1, 8 // n_h)))     # cap unrolled row-chunks
        do_pad = _round_up(Do, tdo)
        dsch = do_pad + dd * (KD - 1)
        need = dsch * Hp * Wp * tbc * isz                  # padded-input scratch
        if shift:
            need += KW * dsch * Hp * Wo * tbc * 4          # f32 pre-shifted scratch
        need += 2 * KD * KH * KW * tbc * 4                 # weight blocks
        need += 2 * tbc * 4                                # bias blocks
        need += 2 * tdo * Ho * Wo * tbc * isz              # output blocks
        need += 4 * tho * Wo * tbc * 4                     # acc / temps headroom
        return tho, tdo, do_pad, dsch, need

    TBC, use_shift, cfg = LANE, False, None
    for shift in (True, False):                 # prefer the aligned-tap path
        for tbc in cands:
            c = plan(tbc, shift)
            if c[-1] <= select_budget:
                TBC, use_shift, cfg = tbc, shift, c
                break
        if cfg is not None:
            break
    if cfg is None:
        TBC, use_shift = LANE, False
        cfg = plan(TBC, use_shift)
    THo, TDo, Do_pad, Dsch, vmem_need = cfg

    BCp = _round_up(BC, TBC)
    nbc = BCp // TBC
    n_do = Do_pad // TDo

    # ---- layout prep (one fusible XLA pass): lane pad + channels-last + H/W pad
    xb = jnp.pad(x.reshape(BC, D, H, W),
                 ((0, BCp - BC), (0, 0), (0, 0), (0, 0)))
    x5 = jnp.transpose(xb.reshape(nbc, TBC, D, H, W), (0, 2, 3, 4, 1))
    x5 = jnp.pad(x5, ((0, 0), (0, 0), (ph, ph), (pw, pw), (0, 0)))  # (nbc,D,Hp,Wp,TBC)

    wb = jnp.pad(dynamic_weight.astype(jnp.float32).reshape(BC, KD, KH, KW),
                 ((0, BCp - BC), (0, 0), (0, 0), (0, 0)))
    w5 = jnp.transpose(wb.reshape(nbc, TBC, KD, KH, KW), (0, 2, 3, 4, 1))

    b3 = jnp.pad(bias.astype(jnp.float32).reshape(BC), (0, BCp - BC))
    b3 = b3.reshape(nbc, 1, TBC)

    kernel = _make_kernel(D=D, Ho=Ho, Wo=Wo, Hp=Hp, Wp=Wp, Dsch=Dsch,
                          KD=KD, KH=KH, KW=KW, dilation=(dd, dh, dw),
                          pd=pd, TDo=TDo, THo=THo, TBC=TBC,
                          use_shift=use_shift, in_dtype=x.dtype)

    scratch = [pltpu.VMEM((Dsch, Hp, Wp, TBC), x.dtype)]
    if use_shift:
        scratch.append(pltpu.VMEM((KW, Dsch, Hp, Wo, TBC), jnp.float32))
    scratch.append(pltpu.SemaphoreType.DMA((1,)))

    grid_spec = pltpu.PrefetchScalarGridSpec(
        num_scalar_prefetch=0,
        grid=(nbc, n_do),
        in_specs=[
            pl.BlockSpec(memory_space=pl.ANY),                       # x: raw HBM
            pl.BlockSpec((None, KD, KH, KW, TBC), lambda i, j: (i, 0, 0, 0, 0)),
            pl.BlockSpec((None, 1, TBC), lambda i, j: (i, 0, 0)),
        ],
        out_specs=pl.BlockSpec((None, TDo, Ho, Wo, TBC),
                               lambda i, j: (i, j, 0, 0, 0)),
        scratch_shapes=scratch,
    )

    vmem_limit = int(min(max(int(vmem_need) + (8 << 20), 32 << 20),
                         int(0.75 * vmem_cap)))

    cost = pl.CostEstimate(
        flops=2 * BCp * Do_pad * Ho * Wo * KD * KH * KW,
        transcendentals=0,
        bytes_accessed=int(x5.size * isz + w5.size * 4 + b3.size * 4
                           + nbc * Do_pad * Ho * Wo * TBC * isz))

    out5 = pl.pallas_call(
        kernel,
        out_shape=jax.ShapeDtypeStruct((nbc, Do_pad, Ho, Wo, TBC), x.dtype),
        grid_spec=grid_spec,
        compiler_params=pltpu.CompilerParams(
            dimension_semantics=("parallel", "arbitrary"),
            vmem_limit_bytes=vmem_limit),
        cost_estimate=cost,
    )(x5, w5, b3)

    # Back to PyTorch layout (B, C, Do, Ho, Wo); drop depth / lane padding.
    y = jnp.transpose(out5[:, :Do], (0, 4, 1, 2, 3)).reshape(BCp, Do, Ho, Wo)
    return y[:BC].reshape(B, C, Do, Ho, Wo)


def _reference(x, dynamic_weight, bias, padding, dilation):
    """Pure-JAX reference matching F.conv3d with groups = B*C."""
    B, C, D, H, W = x.shape
    _, _, KD, KH, KW = dynamic_weight.shape
    BC = B * C
    y = jax.lax.conv_general_dilated(
        x.reshape(1, BC, D, H, W),
        dynamic_weight.reshape(BC, 1, KD, KH, KW),
        window_strides=(1, 1, 1),
        padding=[(padding[0], padding[0]),
                 (padding[1], padding[1]),
                 (padding[2], padding[2])],
        rhs_dilation=dilation,
        dimension_numbers=("NCDHW", "OIDHW", "NCDHW"),
        feature_group_count=BC,
    )
    y = y + bias.reshape(1, BC, 1, 1, 1)
    return y.reshape(B, C, y.shape[2], y.shape[3], y.shape[4])


if __name__ == "__main__":
    # AdaptiveConv3d(in_channels=B*C, out_channels=B*C, kernel_size=3,
    # padding=1, groups=B*C, bias=True) -- the setting for which the PyTorch
    # forward is well-defined (depthwise over batch*channel).
    B, C = 2, 4
    D = H = W = 8
    KD = KH = KW = 3
    padding = (1, 1, 1)
    stride = (1, 1, 1)
    dilation = (1, 1, 1)
    BC = B * C

    key = jax.random.PRNGKey(0)
    kx, kw_, kb = jax.random.split(key, 3)
    x = jax.random.normal(kx, (B, C, D, H, W), dtype=jnp.float32)
    dynamic_weight = jax.random.normal(kw_, (B, C, KD, KH, KW), dtype=jnp.float32)

    # Deterministic bias init matching _ConvNd.reset_parameters:
    # n = in_channels * prod(kernel_size); bias ~ U(-1/sqrt(n), 1/sqrt(n))
    n = BC * KD * KH * KW
    stdv = 1.0 / math.sqrt(n)
    bias = jax.random.uniform(kb, (BC,), minval=-stdv, maxval=stdv,
                              dtype=jnp.float32)

    y = adaptive_conv3d(x, dynamic_weight, bias,
                        stride=stride, padding=padding, dilation=dilation)
    y = jax.block_until_ready(y)

    y_ref = _reference(x, dynamic_weight, bias, padding, dilation)
    np.testing.assert_allclose(np.asarray(y), np.asarray(y_ref),
                               rtol=1e-5, atol=1e-5)
    assert y.shape == (B, C, D, H, W)

    print("KERNEL_OK")
</pallas_src>

<mosaic_0001>
module attributes {stable_mosaic.version = 11 : i64} {
  func.func @kernel(%arg0: i32, %arg1: i32, %arg2: memref<1x8x10x10x128xf32, #tpu.memory_space<any>>, %arg3: memref<1x3x3x3x128xf32, #tpu.memory_space<vmem>>, %arg4: memref<1x1x128xf32, #tpu.memory_space<vmem>>, %arg5: memref<1x8x8x8x128xf32, #tpu.memory_space<vmem>>, %arg6: memref<10x10x10x128xf32, #tpu.memory_space<vmem>>, %arg7: memref<3x10x10x8x128xf32, #tpu.memory_space<vmem>>, %arg8: memref<1x!tpu.dma_semaphore, #tpu.memory_space<semaphore_mem>>) attributes {dimension_semantics = [#tpu.dimension_semantics<parallel>, #tpu.dimension_semantics<arbitrary>], iteration_bounds = array<i64: 1, 1>, scalar_prefetch = 0 : i64, scratch_operands = 3 : i64, tpu.core_type = #tpu.core_type<tc>, window_params = [{}, {transform_indices = @transform_1, window_bounds = array<i64: 1, 3, 3, 3, 128>}, {transform_indices = @transform_2, window_bounds = array<i64: 1, 1, 128>}, {transform_indices = @transform_3, window_bounds = array<i64: 1, 8, 8, 8, 128>}]} {
    %c0_i32 = arith.constant 0 : i32
    %0 = arith.cmpi eq, %arg1, %c0_i32 : i32
    %1 = arith.extui %0 : i1 to i32
    %c0_i32_0 = arith.constant 0 : i32
    %2 = arith.cmpi ne, %1, %c0_i32_0 : i32
    scf.if %2 {
      %cst = arith.constant 0.000000e+00 : f32
      %1636 = vector.broadcast %cst : f32 to vector<1x10x10x128xf32>
      %c0_1051 = arith.constant 0 : index
      %c0_1052 = arith.constant 0 : index
      %c0_1053 = arith.constant 0 : index
      %c0_1054 = arith.constant 0 : index
      %1637 = vector.load %arg6[%c0_1051, %c0_1052, %c0_1053, %c0_1054] : memref<10x10x10x128xf32, #tpu.memory_space<vmem>>, vector<1x10x10x128xf32>
      tpu.vector_store %arg6[%c0_1051, %c0_1052, %c0_1053, %c0_1054], %1636 {strides = array<i32>} : memref<10x10x10x128xf32, #tpu.memory_space<vmem>>, vector<1x10x10x128xf32>,
      %cst_1055 = arith.constant 0.000000e+00 : f32
      %1638 = vector.broadcast %cst_1055 : f32 to vector<1x10x10x128xf32>
      %c9 = arith.constant 9 : index
      %c0_1056 = arith.constant 0 : index
      %c0_1057 = arith.constant 0 : index
      %c0_1058 = arith.constant 0 : index
      %1639 = vector.load %arg6[%c9, %c0_1056, %c0_1057, %c0_1058] : memref<10x10x10x128xf32, #tpu.memory_space<vmem>>, vector<1x10x10x128xf32>
      tpu.vector_store %arg6[%c9, %c0_1056, %c0_1057, %c0_1058], %1638 {strides = array<i32>} : memref<10x10x10x128xf32, #tpu.memory_space<vmem>>, vector<1x10x10x128xf32>,
      %c0_i32_1059 = arith.constant 0 : i32
      %c0_i32_1060 = arith.constant 0 : i32
      %c0_i32_1061 = arith.constant 0 : i32
      %c0_i32_1062 = arith.constant 0 : i32
      %c0_i32_1063 = arith.constant 0 : i32
      %1640 = tpu.memref_slice %arg2[%arg0, %c0_i32_1060, %c0_i32_1061, %c0_i32_1062, %c0_i32_1063] : memref<1x8x10x10x128xf32, #tpu.memory_space<any>> -> memref<1x8x10x10x128xf32, #tpu.memory_space<any>>
      %1641 = tpu.memref_squeeze %1640 : memref<1x8x10x10x128xf32, #tpu.memory_space<any>> -> memref<8x10x10x128xf32, #tpu.memory_space<any>>
      %c1_i32_1064 = arith.constant 1 : i32
      %c0_i32_1065 = arith.constant 0 : i32
      %c0_i32_1066 = arith.constant 0 : i32
      %c0_i32_1067 = arith.constant 0 : i32
      %1642 = tpu.memref_slice %arg6[%c1_i32_1064, %c0_i32_1065, %c0_i32_1066, %c0_i32_1067] : memref<10x10x10x128xf32, #tpu.memory_space<vmem>> -> memref<8x10x10x128xf32, #tpu.memory_space<vmem>>
      %1643 = tpu.memref_slice %arg8[%c0_i32_1059] : memref<1x!tpu.dma_semaphore, #tpu.memory_space<semaphore_mem>> -> memref<1x!tpu.dma_semaphore, #tpu.memory_space<semaphore_mem>>
      %1644 = tpu.memref_squeeze %1643 : memref<1x!tpu.dma_semaphore, #tpu.memory_space<semaphore_mem>> -> memref<!tpu.dma_semaphore, #tpu.memory_space<semaphore_mem>>
      tpu.enqueue_dma source(%1641 : memref<8x10x10x128xf32, #tpu.memory_space<any>>) target(%1642 : memref<8x10x10x128xf32, #tpu.memory_space<vmem>>) target_semaphore(%1644 : memref<!tpu.dma_semaphore, #tpu.memory_space<semaphore_mem>>)
      %c0_i32_1068 = arith.constant 0 : i32
      %c0_i32_1069 = arith.constant 0 : i32
      %c0_i32_1070 = arith.constant 0 : i32
      %c0_i32_1071 = arith.constant 0 : i32
      %c0_i32_1072 = arith.constant 0 : i32
      %1645 = tpu.memref_slice %arg2[%arg0, %c0_i32_1069, %c0_i32_1070, %c0_i32_1071, %c0_i32_1072] : memref<1x8x10x10x128xf32, #tpu.memory_space<any>> -> memref<1x8x10x10x128xf32, #tpu.memory_space<any>>
      %1646 = tpu.memref_squeeze %1645 : memref<1x8x10x10x128xf32, #tpu.memory_space<any>> -> memref<8x10x10x128xf32, #tpu.memory_space<any>>
      %c1_i32_1073 = arith.constant 1 : i32
      %c0_i32_1074 = arith.constant 0 : i32
      %c0_i32_1075 = arith.constant 0 : i32
      %c0_i32_1076 = arith.constant 0 : i32
      %1647 = tpu.memref_slice %arg6[%c1_i32_1073, %c0_i32_1074, %c0_i32_1075, %c0_i32_1076] : memref<10x10x10x128xf32, #tpu.memory_space<vmem>> -> memref<8x10x10x128xf32, #tpu.memory_space<vmem>>
      %1648 = tpu.memref_slice %arg8[%c0_i32_1068] : memref<1x!tpu.dma_semaphore, #tpu.memory_space<semaphore_mem>> -> memref<1x!tpu.dma_semaphore, #tpu.memory_space<semaphore_mem>>
      %1649 = tpu.memref_squeeze %1648 : memref<1x!tpu.dma_semaphore, #tpu.memory_space<semaphore_mem>> -> memref<!tpu.dma_semaphore, #tpu.memory_space<semaphore_mem>>
      tpu.wait_dma2 semaphore(%1649 : memref<!tpu.dma_semaphore, #tpu.memory_space<semaphore_mem>>) src(%1646 : memref<8x10x10x128xf32, #tpu.memory_space<any>>) dst(%1647 : memref<8x10x10x128xf32, #tpu.memory_space<vmem>>)
      %c0_i32_1077 = arith.constant 0 : i32
      %c10_i32 = arith.constant 10 : i32
      %1650 = arith.addi %c0_i32_1077, %c10_i32 : i32
      %c1_i32_1078 = arith.constant 1 : i32
      scf.for %arg9 = %c0_i32_1077 to %1650 step %c1_i32_1078  : i32 {
        %1651 = arith.index_cast %arg9 : i32 to index
        %c0_1080 = arith.constant 0 : index
        %c0_1081 = arith.constant 0 : index
        %c0_1082 = arith.constant 0 : index
        %1652 = vector.load %arg6[%1651, %c0_1080, %c0_1081, %c0_1082] : memref<10x10x10x128xf32, #tpu.memory_space<vmem>>, vector<1x10x8x128xf32>
        %1653 = vector.shape_cast %1652 : vector<1x10x8x128xf32> to vector<10x8x128xf32>
        %c0_1083 = arith.constant 0 : index
        %1654 = arith.index_cast %arg9 : i32 to index
        %c0_1084 = arith.constant 0 : index
        %c0_1085 = arith.constant 0 : index
        %c0_1086 = arith.constant 0 : index
        %1655 = vector.load %arg7[%c0_1083, %1654, %c0_1084, %c0_1085, %c0_1086] : memref<3x10x10x8x128xf32, #tpu.memory_space<vmem>>, vector<1x1x10x8x128xf32>
        %1656 = vector.shape_cast %1655 : vector<1x1x10x8x128xf32> to vector<10x8x128xf32>
        %1657 = vector.shape_cast %1653 : vector<10x8x128xf32> to vector<1x1x10x8x128xf32>
        tpu.vector_store %arg7[%c0_1083, %1654, %c0_1084, %c0_1085, %c0_1086], %1657 {strides = array<i32>} : memref<3x10x10x8x128xf32, #tpu.memory_space<vmem>>, vector<1x1x10x8x128xf32>,
        %1658 = arith.index_cast %arg9 : i32 to index
        %c0_1087 = arith.constant 0 : index
        %c1_1088 = arith.constant 1 : index
        %c0_1089 = arith.constant 0 : index
        %1659 = vector.load %arg6[%1658, %c0_1087, %c1_1088, %c0_1089] : memref<10x10x10x128xf32, #tpu.memory_space<vmem>>, vector<1x10x8x128xf32>
        %1660 = vector.shape_cast %1659 : vector<1x10x8x128xf32> to vector<10x8x128xf32>
        %c1_1090 = arith.constant 1 : index
        %1661 = arith.index_cast %arg9 : i32 to index
        %c0_1091 = arith.constant 0 : index
        %c0_1092 = arith.constant 0 : index
        %c0_1093 = arith.constant 0 : index
        %1662 = vector.load %arg7[%c1_1090, %1661, %c0_1091, %c0_1092, %c0_1093] : memref<3x10x10x8x128xf32, #tpu.memory_space<vmem>>, vector<1x1x10x8x128xf32>
        %1663 = vector.shape_cast %1662 : vector<1x1x10x8x128xf32> to vector<10x8x128xf32>
        %1664 = vector.shape_cast %1660 : vector<10x8x128xf32> to vector<1x1x10x8x128xf32>
        tpu.vector_store %arg7[%c1_1090, %1661, %c0_1091, %c0_1092, %c0_1093], %1664 {strides = array<i32>} : memref<3x10x10x8x128xf32, #tpu.memory_space<vmem>>, vector<1x1x10x8x128xf32>,
        %1665 = arith.index_cast %arg9 : i32 to index
        %c0_1094 = arith.constant 0 : index
        %c2_1095 = arith.constant 2 : index
        %c0_1096 = arith.constant 0 : index
        %1666 = vector.load %arg6[%1665, %c0_1094, %c2_1095, %c0_1096] : memref<10x10x10x128xf32, #tpu.memory_space<vmem>>, vector<1x10x8x128xf32>
        %1667 = vector.shape_cast %1666 : vector<1x10x8x128xf32> to vector<10x8x128xf32>
        %c2_1097 = arith.constant 2 : index
        %1668 = arith.index_cast %arg9 : i32 to index
        %c0_1098 = arith.constant 0 : index
        %c0_1099 = arith.constant 0 : index
        %c0_1100 = arith.constant 0 : index
        %1669 = vector.load %arg7[%c2_1097, %1668, %c0_1098, %c0_1099, %c0_1100] : memref<3x10x10x8x128xf32, #tpu.memory_space<vmem>>, vector<1x1x10x8x128xf32>
        %1670 = vector.shape_cast %1669 : vector<1x1x10x8x128xf32> to vector<10x8x128xf32>
        %1671 = vector.shape_cast %1667 : vector<10x8x128xf32> to vector<1x1x10x8x128xf32>
        tpu.vector_store %arg7[%c2_1097, %1668, %c0_1098, %c0_1099, %c0_1100], %1671 {strides = array<i32>} : memref<3x10x10x8x128xf32, #tpu.memory_space<vmem>>, vector<1x1x10x8x128xf32>,
      }
      %c10_i32_1079 = arith.constant 10 : i32
    } else {
    }
    %c0 = arith.constant 0 : index
    %c0_1 = arith.constant 0 : index
    %c0_2 = arith.constant 0 : index
    %3 = vector.load %arg4[%c0, %c0_1, %c0_2] : memref<1x1x128xf32, #tpu.memory_space<vmem>>, vector<1x1x128xf32>
    %4 = vector.shape_cast %3 : vector<1x1x128xf32> to vector<128xf32>
    %c0_3 = arith.constant 0 : index
    %c0_4 = arith.constant 0 : index
    %c0_5 = arith.constant 0 : index
    %c0_6 = arith.constant 0 : index
    %c0_7 = arith.constant 0 : index
    %5 = vector.load %arg3[%c0_3, %c0_4, %c0_5, %c0_6, %c0_7] : memref<1x3x3x3x128xf32, #tpu.memory_space<vmem>>, vector<1x1x1x1x128xf32>
    %6 = vector.shape_cast %5 : vector<1x1x1x1x128xf32> to vector<128xf32>
    %c0_8 = arith.constant 0 : index
    %c0_9 = arith.constant 0 : index
    %c0_10 = arith.constant 0 : index
    %c1 = arith.constant 1 : index
    %c0_11 = arith.constant 0 : index
    %7 = vector.load %arg3[%c0_8, %c0_9, %c0_10, %c1, %c0_11] : memref<1x3x3x3x128xf32, #tpu.memory_space<vmem>>, vector<1x1x1x1x128xf32>
    %8 = vector.shape_cast %7 : vector<1x1x1x1x128xf32> to vector<128xf32>
    %c0_12 = arith.constant 0 : index
    %c0_13 = arith.constant 0 : index
    %c0_14 = arith.constant 0 : index
    %c2 = arith.constant 2 : index
    %c0_15 = arith.constant 0 : index
    %9 = vector.load %arg3[%c0_12, %c0_13, %c0_14, %c2, %c0_15] : memref<1x3x3x3x128xf32, #tpu.memory_space<vmem>>, vector<1x1x1x1x128xf32>
    %10 = vector.shape_cast %9 : vector<1x1x1x1x128xf32> to vector<128xf32>
    %c0_16 = arith.constant 0 : index
    %c0_17 = arith.constant 0 : index
    %c1_18 = arith.constant 1 : index
    %c0_19 = arith.constant 0 : index
    %c0_20 = arith.constant 0 : index
    %11 = vector.load %arg3[%c0_16, %c0_17, %c1_18, %c0_19, %c0_20] : memref<1x3x3x3x128xf32, #tpu.memory_space<vmem>>, vector<1x1x1x1x128xf32>
    %12 = vector.shape_cast %11 : vector<1x1x1x1x128xf32> to vector<128xf32>
    %c0_21 = arith.constant 0 : index
    %c0_22 = arith.constant 0 : index
    %c1_23 = arith.constant 1 : index
    %c1_24 = arith.constant 1 : index
    %c0_25 = arith.constant 0 : index
    %13 = vector.load %arg3[%c0_21, %c0_22, %c1_23, %c1_24, %c0_25] : memref<1x3x3x3x128xf32, #tpu.memory_space<vmem>>, vector<1x1x1x1x128xf32>
    %14 = vector.shape_cast %13 : vector<1x1x1x1x128xf32> to vector<128xf32>
    %c0_26 = arith.constant 0 : index
    %c0_27 = arith.constant 0 : index
    %c1_28 = arith.constant 1 : index
    %c2_29 = arith.constant 2 : index
    %c0_30 = arith.constant 0 : index
    %15 = vector.load %arg3[%c0_26, %c0_27, %c1_28, %c2_29, %c0_30] : memref<1x3x3x3x128xf32, #tpu.memory_space<vmem>>, vector<1x1x1x1x128xf32>
    %16 = vector.shape_cast %15 : vector<1x1x1x1x128xf32> to vector<128xf32>
    %c0_31 = arith.constant 0 : index
    %c0_32 = arith.constant 0 : index
    %c2_33 = arith.constant 2 : index
    %c0_34 = arith.constant 0 : index
    %c0_35 = arith.constant 0 : index
    %17 = vector.load %arg3[%c0_31, %c0_32, %c2_33, %c0_34, %c0_35] : memref<1x3x3x3x128xf32, #tpu.memory_space<vmem>>, vector<1x1x1x1x128xf32>
    %18 = vector.shape_cast %17 : vector<1x1x1x1x128xf32> to vector<128xf32>
    %c0_36 = arith.constant 0 : index
    %c0_37 = arith.constant 0 : index
    %c2_38 = arith.constant 2 : index
    %c1_39 = arith.constant 1 : index
    %c0_40 = arith.constant 0 : index
    %19 = vector.load %arg3[%c0_36, %c0_37, %c2_38, %c1_39, %c0_40] : memref<1x3x3x3x128xf32, #tpu.memory_space<vmem>>, vector<1x1x1x1x128xf32>
    %20 = vector.shape_cast %19 : vector<1x1x1x1x128xf32> to vector<128xf32>
    %c0_41 = arith.constant 0 : index
    %c0_42 = arith.constant 0 : index
    %c2_43 = arith.constant 2 : index
    %c2_44 = arith.constant 2 : index
    %c0_45 = arith.constant 0 : index
    %21 = vector.load %arg3[%c0_41, %c0_42, %c2_43, %c2_44, %c0_45] : memref<1x3x3x3x128xf32, #tpu.memory_space<vmem>>, vector<1x1x1x1x128xf32>
    %22 = vector.shape_cast %21 : vector<1x1x1x1x128xf32> to vector<128xf32>
    %c0_46 = arith.constant 0 : index
    %c1_47 = arith.constant 1 : index
    %c0_48 = arith.constant 0 : index
    %c0_49 = arith.constant 0 : index
    %c0_50 = arith.constant 0 : index
    %23 = vector.load %arg3[%c0_46, %c1_47, %c0_48, %c0_49, %c0_50] : memref<1x3x3x3x128xf32, #tpu.memory_space<vmem>>, vector<1x1x1x1x128xf32>
    %24 = vector.shape_cast %23 : vector<1x1x1x1x128xf32> to vector<128xf32>
    %c0_51 = arith.constant 0 : index
    %c1_52 = arith.constant 1 : index
    %c0_53 = arith.constant 0 : index
    %c1_54 = arith.constant 1 : index
    %c0_55 = arith.constant 0 : index
    %25 = vector.load %arg3[%c0_51, %c1_52, %c0_53, %c1_54, %c0_55] : memref<1x3x3x3x128xf32, #tpu.memory_space<vmem>>, vector<1x1x1x1x128xf32>
    %26 = vector.shape_cast %25 : vector<1x1x1x1x128xf32> to vector<128xf32>
    %c0_56 = arith.constant 0 : index
    %c1_57 = arith.constant 1 : index
    %c0_58 = arith.constant 0 : index
    %c2_59 = arith.constant 2 : index
    %c0_60 = arith.constant 0 : index
    %27 = vector.load %arg3[%c0_56, %c1_57, %c0_58, %c2_59, %c0_60] : memref<1x3x3x3x128xf32, #tpu.memory_space<vmem>>, vector<1x1x1x1x128xf32>
    %28 = vector.shape_cast %27 : vector<1x1x1x1x128xf32> to vector<128xf32>
    %c0_61 = arith.constant 0 : index
    %c1_62 = arith.constant 1 : index
    %c1_63 = arith.constant 1 : index
    %c0_64 = arith.constant 0 : index
    %c0_65 = arith.constant 0 : index
    %29 = vector.load %arg3[%c0_61, %c1_62, %c1_63, %c0_64, %c0_65] : memref<1x3x3x3x128xf32, #tpu.memory_space<vmem>>, vector<1x1x1x1x128xf32>
    %30 = vector.shape_cast %29 : vector<1x1x1x1x128xf32> to vector<128xf32>
    %c0_66 = arith.constant 0 : index
    %c1_67 = arith.constant 1 : index
    %c1_68 = arith.constant 1 : index
    %c1_69 = arith.constant 1 : index
    %c0_70 = arith.constant 0 : index
    %31 = vector.load %arg3[%c0_66, %c1_67, %c1_68, %c1_69, %c0_70] : memref<1x3x3x3x128xf32, #tpu.memory_space<vmem>>, vector<1x1x1x1x128xf32>
    %32 = vector.shape_cast %31 : vector<1x1x1x1x128xf32> to vector<128xf32>
    %c0_71 = arith.constant 0 : index
    %c1_72 = arith.constant 1 : index
    %c1_73 = arith.constant 1 : index
    %c2_74 = arith.constant 2 : index
    %c0_75 = arith.constant 0 : index
    %33 = vector.load %arg3[%c0_71, %c1_72, %c1_73, %c2_74, %c0_75] : memref<1x3x3x3x128xf32, #tpu.memory_space<vmem>>, vector<1x1x1x1x128xf32>
    %34 = vector.shape_cast %33 : vector<1x1x1x1x128xf32> to vector<128xf32>
    %c0_76 = arith.constant 0 : index
    %c1_77 = arith.constant 1 : index
    %c2_78 = arith.constant 2 : index
    %c0_79 = arith.constant 0 : index
    %c0_80 = arith.constant 0 : index
    %35 = vector.load %arg3[%c0_76, %c1_77, %c2_78, %c0_79, %c0_80] : memref<1x3x3x3x128xf32, #tpu.memory_space<vmem>>, vector<1x1x1x1x128xf32>
    %36 = vector.shape_cast %35 : vector<1x1x1x1x128xf32> to vector<128xf32>
    %c0_81 = arith.constant 0 : index
    %c1_82 = arith.constant 1 : index
    %c2_83 = arith.constant 2 : index
    %c1_84 = arith.constant 1 : index
    %c0_85 = arith.constant 0 : index
    %37 = vector.load %arg3[%c0_81, %c1_82, %c2_83, %c1_84, %c0_85] : memref<1x3x3x3x128xf32, #tpu.memory_space<vmem>>, vector<1x1x1x1x128xf32>
    %38 = vector.shape_cast %37 : vector<1x1x1x1x128xf32> to vector<128xf32>
    %c0_86 = arith.constant 0 : index
    %c1_87 = arith.constant 1 : index
    %c2_88 = arith.constant 2 : index
    %c2_89 = arith.constant 2 : index
    %c0_90 = arith.constant 0 : index
    %39 = vector.load %arg3[%c0_86, %c1_87, %c2_88, %c2_89, %c0_90] : memref<1x3x3x3x128xf32, #tpu.memory_space<vmem>>, vector<1x1x1x1x128xf32>
    %40 = vector.shape_cast %39 : vector<1x1x1x1x128xf32> to vector<128xf32>
    %c0_91 = arith.constant 0 : index
    %c2_92 = arith.constant 2 : index
    %c0_93 = arith.constant 0 : index
    %c0_94 = arith.constant 0 : index
    %c0_95 = arith.constant 0 : index
    %41 = vector.load %arg3[%c0_91, %c2_92, %c0_93, %c0_94, %c0_95] : memref<1x3x3x3x128xf32, #tpu.memory_space<vmem>>, vector<1x1x1x1x128xf32>
    %42 = vector.shape_cast %41 : vector<1x1x1x1x128xf32> to vector<128xf32>
    %c0_96 = arith.constant 0 : index
    %c2_97 = arith.constant 2 : index
    %c0_98 = arith.constant 0 : index
    %c1_99 = arith.constant 1 : index
    %c0_100 = arith.constant 0 : index
    %43 = vector.load %arg3[%c0_96, %c2_97, %c0_98, %c1_99, %c0_100] : memref<1x3x3x3x128xf32, #tpu.memory_space<vmem>>, vector<1x1x1x1x128xf32>
    %44 = vector.shape_cast %43 : vector<1x1x1x1x128xf32> to vector<128xf32>
    %c0_101 = arith.constant 0 : index
    %c2_102 = arith.constant 2 : index
    %c0_103 = arith.constant 0 : index
    %c2_104 = arith.constant 2 : index
    %c0_105 = arith.constant 0 : index
    %45 = vector.load %arg3[%c0_101, %c2_102, %c0_103, %c2_104, %c0_105] : memref<1x3x3x3x128xf32, #tpu.memory_space<vmem>>, vector<1x1x1x1x128xf32>
    %46 = vector.shape_cast %45 : vector<1x1x1x1x128xf32> to vector<128xf32>
    %c0_106 = arith.constant 0 : index
    %c2_107 = arith.constant 2 : index
    %c1_108 = arith.constant 1 : index
    %c0_109 = arith.constant 0 : index
    %c0_110 = arith.constant 0 : index
    %47 = vector.load %arg3[%c0_106, %c2_107, %c1_108, %c0_109, %c0_110] : memref<1x3x3x3x128xf32, #tpu.memory_space<vmem>>, vector<1x1x1x1x128xf32>
    %48 = vector.shape_cast %47 : vector<1x1x1x1x128xf32> to vector<128xf32>
    %c0_111 = arith.constant 0 : index
    %c2_112 = arith.constant 2 : index
    %c1_113 = arith.constant 1 : index
    %c1_114 = arith.constant 1 : index
    %c0_115 = arith.constant 0 : index
    %49 = vector.load %arg3[%c0_111, %c2_112, %c1_113, %c1_114, %c0_115] : memref<1x3x3x3x128xf32, #tpu.memory_space<vmem>>, vector<1x1x1x1x128xf32>
    %50 = vector.shape_cast %49 : vector<1x1x1x1x128xf32> to vector<128xf32>
    %c0_116 = arith.constant 0 : index
    %c2_117 = arith.constant 2 : index
    %c1_118 = arith.constant 1 : index
    %c2_119 = arith.constant 2 : index
    %c0_120 = arith.constant 0 : index
    %51 = vector.load %arg3[%c0_116, %c2_117, %c1_118, %c2_119, %c0_120] : memref<1x3x3x3x128xf32, #tpu.memory_space<vmem>>, vector<1x1x1x1x128xf32>
    %52 = vector.shape_cast %51 : vector<1x1x1x1x128xf32> to vector<128xf32>
    %c0_121 = arith.constant 0 : index
    %c2_122 = arith.constant 2 : index
    %c2_123 = arith.constant 2 : index
    %c0_124 = arith.constant 0 : index
    %c0_125 = arith.constant 0 : index
    %53 = vector.load %arg3[%c0_121, %c2_122, %c2_123, %c0_124, %c0_125] : memref<1x3x3x3x128xf32, #tpu.memory_space<vmem>>, vector<1x1x1x1x128xf32>
    %54 = vector.shape_cast %53 : vector<1x1x1x1x128xf32> to vector<128xf32>
    %c0_126 = arith.constant 0 : index
    %c2_127 = arith.constant 2 : index
    %c2_128 = arith.constant 2 : index
    %c1_129 = arith.constant 1 : index
    %c0_130 = arith.constant 0 : index
    %55 = vector.load %arg3[%c0_126, %c2_127, %c2_128, %c1_129, %c0_130] : memref<1x3x3x3x128xf32, #tpu.memory_space<vmem>>, vector<1x1x1x1x128xf32>
    %56 = vector.shape_cast %55 : vector<1x1x1x1x128xf32> to vector<128xf32>
    %c0_131 = arith.constant 0 : index
    %c2_132 = arith.constant 2 : index
    %c2_133 = arith.constant 2 : index
    %c2_134 = arith.constant 2 : index
    %c0_135 = arith.constant 0 : index
    %57 = vector.load %arg3[%c0_131, %c2_132, %c2_133, %c2_134, %c0_135] : memref<1x3x3x3x128xf32, #tpu.memory_space<vmem>>, vector<1x1x1x1x128xf32>
    %58 = vector.shape_cast %57 : vector<1x1x1x1x128xf32> to vector<128xf32>
    %c8_i32 = arith.constant 8 : i32
    %59 = arith.muli %arg1, %c8_i32 : i32
    %c0_i32_136 = arith.constant 0 : i32
    %60 = arith.addi %59, %c0_i32_136 : i32
    %c0_137 = arith.constant 0 : index
    %61 = arith.index_cast %60 : i32 to index
    %c0_138 = arith.constant 0 : index
    %c0_139 = arith.constant 0 : index
    %c0_140 = arith.constant 0 : index
    %62 = vector.load %arg7[%c0_137, %61, %c0_138, %c0_139, %c0_140] : memref<3x10x10x8x128xf32, #tpu.memory_space<vmem>>, vector<1x1x8x8x128xf32>
    %63 = vector.shape_cast %62 : vector<1x1x8x8x128xf32> to vector<8x8x128xf32>
    %64 = vector.shape_cast %6 : vector<128xf32> to vector<1x1x128xf32>
    %65 = vector.broadcast %64 : vector<1x1x128xf32> to vector<8x8x128xf32>
    %66 = arith.mulf %63, %65 : vector<8x8x128xf32>
    %c1_141 = arith.constant 1 : index
    %67 = arith.index_cast %60 : i32 to index
    %c0_142 = arith.constant 0 : index
    %c0_143 = arith.constant 0 : index
    %c0_144 = arith.constant 0 : index
    %68 = vector.load %arg7[%c1_141, %67, %c0_142, %c0_143, %c0_144] : memref<3x10x10x8x128xf32, #tpu.memory_space<vmem>>, vector<1x1x8x8x128xf32>
    %69 = vector.shape_cast %68 : vector<1x1x8x8x128xf32> to vector<8x8x128xf32>
    %70 = vector.shape_cast %8 : vector<128xf32> to vector<1x1x128xf32>
    %71 = vector.broadcast %70 : vector<1x1x128xf32> to vector<8x8x128xf32>
    %72 = arith.mulf %69, %71 : vector<8x8x128xf32>
    %73 = arith.addf %66, %72 : vector<8x8x128xf32>
    %c2_145 = arith.constant 2 : index
    %74 = arith.index_cast %60 : i32 to index
    %c0_146 = arith.constant 0 : index
    %c0_147 = arith.constant 0 : index
    %c0_148 = arith.constant 0 : index
    %75 = vector.load %arg7[%c2_145, %74, %c0_146, %c0_147, %c0_148] : memref<3x10x10x8x128xf32, #tpu.memory_space<vmem>>, vector<1x1x8x8x128xf32>
    %76 = vector.shape_cast %75 : vector<1x1x8x8x128xf32> to vector<8x8x128xf32>
    %77 = vector.shape_cast %10 : vector<128xf32> to vector<1x1x128xf32>
    %78 = vector.broadcast %77 : vector<1x1x128xf32> to vector<8x8x128xf32>
    %79 = arith.mulf %76, %78 : vector<8x8x128xf32>
    %80 = arith.addf %73, %79 : vector<8x8x128xf32>
    %c0_149 = arith.constant 0 : index
    %81 = arith.index_cast %60 : i32 to index
    %c1_150 = arith.constant 1 : index
    %c0_151 = arith.constant 0 : index
    %c0_152 = arith.constant 0 : index
    %82 = vector.load %arg7[%c0_149, %81, %c1_150, %c0_151, %c0_152] : memref<3x10x10x8x128xf32, #tpu.memory_space<vmem>>, vector<1x1x8x8x128xf32>
    %83 = vector.shape_cast %82 : vector<1x1x8x8x128xf32> to vector<8x8x128xf32>
    %84 = vector.shape_cast %12 : vector<128xf32> to vector<1x1x128xf32>
    %85 = vector.broadcast %84 : vector<1x1x128xf32> to vector<8x8x128xf32>
    %86 = arith.mulf %83, %85 : vector<8x8x128xf32>
    %87 = arith.addf %80, %86 : vector<8x8x128xf32>
    %c1_153 = arith.constant 1 : index
    %88 = arith.index_cast %60 : i32 to index
    %c1_154 = arith.constant 1 : index
    %c0_155 = arith.constant 0 : index
    %c0_156 = arith.constant 0 : index
    %89 = vector.load %arg7[%c1_153, %88, %c1_154, %c0_155, %c0_156] : memref<3x10x10x8x128xf32, #tpu.memory_space<vmem>>, vector<1x1x8x8x128xf32>
    %90 = vector.shape_cast %89 : vector<1x1x8x8x128xf32> to vector<8x8x128xf32>
    %91 = vector.shape_cast %14 : vector<128xf32> to vector<1x1x128xf32>
    %92 = vector.broadcast %91 : vector<1x1x128xf32> to vector<8x8x128xf32>
    %93 = arith.mulf %90, %92 : vector<8x8x128xf32>
    %94 = arith.addf %87, %93 : vector<8x8x128xf32>
    %c2_157 = arith.constant 2 : index
    %95 = arith.index_cast %60 : i32 to index
    %c1_158 = arith.constant 1 : index
    %c0_159 = arith.constant 0 : index
    %c0_160 = arith.constant 0 : index
    %96 = vector.load %arg7[%c2_157, %95, %c1_158, %c0_159, %c0_160] : memref<3x10x10x8x128xf32, #tpu.memory_space<vmem>>, vector<1x1x8x8x128xf32>
    %97 = vector.shape_cast %96 : vector<1x1x8x8x128xf32> to vector<8x8x128xf32>
    %98 = vector.shape_cast %16 : vector<128xf32> to vector<1x1x128xf32>
    %99 = vector.broadcast %98 : vector<1x1x128xf32> to vector<8x8x128xf32>
    %100 = arith.mulf %97, %99 : vector<8x8x128xf32>
    %101 = arith.addf %94, %100 : vector<8x8x128xf32>
    %c0_161 = arith.constant 0 : index
    %102 = arith.index_cast %60 : i32 to index
    %c2_162 = arith.constant 2 : index
    %c0_163 = arith.constant 0 : index
    %c0_164 = arith.constant 0 : index
    %103 = vector.load %arg7[%c0_161, %102, %c2_162, %c0_163, %c0_164] : memref<3x10x10x8x128xf32, #tpu.memory_space<vmem>>, vector<1x1x8x8x128xf32>
    %104 = vector.shape_cast %103 : vector<1x1x8x8x128xf32> to vector<8x8x128xf32>
    %105 = vector.shape_cast %18 : vector<128xf32> to vector<1x1x128xf32>
    %106 = vector.broadcast %105 : vector<1x1x128xf32> to vector<8x8x128xf32>
    %107 = arith.mulf %104, %106 : vector<8x8x128xf32>
    %108 = arith.addf %101, %107 : vector<8x8x128xf32>
    %c1_165 = arith.constant 1 : index
    %109 = arith.index_cast %60 : i32 to index
    %c2_166 = arith.constant 2 : index
    %c0_167 = arith.constant 0 : index
    %c0_168 = arith.constant 0 : index
    %110 = vector.load %arg7[%c1_165, %109, %c2_166, %c0_167, %c0_168] : memref<3x10x10x8x128xf32, #tpu.memory_space<vmem>>, vector<1x1x8x8x128xf32>
    %111 = vector.shape_cast %110 : vector<1x1x8x8x128xf32> to vector<8x8x128xf32>
    %112 = vector.shape_cast %20 : vector<128xf32> to vector<1x1x128xf32>
    %113 = vector.broadcast %112 : vector<1x1x128xf32> to vector<8x8x128xf32>
    %114 = arith.mulf %111, %113 : vector<8x8x128xf32>
    %115 = arith.addf %108, %114 : vector<8x8x128xf32>
    %c2_169 = arith.constant 2 : index
    %116 = arith.index_cast %60 : i32 to index
    %c2_170 = arith.constant 2 : index
    %c0_171 = arith.constant 0 : index
    %c0_172 = arith.constant 0 : index
    %117 = vector.load %arg7[%c2_169, %116, %c2_170, %c0_171, %c0_172] : memref<3x10x10x8x128xf32, #tpu.memory_space<vmem>>, vector<1x1x8x8x128xf32>
    %118 = vector.shape_cast %117 : vector<1x1x8x8x128xf32> to vector<8x8x128xf32>
    %119 = vector.shape_cast %22 : vector<128xf32> to vector<1x1x128xf32>
    %120 = vector.broadcast %119 : vector<1x1x128xf32> to vector<8x8x128xf32>
    %121 = arith.mulf %118, %120 : vector<8x8x128xf32>
    %122 = arith.addf %115, %121 : vector<8x8x128xf32>
    %c1_i32 = arith.constant 1 : i32
    %123 = arith.addi %59, %c1_i32 : i32
    %c0_173 = arith.constant 0 : index
    %124 = arith.index_cast %123 : i32 to index
    %c0_174 = arith.constant 0 : index
    %c0_175 = arith.constant 0 : index
    %c0_176 = arith.constant 0 : index
    %125 = vector.load %arg7[%c0_173, %124, %c0_174, %c0_175, %c0_176] : memref<3x10x10x8x128xf32, #tpu.memory_space<vmem>>, vector<1x1x8x8x128xf32>
    %126 = vector.shape_cast %125 : vector<1x1x8x8x128xf32> to vector<8x8x128xf32>
    %127 = vector.shape_cast %24 : vector<128xf32> to vector<1x1x128xf32>
    %128 = vector.broadcast %127 : vector<1x1x128xf32> to vector<8x8x128xf32>
    %129 = arith.mulf %126, %128 : vector<8x8x128xf32>
    %130 = arith.addf %122, %129 : vector<8x8x128xf32>
    %c1_177 = arith.constant 1 : index
    %131 = arith.index_cast %123 : i32 to index
    %c0_178 = arith.constant 0 : index
    %c0_179 = arith.constant 0 : index
    %c0_180 = arith.constant 0 : index
    %132 = vector.load %arg7[%c1_177, %131, %c0_178, %c0_179, %c0_180] : memref<3x10x10x8x128xf32, #tpu.memory_space<vmem>>, vector<1x1x8x8x128xf32>
    %133 = vector.shape_cast %132 : vector<1x1x8x8x128xf32> to vector<8x8x128xf32>
    %134 = vector.shape_cast %26 : vector<128xf32> to vector<1x1x128xf32>
    %135 = vector.broadcast %134 : vector<1x1x128xf32> to vector<8x8x128xf32>
    %136 = arith.mulf %133, %135 : vector<8x8x128xf32>
    %137 = arith.addf %130, %136 : vector<8x8x128xf32>
    %c2_181 = arith.constant 2 : index
    %138 = arith.index_cast %123 : i32 to index
    %c0_182 = arith.constant 0 : index
    %c0_183 = arith.constant 0 : index
    %c0_184 = arith.constant 0 : index
    %139 = vector.load %arg7[%c2_181, %138, %c0_182, %c0_183, %c0_184] : memref<3x10x10x8x128xf32, #tpu.memory_space<vmem>>, vector<1x1x8x8x128xf32>
    %140 = vector.shape_cast %139 : vector<1x1x8x8x128xf32> to vector<8x8x128xf32>
    %141 = vector.shape_cast %28 : vector<128xf32> to vector<1x1x128xf32>
    %142 = vector.broadcast %141 : vector<1x1x128xf32> to vector<8x8x128xf32>
    %143 = arith.mulf %140, %142 : vector<8x8x128xf32>
    %144 = arith.addf %137, %143 : vector<8x8x128xf32>
    %c0_185 = arith.constant 0 : index
    %145 = arith.index_cast %123 : i32 to index
    %c1_186 = arith.constant 1 : index
    %c0_187 = arith.constant 0 : index
    %c0_188 = arith.constant 0 : index
    %146 = vector.load %arg7[%c0_185, %145, %c1_186, %c0_187, %c0_188] : memref<3x10x10x8x128xf32, #tpu.memory_space<vmem>>, vector<1x1x8x8x128xf32>
    %147 = vector.shape_cast %146 : vector<1x1x8x8x128xf32> to vector<8x8x128xf32>
    %148 = vector.shape_cast %30 : vector<128xf32> to vector<1x1x128xf32>
    %149 = vector.broadcast %148 : vector<1x1x128xf32> to vector<8x8x128xf32>
    %150 = arith.mulf %147, %149 : vector<8x8x128xf32>
    %151 = arith.addf %144, %150 : vector<8x8x128xf32>
    %c1_189 = arith.constant 1 : index
    %152 = arith.index_cast %123 : i32 to index
    %c1_190 = arith.constant 1 : index
    %c0_191 = arith.constant 0 : index
    %c0_192 = arith.constant 0 : index
    %153 = vector.load %arg7[%c1_189, %152, %c1_190, %c0_191, %c0_192] : memref<3x10x10x8x128xf32, #tpu.memory_space<vmem>>, vector<1x1x8x8x128xf32>
    %154 = vector.shape_cast %153 : vector<1x1x8x8x128xf32> to vector<8x8x128xf32>
    %155 = vector.shape_cast %32 : vector<128xf32> to vector<1x1x128xf32>
    %156 = vector.broadcast %155 : vector<1x1x128xf32> to vector<8x8x128xf32>
    %157 = arith.mulf %154, %156 : vector<8x8x128xf32>
    %158 = arith.addf %151, %157 : vector<8x8x128xf32>
    %c2_193 = arith.constant 2 : index
    %159 = arith.index_cast %123 : i32 to index
    %c1_194 = arith.constant 1 : index
    %c0_195 = arith.constant 0 : index
    %c0_196 = arith.constant 0 : index
    %160 = vector.load %arg7[%c2_193, %159, %c1_194, %c0_195, %c0_196] : memref<3x10x10x8x128xf32, #tpu.memory_space<vmem>>, vector<1x1x8x8x128xf32>
    %161 = vector.shape_cast %160 : vector<1x1x8x8x128xf32> to vector<8x8x128xf32>
    %162 = vector.shape_cast %34 : vector<128xf32> to vector<1x1x128xf32>
    %163 = vector.broadcast %162 : vector<1x1x128xf32> to vector<8x8x128xf32>
    %164 = arith.mulf %161, %163 : vector<8x8x128xf32>
    %165 = arith.addf %158, %164 : vector<8x8x128xf32>
    %c0_197 = arith.constant 0 : index
    %166 = arith.index_cast %123 : i32 to index
    %c2_198 = arith.constant 2 : index
    %c0_199 = arith.constant 0 : index
    %c0_200 = arith.constant 0 : index
    %167 = vector.load %arg7[%c0_197, %166, %c2_198, %c0_199, %c0_200] : memref<3x10x10x8x128xf32, #tpu.memory_space<vmem>>, vector<1x1x8x8x128xf32>
    %168 = vector.shape_cast %167 : vector<1x1x8x8x128xf32> to vector<8x8x128xf32>
    %169 = vector.shape_cast %36 : vector<128xf32> to vector<1x1x128xf32>
    %170 = vector.broadcast %169 : vector<1x1x128xf32> to vector<8x8x128xf32>
    %171 = arith.mulf %168, %170 : vector<8x8x128xf32>
    %172 = arith.addf %165, %171 : vector<8x8x128xf32>
    %c1_201 = arith.constant 1 : index
    %173 = arith.index_cast %123 : i32 to index
    %c2_202 = arith.constant 2 : index
    %c0_203 = arith.constant 0 : index
    %c0_204 = arith.constant 0 : index
    %174 = vector.load %arg7[%c1_201, %173, %c2_202, %c0_203, %c0_204] : memref<3x10x10x8x128xf32, #tpu.memory_space<vmem>>, vector<1x1x8x8x128xf32>
    %175 = vector.shape_cast %174 : vector<1x1x8x8x128xf32> to vector<8x8x128xf32>
    %176 = vector.shape_cast %38 : vector<128xf32> to vector<1x1x128xf32>
    %177 = vector.broadcast %176 : vector<1x1x128xf32> to vector<8x8x128xf32>
    %178 = arith.mulf %175, %177 : vector<8x8x128xf32>
    %179 = arith.addf %172, %178 : vector<8x8x128xf32>
    %c2_205 = arith.constant 2 : index
    %180 = arith.index_cast %123 : i32 to index
    %c2_206 = arith.constant 2 : index
    %c0_207 = arith.constant 0 : index
    %c0_208 = arith.constant 0 : index
    %181 = vector.load %arg7[%c2_205, %180, %c2_206, %c0_207, %c0_208] : memref<3x10x10x8x128xf32, #tpu.memory_space<vmem>>, vector<1x1x8x8x128xf32>
    %182 = vector.shape_cast %181 : vector<1x1x8x8x128xf32> to vector<8x8x128xf32>
    %183 = vector.shape_cast %40 : vector<128xf32> to vector<1x1x128xf32>
    %184 = vector.broadcast %183 : vector<1x1x128xf32> to vector<8x8x128xf32>
    %185 = arith.mulf %182, %184 : vector<8x8x128xf32>
    %186 = arith.addf %179, %185 : vector<8x8x128xf32>
    %c2_i32 = arith.constant 2 : i32
    %187 = arith.addi %59, %c2_i32 : i32
    %c0_209 = arith.constant 0 : index
    %188 = arith.index_cast %187 : i32 to index
    %c0_210 = arith.constant 0 : index
    %c0_211 = arith.constant 0 : index
    %c0_212 = arith.constant 0 : index
    %189 = vector.load %arg7[%c0_209, %188, %c0_210, %c0_211, %c0_212] : memref<3x10x10x8x128xf32, #tpu.memory_space<vmem>>, vector<1x1x8x8x128xf32>
    %190 = vector.shape_cast %189 : vector<1x1x8x8x128xf32> to vector<8x8x128xf32>
    %191 = vector.shape_cast %42 : vector<128xf32> to vector<1x1x128xf32>
    %192 = vector.broadcast %191 : vector<1x1x128xf32> to vector<8x8x128xf32>
    %193 = arith.mulf %190, %192 : vector<8x8x128xf32>
    %194 = arith.addf %186, %193 : vector<8x8x128xf32>
    %c1_213 = arith.constant 1 : index
    %195 = arith.index_cast %187 : i32 to index
    %c0_214 = arith.constant 0 : index
    %c0_215 = arith.constant 0 : index
    %c0_216 = arith.constant 0 : index
    %196 = vector.load %arg7[%c1_213, %195, %c0_214, %c0_215, %c0_216] : memref<3x10x10x8x128xf32, #tpu.memory_space<vmem>>, vector<1x1x8x8x128xf32>
    %197 = vector.shape_cast %196 : vector<1x1x8x8x128xf32> to vector<8x8x128xf32>
    %198 = vector.shape_cast %44 : vector<128xf32> to vector<1x1x128xf32>
    %199 = vector.broadcast %198 : vector<1x1x128xf32> to vector<8x8x128xf32>
    %200 = arith.mulf %197, %199 : vector<8x8x128xf32>
    %201 = arith.addf %194, %200 : vector<8x8x128xf32>
    %c2_217 = arith.constant 2 : index
    %202 = arith.index_cast %187 : i32 to index
    %c0_218 = arith.constant 0 : index
    %c0_219 = arith.constant 0 : index
    %c0_220 = arith.constant 0 : index
    %203 = vector.load %arg7[%c2_217, %202, %c0_218, %c0_219, %c0_220] : memref<3x10x10x8x128xf32, #tpu.memory_space<vmem>>, vector<1x1x8x8x128xf32>
    %204 = vector.shape_cast %203 : vector<1x1x8x8x128xf32> to vector<8x8x128xf32>
    %205 = vector.shape_cast %46 : vector<128xf32> to vector<1x1x128xf32>
    %206 = vector.broadcast %205 : vector<1x1x128xf32> to vector<8x8x128xf32>
    %207 = arith.mulf %204, %206 : vector<8x8x128xf32>
    %208 = arith.addf %201, %207 : vector<8x8x128xf32>
    %c0_221 = arith.constant 0 : index
    %209 = arith.index_cast %187 : i32 to index
    %c1_222 = arith.constant 1 : index
    %c0_223 = arith.constant 0 : index
    %c0_224 = arith.constant 0 : index
    %210 = vector.load %arg7[%c0_221, %209, %c1_222, %c0_223, %c0_224] : memref<3x10x10x8x128xf32, #tpu.memory_space<vmem>>, vector<1x1x8x8x128xf32>
    %211 = vector.shape_cast %210 : vector<1x1x8x8x128xf32> to vector<8x8x128xf32>
    %212 = vector.shape_cast %48 : vector<128xf32> to vector<1x1x128xf32>
    %213 = vector.broadcast %212 : vector<1x1x128xf32> to vector<8x8x128xf32>
    %214 = arith.mulf %211, %213 : vector<8x8x128xf32>
    %215 = arith.addf %208, %214 : vector<8x8x128xf32>
    %c1_225 = arith.constant 1 : index
    %216 = arith.index_cast %187 : i32 to index
    %c1_226 = arith.constant 1 : index
    %c0_227 = arith.constant 0 : index
    %c0_228 = arith.constant 0 : index
    %217 = vector.load %arg7[%c1_225, %216, %c1_226, %c0_227, %c0_228] : memref<3x10x10x8x128xf32, #tpu.memory_space<vmem>>, vector<1x1x8x8x128xf32>
    %218 = vector.shape_cast %217 : vector<1x1x8x8x128xf32> to vector<8x8x128xf32>
    %219 = vector.shape_cast %50 : vector<128xf32> to vector<1x1x128xf32>
    %220 = vector.broadcast %219 : vector<1x1x128xf32> to vector<8x8x128xf32>
    %221 = arith.mulf %218, %220 : vector<8x8x128xf32>
    %222 = arith.addf %215, %221 : vector<8x8x128xf32>
    %c2_229 = arith.constant 2 : index
    %223 = arith.index_cast %187 : i32 to index
    %c1_230 = arith.constant 1 : index
    %c0_231 = arith.constant 0 : index
    %c0_232 = arith.constant 0 : index
    %224 = vector.load %arg7[%c2_229, %223, %c1_230, %c0_231, %c0_232] : memref<3x10x10x8x128xf32, #tpu.memory_space<vmem>>, vector<1x1x8x8x128xf32>
    %225 = vector.shape_cast %224 : vector<1x1x8x8x128xf32> to vector<8x8x128xf32>
    %226 = vector.shape_cast %52 : vector<128xf32> to vector<1x1x128xf32>
    %227 = vector.broadcast %226 : vector<1x1x128xf32> to vector<8x8x128xf32>
    %228 = arith.mulf %225, %227 : vector<8x8x128xf32>
    %229 = arith.addf %222, %228 : vector<8x8x128xf32>
    %c0_233 = arith.constant 0 : index
    %230 = arith.index_cast %187 : i32 to index
    %c2_234 = arith.constant 2 : index
    %c0_235 = arith.constant 0 : index
    %c0_236 = arith.constant 0 : index
    %231 = vector.load %arg7[%c0_233, %230, %c2_234, %c0_235, %c0_236] : memref<3x10x10x8x128xf32, #tpu.memory_space<vmem>>, vector<1x1x8x8x128xf32>
    %232 = vector.shape_cast %231 : vector<1x1x8x8x128xf32> to vector<8x8x128xf32>
    %233 = vector.shape_cast %54 : vector<128xf32> to vector<1x1x128xf32>
    %234 = vector.broadcast %233 : vector<1x1x128xf32> to vector<8x8x128xf32>
    %235 = arith.mulf %232, %234 : vector<8x8x128xf32>
    %236 = arith.addf %229, %235 : vector<8x8x128xf32>
    %c1_237 = arith.constant 1 : index
    %237 = arith.index_cast %187 : i32 to index
    %c2_238 = arith.constant 2 : index
    %c0_239 = arith.constant 0 : index
    %c0_240 = arith.constant 0 : index
    %238 = vector.load %arg7[%c1_237, %237, %c2_238, %c0_239, %c0_240] : memref<3x10x10x8x128xf32, #tpu.memory_space<vmem>>, vector<1x1x8x8x128xf32>
    %239 = vector.shape_cast %238 : vector<1x1x8x8x128xf32> to vector<8x8x128xf32>
    %240 = vector.shape_cast %56 : vector<128xf32> to vector<1x1x128xf32>
    %241 = vector.broadcast %240 : vector<1x1x128xf32> to vector<8x8x128xf32>
    %242 = arith.mulf %239, %241 : vector<8x8x128xf32>
    %243 = arith.addf %236, %242 : vector<8x8x128xf32>
    %c2_241 = arith.constant 2 : index
    %244 = arith.index_cast %187 : i32 to index
    %c2_242 = arith.constant 2 : index
    %c0_243 = arith.constant 0 : index
    %c0_244 = arith.constant 0 : index
    %245 = vector.load %arg7[%c2_241, %244, %c2_242, %c0_243, %c0_244] : memref<3x10x10x8x128xf32, #tpu.memory_space<vmem>>, vector<1x1x8x8x128xf32>
    %246 = vector.shape_cast %245 : vector<1x1x8x8x128xf32> to vector<8x8x128xf32>
    %247 = vector.shape_cast %58 : vector<128xf32> to vector<1x1x128xf32>
    %248 = vector.broadcast %247 : vector<1x1x128xf32> to vector<8x8x128xf32>
    %249 = arith.mulf %246, %248 : vector<8x8x128xf32>
    %250 = arith.addf %243, %249 : vector<8x8x128xf32>
    %251 = vector.shape_cast %4 : vector<128xf32> to vector<1x1x128xf32>
    %252 = vector.broadcast %251 : vector<1x1x128xf32> to vector<8x8x128xf32>
    %253 = arith.addf %250, %252 : vector<8x8x128xf32>
    %c0_245 = arith.constant 0 : index
    %c0_246 = arith.constant 0 : index
    %c0_247 = arith.constant 0 : index
    %c0_248 = arith.constant 0 : index
    %c0_249 = arith.constant 0 : index
    %254 = vector.load %arg5[%c0_245, %c0_246, %c0_247, %c0_248, %c0_249] : memref<1x8x8x8x128xf32, #tpu.memory_space<vmem>>, vector<1x1x8x8x128xf32>
    %255 = vector.shape_cast %254 : vector<1x1x8x8x128xf32> to vector<8x8x128xf32>
    %256 = vector.shape_cast %253 : vector<8x8x128xf32> to vector<1x1x8x8x128xf32>
    tpu.vector_store %arg5[%c0_245, %c0_246, %c0_247, %c0_248, %c0_249], %256 {strides = array<i32>} : memref<1x8x8x8x128xf32, #tpu.memory_space<vmem>>, vector<1x1x8x8x128xf32>,
    %c1_i32_250 = arith.constant 1 : i32
    %257 = arith.addi %59, %c1_i32_250 : i32
    %c0_251 = arith.constant 0 : index
    %258 = arith.index_cast %257 : i32 to index
    %c0_252 = arith.constant 0 : index
    %c0_253 = arith.constant 0 : index
    %c0_254 = arith.constant 0 : index
    %259 = vector.load %arg7[%c0_251, %258, %c0_252, %c0_253, %c0_254] : memref<3x10x10x8x128xf32, #tpu.memory_space<vmem>>, vector<1x1x8x8x128xf32>
    %260 = vector.shape_cast %259 : vector<1x1x8x8x128xf32> to vector<8x8x128xf32>
    %261 = vector.shape_cast %6 : vector<128xf32> to vector<1x1x128xf32>
    %262 = vector.broadcast %261 : vector<1x1x128xf32> to vector<8x8x128xf32>
    %263 = arith.mulf %260, %262 : vector<8x8x128xf32>
    %c1_255 = arith.constant 1 : index
    %264 = arith.index_cast %257 : i32 to index
    %c0_256 = arith.constant 0 : index
    %c0_257 = arith.constant 0 : index
    %c0_258 = arith.constant 0 : index
    %265 = vector.load %arg7[%c1_255, %264, %c0_256, %c0_257, %c0_258] : memref<3x10x10x8x128xf32, #tpu.memory_space<vmem>>, vector<1x1x8x8x128xf32>
    %266 = vector.shape_cast %265 : vector<1x1x8x8x128xf32> to vector<8x8x128xf32>
    %267 = vector.shape_cast %8 : vector<128xf32> to vector<1x1x128xf32>
    %268 = vector.broadcast %267 : vector<1x1x128xf32> to vector<8x8x128xf32>
    %269 = arith.mulf %266, %268 : vector<8x8x128xf32>
    %270 = arith.addf %263, %269 : vector<8x8x128xf32>
    %c2_259 = arith.constant 2 : index
    %271 = arith.index_cast %257 : i32 to index
    %c0_260 = arith.constant 0 : index
    %c0_261 = arith.constant 0 : index
    %c0_262 = arith.constant 0 : index
    %272 = vector.load %arg7[%c2_259, %271, %c0_260, %c0_261, %c0_262] : memref<3x10x10x8x128xf32, #tpu.memory_space<vmem>>, vector<1x1x8x8x128xf32>
    %273 = vector.shape_cast %272 : vector<1x1x8x8x128xf32> to vector<8x8x128xf32>
    %274 = vector.shape_cast %10 : vector<128xf32> to vector<1x1x128xf32>
    %275 = vector.broadcast %274 : vector<1x1x128xf32> to vector<8x8x128xf32>
    %276 = arith.mulf %273, %275 : vector<8x8x128xf32>
    %277 = arith.addf %270, %276 : vector<8x8x128xf32>
    %c0_263 = arith.constant 0 : index
    %278 = arith.index_cast %257 : i32 to index
    %c1_264 = arith.constant 1 : index
    %c0_265 = arith.constant 0 : index
    %c0_266 = arith.constant 0 : index
    %279 = vector.load %arg7[%c0_263, %278, %c1_264, %c0_265, %c0_266] : memref<3x10x10x8x128xf32, #tpu.memory_space<vmem>>, vector<1x1x8x8x128xf32>
    %280 = vector.shape_cast %279 : vector<1x1x8x8x128xf32> to vector<8x8x128xf32>
    %281 = vector.shape_cast %12 : vector<128xf32> to vector<1x1x128xf32>
    %282 = vector.broadcast %281 : vector<1x1x128xf32> to vector<8x8x128xf32>
    %283 = arith.mulf %280, %282 : vector<8x8x128xf32>
    %284 = arith.addf %277, %283 : vector<8x8x128xf32>
    %c1_267 = arith.constant 1 : index
    %285 = arith.index_cast %257 : i32 to index
    %c1_268 = arith.constant 1 : index
    %c0_269 = arith.constant 0 : index
    %c0_270 = arith.constant 0 : index
    %286 = vector.load %arg7[%c1_267, %285, %c1_268, %c0_269, %c0_270] : memref<3x10x10x8x128xf32, #tpu.memory_space<vmem>>, vector<1x1x8x8x128xf32>
    %287 = vector.shape_cast %286 : vector<1x1x8x8x128xf32> to vector<8x8x128xf32>
    %288 = vector.shape_cast %14 : vector<128xf32> to vector<1x1x128xf32>
    %289 = vector.broadcast %288 : vector<1x1x128xf32> to vector<8x8x128xf32>
    %290 = arith.mulf %287, %289 : vector<8x8x128xf32>
    %291 = arith.addf %284, %290 : vector<8x8x128xf32>
    %c2_271 = arith.constant 2 : index
    %292 = arith.index_cast %257 : i32 to index
    %c1_272 = arith.constant 1 : index
    %c0_273 = arith.constant 0 : index
    %c0_274 = arith.constant 0 : index
    %293 = vector.load %arg7[%c2_271, %292, %c1_272, %c0_273, %c0_274] : memref<3x10x10x8x128xf32, #tpu.memory_space<vmem>>, vector<1x1x8x8x128xf32>
    %294 = vector.shape_cast %293 : vector<1x1x8x8x128xf32> to vector<8x8x128xf32>
    %295 = vector.shape_cast %16 : vector<128xf32> to vector<1x1x128xf32>
    %296 = vector.broadcast %295 : vector<1x1x128xf32> to vector<8x8x128xf32>
    %297 = arith.mulf %294, %296 : vector<8x8x128xf32>
    %298 = arith.addf %291, %297 : vector<8x8x128xf32>
    %c0_275 = arith.constant 0 : index
    %299 = arith.index_cast %257 : i32 to index
    %c2_276 = arith.constant 2 : index
    %c0_277 = arith.constant 0 : index
    %c0_278 = arith.constant 0 : index
    %300 = vector.load %arg7[%c0_275, %299, %c2_276, %c0_277, %c0_278] : memref<3x10x10x8x128xf32, #tpu.memory_space<vmem>>, vector<1x1x8x8x128xf32>
    %301 = vector.shape_cast %300 : vector<1x1x8x8x128xf32> to vector<8x8x128xf32>
    %302 = vector.shape_cast %18 : vector<128xf32> to vector<1x1x128xf32>
    %303 = vector.broadcast %302 : vector<1x1x128xf32> to vector<8x8x128xf32>
    %304 = arith.mulf %301, %303 : vector<8x8x128xf32>
    %305 = arith.addf %298, %304 : vector<8x8x128xf32>
    %c1_279 = arith.constant 1 : index
    %306 = arith.index_cast %257 : i32 to index
    %c2_280 = arith.constant 2 : index
    %c0_281 = arith.constant 0 : index
    %c0_282 = arith.constant 0 : index
    %307 = vector.load %arg7[%c1_279, %306, %c2_280, %c0_281, %c0_282] : memref<3x10x10x8x128xf32, #tpu.memory_space<vmem>>, vector<1x1x8x8x128xf32>
    %308 = vector.shape_cast %307 : vector<1x1x8x8x128xf32> to vector<8x8x128xf32>
    %309 = vector.shape_cast %20 : vector<128xf32> to vector<1x1x128xf32>
    %310 = vector.broadcast %309 : vector<1x1x128xf32> to vector<8x8x128xf32>
    %311 = arith.mulf %308, %310 : vector<8x8x128xf32>
    %312 = arith.addf %305, %311 : vector<8x8x128xf32>
    %c2_283 = arith.constant 2 : index
    %313 = arith.index_cast %257 : i32 to index
    %c2_284 = arith.constant 2 : index
    %c0_285 = arith.constant 0 : index
    %c0_286 = arith.constant 0 : index
    %314 = vector.load %arg7[%c2_283, %313, %c2_284, %c0_285, %c0_286] : memref<3x10x10x8x128xf32, #tpu.memory_space<vmem>>, vector<1x1x8x8x128xf32>
    %315 = vector.shape_cast %314 : vector<1x1x8x8x128xf32> to vector<8x8x128xf32>
    %316 = vector.shape_cast %22 : vector<128xf32> to vector<1x1x128xf32>
    %317 = vector.broadcast %316 : vector<1x1x128xf32> to vector<8x8x128xf32>
    %318 = arith.mulf %315, %317 : vector<8x8x128xf32>
    %319 = arith.addf %312, %318 : vector<8x8x128xf32>
    %c2_i32_287 = arith.constant 2 : i32
    %320 = arith.addi %59, %c2_i32_287 : i32
    %c0_288 = arith.constant 0 : index
    %321 = arith.index_cast %320 : i32 to index
    %c0_289 = arith.constant 0 : index
    %c0_290 = arith.constant 0 : index
    %c0_291 = arith.constant 0 : index
    %322 = vector.load %arg7[%c0_288, %321, %c0_289, %c0_290, %c0_291] : memref<3x10x10x8x128xf32, #tpu.memory_space<vmem>>, vector<1x1x8x8x128xf32>
    %323 = vector.shape_cast %322 : vector<1x1x8x8x128xf32> to vector<8x8x128xf32>
    %324 = vector.shape_cast %24 : vector<128xf32> to vector<1x1x128xf32>
    %325 = vector.broadcast %324 : vector<1x1x128xf32> to vector<8x8x128xf32>
    %326 = arith.mulf %323, %325 : vector<8x8x128xf32>
    %327 = arith.addf %319, %326 : vector<8x8x128xf32>
    %c1_292 = arith.constant 1 : index
    %328 = arith.index_cast %320 : i32 to index
    %c0_293 = arith.constant 0 : index
    %c0_294 = arith.constant 0 : index
    %c0_295 = arith.constant 0 : index
    %329 = vector.load %arg7[%c1_292, %328, %c0_293, %c0_294, %c0_295] : memref<3x10x10x8x128xf32, #tpu.memory_space<vmem>>, vector<1x1x8x8x128xf32>
    %330 = vector.shape_cast %329 : vector<1x1x8x8x128xf32> to vector<8x8x128xf32>
    %331 = vector.shape_cast %26 : vector<128xf32> to vector<1x1x128xf32>
    %332 = vector.broadcast %331 : vector<1x1x128xf32> to vector<8x8x128xf32>
    %333 = arith.mulf %330, %332 : vector<8x8x128xf32>
    %334 = arith.addf %327, %333 : vector<8x8x128xf32>
    %c2_296 = arith.constant 2 : index
    %335 = arith.index_cast %320 : i32 to index
    %c0_297 = arith.constant 0 : index
    %c0_298 = arith.constant 0 : index
    %c0_299 = arith.constant 0 : index
    %336 = vector.load %arg7[%c2_296, %335, %c0_297, %c0_298, %c0_299] : memref<3x10x10x8x128xf32, #tpu.memory_space<vmem>>, vector<1x1x8x8x128xf32>
    %337 = vector.shape_cast %336 : vector<1x1x8x8x128xf32> to vector<8x8x128xf32>
    %338 = vector.shape_cast %28 : vector<128xf32> to vector<1x1x128xf32>
    %339 = vector.broadcast %338 : vector<1x1x128xf32> to vector<8x8x128xf32>
    %340 = arith.mulf %337, %339 : vector<8x8x128xf32>
    %341 = arith.addf %334, %340 : vector<8x8x128xf32>
    %c0_300 = arith.constant 0 : index
    %342 = arith.index_cast %320 : i32 to index
    %c1_301 = arith.constant 1 : index
    %c0_302 = arith.constant 0 : index
    %c0_303 = arith.constant 0 : index
    %343 = vector.load %arg7[%c0_300, %342, %c1_301, %c0_302, %c0_303] : memref<3x10x10x8x128xf32, #tpu.memory_space<vmem>>, vector<1x1x8x8x128xf32>
    %344 = vector.shape_cast %343 : vector<1x1x8x8x128xf32> to vector<8x8x128xf32>
    %345 = vector.shape_cast %30 : vector<128xf32> to vector<1x1x128xf32>
    %346 = vector.broadcast %345 : vector<1x1x128xf32> to vector<8x8x128xf32>
    %347 = arith.mulf %344, %346 : vector<8x8x128xf32>
    %348 = arith.addf %341, %347 : vector<8x8x128xf32>
    %c1_304 = arith.constant 1 : index
    %349 = arith.index_cast %320 : i32 to index
    %c1_305 = arith.constant 1 : index
    %c0_306 = arith.constant 0 : index
    %c0_307 = arith.constant 0 : index
    %350 = vector.load %arg7[%c1_304, %349, %c1_305, %c0_306, %c0_307] : memref<3x10x10x8x128xf32, #tpu.memory_space<vmem>>, vector<1x1x8x8x128xf32>
    %351 = vector.shape_cast %350 : vector<1x1x8x8x128xf32> to vector<8x8x128xf32>
    %352 = vector.shape_cast %32 : vector<128xf32> to vector<1x1x128xf32>
    %353 = vector.broadcast %352 : vector<1x1x128xf32> to vector<8x8x128xf32>
    %354 = arith.mulf %351, %353 : vector<8x8x128xf32>
    %355 = arith.addf %348, %354 : vector<8x8x128xf32>
    %c2_308 = arith.constant 2 : index
    %356 = arith.index_cast %320 : i32 to index
    %c1_309 = arith.constant 1 : index
    %c0_310 = arith.constant 0 : index
    %c0_311 = arith.constant 0 : index
    %357 = vector.load %arg7[%c2_308, %356, %c1_309, %c0_310, %c0_311] : memref<3x10x10x8x128xf32, #tpu.memory_space<vmem>>, vector<1x1x8x8x128xf32>
    %358 = vector.shape_cast %357 : vector<1x1x8x8x128xf32> to vector<8x8x128xf32>
    %359 = vector.shape_cast %34 : vector<128xf32> to vector<1x1x128xf32>
    %360 = vector.broadcast %359 : vector<1x1x128xf32> to vector<8x8x128xf32>
    %361 = arith.mulf %358, %360 : vector<8x8x128xf32>
    %362 = arith.addf %355, %361 : vector<8x8x128xf32>
    %c0_312 = arith.constant 0 : index
    %363 = arith.index_cast %320 : i32 to index
    %c2_313 = arith.constant 2 : index
    %c0_314 = arith.constant 0 : index
    %c0_315 = arith.constant 0 : index
    %364 = vector.load %arg7[%c0_312, %363, %c2_313, %c0_314, %c0_315] : memref<3x10x10x8x128xf32, #tpu.memory_space<vmem>>, vector<1x1x8x8x128xf32>
    %365 = vector.shape_cast %364 : vector<1x1x8x8x128xf32> to vector<8x8x128xf32>
    %366 = vector.shape_cast %36 : vector<128xf32> to vector<1x1x128xf32>
    %367 = vector.broadcast %366 : vector<1x1x128xf32> to vector<8x8x128xf32>
    %368 = arith.mulf %365, %367 : vector<8x8x128xf32>
    %369 = arith.addf %362, %368 : vector<8x8x128xf32>
    %c1_316 = arith.constant 1 : index
    %370 = arith.index_cast %320 : i32 to index
    %c2_317 = arith.constant 2 : index
    %c0_318 = arith.constant 0 : index
    %c0_319 = arith.constant 0 : index
    %371 = vector.load %arg7[%c1_316, %370, %c2_317, %c0_318, %c0_319] : memref<3x10x10x8x128xf32, #tpu.memory_space<vmem>>, vector<1x1x8x8x128xf32>
    %372 = vector.shape_cast %371 : vector<1x1x8x8x128xf32> to vector<8x8x128xf32>
    %373 = vector.shape_cast %38 : vector<128xf32> to vector<1x1x128xf32>
    %374 = vector.broadcast %373 : vector<1x1x128xf32> to vector<8x8x128xf32>
    %375 = arith.mulf %372, %374 : vector<8x8x128xf32>
    %376 = arith.addf %369, %375 : vector<8x8x128xf32>
    %c2_320 = arith.constant 2 : index
    %377 = arith.index_cast %320 : i32 to index
    %c2_321 = arith.constant 2 : index
    %c0_322 = arith.constant 0 : index
    %c0_323 = arith.constant 0 : index
    %378 = vector.load %arg7[%c2_320, %377, %c2_321, %c0_322, %c0_323] : memref<3x10x10x8x128xf32, #tpu.memory_space<vmem>>, vector<1x1x8x8x128xf32>
    %379 = vector.shape_cast %378 : vector<1x1x8x8x128xf32> to vector<8x8x128xf32>
    %380 = vector.shape_cast %40 : vector<128xf32> to vector<1x1x128xf32>
    %381 = vector.broadcast %380 : vector<1x1x128xf32> to vector<8x8x128xf32>
    %382 = arith.mulf %379, %381 : vector<8x8x128xf32>
    %383 = arith.addf %376, %382 : vector<8x8x128xf32>
    %c3_i32 = arith.constant 3 : i32
    %384 = arith.addi %59, %c3_i32 : i32
    %c0_324 = arith.constant 0 : index
    %385 = arith.index_cast %384 : i32 to index
    %c0_325 = arith.constant 0 : index
    %c0_326 = arith.constant 0 : index
    %c0_327 = arith.constant 0 : index
    %386 = vector.load %arg7[%c0_324, %385, %c0_325, %c0_326, %c0_327] : memref<3x10x10x8x128xf32, #tpu.memory_space<vmem>>, vector<1x1x8x8x128xf32>
    %387 = vector.shape_cast %386 : vector<1x1x8x8x128xf32> to vector<8x8x128xf32>
    %388 = vector.shape_cast %42 : vector<128xf32> to vector<1x1x128xf32>
    %389 = vector.broadcast %388 : vector<1x1x128xf32> to vector<8x8x128xf32>
    %390 = arith.mulf %387, %389 : vector<8x8x128xf32>
    %391 = arith.addf %383, %390 : vector<8x8x128xf32>
    %c1_328 = arith.constant 1 : index
    %392 = arith.index_cast %384 : i32 to index
    %c0_329 = arith.constant 0 : index
    %c0_330 = arith.constant 0 : index
    %c0_331 = arith.constant 0 : index
    %393 = vector.load %arg7[%c1_328, %392, %c0_329, %c0_330, %c0_331] : memref<3x10x10x8x128xf32, #tpu.memory_space<vmem>>, vector<1x1x8x8x128xf32>
    %394 = vector.shape_cast %393 : vector<1x1x8x8x128xf32> to vector<8x8x128xf32>
    %395 = vector.shape_cast %44 : vector<128xf32> to vector<1x1x128xf32>
    %396 = vector.broadcast %395 : vector<1x1x128xf32> to vector<8x8x128xf32>
    %397 = arith.mulf %394, %396 : vector<8x8x128xf32>
    %398 = arith.addf %391, %397 : vector<8x8x128xf32>
    %c2_332 = arith.constant 2 : index
    %399 = arith.index_cast %384 : i32 to index
    %c0_333 = arith.constant 0 : index
    %c0_334 = arith.constant 0 : index
    %c0_335 = arith.constant 0 : index
    %400 = vector.load %arg7[%c2_332, %399, %c0_333, %c0_334, %c0_335] : memref<3x10x10x8x128xf32, #tpu.memory_space<vmem>>, vector<1x1x8x8x128xf32>
    %401 = vector.shape_cast %400 : vector<1x1x8x8x128xf32> to vector<8x8x128xf32>
    %402 = vector.shape_cast %46 : vector<128xf32> to vector<1x1x128xf32>
    %403 = vector.broadcast %402 : vector<1x1x128xf32> to vector<8x8x128xf32>
    %404 = arith.mulf %401, %403 : vector<8x8x128xf32>
    %405 = arith.addf %398, %404 : vector<8x8x128xf32>
    %c0_336 = arith.constant 0 : index
    %406 = arith.index_cast %384 : i32 to index
    %c1_337 = arith.constant 1 : index
    %c0_338 = arith.constant 0 : index
    %c0_339 = arith.constant 0 : index
    %407 = vector.load %arg7[%c0_336, %406, %c1_337, %c0_338, %c0_339] : memref<3x10x10x8x128xf32, #tpu.memory_space<vmem>>, vector<1x1x8x8x128xf32>
    %408 = vector.shape_cast %407 : vector<1x1x8x8x128xf32> to vector<8x8x128xf32>
    %409 = vector.shape_cast %48 : vector<128xf32> to vector<1x1x128xf32>
    %410 = vector.broadcast %409 : vector<1x1x128xf32> to vector<8x8x128xf32>
    %411 = arith.mulf %408, %410 : vector<8x8x128xf32>
    %412 = arith.addf %405, %411 : vector<8x8x128xf32>
    %c1_340 = arith.constant 1 : index
    %413 = arith.index_cast %384 : i32 to index
    %c1_341 = arith.constant 1 : index
    %c0_342 = arith.constant 0 : index
    %c0_343 = arith.constant 0 : index
    %414 = vector.load %arg7[%c1_340, %413, %c1_341, %c0_342, %c0_343] : memref<3x10x10x8x128xf32, #tpu.memory_space<vmem>>, vector<1x1x8x8x128xf32>
    %415 = vector.shape_cast %414 : vector<1x1x8x8x128xf32> to vector<8x8x128xf32>
    %416 = vector.shape_cast %50 : vector<128xf32> to vector<1x1x128xf32>
    %417 = vector.broadcast %416 : vector<1x1x128xf32> to vector<8x8x128xf32>
    %418 = arith.mulf %415, %417 : vector<8x8x128xf32>
    %419 = arith.addf %412, %418 : vector<8x8x128xf32>
    %c2_344 = arith.constant 2 : index
    %420 = arith.index_cast %384 : i32 to index
    %c1_345 = arith.constant 1 : index
    %c0_346 = arith.constant 0 : index
    %c0_347 = arith.constant 0 : index
    %421 = vector.load %arg7[%c2_344, %420, %c1_345, %c0_346, %c0_347] : memref<3x10x10x8x128xf32, #tpu.memory_space<vmem>>, vector<1x1x8x8x128xf32>
    %422 = vector.shape_cast %421 : vector<1x1x8x8x128xf32> to vector<8x8x128xf32>
    %423 = vector.shape_cast %52 : vector<128xf32> to vector<1x1x128xf32>
    %424 = vector.broadcast %423 : vector<1x1x128xf32> to vector<8x8x128xf32>
    %425 = arith.mulf %422, %424 : vector<8x8x128xf32>
    %426 = arith.addf %419, %425 : vector<8x8x128xf32>
    %c0_348 = arith.constant 0 : index
    %427 = arith.index_cast %384 : i32 to index
    %c2_349 = arith.constant 2 : index
    %c0_350 = arith.constant 0 : index
    %c0_351 = arith.constant 0 : index
    %428 = vector.load %arg7[%c0_348, %427, %c2_349, %c0_350, %c0_351] : memref<3x10x10x8x128xf32, #tpu.memory_space<vmem>>, vector<1x1x8x8x128xf32>
    %429 = vector.shape_cast %428 : vector<1x1x8x8x128xf32> to vector<8x8x128xf32>
    %430 = vector.shape_cast %54 : vector<128xf32> to vector<1x1x128xf32>
    %431 = vector.broadcast %430 : vector<1x1x128xf32> to vector<8x8x128xf32>
    %432 = arith.mulf %429, %431 : vector<8x8x128xf32>
    %433 = arith.addf %426, %432 : vector<8x8x128xf32>
    %c1_352 = arith.constant 1 : index
    %434 = arith.index_cast %384 : i32 to index
    %c2_353 = arith.constant 2 : index
    %c0_354 = arith.constant 0 : index
    %c0_355 = arith.constant 0 : index
    %435 = vector.load %arg7[%c1_352, %434, %c2_353, %c0_354, %c0_355] : memref<3x10x10x8x128xf32, #tpu.memory_space<vmem>>, vector<1x1x8x8x128xf32>
    %436 = vector.shape_cast %435 : vector<1x1x8x8x128xf32> to vector<8x8x128xf32>
    %437 = vector.shape_cast %56 : vector<128xf32> to vector<1x1x128xf32>
    %438 = vector.broadcast %437 : vector<1x1x128xf32> to vector<8x8x128xf32>
    %439 = arith.mulf %436, %438 : vector<8x8x128xf32>
    %440 = arith.addf %433, %439 : vector<8x8x128xf32>
    %c2_356 = arith.constant 2 : index
    %441 = arith.index_cast %384 : i32 to index
    %c2_357 = arith.constant 2 : index
    %c0_358 = arith.constant 0 : index
    %c0_359 = arith.constant 0 : index
    %442 = vector.load %arg7[%c2_356, %441, %c2_357, %c0_358, %c0_359] : memref<3x10x10x8x128xf32, #tpu.memory_space<vmem>>, vector<1x1x8x8x128xf32>
    %443 = vector.shape_cast %442 : vector<1x1x8x8x128xf32> to vector<8x8x128xf32>
    %444 = vector.shape_cast %58 : vector<128xf32> to vector<1x1x128xf32>
    %445 = vector.broadcast %444 : vector<1x1x128xf32> to vector<8x8x128xf32>
    %446 = arith.mulf %443, %445 : vector<8x8x128xf32>
    %447 = arith.addf %440, %446 : vector<8x8x128xf32>
    %448 = vector.shape_cast %4 : vector<128xf32> to vector<1x1x128xf32>
    %449 = vector.broadcast %448 : vector<1x1x128xf32> to vector<8x8x128xf32>
    %450 = arith.addf %447, %449 : vector<8x8x128xf32>
    %c0_360 = arith.constant 0 : index
    %c1_361 = arith.constant 1 : index
    %c0_362 = arith.constant 0 : index
    %c0_363 = arith.constant 0 : index
    %c0_364 = arith.constant 0 : index
    %451 = vector.load %arg5[%c0_360, %c1_361, %c0_362, %c0_363, %c0_364] : memref<1x8x8x8x128xf32, #tpu.memory_space<vmem>>, vector<1x1x8x8x128xf32>
    %452 = vector.shape_cast %451 : vector<1x1x8x8x128xf32> to vector<8x8x128xf32>
    %453 = vector.shape_cast %450 : vector<8x8x128xf32> to vector<1x1x8x8x128xf32>
    tpu.vector_store %arg5[%c0_360, %c1_361, %c0_362, %c0_363, %c0_364], %453 {strides = array<i32>} : memref<1x8x8x8x128xf32, #tpu.memory_space<vmem>>, vector<1x1x8x8x128xf32>,
    %c2_i32_365 = arith.constant 2 : i32
    %454 = arith.addi %59, %c2_i32_365 : i32
    %c0_366 = arith.constant 0 : index
    %455 = arith.index_cast %454 : i32 to index
    %c0_367 = arith.constant 0 : index
    %c0_368 = arith.constant 0 : index
    %c0_369 = arith.constant 0 : index
    %456 = vector.load %arg7[%c0_366, %455, %c0_367, %c0_368, %c0_369] : memref<3x10x10x8x128xf32, #tpu.memory_space<vmem>>, vector<1x1x8x8x128xf32>
    %457 = vector.shape_cast %456 : vector<1x1x8x8x128xf32> to vector<8x8x128xf32>
    %458 = vector.shape_cast %6 : vector<128xf32> to vector<1x1x128xf32>
    %459 = vector.broadcast %458 : vector<1x1x128xf32> to vector<8x8x128xf32>
    %460 = arith.mulf %457, %459 : vector<8x8x128xf32>
    %c1_370 = arith.constant 1 : index
    %461 = arith.index_cast %454 : i32 to index
    %c0_371 = arith.constant 0 : index
    %c0_372 = arith.constant 0 : index
    %c0_373 = arith.constant 0 : index
    %462 = vector.load %arg7[%c1_370, %461, %c0_371, %c0_372, %c0_373] : memref<3x10x10x8x128xf32, #tpu.memory_space<vmem>>, vector<1x1x8x8x128xf32>
    %463 = vector.shape_cast %462 : vector<1x1x8x8x128xf32> to vector<8x8x128xf32>
    %464 = vector.shape_cast %8 : vector<128xf32> to vector<1x1x128xf32>
    %465 = vector.broadcast %464 : vector<1x1x128xf32> to vector<8x8x128xf32>
    %466 = arith.mulf %463, %465 : vector<8x8x128xf32>
    %467 = arith.addf %460, %466 : vector<8x8x128xf32>
    %c2_374 = arith.constant 2 : index
    %468 = arith.index_cast %454 : i32 to index
    %c0_375 = arith.constant 0 : index
    %c0_376 = arith.constant 0 : index
    %c0_377 = arith.constant 0 : index
    %469 = vector.load %arg7[%c2_374, %468, %c0_375, %c0_376, %c0_377] : memref<3x10x10x8x128xf32, #tpu.memory_space<vmem>>, vector<1x1x8x8x128xf32>
    %470 = vector.shape_cast %469 : vector<1x1x8x8x128xf32> to vector<8x8x128xf32>
    %471 = vector.shape_cast %10 : vector<128xf32> to vector<1x1x128xf32>
    %472 = vector.broadcast %471 : vector<1x1x128xf32> to vector<8x8x128xf32>
    %473 = arith.mulf %470, %472 : vector<8x8x128xf32>
    %474 = arith.addf %467, %473 : vector<8x8x128xf32>
    %c0_378 = arith.constant 0 : index
    %475 = arith.index_cast %454 : i32 to index
    %c1_379 = arith.constant 1 : index
    %c0_380 = arith.constant 0 : index
    %c0_381 = arith.constant 0 : index
    %476 = vector.load %arg7[%c0_378, %475, %c1_379, %c0_380, %c0_381] : memref<3x10x10x8x128xf32, #tpu.memory_space<vmem>>, vector<1x1x8x8x128xf32>
    %477 = vector.shape_cast %476 : vector<1x1x8x8x128xf32> to vector<8x8x128xf32>
    %478 = vector.shape_cast %12 : vector<128xf32> to vector<1x1x128xf32>
    %479 = vector.broadcast %478 : vector<1x1x128xf32> to vector<8x8x128xf32>
    %480 = arith.mulf %477, %479 : vector<8x8x128xf32>
    %481 = arith.addf %474, %480 : vector<8x8x128xf32>
    %c1_382 = arith.constant 1 : index
    %482 = arith.index_cast %454 : i32 to index
    %c1_383 = arith.constant 1 : index
    %c0_384 = arith.constant 0 : index
    %c0_385 = arith.constant 0 : index
    %483 = vector.load %arg7[%c1_382, %482, %c1_383, %c0_384, %c0_385] : memref<3x10x10x8x128xf32, #tpu.memory_space<vmem>>, vector<1x1x8x8x128xf32>
    %484 = vector.shape_cast %483 : vector<1x1x8x8x128xf32> to vector<8x8x128xf32>
    %485 = vector.shape_cast %14 : vector<128xf32> to vector<1x1x128xf32>
    %486 = vector.broadcast %485 : vector<1x1x128xf32> to vector<8x8x128xf32>
    %487 = arith.mulf %484, %486 : vector<8x8x128xf32>
    %488 = arith.addf %481, %487 : vector<8x8x128xf32>
    %c2_386 = arith.constant 2 : index
    %489 = arith.index_cast %454 : i32 to index
    %c1_387 = arith.constant 1 : index
    %c0_388 = arith.constant 0 : index
    %c0_389 = arith.constant 0 : index
    %490 = vector.load %arg7[%c2_386, %489, %c1_387, %c0_388, %c0_389] : memref<3x10x10x8x128xf32, #tpu.memory_space<vmem>>, vector<1x1x8x8x128xf32>
    %491 = vector.shape_cast %490 : vector<1x1x8x8x128xf32> to vector<8x8x128xf32>
    %492 = vector.shape_cast %16 : vector<128xf32> to vector<1x1x128xf32>
    %493 = vector.broadcast %492 : vector<1x1x128xf32> to vector<8x8x128xf32>
    %494 = arith.mulf %491, %493 : vector<8x8x128xf32>
    %495 = arith.addf %488, %494 : vector<8x8x128xf32>
    %c0_390 = arith.constant 0 : index
    %496 = arith.index_cast %454 : i32 to index
    %c2_391 = arith.constant 2 : index
    %c0_392 = arith.constant 0 : index
    %c0_393 = arith.constant 0 : index
    %497 = vector.load %arg7[%c0_390, %496, %c2_391, %c0_392, %c0_393] : memref<3x10x10x8x128xf32, #tpu.memory_space<vmem>>, vector<1x1x8x8x128xf32>
    %498 = vector.shape_cast %497 : vector<1x1x8x8x128xf32> to vector<8x8x128xf32>
    %499 = vector.shape_cast %18 : vector<128xf32> to vector<1x1x128xf32>
    %500 = vector.broadcast %499 : vector<1x1x128xf32> to vector<8x8x128xf32>
    %501 = arith.mulf %498, %500 : vector<8x8x128xf32>
    %502 = arith.addf %495, %501 : vector<8x8x128xf32>
    %c1_394 = arith.constant 1 : index
    %503 = arith.index_cast %454 : i32 to index
    %c2_395 = arith.constant 2 : index
    %c0_396 = arith.constant 0 : index
    %c0_397 = arith.constant 0 : index
    %504 = vector.load %arg7[%c1_394, %503, %c2_395, %c0_396, %c0_397] : memref<3x10x10x8x128xf32, #tpu.memory_space<vmem>>, vector<1x1x8x8x128xf32>
    %505 = vector.shape_cast %504 : vector<1x1x8x8x128xf32> to vector<8x8x128xf32>
    %506 = vector.shape_cast %20 : vector<128xf32> to vector<1x1x128xf32>
    %507 = vector.broadcast %506 : vector<1x1x128xf32> to vector<8x8x128xf32>
    %508 = arith.mulf %505, %507 : vector<8x8x128xf32>
    %509 = arith.addf %502, %508 : vector<8x8x128xf32>
    %c2_398 = arith.constant 2 : index
    %510 = arith.index_cast %454 : i32 to index
    %c2_399 = arith.constant 2 : index
    %c0_400 = arith.constant 0 : index
    %c0_401 = arith.constant 0 : index
    %511 = vector.load %arg7[%c2_398, %510, %c2_399, %c0_400, %c0_401] : memref<3x10x10x8x128xf32, #tpu.memory_space<vmem>>, vector<1x1x8x8x128xf32>
    %512 = vector.shape_cast %511 : vector<1x1x8x8x128xf32> to vector<8x8x128xf32>
    %513 = vector.shape_cast %22 : vector<128xf32> to vector<1x1x128xf32>
    %514 = vector.broadcast %513 : vector<1x1x128xf32> to vector<8x8x128xf32>
    %515 = arith.mulf %512, %514 : vector<8x8x128xf32>
    %516 = arith.addf %509, %515 : vector<8x8x128xf32>
    %c3_i32_402 = arith.constant 3 : i32
    %517 = arith.addi %59, %c3_i32_402 : i32
    %c0_403 = arith.constant 0 : index
    %518 = arith.index_cast %517 : i32 to index
    %c0_404 = arith.constant 0 : index
    %c0_405 = arith.constant 0 : index
    %c0_406 = arith.constant 0 : index
    %519 = vector.load %arg7[%c0_403, %518, %c0_404, %c0_405, %c0_406] : memref<3x10x10x8x128xf32, #tpu.memory_space<vmem>>, vector<1x1x8x8x128xf32>
    %520 = vector.shape_cast %519 : vector<1x1x8x8x128xf32> to vector<8x8x128xf32>
    %521 = vector.shape_cast %24 : vector<128xf32> to vector<1x1x128xf32>
    %522 = vector.broadcast %521 : vector<1x1x128xf32> to vector<8x8x128xf32>
    %523 = arith.mulf %520, %522 : vector<8x8x128xf32>
    %524 = arith.addf %516, %523 : vector<8x8x128xf32>
    %c1_407 = arith.constant 1 : index
    %525 = arith.index_cast %517 : i32 to index
    %c0_408 = arith.constant 0 : index
    %c0_409 = arith.constant 0 : index
    %c0_410 = arith.constant 0 : index
    %526 = vector.load %arg7[%c1_407, %525, %c0_408, %c0_409, %c0_410] : memref<3x10x10x8x128xf32, #tpu.memory_space<vmem>>, vector<1x1x8x8x128xf32>
    %527 = vector.shape_cast %526 : vector<1x1x8x8x128xf32> to vector<8x8x128xf32>
    %528 = vector.shape_cast %26 : vector<128xf32> to vector<1x1x128xf32>
    %529 = vector.broadcast %528 : vector<1x1x128xf32> to vector<8x8x128xf32>
    %530 = arith.mulf %527, %529 : vector<8x8x128xf32>
    %531 = arith.addf %524, %530 : vector<8x8x128xf32>
    %c2_411 = arith.constant 2 : index
    %532 = arith.index_cast %517 : i32 to index
    %c0_412 = arith.constant 0 : index
    %c0_413 = arith.constant 0 : index
    %c0_414 = arith.constant 0 : index
    %533 = vector.load %arg7[%c2_411, %532, %c0_412, %c0_413, %c0_414] : memref<3x10x10x8x128xf32, #tpu.memory_space<vmem>>, vector<1x1x8x8x128xf32>
    %534 = vector.shape_cast %533 : vector<1x1x8x8x128xf32> to vector<8x8x128xf32>
    %535 = vector.shape_cast %28 : vector<128xf32> to vector<1x1x128xf32>
    %536 = vector.broadcast %535 : vector<1x1x128xf32> to vector<8x8x128xf32>
    %537 = arith.mulf %534, %536 : vector<8x8x128xf32>
    %538 = arith.addf %531, %537 : vector<8x8x128xf32>
    %c0_415 = arith.constant 0 : index
    %539 = arith.index_cast %517 : i32 to index
    %c1_416 = arith.constant 1 : index
    %c0_417 = arith.constant 0 : index
    %c0_418 = arith.constant 0 : index
    %540 = vector.load %arg7[%c0_415, %539, %c1_416, %c0_417, %c0_418] : memref<3x10x10x8x128xf32, #tpu.memory_space<vmem>>, vector<1x1x8x8x128xf32>
    %541 = vector.shape_cast %540 : vector<1x1x8x8x128xf32> to vector<8x8x128xf32>
    %542 = vector.shape_cast %30 : vector<128xf32> to vector<1x1x128xf32>
    %543 = vector.broadcast %542 : vector<1x1x128xf32> to vector<8x8x128xf32>
    %544 = arith.mulf %541, %543 : vector<8x8x128xf32>
    %545 = arith.addf %538, %544 : vector<8x8x128xf32>
    %c1_419 = arith.constant 1 : index
    %546 = arith.index_cast %517 : i32 to index
    %c1_420 = arith.constant 1 : index
    %c0_421 = arith.constant 0 : index
    %c0_422 = arith.constant 0 : index
    %547 = vector.load %arg7[%c1_419, %546, %c1_420, %c0_421, %c0_422] : memref<3x10x10x8x128xf32, #tpu.memory_space<vmem>>, vector<1x1x8x8x128xf32>
    %548 = vector.shape_cast %547 : vector<1x1x8x8x128xf32> to vector<8x8x128xf32>
    %549 = vector.shape_cast %32 : vector<128xf32> to vector<1x1x128xf32>
    %550 = vector.broadcast %549 : vector<1x1x128xf32> to vector<8x8x128xf32>
    %551 = arith.mulf %548, %550 : vector<8x8x128xf32>
    %552 = arith.addf %545, %551 : vector<8x8x128xf32>
    %c2_423 = arith.constant 2 : index
    %553 = arith.index_cast %517 : i32 to index
    %c1_424 = arith.constant 1 : index
    %c0_425 = arith.constant 0 : index
    %c0_426 = arith.constant 0 : index
    %554 = vector.load %arg7[%c2_423, %553, %c1_424, %c0_425, %c0_426] : memref<3x10x10x8x128xf32, #tpu.memory_space<vmem>>, vector<1x1x8x8x128xf32>
    %555 = vector.shape_cast %554 : vector<1x1x8x8x128xf32> to vector<8x8x128xf32>
    %556 = vector.shape_cast %34 : vector<128xf32> to vector<1x1x128xf32>
    %557 = vector.broadcast %556 : vector<1x1x128xf32> to vector<8x8x128xf32>
    %558 = arith.mulf %555, %557 : vector<8x8x128xf32>
    %559 = arith.addf %552, %558 : vector<8x8x128xf32>
    %c0_427 = arith.constant 0 : index
    %560 = arith.index_cast %517 : i32 to index
    %c2_428 = arith.constant 2 : index
    %c0_429 = arith.constant 0 : index
    %c0_430 = arith.constant 0 : index
    %561 = vector.load %arg7[%c0_427, %560, %c2_428, %c0_429, %c0_430] : memref<3x10x10x8x128xf32, #tpu.memory_space<vmem>>, vector<1x1x8x8x128xf32>
    %562 = vector.shape_cast %561 : vector<1x1x8x8x128xf32> to vector<8x8x128xf32>
    %563 = vector.shape_cast %36 : vector<128xf32> to vector<1x1x128xf32>
    %564 = vector.broadcast %563 : vector<1x1x128xf32> to vector<8x8x128xf32>
    %565 = arith.mulf %562, %564 : vector<8x8x128xf32>
    %566 = arith.addf %559, %565 : vector<8x8x128xf32>
    %c1_431 = arith.constant 1 : index
    %567 = arith.index_cast %517 : i32 to index
    %c2_432 = arith.constant 2 : index
    %c0_433 = arith.constant 0 : index
    %c0_434 = arith.constant 0 : index
    %568 = vector.load %arg7[%c1_431, %567, %c2_432, %c0_433, %c0_434] : memref<3x10x10x8x128xf32, #tpu.memory_space<vmem>>, vector<1x1x8x8x128xf32>
    %569 = vector.shape_cast %568 : vector<1x1x8x8x128xf32> to vector<8x8x128xf32>
    %570 = vector.shape_cast %38 : vector<128xf32> to vector<1x1x128xf32>
    %571 = vector.broadcast %570 : vector<1x1x128xf32> to vector<8x8x128xf32>
    %572 = arith.mulf %569, %571 : vector<8x8x128xf32>
    %573 = arith.addf %566, %572 : vector<8x8x128xf32>
    %c2_435 = arith.constant 2 : index
    %574 = arith.index_cast %517 : i32 to index
    %c2_436 = arith.constant 2 : index
    %c0_437 = arith.constant 0 : index
    %c0_438 = arith.constant 0 : index
    %575 = vector.load %arg7[%c2_435, %574, %c2_436, %c0_437, %c0_438] : memref<3x10x10x8x128xf32, #tpu.memory_space<vmem>>, vector<1x1x8x8x128xf32>
    %576 = vector.shape_cast %575 : vector<1x1x8x8x128xf32> to vector<8x8x128xf32>
    %577 = vector.shape_cast %40 : vector<128xf32> to vector<1x1x128xf32>
    %578 = vector.broadcast %577 : vector<1x1x128xf32> to vector<8x8x128xf32>
    %579 = arith.mulf %576, %578 : vector<8x8x128xf32>
    %580 = arith.addf %573, %579 : vector<8x8x128xf32>
    %c4_i32 = arith.constant 4 : i32
    %581 = arith.addi %59, %c4_i32 : i32
    %c0_439 = arith.constant 0 : index
    %582 = arith.index_cast %581 : i32 to index
    %c0_440 = arith.constant 0 : index
    %c0_441 = arith.constant 0 : index
    %c0_442 = arith.constant 0 : index
    %583 = vector.load %arg7[%c0_439, %582, %c0_440, %c0_441, %c0_442] : memref<3x10x10x8x128xf32, #tpu.memory_space<vmem>>, vector<1x1x8x8x128xf32>
    %584 = vector.shape_cast %583 : vector<1x1x8x8x128xf32> to vector<8x8x128xf32>
    %585 = vector.shape_cast %42 : vector<128xf32> to vector<1x1x128xf32>
    %586 = vector.broadcast %585 : vector<1x1x128xf32> to vector<8x8x128xf32>
    %587 = arith.mulf %584, %586 : vector<8x8x128xf32>
    %588 = arith.addf %580, %587 : vector<8x8x128xf32>
    %c1_443 = arith.constant 1 : index
    %589 = arith.index_cast %581 : i32 to index
    %c0_444 = arith.constant 0 : index
    %c0_445 = arith.constant 0 : index
    %c0_446 = arith.constant 0 : index
    %590 = vector.load %arg7[%c1_443, %589, %c0_444, %c0_445, %c0_446] : memref<3x10x10x8x128xf32, #tpu.memory_space<vmem>>, vector<1x1x8x8x128xf32>
    %591 = vector.shape_cast %590 : vector<1x1x8x8x128xf32> to vector<8x8x128xf32>
    %592 = vector.shape_cast %44 : vector<128xf32> to vector<1x1x128xf32>
    %593 = vector.broadcast %592 : vector<1x1x128xf32> to vector<8x8x128xf32>
    %594 = arith.mulf %591, %593 : vector<8x8x128xf32>
    %595 = arith.addf %588, %594 : vector<8x8x128xf32>
    %c2_447 = arith.constant 2 : index
    %596 = arith.index_cast %581 : i32 to index
    %c0_448 = arith.constant 0 : index
    %c0_449 = arith.constant 0 : index
    %c0_450 = arith.constant 0 : index
    %597 = vector.load %arg7[%c2_447, %596, %c0_448, %c0_449, %c0_450] : memref<3x10x10x8x128xf32, #tpu.memory_space<vmem>>, vector<1x1x8x8x128xf32>
    %598 = vector.shape_cast %597 : vector<1x1x8x8x128xf32> to vector<8x8x128xf32>
    %599 = vector.shape_cast %46 : vector<128xf32> to vector<1x1x128xf32>
    %600 = vector.broadcast %599 : vector<1x1x128xf32> to vector<8x8x128xf32>
    %601 = arith.mulf %598, %600 : vector<8x8x128xf32>
    %602 = arith.addf %595, %601 : vector<8x8x128xf32>
    %c0_451 = arith.constant 0 : index
    %603 = arith.index_cast %581 : i32 to index
    %c1_452 = arith.constant 1 : index
    %c0_453 = arith.constant 0 : index
    %c0_454 = arith.constant 0 : index
    %604 = vector.load %arg7[%c0_451, %603, %c1_452, %c0_453, %c0_454] : memref<3x10x10x8x128xf32, #tpu.memory_space<vmem>>, vector<1x1x8x8x128xf32>
    %605 = vector.shape_cast %604 : vector<1x1x8x8x128xf32> to vector<8x8x128xf32>
    %606 = vector.shape_cast %48 : vector<128xf32> to vector<1x1x128xf32>
    %607 = vector.broadcast %606 : vector<1x1x128xf32> to vector<8x8x128xf32>
    %608 = arith.mulf %605, %607 : vector<8x8x128xf32>
    %609 = arith.addf %602, %608 : vector<8x8x128xf32>
    %c1_455 = arith.constant 1 : index
    %610 = arith.index_cast %581 : i32 to index
    %c1_456 = arith.constant 1 : index
    %c0_457 = arith.constant 0 : index
    %c0_458 = arith.constant 0 : index
    %611 = vector.load %arg7[%c1_455, %610, %c1_456, %c0_457, %c0_458] : memref<3x10x10x8x128xf32, #tpu.memory_space<vmem>>, vector<1x1x8x8x128xf32>
    %612 = vector.shape_cast %611 : vector<1x1x8x8x128xf32> to vector<8x8x128xf32>
    %613 = vector.shape_cast %50 : vector<128xf32> to vector<1x1x128xf32>
    %614 = vector.broadcast %613 : vector<1x1x128xf32> to vector<8x8x128xf32>
    %615 = arith.mulf %612, %614 : vector<8x8x128xf32>
    %616 = arith.addf %609, %615 : vector<8x8x128xf32>
    %c2_459 = arith.constant 2 : index
    %617 = arith.index_cast %581 : i32 to index
    %c1_460 = arith.constant 1 : index
    %c0_461 = arith.constant 0 : index
    %c0_462 = arith.constant 0 : index
    %618 = vector.load %arg7[%c2_459, %617, %c1_460, %c0_461, %c0_462] : memref<3x10x10x8x128xf32, #tpu.memory_space<vmem>>, vector<1x1x8x8x128xf32>
    %619 = vector.shape_cast %618 : vector<1x1x8x8x128xf32> to vector<8x8x128xf32>
    %620 = vector.shape_cast %52 : vector<128xf32> to vector<1x1x128xf32>
    %621 = vector.broadcast %620 : vector<1x1x128xf32> to vector<8x8x128xf32>
    %622 = arith.mulf %619, %621 : vector<8x8x128xf32>
    %623 = arith.addf %616, %622 : vector<8x8x128xf32>
    %c0_463 = arith.constant 0 : index
    %624 = arith.index_cast %581 : i32 to index
    %c2_464 = arith.constant 2 : index
    %c0_465 = arith.constant 0 : index
    %c0_466 = arith.constant 0 : index
    %625 = vector.load %arg7[%c0_463, %624, %c2_464, %c0_465, %c0_466] : memref<3x10x10x8x128xf32, #tpu.memory_space<vmem>>, vector<1x1x8x8x128xf32>
    %626 = vector.shape_cast %625 : vector<1x1x8x8x128xf32> to vector<8x8x128xf32>
    %627 = vector.shape_cast %54 : vector<128xf32> to vector<1x1x128xf32>
    %628 = vector.broadcast %627 : vector<1x1x128xf32> to vector<8x8x128xf32>
    %629 = arith.mulf %626, %628 : vector<8x8x128xf32>
    %630 = arith.addf %623, %629 : vector<8x8x128xf32>
    %c1_467 = arith.constant 1 : index
    %631 = arith.index_cast %581 : i32 to index
    %c2_468 = arith.constant 2 : index
    %c0_469 = arith.constant 0 : index
    %c0_470 = arith.constant 0 : index
    %632 = vector.load %arg7[%c1_467, %631, %c2_468, %c0_469, %c0_470] : memref<3x10x10x8x128xf32, #tpu.memory_space<vmem>>, vector<1x1x8x8x128xf32>
    %633 = vector.shape_cast %632 : vector<1x1x8x8x128xf32> to vector<8x8x128xf32>
    %634 = vector.shape_cast %56 : vector<128xf32> to vector<1x1x128xf32>
    %635 = vector.broadcast %634 : vector<1x1x128xf32> to vector<8x8x128xf32>
    %636 = arith.mulf %633, %635 : vector<8x8x128xf32>
    %637 = arith.addf %630, %636 : vector<8x8x128xf32>
    %c2_471 = arith.constant 2 : index
    %638 = arith.index_cast %581 : i32 to index
    %c2_472 = arith.constant 2 : index
    %c0_473 = arith.constant 0 : index
    %c0_474 = arith.constant 0 : index
    %639 = vector.load %arg7[%c2_471, %638, %c2_472, %c0_473, %c0_474] : memref<3x10x10x8x128xf32, #tpu.memory_space<vmem>>, vector<1x1x8x8x128xf32>
    %640 = vector.shape_cast %639 : vector<1x1x8x8x128xf32> to vector<8x8x128xf32>
    %641 = vector.shape_cast %58 : vector<128xf32> to vector<1x1x128xf32>
    %642 = vector.broadcast %641 : vector<1x1x128xf32> to vector<8x8x128xf32>
    %643 = arith.mulf %640, %642 : vector<8x8x128xf32>
    %644 = arith.addf %637, %643 : vector<8x8x128xf32>
    %645 = vector.shape_cast %4 : vector<128xf32> to vector<1x1x128xf32>
    %646 = vector.broadcast %645 : vector<1x1x128xf32> to vector<8x8x128xf32>
    %647 = arith.addf %644, %646 : vector<8x8x128xf32>
    %c0_475 = arith.constant 0 : index
    %c2_476 = arith.constant 2 : index
    %c0_477 = arith.constant 0 : index
    %c0_478 = arith.constant 0 : index
    %c0_479 = arith.constant 0 : index
    %648 = vector.load %arg5[%c0_475, %c2_476, %c0_477, %c0_478, %c0_479] : memref<1x8x8x8x128xf32, #tpu.memory_space<vmem>>, vector<1x1x8x8x128xf32>
    %649 = vector.shape_cast %648 : vector<1x1x8x8x128xf32> to vector<8x8x128xf32>
    %650 = vector.shape_cast %647 : vector<8x8x128xf32> to vector<1x1x8x8x128xf32>
    tpu.vector_store %arg5[%c0_475, %c2_476, %c0_477, %c0_478, %c0_479], %650 {strides = array<i32>} : memref<1x8x8x8x128xf32, #tpu.memory_space<vmem>>, vector<1x1x8x8x128xf32>,
    %c3_i32_480 = arith.constant 3 : i32
    %651 = arith.addi %59, %c3_i32_480 : i32
    %c0_481 = arith.constant 0 : index
    %652 = arith.index_cast %651 : i32 to index
    %c0_482 = arith.constant 0 : index
    %c0_483 = arith.constant 0 : index
    %c0_484 = arith.constant 0 : index
    %653 = vector.load %arg7[%c0_481, %652, %c0_482, %c0_483, %c0_484] : memref<3x10x10x8x128xf32, #tpu.memory_space<vmem>>, vector<1x1x8x8x128xf32>
    %654 = vector.shape_cast %653 : vector<1x1x8x8x128xf32> to vector<8x8x128xf32>
    %655 = vector.shape_cast %6 : vector<128xf32> to vector<1x1x128xf32>
    %656 = vector.broadcast %655 : vector<1x1x128xf32> to vector<8x8x128xf32>
    %657 = arith.mulf %654, %656 : vector<8x8x128xf32>
    %c1_485 = arith.constant 1 : index
    %658 = arith.index_cast %651 : i32 to index
    %c0_486 = arith.constant 0 : index
    %c0_487 = arith.constant 0 : index
    %c0_488 = arith.constant 0 : index
    %659 = vector.load %arg7[%c1_485, %658, %c0_486, %c0_487, %c0_488] : memref<3x10x10x8x128xf32, #tpu.memory_space<vmem>>, vector<1x1x8x8x128xf32>
    %660 = vector.shape_cast %659 : vector<1x1x8x8x128xf32> to vector<8x8x128xf32>
    %661 = vector.shape_cast %8 : vector<128xf32> to vector<1x1x128xf32>
    %662 = vector.broadcast %661 : vector<1x1x128xf32> to vector<8x8x128xf32>
    %663 = arith.mulf %660, %662 : vector<8x8x128xf32>
    %664 = arith.addf %657, %663 : vector<8x8x128xf32>
    %c2_489 = arith.constant 2 : index
    %665 = arith.index_cast %651 : i32 to index
    %c0_490 = arith.constant 0 : index
    %c0_491 = arith.constant 0 : index
    %c0_492 = arith.constant 0 : index
    %666 = vector.load %arg7[%c2_489, %665, %c0_490, %c0_491, %c0_492] : memref<3x10x10x8x128xf32, #tpu.memory_space<vmem>>, vector<1x1x8x8x128xf32>
    %667 = vector.shape_cast %666 : vector<1x1x8x8x128xf32> to vector<8x8x128xf32>
    %668 = vector.shape_cast %10 : vector<128xf32> to vector<1x1x128xf32>
    %669 = vector.broadcast %668 : vector<1x1x128xf32> to vector<8x8x128xf32>
    %670 = arith.mulf %667, %669 : vector<8x8x128xf32>
    %671 = arith.addf %664, %670 : vector<8x8x128xf32>
    %c0_493 = arith.constant 0 : index
    %672 = arith.index_cast %651 : i32 to index
    %c1_494 = arith.constant 1 : index
    %c0_495 = arith.constant 0 : index
    %c0_496 = arith.constant 0 : index
    %673 = vector.load %arg7[%c0_493, %672, %c1_494, %c0_495, %c0_496] : memref<3x10x10x8x128xf32, #tpu.memory_space<vmem>>, vector<1x1x8x8x128xf32>
    %674 = vector.shape_cast %673 : vector<1x1x8x8x128xf32> to vector<8x8x128xf32>
    %675 = vector.shape_cast %12 : vector<128xf32> to vector<1x1x128xf32>
    %676 = vector.broadcast %675 : vector<1x1x128xf32> to vector<8x8x128xf32>
    %677 = arith.mulf %674, %676 : vector<8x8x128xf32>
    %678 = arith.addf %671, %677 : vector<8x8x128xf32>
    %c1_497 = arith.constant 1 : index
    %679 = arith.index_cast %651 : i32 to index
    %c1_498 = arith.constant 1 : index
    %c0_499 = arith.constant 0 : index
    %c0_500 = arith.constant 0 : index
    %680 = vector.load %arg7[%c1_497, %679, %c1_498, %c0_499, %c0_500] : memref<3x10x10x8x128xf32, #tpu.memory_space<vmem>>, vector<1x1x8x8x128xf32>
    %681 = vector.shape_cast %680 : vector<1x1x8x8x128xf32> to vector<8x8x128xf32>
    %682 = vector.shape_cast %14 : vector<128xf32> to vector<1x1x128xf32>
    %683 = vector.broadcast %682 : vector<1x1x128xf32> to vector<8x8x128xf32>
    %684 = arith.mulf %681, %683 : vector<8x8x128xf32>
    %685 = arith.addf %678, %684 : vector<8x8x128xf32>
    %c2_501 = arith.constant 2 : index
    %686 = arith.index_cast %651 : i32 to index
    %c1_502 = arith.constant 1 : index
    %c0_503 = arith.constant 0 : index
    %c0_504 = arith.constant 0 : index
    %687 = vector.load %arg7[%c2_501, %686, %c1_502, %c0_503, %c0_504] : memref<3x10x10x8x128xf32, #tpu.memory_space<vmem>>, vector<1x1x8x8x128xf32>
    %688 = vector.shape_cast %687 : vector<1x1x8x8x128xf32> to vector<8x8x128xf32>
    %689 = vector.shape_cast %16 : vector<128xf32> to vector<1x1x128xf32>
    %690 = vector.broadcast %689 : vector<1x1x128xf32> to vector<8x8x128xf32>
    %691 = arith.mulf %688, %690 : vector<8x8x128xf32>
    %692 = arith.addf %685, %691 : vector<8x8x128xf32>
    %c0_505 = arith.constant 0 : index
    %693 = arith.index_cast %651 : i32 to index
    %c2_506 = arith.constant 2 : index
    %c0_507 = arith.constant 0 : index
    %c0_508 = arith.constant 0 : index
    %694 = vector.load %arg7[%c0_505, %693, %c2_506, %c0_507, %c0_508] : memref<3x10x10x8x128xf32, #tpu.memory_space<vmem>>, vector<1x1x8x8x128xf32>
    %695 = vector.shape_cast %694 : vector<1x1x8x8x128xf32> to vector<8x8x128xf32>
    %696 = vector.shape_cast %18 : vector<128xf32> to vector<1x1x128xf32>
    %697 = vector.broadcast %696 : vector<1x1x128xf32> to vector<8x8x128xf32>
    %698 = arith.mulf %695, %697 : vector<8x8x128xf32>
    %699 = arith.addf %692, %698 : vector<8x8x128xf32>
    %c1_509 = arith.constant 1 : index
    %700 = arith.index_cast %651 : i32 to index
    %c2_510 = arith.constant 2 : index
    %c0_511 = arith.constant 0 : index
    %c0_512 = arith.constant 0 : index
    %701 = vector.load %arg7[%c1_509, %700, %c2_510, %c0_511, %c0_512] : memref<3x10x10x8x128xf32, #tpu.memory_space<vmem>>, vector<1x1x8x8x128xf32>
    %702 = vector.shape_cast %701 : vector<1x1x8x8x128xf32> to vector<8x8x128xf32>
    %703 = vector.shape_cast %20 : vector<128xf32> to vector<1x1x128xf32>
    %704 = vector.broadcast %703 : vector<1x1x128xf32> to vector<8x8x128xf32>
    %705 = arith.mulf %702, %704 : vector<8x8x128xf32>
    %706 = arith.addf %699, %705 : vector<8x8x128xf32>
    %c2_513 = arith.constant 2 : index
    %707 = arith.index_cast %651 : i32 to index
    %c2_514 = arith.constant 2 : index
    %c0_515 = arith.constant 0 : index
    %c0_516 = arith.constant 0 : index
    %708 = vector.load %arg7[%c2_513, %707, %c2_514, %c0_515, %c0_516] : memref<3x10x10x8x128xf32, #tpu.memory_space<vmem>>, vector<1x1x8x8x128xf32>
    %709 = vector.shape_cast %708 : vector<1x1x8x8x128xf32> to vector<8x8x128xf32>
    %710 = vector.shape_cast %22 : vector<128xf32> to vector<1x1x128xf32>
    %711 = vector.broadcast %710 : vector<1x1x128xf32> to vector<8x8x128xf32>
    %712 = arith.mulf %709, %711 : vector<8x8x128xf32>
    %713 = arith.addf %706, %712 : vector<8x8x128xf32>
    %c4_i32_517 = arith.constant 4 : i32
    %714 = arith.addi %59, %c4_i32_517 : i32
    %c0_518 = arith.constant 0 : index
    %715 = arith.index_cast %714 : i32 to index
    %c0_519 = arith.constant 0 : index
    %c0_520 = arith.constant 0 : index
    %c0_521 = arith.constant 0 : index
    %716 = vector.load %arg7[%c0_518, %715, %c0_519, %c0_520, %c0_521] : memref<3x10x10x8x128xf32, #tpu.memory_space<vmem>>, vector<1x1x8x8x128xf32>
    %717 = vector.shape_cast %716 : vector<1x1x8x8x128xf32> to vector<8x8x128xf32>
    %718 = vector.shape_cast %24 : vector<128xf32> to vector<1x1x128xf32>
    %719 = vector.broadcast %718 : vector<1x1x128xf32> to vector<8x8x128xf32>
    %720 = arith.mulf %717, %719 : vector<8x8x128xf32>
    %721 = arith.addf %713, %720 : vector<8x8x128xf32>
    %c1_522 = arith.constant 1 : index
    %722 = arith.index_cast %714 : i32 to index
    %c0_523 = arith.constant 0 : index
    %c0_524 = arith.constant 0 : index
    %c0_525 = arith.constant 0 : index
    %723 = vector.load %arg7[%c1_522, %722, %c0_523, %c0_524, %c0_525] : memref<3x10x10x8x128xf32, #tpu.memory_space<vmem>>, vector<1x1x8x8x128xf32>
    %724 = vector.shape_cast %723 : vector<1x1x8x8x128xf32> to vector<8x8x128xf32>
    %725 = vector.shape_cast %26 : vector<128xf32> to vector<1x1x128xf32>
    %726 = vector.broadcast %725 : vector<1x1x128xf32> to vector<8x8x128xf32>
    %727 = arith.mulf %724, %726 : vector<8x8x128xf32>
    %728 = arith.addf %721, %727 : vector<8x8x128xf32>
    %c2_526 = arith.constant 2 : index
    %729 = arith.index_cast %714 : i32 to index
    %c0_527 = arith.constant 0 : index
    %c0_528 = arith.constant 0 : index
    %c0_529 = arith.constant 0 : index
    %730 = vector.load %arg7[%c2_526, %729, %c0_527, %c0_528, %c0_529] : memref<3x10x10x8x128xf32, #tpu.memory_space<vmem>>, vector<1x1x8x8x128xf32>
    %731 = vector.shape_cast %730 : vector<1x1x8x8x128xf32> to vector<8x8x128xf32>
    %732 = vector.shape_cast %28 : vector<128xf32> to vector<1x1x128xf32>
    %733 = vector.broadcast %732 : vector<1x1x128xf32> to vector<8x8x128xf32>
    %734 = arith.mulf %731, %733 : vector<8x8x128xf32>
    %735 = arith.addf %728, %734 : vector<8x8x128xf32>
    %c0_530 = arith.constant 0 : index
    %736 = arith.index_cast %714 : i32 to index
    %c1_531 = arith.constant 1 : index
    %c0_532 = arith.constant 0 : index
    %c0_533 = arith.constant 0 : index
    %737 = vector.load %arg7[%c0_530, %736, %c1_531, %c0_532, %c0_533] : memref<3x10x10x8x128xf32, #tpu.memory_space<vmem>>, vector<1x1x8x8x128xf32>
    %738 = vector.shape_cast %737 : vector<1x1x8x8x128xf32> to vector<8x8x128xf32>
    %739 = vector.shape_cast %30 : vector<128xf32> to vector<1x1x128xf32>
    %740 = vector.broadcast %739 : vector<1x1x128xf32> to vector<8x8x128xf32>
    %741 = arith.mulf %738, %740 : vector<8x8x128xf32>
    %742 = arith.addf %735, %741 : vector<8x8x128xf32>
    %c1_534 = arith.constant 1 : index
    %743 = arith.index_cast %714 : i32 to index
    %c1_535 = arith.constant 1 : index
    %c0_536 = arith.constant 0 : index
    %c0_537 = arith.constant 0 : index
    %744 = vector.load %arg7[%c1_534, %743, %c1_535, %c0_536, %c0_537] : memref<3x10x10x8x128xf32, #tpu.memory_space<vmem>>, vector<1x1x8x8x128xf32>
    %745 = vector.shape_cast %744 : vector<1x1x8x8x128xf32> to vector<8x8x128xf32>
    %746 = vector.shape_cast %32 : vector<128xf32> to vector<1x1x128xf32>
    %747 = vector.broadcast %746 : vector<1x1x128xf32> to vector<8x8x128xf32>
    %748 = arith.mulf %745, %747 : vector<8x8x128xf32>
    %749 = arith.addf %742, %748 : vector<8x8x128xf32>
    %c2_538 = arith.constant 2 : index
    %750 = arith.index_cast %714 : i32 to index
    %c1_539 = arith.constant 1 : index
    %c0_540 = arith.constant 0 : index
    %c0_541 = arith.constant 0 : index
    %751 = vector.load %arg7[%c2_538, %750, %c1_539, %c0_540, %c0_541] : memref<3x10x10x8x128xf32, #tpu.memory_space<vmem>>, vector<1x1x8x8x128xf32>
    %752 = vector.shape_cast %751 : vector<1x1x8x8x128xf32> to vector<8x8x128xf32>
    %753 = vector.shape_cast %34 : vector<128xf32> to vector<1x1x128xf32>
    %754 = vector.broadcast %753 : vector<1x1x128xf32> to vector<8x8x128xf32>
    %755 = arith.mulf %752, %754 : vector<8x8x128xf32>
    %756 = arith.addf %749, %755 : vector<8x8x128xf32>
    %c0_542 = arith.constant 0 : index
    %757 = arith.index_cast %714 : i32 to index
    %c2_543 = arith.constant 2 : index
    %c0_544 = arith.constant 0 : index
    %c0_545 = arith.constant 0 : index
    %758 = vector.load %arg7[%c0_542, %757, %c2_543, %c0_544, %c0_545] : memref<3x10x10x8x128xf32, #tpu.memory_space<vmem>>, vector<1x1x8x8x128xf32>
    %759 = vector.shape_cast %758 : vector<1x1x8x8x128xf32> to vector<8x8x128xf32>
    %760 = vector.shape_cast %36 : vector<128xf32> to vector<1x1x128xf32>
    %761 = vector.broadcast %760 : vector<1x1x128xf32> to vector<8x8x128xf32>
    %762 = arith.mulf %759, %761 : vector<8x8x128xf32>
    %763 = arith.addf %756, %762 : vector<8x8x128xf32>
    %c1_546 = arith.constant 1 : index
    %764 = arith.index_cast %714 : i32 to index
    %c2_547 = arith.constant 2 : index
    %c0_548 = arith.constant 0 : index
    %c0_549 = arith.constant 0 : index
    %765 = vector.load %arg7[%c1_546, %764, %c2_547, %c0_548, %c0_549] : memref<3x10x10x8x128xf32, #tpu.memory_space<vmem>>, vector<1x1x8x8x128xf32>
    %766 = vector.shape_cast %765 : vector<1x1x8x8x128xf32> to vector<8x8x128xf32>
    %767 = vector.shape_cast %38 : vector<128xf32> to vector<1x1x128xf32>
    %768 = vector.broadcast %767 : vector<1x1x128xf32> to vector<8x8x128xf32>
    %769 = arith.mulf %766, %768 : vector<8x8x128xf32>
    %770 = arith.addf %763, %769 : vector<8x8x128xf32>
    %c2_550 = arith.constant 2 : index
    %771 = arith.index_cast %714 : i32 to index
    %c2_551 = arith.constant 2 : index
    %c0_552 = arith.constant 0 : index
    %c0_553 = arith.constant 0 : index
    %772 = vector.load %arg7[%c2_550, %771, %c2_551, %c0_552, %c0_553] : memref<3x10x10x8x128xf32, #tpu.memory_space<vmem>>, vector<1x1x8x8x128xf32>
    %773 = vector.shape_cast %772 : vector<1x1x8x8x128xf32> to vector<8x8x128xf32>
    %774 = vector.shape_cast %40 : vector<128xf32> to vector<1x1x128xf32>
    %775 = vector.broadcast %774 : vector<1x1x128xf32> to vector<8x8x128xf32>
    %776 = arith.mulf %773, %775 : vector<8x8x128xf32>
    %777 = arith.addf %770, %776 : vector<8x8x128xf32>
    %c5_i32 = arith.constant 5 : i32
    %778 = arith.addi %59, %c5_i32 : i32
    %c0_554 = arith.constant 0 : index
    %779 = arith.index_cast %778 : i32 to index
    %c0_555 = arith.constant 0 : index
    %c0_556 = arith.constant 0 : index
    %c0_557 = arith.constant 0 : index
    %780 = vector.load %arg7[%c0_554, %779, %c0_555, %c0_556, %c0_557] : memref<3x10x10x8x128xf32, #tpu.memory_space<vmem>>, vector<1x1x8x8x128xf32>
    %781 = vector.shape_cast %780 : vector<1x1x8x8x128xf32> to vector<8x8x128xf32>
    %782 = vector.shape_cast %42 : vector<128xf32> to vector<1x1x128xf32>
    %783 = vector.broadcast %782 : vector<1x1x128xf32> to vector<8x8x128xf32>
    %784 = arith.mulf %781, %783 : vector<8x8x128xf32>
    %785 = arith.addf %777, %784 : vector<8x8x128xf32>
    %c1_558 = arith.constant 1 : index
    %786 = arith.index_cast %778 : i32 to index
    %c0_559 = arith.constant 0 : index
    %c0_560 = arith.constant 0 : index
    %c0_561 = arith.constant 0 : index
    %787 = vector.load %arg7[%c1_558, %786, %c0_559, %c0_560, %c0_561] : memref<3x10x10x8x128xf32, #tpu.memory_space<vmem>>, vector<1x1x8x8x128xf32>
    %788 = vector.shape_cast %787 : vector<1x1x8x8x128xf32> to vector<8x8x128xf32>
    %789 = vector.shape_cast %44 : vector<128xf32> to vector<1x1x128xf32>
    %790 = vector.broadcast %789 : vector<1x1x128xf32> to vector<8x8x128xf32>
    %791 = arith.mulf %788, %790 : vector<8x8x128xf32>
    %792 = arith.addf %785, %791 : vector<8x8x128xf32>
    %c2_562 = arith.constant 2 : index
    %793 = arith.index_cast %778 : i32 to index
    %c0_563 = arith.constant 0 : index
    %c0_564 = arith.constant 0 : index
    %c0_565 = arith.constant 0 : index
    %794 = vector.load %arg7[%c2_562, %793, %c0_563, %c0_564, %c0_565] : memref<3x10x10x8x128xf32, #tpu.memory_space<vmem>>, vector<1x1x8x8x128xf32>
    %795 = vector.shape_cast %794 : vector<1x1x8x8x128xf32> to vector<8x8x128xf32>
    %796 = vector.shape_cast %46 : vector<128xf32> to vector<1x1x128xf32>
    %797 = vector.broadcast %796 : vector<1x1x128xf32> to vector<8x8x128xf32>
    %798 = arith.mulf %795, %797 : vector<8x8x128xf32>
    %799 = arith.addf %792, %798 : vector<8x8x128xf32>
    %c0_566 = arith.constant 0 : index
    %800 = arith.index_cast %778 : i32 to index
    %c1_567 = arith.constant 1 : index
    %c0_568 = arith.constant 0 : index
    %c0_569 = arith.constant 0 : index
    %801 = vector.load %arg7[%c0_566, %800, %c1_567, %c0_568, %c0_569] : memref<3x10x10x8x128xf32, #tpu.memory_space<vmem>>, vector<1x1x8x8x128xf32>
    %802 = vector.shape_cast %801 : vector<1x1x8x8x128xf32> to vector<8x8x128xf32>
    %803 = vector.shape_cast %48 : vector<128xf32> to vector<1x1x128xf32>
    %804 = vector.broadcast %803 : vector<1x1x128xf32> to vector<8x8x128xf32>
    %805 = arith.mulf %802, %804 : vector<8x8x128xf32>
    %806 = arith.addf %799, %805 : vector<8x8x128xf32>
    %c1_570 = arith.constant 1 : index
    %807 = arith.index_cast %778 : i32 to index
    %c1_571 = arith.constant 1 : index
    %c0_572 = arith.constant 0 : index
    %c0_573 = arith.constant 0 : index
    %808 = vector.load %arg7[%c1_570, %807, %c1_571, %c0_572, %c0_573] : memref<3x10x10x8x128xf32, #tpu.memory_space<vmem>>, vector<1x1x8x8x128xf32>
    %809 = vector.shape_cast %808 : vector<1x1x8x8x128xf32> to vector<8x8x128xf32>
    %810 = vector.shape_cast %50 : vector<128xf32> to vector<1x1x128xf32>
    %811 = vector.broadcast %810 : vector<1x1x128xf32> to vector<8x8x128xf32>
    %812 = arith.mulf %809, %811 : vector<8x8x128xf32>
    %813 = arith.addf %806, %812 : vector<8x8x128xf32>
    %c2_574 = arith.constant 2 : index
    %814 = arith.index_cast %778 : i32 to index
    %c1_575 = arith.constant 1 : index
    %c0_576 = arith.constant 0 : index
    %c0_577 = arith.constant 0 : index
    %815 = vector.load %arg7[%c2_574, %814, %c1_575, %c0_576, %c0_577] : memref<3x10x10x8x128xf32, #tpu.memory_space<vmem>>, vector<1x1x8x8x128xf32>
    %816 = vector.shape_cast %815 : vector<1x1x8x8x128xf32> to vector<8x8x128xf32>
    %817 = vector.shape_cast %52 : vector<128xf32> to vector<1x1x128xf32>
    %818 = vector.broadcast %817 : vector<1x1x128xf32> to vector<8x8x128xf32>
    %819 = arith.mulf %816, %818 : vector<8x8x128xf32>
    %820 = arith.addf %813, %819 : vector<8x8x128xf32>
    %c0_578 = arith.constant 0 : index
    %821 = arith.index_cast %778 : i32 to index
    %c2_579 = arith.constant 2 : index
    %c0_580 = arith.constant 0 : index
    %c0_581 = arith.constant 0 : index
    %822 = vector.load %arg7[%c0_578, %821, %c2_579, %c0_580, %c0_581] : memref<3x10x10x8x128xf32, #tpu.memory_space<vmem>>, vector<1x1x8x8x128xf32>
    %823 = vector.shape_cast %822 : vector<1x1x8x8x128xf32> to vector<8x8x128xf32>
    %824 = vector.shape_cast %54 : vector<128xf32> to vector<1x1x128xf32>
    %825 = vector.broadcast %824 : vector<1x1x128xf32> to vector<8x8x128xf32>
    %826 = arith.mulf %823, %825 : vector<8x8x128xf32>
    %827 = arith.addf %820, %826 : vector<8x8x128xf32>
    %c1_582 = arith.constant 1 : index
    %828 = arith.index_cast %778 : i32 to index
    %c2_583 = arith.constant 2 : index
    %c0_584 = arith.constant 0 : index
    %c0_585 = arith.constant 0 : index
    %829 = vector.load %arg7[%c1_582, %828, %c2_583, %c0_584, %c0_585] : memref<3x10x10x8x128xf32, #tpu.memory_space<vmem>>, vector<1x1x8x8x128xf32>
    %830 = vector.shape_cast %829 : vector<1x1x8x8x128xf32> to vector<8x8x128xf32>
    %831 = vector.shape_cast %56 : vector<128xf32> to vector<1x1x128xf32>
    %832 = vector.broadcast %831 : vector<1x1x128xf32> to vector<8x8x128xf32>
    %833 = arith.mulf %830, %832 : vector<8x8x128xf32>
    %834 = arith.addf %827, %833 : vector<8x8x128xf32>
    %c2_586 = arith.constant 2 : index
    %835 = arith.index_cast %778 : i32 to index
    %c2_587 = arith.constant 2 : index
    %c0_588 = arith.constant 0 : index
    %c0_589 = arith.constant 0 : index
    %836 = vector.load %arg7[%c2_586, %835, %c2_587, %c0_588, %c0_589] : memref<3x10x10x8x128xf32, #tpu.memory_space<vmem>>, vector<1x1x8x8x128xf32>
    %837 = vector.shape_cast %836 : vector<1x1x8x8x128xf32> to vector<8x8x128xf32>
    %838 = vector.shape_cast %58 : vector<128xf32> to vector<1x1x128xf32>
    %839 = vector.broadcast %838 : vector<1x1x128xf32> to vector<8x8x128xf32>
    %840 = arith.mulf %837, %839 : vector<8x8x128xf32>
    %841 = arith.addf %834, %840 : vector<8x8x128xf32>
    %842 = vector.shape_cast %4 : vector<128xf32> to vector<1x1x128xf32>
    %843 = vector.broadcast %842 : vector<1x1x128xf32> to vector<8x8x128xf32>
    %844 = arith.addf %841, %843 : vector<8x8x128xf32>
    %c0_590 = arith.constant 0 : index
    %c3 = arith.constant 3 : index
    %c0_591 = arith.constant 0 : index
    %c0_592 = arith.constant 0 : index
    %c0_593 = arith.constant 0 : index
    %845 = vector.load %arg5[%c0_590, %c3, %c0_591, %c0_592, %c0_593] : memref<1x8x8x8x128xf32, #tpu.memory_space<vmem>>, vector<1x1x8x8x128xf32>
    %846 = vector.shape_cast %845 : vector<1x1x8x8x128xf32> to vector<8x8x128xf32>
    %847 = vector.shape_cast %844 : vector<8x8x128xf32> to vector<1x1x8x8x128xf32>
    tpu.vector_store %arg5[%c0_590, %c3, %c0_591, %c0_592, %c0_593], %847 {strides = array<i32>} : memref<1x8x8x8x128xf32, #tpu.memory_space<vmem>>, vector<1x1x8x8x128xf32>,
    %c4_i32_594 = arith.constant 4 : i32
    %848 = arith.addi %59, %c4_i32_594 : i32
    %c0_595 = arith.constant 0 : index
    %849 = arith.index_cast %848 : i32 to index
    %c0_596 = arith.constant 0 : index
    %c0_597 = arith.constant 0 : index
    %c0_598 = arith.constant 0 : index
    %850 = vector.load %arg7[%c0_595, %849, %c0_596, %c0_597, %c0_598] : memref<3x10x10x8x128xf32, #tpu.memory_space<vmem>>, vector<1x1x8x8x128xf32>
    %851 = vector.shape_cast %850 : vector<1x1x8x8x128xf32> to vector<8x8x128xf32>
    %852 = vector.shape_cast %6 : vector<128xf32> to vector<1x1x128xf32>
    %853 = vector.broadcast %852 : vector<1x1x128xf32> to vector<8x8x128xf32>
    %854 = arith.mulf %851, %853 : vector<8x8x128xf32>
    %c1_599 = arith.constant 1 : index
    %855 = arith.index_cast %848 : i32 to index
    %c0_600 = arith.constant 0 : index
    %c0_601 = arith.constant 0 : index
    %c0_602 = arith.constant 0 : index
    %856 = vector.load %arg7[%c1_599, %855, %c0_600, %c0_601, %c0_602] : memref<3x10x10x8x128xf32, #tpu.memory_space<vmem>>, vector<1x1x8x8x128xf32>
    %857 = vector.shape_cast %856 : vector<1x1x8x8x128xf32> to vector<8x8x128xf32>
    %858 = vector.shape_cast %8 : vector<128xf32> to vector<1x1x128xf32>
    %859 = vector.broadcast %858 : vector<1x1x128xf32> to vector<8x8x128xf32>
    %860 = arith.mulf %857, %859 : vector<8x8x128xf32>
    %861 = arith.addf %854, %860 : vector<8x8x128xf32>
    %c2_603 = arith.constant 2 : index
    %862 = arith.index_cast %848 : i32 to index
    %c0_604 = arith.constant 0 : index
    %c0_605 = arith.constant 0 : index
    %c0_606 = arith.constant 0 : index
    %863 = vector.load %arg7[%c2_603, %862, %c0_604, %c0_605, %c0_606] : memref<3x10x10x8x128xf32, #tpu.memory_space<vmem>>, vector<1x1x8x8x128xf32>
    %864 = vector.shape_cast %863 : vector<1x1x8x8x128xf32> to vector<8x8x128xf32>
    %865 = vector.shape_cast %10 : vector<128xf32> to vector<1x1x128xf32>
    %866 = vector.broadcast %865 : vector<1x1x128xf32> to vector<8x8x128xf32>
    %867 = arith.mulf %864, %866 : vector<8x8x128xf32>
    %868 = arith.addf %861, %867 : vector<8x8x128xf32>
    %c0_607 = arith.constant 0 : index
    %869 = arith.index_cast %848 : i32 to index
    %c1_608 = arith.constant 1 : index
    %c0_609 = arith.constant 0 : index
    %c0_610 = arith.constant 0 : index
    %870 = vector.load %arg7[%c0_607, %869, %c1_608, %c0_609, %c0_610] : memref<3x10x10x8x128xf32, #tpu.memory_space<vmem>>, vector<1x1x8x8x128xf32>
    %871 = vector.shape_cast %870 : vector<1x1x8x8x128xf32> to vector<8x8x128xf32>
    %872 = vector.shape_cast %12 : vector<128xf32> to vector<1x1x128xf32>
    %873 = vector.broadcast %872 : vector<1x1x128xf32> to vector<8x8x128xf32>
    %874 = arith.mulf %871, %873 : vector<8x8x128xf32>
    %875 = arith.addf %868, %874 : vector<8x8x128xf32>
    %c1_611 = arith.constant 1 : index
    %876 = arith.index_cast %848 : i32 to index
    %c1_612 = arith.constant 1 : index
    %c0_613 = arith.constant 0 : index
    %c0_614 = arith.constant 0 : index
    %877 = vector.load %arg7[%c1_611, %876, %c1_612, %c0_613, %c0_614] : memref<3x10x10x8x128xf32, #tpu.memory_space<vmem>>, vector<1x1x8x8x128xf32>
    %878 = vector.shape_cast %877 : vector<1x1x8x8x128xf32> to vector<8x8x128xf32>
    %879 = vector.shape_cast %14 : vector<128xf32> to vector<1x1x128xf32>
    %880 = vector.broadcast %879 : vector<1x1x128xf32> to vector<8x8x128xf32>
    %881 = arith.mulf %878, %880 : vector<8x8x128xf32>
    %882 = arith.addf %875, %881 : vector<8x8x128xf32>
    %c2_615 = arith.constant 2 : index
    %883 = arith.index_cast %848 : i32 to index
    %c1_616 = arith.constant 1 : index
    %c0_617 = arith.constant 0 : index
    %c0_618 = arith.constant 0 : index
    %884 = vector.load %arg7[%c2_615, %883, %c1_616, %c0_617, %c0_618] : memref<3x10x10x8x128xf32, #tpu.memory_space<vmem>>, vector<1x1x8x8x128xf32>
    %885 = vector.shape_cast %884 : vector<1x1x8x8x128xf32> to vector<8x8x128xf32>
    %886 = vector.shape_cast %16 : vector<128xf32> to vector<1x1x128xf32>
    %887 = vector.broadcast %886 : vector<1x1x128xf32> to vector<8x8x128xf32>
    %888 = arith.mulf %885, %887 : vector<8x8x128xf32>
    %889 = arith.addf %882, %888 : vector<8x8x128xf32>
    %c0_619 = arith.constant 0 : index
    %890 = arith.index_cast %848 : i32 to index
    %c2_620 = arith.constant 2 : index
    %c0_621 = arith.constant 0 : index
    %c0_622 = arith.constant 0 : index
    %891 = vector.load %arg7[%c0_619, %890, %c2_620, %c0_621, %c0_622] : memref<3x10x10x8x128xf32, #tpu.memory_space<vmem>>, vector<1x1x8x8x128xf32>
    %892 = vector.shape_cast %891 : vector<1x1x8x8x128xf32> to vector<8x8x128xf32>
    %893 = vector.shape_cast %18 : vector<128xf32> to vector<1x1x128xf32>
    %894 = vector.broadcast %893 : vector<1x1x128xf32> to vector<8x8x128xf32>
    %895 = arith.mulf %892, %894 : vector<8x8x128xf32>
    %896 = arith.addf %889, %895 : vector<8x8x128xf32>
    %c1_623 = arith.constant 1 : index
    %897 = arith.index_cast %848 : i32 to index
    %c2_624 = arith.constant 2 : index
    %c0_625 = arith.constant 0 : index
    %c0_626 = arith.constant 0 : index
    %898 = vector.load %arg7[%c1_623, %897, %c2_624, %c0_625, %c0_626] : memref<3x10x10x8x128xf32, #tpu.memory_space<vmem>>, vector<1x1x8x8x128xf32>
    %899 = vector.shape_cast %898 : vector<1x1x8x8x128xf32> to vector<8x8x128xf32>
    %900 = vector.shape_cast %20 : vector<128xf32> to vector<1x1x128xf32>
    %901 = vector.broadcast %900 : vector<1x1x128xf32> to vector<8x8x128xf32>
    %902 = arith.mulf %899, %901 : vector<8x8x128xf32>
    %903 = arith.addf %896, %902 : vector<8x8x128xf32>
    %c2_627 = arith.constant 2 : index
    %904 = arith.index_cast %848 : i32 to index
    %c2_628 = arith.constant 2 : index
    %c0_629 = arith.constant 0 : index
    %c0_630 = arith.constant 0 : index
    %905 = vector.load %arg7[%c2_627, %904, %c2_628, %c0_629, %c0_630] : memref<3x10x10x8x128xf32, #tpu.memory_space<vmem>>, vector<1x1x8x8x128xf32>
    %906 = vector.shape_cast %905 : vector<1x1x8x8x128xf32> to vector<8x8x128xf32>
    %907 = vector.shape_cast %22 : vector<128xf32> to vector<1x1x128xf32>
    %908 = vector.broadcast %907 : vector<1x1x128xf32> to vector<8x8x128xf32>
    %909 = arith.mulf %906, %908 : vector<8x8x128xf32>
    %910 = arith.addf %903, %909 : vector<8x8x128xf32>
    %c5_i32_631 = arith.constant 5 : i32
    %911 = arith.addi %59, %c5_i32_631 : i32
    %c0_632 = arith.constant 0 : index
    %912 = arith.index_cast %911 : i32 to index
    %c0_633 = arith.constant 0 : index
    %c0_634 = arith.constant 0 : index
    %c0_635 = arith.constant 0 : index
    %913 = vector.load %arg7[%c0_632, %912, %c0_633, %c0_634, %c0_635] : memref<3x10x10x8x128xf32, #tpu.memory_space<vmem>>, vector<1x1x8x8x128xf32>
    %914 = vector.shape_cast %913 : vector<1x1x8x8x128xf32> to vector<8x8x128xf32>
    %915 = vector.shape_cast %24 : vector<128xf32> to vector<1x1x128xf32>
    %916 = vector.broadcast %915 : vector<1x1x128xf32> to vector<8x8x128xf32>
    %917 = arith.mulf %914, %916 : vector<8x8x128xf32>
    %918 = arith.addf %910, %917 : vector<8x8x128xf32>
    %c1_636 = arith.constant 1 : index
    %919 = arith.index_cast %911 : i32 to index
    %c0_637 = arith.constant 0 : index
    %c0_638 = arith.constant 0 : index
    %c0_639 = arith.constant 0 : index
    %920 = vector.load %arg7[%c1_636, %919, %c0_637, %c0_638, %c0_639] : memref<3x10x10x8x128xf32, #tpu.memory_space<vmem>>, vector<1x1x8x8x128xf32>
    %921 = vector.shape_cast %920 : vector<1x1x8x8x128xf32> to vector<8x8x128xf32>
    %922 = vector.shape_cast %26 : vector<128xf32> to vector<1x1x128xf32>
    %923 = vector.broadcast %922 : vector<1x1x128xf32> to vector<8x8x128xf32>
    %924 = arith.mulf %921, %923 : vector<8x8x128xf32>
    %925 = arith.addf %918, %924 : vector<8x8x128xf32>
    %c2_640 = arith.constant 2 : index
    %926 = arith.index_cast %911 : i32 to index
    %c0_641 = arith.constant 0 : index
    %c0_642 = arith.constant 0 : index
    %c0_643 = arith.constant 0 : index
    %927 = vector.load %arg7[%c2_640, %926, %c0_641, %c0_642, %c0_643] : memref<3x10x10x8x128xf32, #tpu.memory_space<vmem>>, vector<1x1x8x8x128xf32>
    %928 = vector.shape_cast %927 : vector<1x1x8x8x128xf32> to vector<8x8x128xf32>
    %929 = vector.shape_cast %28 : vector<128xf32> to vector<1x1x128xf32>
    %930 = vector.broadcast %929 : vector<1x1x128xf32> to vector<8x8x128xf32>
    %931 = arith.mulf %928, %930 : vector<8x8x128xf32>
    %932 = arith.addf %925, %931 : vector<8x8x128xf32>
    %c0_644 = arith.constant 0 : index
    %933 = arith.index_cast %911 : i32 to index
    %c1_645 = arith.constant 1 : index
    %c0_646 = arith.constant 0 : index
    %c0_647 = arith.constant 0 : index
    %934 = vector.load %arg7[%c0_644, %933, %c1_645, %c0_646, %c0_647] : memref<3x10x10x8x128xf32, #tpu.memory_space<vmem>>, vector<1x1x8x8x128xf32>
    %935 = vector.shape_cast %934 : vector<1x1x8x8x128xf32> to vector<8x8x128xf32>
    %936 = vector.shape_cast %30 : vector<128xf32> to vector<1x1x128xf32>
    %937 = vector.broadcast %936 : vector<1x1x128xf32> to vector<8x8x128xf32>
    %938 = arith.mulf %935, %937 : vector<8x8x128xf32>
    %939 = arith.addf %932, %938 : vector<8x8x128xf32>
    %c1_648 = arith.constant 1 : index
    %940 = arith.index_cast %911 : i32 to index
    %c1_649 = arith.constant 1 : index
    %c0_650 = arith.constant 0 : index
    %c0_651 = arith.constant 0 : index
    %941 = vector.load %arg7[%c1_648, %940, %c1_649, %c0_650, %c0_651] : memref<3x10x10x8x128xf32, #tpu.memory_space<vmem>>, vector<1x1x8x8x128xf32>
    %942 = vector.shape_cast %941 : vector<1x1x8x8x128xf32> to vector<8x8x128xf32>
    %943 = vector.shape_cast %32 : vector<128xf32> to vector<1x1x128xf32>
    %944 = vector.broadcast %943 : vector<1x1x128xf32> to vector<8x8x128xf32>
    %945 = arith.mulf %942, %944 : vector<8x8x128xf32>
    %946 = arith.addf %939, %945 : vector<8x8x128xf32>
    %c2_652 = arith.constant 2 : index
    %947 = arith.index_cast %911 : i32 to index
    %c1_653 = arith.constant 1 : index
    %c0_654 = arith.constant 0 : index
    %c0_655 = arith.constant 0 : index
    %948 = vector.load %arg7[%c2_652, %947, %c1_653, %c0_654, %c0_655] : memref<3x10x10x8x128xf32, #tpu.memory_space<vmem>>, vector<1x1x8x8x128xf32>
    %949 = vector.shape_cast %948 : vector<1x1x8x8x128xf32> to vector<8x8x128xf32>
    %950 = vector.shape_cast %34 : vector<128xf32> to vector<1x1x128xf32>
    %951 = vector.broadcast %950 : vector<1x1x128xf32> to vector<8x8x128xf32>
    %952 = arith.mulf %949, %951 : vector<8x8x128xf32>
    %953 = arith.addf %946, %952 : vector<8x8x128xf32>
    %c0_656 = arith.constant 0 : index
    %954 = arith.index_cast %911 : i32 to index
    %c2_657 = arith.constant 2 : index
    %c0_658 = arith.constant 0 : index
    %c0_659 = arith.constant 0 : index
    %955 = vector.load %arg7[%c0_656, %954, %c2_657, %c0_658, %c0_659] : memref<3x10x10x8x128xf32, #tpu.memory_space<vmem>>, vector<1x1x8x8x128xf32>
    %956 = vector.shape_cast %955 : vector<1x1x8x8x128xf32> to vector<8x8x128xf32>
    %957 = vector.shape_cast %36 : vector<128xf32> to vector<1x1x128xf32>
    %958 = vector.broadcast %957 : vector<1x1x128xf32> to vector<8x8x128xf32>
    %959 = arith.mulf %956, %958 : vector<8x8x128xf32>
    %960 = arith.addf %953, %959 : vector<8x8x128xf32>
    %c1_660 = arith.constant 1 : index
    %961 = arith.index_cast %911 : i32 to index
    %c2_661 = arith.constant 2 : index
    %c0_662 = arith.constant 0 : index
    %c0_663 = arith.constant 0 : index
    %962 = vector.load %arg7[%c1_660, %961, %c2_661, %c0_662, %c0_663] : memref<3x10x10x8x128xf32, #tpu.memory_space<vmem>>, vector<1x1x8x8x128xf32>
    %963 = vector.shape_cast %962 : vector<1x1x8x8x128xf32> to vector<8x8x128xf32>
    %964 = vector.shape_cast %38 : vector<128xf32> to vector<1x1x128xf32>
    %965 = vector.broadcast %964 : vector<1x1x128xf32> to vector<8x8x128xf32>
    %966 = arith.mulf %963, %965 : vector<8x8x128xf32>
    %967 = arith.addf %960, %966 : vector<8x8x128xf32>
    %c2_664 = arith.constant 2 : index
    %968 = arith.index_cast %911 : i32 to index
    %c2_665 = arith.constant 2 : index
    %c0_666 = arith.constant 0 : index
    %c0_667 = arith.constant 0 : index
    %969 = vector.load %arg7[%c2_664, %968, %c2_665, %c0_666, %c0_667] : memref<3x10x10x8x128xf32, #tpu.memory_space<vmem>>, vector<1x1x8x8x128xf32>
    %970 = vector.shape_cast %969 : vector<1x1x8x8x128xf32> to vector<8x8x128xf32>
    %971 = vector.shape_cast %40 : vector<128xf32> to vector<1x1x128xf32>
    %972 = vector.broadcast %971 : vector<1x1x128xf32> to vector<8x8x128xf32>
    %973 = arith.mulf %970, %972 : vector<8x8x128xf32>
    %974 = arith.addf %967, %973 : vector<8x8x128xf32>
    %c6_i32 = arith.constant 6 : i32
    %975 = arith.addi %59, %c6_i32 : i32
    %c0_668 = arith.constant 0 : index
    %976 = arith.index_cast %975 : i32 to index
    %c0_669 = arith.constant 0 : index
    %c0_670 = arith.constant 0 : index
    %c0_671 = arith.constant 0 : index
    %977 = vector.load %arg7[%c0_668, %976, %c0_669, %c0_670, %c0_671] : memref<3x10x10x8x128xf32, #tpu.memory_space<vmem>>, vector<1x1x8x8x128xf32>
    %978 = vector.shape_cast %977 : vector<1x1x8x8x128xf32> to vector<8x8x128xf32>
    %979 = vector.shape_cast %42 : vector<128xf32> to vector<1x1x128xf32>
    %980 = vector.broadcast %979 : vector<1x1x128xf32> to vector<8x8x128xf32>
    %981 = arith.mulf %978, %980 : vector<8x8x128xf32>
    %982 = arith.addf %974, %981 : vector<8x8x128xf32>
    %c1_672 = arith.constant 1 : index
    %983 = arith.index_cast %975 : i32 to index
    %c0_673 = arith.constant 0 : index
    %c0_674 = arith.constant 0 : index
    %c0_675 = arith.constant 0 : index
    %984 = vector.load %arg7[%c1_672, %983, %c0_673, %c0_674, %c0_675] : memref<3x10x10x8x128xf32, #tpu.memory_space<vmem>>, vector<1x1x8x8x128xf32>
    %985 = vector.shape_cast %984 : vector<1x1x8x8x128xf32> to vector<8x8x128xf32>
    %986 = vector.shape_cast %44 : vector<128xf32> to vector<1x1x128xf32>
    %987 = vector.broadcast %986 : vector<1x1x128xf32> to vector<8x8x128xf32>
    %988 = arith.mulf %985, %987 : vector<8x8x128xf32>
    %989 = arith.addf %982, %988 : vector<8x8x128xf32>
    %c2_676 = arith.constant 2 : index
    %990 = arith.index_cast %975 : i32 to index
    %c0_677 = arith.constant 0 : index
    %c0_678 = arith.constant 0 : index
    %c0_679 = arith.constant 0 : index
    %991 = vector.load %arg7[%c2_676, %990, %c0_677, %c0_678, %c0_679] : memref<3x10x10x8x128xf32, #tpu.memory_space<vmem>>, vector<1x1x8x8x128xf32>
    %992 = vector.shape_cast %991 : vector<1x1x8x8x128xf32> to vector<8x8x128xf32>
    %993 = vector.shape_cast %46 : vector<128xf32> to vector<1x1x128xf32>
    %994 = vector.broadcast %993 : vector<1x1x128xf32> to vector<8x8x128xf32>
    %995 = arith.mulf %992, %994 : vector<8x8x128xf32>
    %996 = arith.addf %989, %995 : vector<8x8x128xf32>
    %c0_680 = arith.constant 0 : index
    %997 = arith.index_cast %975 : i32 to index
    %c1_681 = arith.constant 1 : index
    %c0_682 = arith.constant 0 : index
    %c0_683 = arith.constant 0 : index
    %998 = vector.load %arg7[%c0_680, %997, %c1_681, %c0_682, %c0_683] : memref<3x10x10x8x128xf32, #tpu.memory_space<vmem>>, vector<1x1x8x8x128xf32>
    %999 = vector.shape_cast %998 : vector<1x1x8x8x128xf32> to vector<8x8x128xf32>
    %1000 = vector.shape_cast %48 : vector<128xf32> to vector<1x1x128xf32>
    %1001 = vector.broadcast %1000 : vector<1x1x128xf32> to vector<8x8x128xf32>
    %1002 = arith.mulf %999, %1001 : vector<8x8x128xf32>
    %1003 = arith.addf %996, %1002 : vector<8x8x128xf32>
    %c1_684 = arith.constant 1 : index
    %1004 = arith.index_cast %975 : i32 to index
    %c1_685 = arith.constant 1 : index
    %c0_686 = arith.constant 0 : index
    %c0_687 = arith.constant 0 : index
    %1005 = vector.load %arg7[%c1_684, %1004, %c1_685, %c0_686, %c0_687] : memref<3x10x10x8x128xf32, #tpu.memory_space<vmem>>, vector<1x1x8x8x128xf32>
    %1006 = vector.shape_cast %1005 : vector<1x1x8x8x128xf32> to vector<8x8x128xf32>
    %1007 = vector.shape_cast %50 : vector<128xf32> to vector<1x1x128xf32>
    %1008 = vector.broadcast %1007 : vector<1x1x128xf32> to vector<8x8x128xf32>
    %1009 = arith.mulf %1006, %1008 : vector<8x8x128xf32>
    %1010 = arith.addf %1003, %1009 : vector<8x8x128xf32>
    %c2_688 = arith.constant 2 : index
    %1011 = arith.index_cast %975 : i32 to index
    %c1_689 = arith.constant 1 : index
    %c0_690 = arith.constant 0 : index
    %c0_691 = arith.constant 0 : index
    %1012 = vector.load %arg7[%c2_688, %1011, %c1_689, %c0_690, %c0_691] : memref<3x10x10x8x128xf32, #tpu.memory_space<vmem>>, vector<1x1x8x8x128xf32>
    %1013 = vector.shape_cast %1012 : vector<1x1x8x8x128xf32> to vector<8x8x128xf32>
    %1014 = vector.shape_cast %52 : vector<128xf32> to vector<1x1x128xf32>
    %1015 = vector.broadcast %1014 : vector<1x1x128xf32> to vector<8x8x128xf32>
    %1016 = arith.mulf %1013, %1015 : vector<8x8x128xf32>
    %1017 = arith.addf %1010, %1016 : vector<8x8x128xf32>
    %c0_692 = arith.constant 0 : index
    %1018 = arith.index_cast %975 : i32 to index
    %c2_693 = arith.constant 2 : index
    %c0_694 = arith.constant 0 : index
    %c0_695 = arith.constant 0 : index
    %1019 = vector.load %arg7[%c0_692, %1018, %c2_693, %c0_694, %c0_695] : memref<3x10x10x8x128xf32, #tpu.memory_space<vmem>>, vector<1x1x8x8x128xf32>
    %1020 = vector.shape_cast %1019 : vector<1x1x8x8x128xf32> to vector<8x8x128xf32>
    %1021 = vector.shape_cast %54 : vector<128xf32> to vector<1x1x128xf32>
    %1022 = vector.broadcast %1021 : vector<1x1x128xf32> to vector<8x8x128xf32>
    %1023 = arith.mulf %1020, %1022 : vector<8x8x128xf32>
    %1024 = arith.addf %1017, %1023 : vector<8x8x128xf32>
    %c1_696 = arith.constant 1 : index
    %1025 = arith.index_cast %975 : i32 to index
    %c2_697 = arith.constant 2 : index
    %c0_698 = arith.constant 0 : index
    %c0_699 = arith.constant 0 : index
    %1026 = vector.load %arg7[%c1_696, %1025, %c2_697, %c0_698, %c0_699] : memref<3x10x10x8x128xf32, #tpu.memory_space<vmem>>, vector<1x1x8x8x128xf32>
    %1027 = vector.shape_cast %1026 : vector<1x1x8x8x128xf32> to vector<8x8x128xf32>
    %1028 = vector.shape_cast %56 : vector<128xf32> to vector<1x1x128xf32>
    %1029 = vector.broadcast %1028 : vector<1x1x128xf32> to vector<8x8x128xf32>
    %1030 = arith.mulf %1027, %1029 : vector<8x8x128xf32>
    %1031 = arith.addf %1024, %1030 : vector<8x8x128xf32>
    %c2_700 = arith.constant 2 : index
    %1032 = arith.index_cast %975 : i32 to index
    %c2_701 = arith.constant 2 : index
    %c0_702 = arith.constant 0 : index
    %c0_703 = arith.constant 0 : index
    %1033 = vector.load %arg7[%c2_700, %1032, %c2_701, %c0_702, %c0_703] : memref<3x10x10x8x128xf32, #tpu.memory_space<vmem>>, vector<1x1x8x8x128xf32>
    %1034 = vector.shape_cast %1033 : vector<1x1x8x8x128xf32> to vector<8x8x128xf32>
    %1035 = vector.shape_cast %58 : vector<128xf32> to vector<1x1x128xf32>
    %1036 = vector.broadcast %1035 : vector<1x1x128xf32> to vector<8x8x128xf32>
    %1037 = arith.mulf %1034, %1036 : vector<8x8x128xf32>
    %1038 = arith.addf %1031, %1037 : vector<8x8x128xf32>
    %1039 = vector.shape_cast %4 : vector<128xf32> to vector<1x1x128xf32>
    %1040 = vector.broadcast %1039 : vector<1x1x128xf32> to vector<8x8x128xf32>
    %1041 = arith.addf %1038, %1040 : vector<8x8x128xf32>
    %c0_704 = arith.constant 0 : index
    %c4 = arith.constant 4 : index
    %c0_705 = arith.constant 0 : index
    %c0_706 = arith.constant 0 : index
    %c0_707 = arith.constant 0 : index
    %1042 = vector.load %arg5[%c0_704, %c4, %c0_705, %c0_706, %c0_707] : memref<1x8x8x8x128xf32, #tpu.memory_space<vmem>>, vector<1x1x8x8x128xf32>
    %1043 = vector.shape_cast %1042 : vector<1x1x8x8x128xf32> to vector<8x8x128xf32>
    %1044 = vector.shape_cast %1041 : vector<8x8x128xf32> to vector<1x1x8x8x128xf32>
    tpu.vector_store %arg5[%c0_704, %c4, %c0_705, %c0_706, %c0_707], %1044 {strides = array<i32>} : memref<1x8x8x8x128xf32, #tpu.memory_space<vmem>>, vector<1x1x8x8x128xf32>,
    %c5_i32_708 = arith.constant 5 : i32
    %1045 = arith.addi %59, %c5_i32_708 : i32
    %c0_709 = arith.constant 0 : index
    %1046 = arith.index_cast %1045 : i32 to index
    %c0_710 = arith.constant 0 : index
    %c0_711 = arith.constant 0 : index
    %c0_712 = arith.constant 0 : index
    %1047 = vector.load %arg7[%c0_709, %1046, %c0_710, %c0_711, %c0_712] : memref<3x10x10x8x128xf32, #tpu.memory_space<vmem>>, vector<1x1x8x8x128xf32>
    %1048 = vector.shape_cast %1047 : vector<1x1x8x8x128xf32> to vector<8x8x128xf32>
    %1049 = vector.shape_cast %6 : vector<128xf32> to vector<1x1x128xf32>
    %1050 = vector.broadcast %1049 : vector<1x1x128xf32> to vector<8x8x128xf32>
    %1051 = arith.mulf %1048, %1050 : vector<8x8x128xf32>
    %c1_713 = arith.constant 1 : index
    %1052 = arith.index_cast %1045 : i32 to index
    %c0_714 = arith.constant 0 : index
    %c0_715 = arith.constant 0 : index
    %c0_716 = arith.constant 0 : index
    %1053 = vector.load %arg7[%c1_713, %1052, %c0_714, %c0_715, %c0_716] : memref<3x10x10x8x128xf32, #tpu.memory_space<vmem>>, vector<1x1x8x8x128xf32>
    %1054 = vector.shape_cast %1053 : vector<1x1x8x8x128xf32> to vector<8x8x128xf32>
    %1055 = vector.shape_cast %8 : vector<128xf32> to vector<1x1x128xf32>
    %1056 = vector.broadcast %1055 : vector<1x1x128xf32> to vector<8x8x128xf32>
    %1057 = arith.mulf %1054, %1056 : vector<8x8x128xf32>
    %1058 = arith.addf %1051, %1057 : vector<8x8x128xf32>
    %c2_717 = arith.constant 2 : index
    %1059 = arith.index_cast %1045 : i32 to index
    %c0_718 = arith.constant 0 : index
    %c0_719 = arith.constant 0 : index
    %c0_720 = arith.constant 0 : index
    %1060 = vector.load %arg7[%c2_717, %1059, %c0_718, %c0_719, %c0_720] : memref<3x10x10x8x128xf32, #tpu.memory_space<vmem>>, vector<1x1x8x8x128xf32>
    %1061 = vector.shape_cast %1060 : vector<1x1x8x8x128xf32> to vector<8x8x128xf32>
    %1062 = vector.shape_cast %10 : vector<128xf32> to vector<1x1x128xf32>
    %1063 = vector.broadcast %1062 : vector<1x1x128xf32> to vector<8x8x128xf32>
    %1064 = arith.mulf %1061, %1063 : vector<8x8x128xf32>
    %1065 = arith.addf %1058, %1064 : vector<8x8x128xf32>
    %c0_721 = arith.constant 0 : index
    %1066 = arith.index_cast %1045 : i32 to index
    %c1_722 = arith.constant 1 : index
    %c0_723 = arith.constant 0 : index
    %c0_724 = arith.constant 0 : index
    %1067 = vector.load %arg7[%c0_721, %1066, %c1_722, %c0_723, %c0_724] : memref<3x10x10x8x128xf32, #tpu.memory_space<vmem>>, vector<1x1x8x8x128xf32>
    %1068 = vector.shape_cast %1067 : vector<1x1x8x8x128xf32> to vector<8x8x128xf32>
    %1069 = vector.shape_cast %12 : vector<128xf32> to vector<1x1x128xf32>
    %1070 = vector.broadcast %1069 : vector<1x1x128xf32> to vector<8x8x128xf32>
    %1071 = arith.mulf %1068, %1070 : vector<8x8x128xf32>
    %1072 = arith.addf %1065, %1071 : vector<8x8x128xf32>
    %c1_725 = arith.constant 1 : index
    %1073 = arith.index_cast %1045 : i32 to index
    %c1_726 = arith.constant 1 : index
    %c0_727 = arith.constant 0 : index
    %c0_728 = arith.constant 0 : index
    %1074 = vector.load %arg7[%c1_725, %1073, %c1_726, %c0_727, %c0_728] : memref<3x10x10x8x128xf32, #tpu.memory_space<vmem>>, vector<1x1x8x8x128xf32>
    %1075 = vector.shape_cast %1074 : vector<1x1x8x8x128xf32> to vector<8x8x128xf32>
    %1076 = vector.shape_cast %14 : vector<128xf32> to vector<1x1x128xf32>
    %1077 = vector.broadcast %1076 : vector<1x1x128xf32> to vector<8x8x128xf32>
    %1078 = arith.mulf %1075, %1077 : vector<8x8x128xf32>
    %1079 = arith.addf %1072, %1078 : vector<8x8x128xf32>
    %c2_729 = arith.constant 2 : index
    %1080 = arith.index_cast %1045 : i32 to index
    %c1_730 = arith.constant 1 : index
    %c0_731 = arith.constant 0 : index
    %c0_732 = arith.constant 0 : index
    %1081 = vector.load %arg7[%c2_729, %1080, %c1_730, %c0_731, %c0_732] : memref<3x10x10x8x128xf32, #tpu.memory_space<vmem>>, vector<1x1x8x8x128xf32>
    %1082 = vector.shape_cast %1081 : vector<1x1x8x8x128xf32> to vector<8x8x128xf32>
    %1083 = vector.shape_cast %16 : vector<128xf32> to vector<1x1x128xf32>
    %1084 = vector.broadcast %1083 : vector<1x1x128xf32> to vector<8x8x128xf32>
    %1085 = arith.mulf %1082, %1084 : vector<8x8x128xf32>
    %1086 = arith.addf %1079, %1085 : vector<8x8x128xf32>
    %c0_733 = arith.constant 0 : index
    %1087 = arith.index_cast %1045 : i32 to index
    %c2_734 = arith.constant 2 : index
    %c0_735 = arith.constant 0 : index
    %c0_736 = arith.constant 0 : index
    %1088 = vector.load %arg7[%c0_733, %1087, %c2_734, %c0_735, %c0_736] : memref<3x10x10x8x128xf32, #tpu.memory_space<vmem>>, vector<1x1x8x8x128xf32>
    %1089 = vector.shape_cast %1088 : vector<1x1x8x8x128xf32> to vector<8x8x128xf32>
    %1090 = vector.shape_cast %18 : vector<128xf32> to vector<1x1x128xf32>
    %1091 = vector.broadcast %1090 : vector<1x1x128xf32> to vector<8x8x128xf32>
    %1092 = arith.mulf %1089, %1091 : vector<8x8x128xf32>
    %1093 = arith.addf %1086, %1092 : vector<8x8x128xf32>
    %c1_737 = arith.constant 1 : index
    %1094 = arith.index_cast %1045 : i32 to index
    %c2_738 = arith.constant 2 : index
    %c0_739 = arith.constant 0 : index
    %c0_740 = arith.constant 0 : index
    %1095 = vector.load %arg7[%c1_737, %1094, %c2_738, %c0_739, %c0_740] : memref<3x10x10x8x128xf32, #tpu.memory_space<vmem>>, vector<1x1x8x8x128xf32>
    %1096 = vector.shape_cast %1095 : vector<1x1x8x8x128xf32> to vector<8x8x128xf32>
    %1097 = vector.shape_cast %20 : vector<128xf32> to vector<1x1x128xf32>
    %1098 = vector.broadcast %1097 : vector<1x1x128xf32> to vector<8x8x128xf32>
    %1099 = arith.mulf %1096, %1098 : vector<8x8x128xf32>
    %1100 = arith.addf %1093, %1099 : vector<8x8x128xf32>
    %c2_741 = arith.constant 2 : index
    %1101 = arith.index_cast %1045 : i32 to index
    %c2_742 = arith.constant 2 : index
    %c0_743 = arith.constant 0 : index
    %c0_744 = arith.constant 0 : index
    %1102 = vector.load %arg7[%c2_741, %1101, %c2_742, %c0_743, %c0_744] : memref<3x10x10x8x128xf32, #tpu.memory_space<vmem>>, vector<1x1x8x8x128xf32>
    %1103 = vector.shape_cast %1102 : vector<1x1x8x8x128xf32> to vector<8x8x128xf32>
    %1104 = vector.shape_cast %22 : vector<128xf32> to vector<1x1x128xf32>
    %1105 = vector.broadcast %1104 : vector<1x1x128xf32> to vector<8x8x128xf32>
    %1106 = arith.mulf %1103, %1105 : vector<8x8x128xf32>
    %1107 = arith.addf %1100, %1106 : vector<8x8x128xf32>
    %c6_i32_745 = arith.constant 6 : i32
    %1108 = arith.addi %59, %c6_i32_745 : i32
    %c0_746 = arith.constant 0 : index
    %1109 = arith.index_cast %1108 : i32 to index
    %c0_747 = arith.constant 0 : index
    %c0_748 = arith.constant 0 : index
    %c0_749 = arith.constant 0 : index
    %1110 = vector.load %arg7[%c0_746, %1109, %c0_747, %c0_748, %c0_749] : memref<3x10x10x8x128xf32, #tpu.memory_space<vmem>>, vector<1x1x8x8x128xf32>
    %1111 = vector.shape_cast %1110 : vector<1x1x8x8x128xf32> to vector<8x8x128xf32>
    %1112 = vector.shape_cast %24 : vector<128xf32> to vector<1x1x128xf32>
    %1113 = vector.broadcast %1112 : vector<1x1x128xf32> to vector<8x8x128xf32>
    %1114 = arith.mulf %1111, %1113 : vector<8x8x128xf32>
    %1115 = arith.addf %1107, %1114 : vector<8x8x128xf32>
    %c1_750 = arith.constant 1 : index
    %1116 = arith.index_cast %1108 : i32 to index
    %c0_751 = arith.constant 0 : index
    %c0_752 = arith.constant 0 : index
    %c0_753 = arith.constant 0 : index
    %1117 = vector.load %arg7[%c1_750, %1116, %c0_751, %c0_752, %c0_753] : memref<3x10x10x8x128xf32, #tpu.memory_space<vmem>>, vector<1x1x8x8x128xf32>
    %1118 = vector.shape_cast %1117 : vector<1x1x8x8x128xf32> to vector<8x8x128xf32>
    %1119 = vector.shape_cast %26 : vector<128xf32> to vector<1x1x128xf32>
    %1120 = vector.broadcast %1119 : vector<1x1x128xf32> to vector<8x8x128xf32>
    %1121 = arith.mulf %1118, %1120 : vector<8x8x128xf32>
    %1122 = arith.addf %1115, %1121 : vector<8x8x128xf32>
    %c2_754 = arith.constant 2 : index
    %1123 = arith.index_cast %1108 : i32 to index
    %c0_755 = arith.constant 0 : index
    %c0_756 = arith.constant 0 : index
    %c0_757 = arith.constant 0 : index
    %1124 = vector.load %arg7[%c2_754, %1123, %c0_755, %c0_756, %c0_757] : memref<3x10x10x8x128xf32, #tpu.memory_space<vmem>>, vector<1x1x8x8x128xf32>
    %1125 = vector.shape_cast %1124 : vector<1x1x8x8x128xf32> to vector<8x8x128xf32>
    %1126 = vector.shape_cast %28 : vector<128xf32> to vector<1x1x128xf32>
    %1127 = vector.broadcast %1126 : vector<1x1x128xf32> to vector<8x8x128xf32>
    %1128 = arith.mulf %1125, %1127 : vector<8x8x128xf32>
    %1129 = arith.addf %1122, %1128 : vector<8x8x128xf32>
    %c0_758 = arith.constant 0 : index
    %1130 = arith.index_cast %1108 : i32 to index
    %c1_759 = arith.constant 1 : index
    %c0_760 = arith.constant 0 : index
    %c0_761 = arith.constant 0 : index
    %1131 = vector.load %arg7[%c0_758, %1130, %c1_759, %c0_760, %c0_761] : memref<3x10x10x8x128xf32, #tpu.memory_space<vmem>>, vector<1x1x8x8x128xf32>
    %1132 = vector.shape_cast %1131 : vector<1x1x8x8x128xf32> to vector<8x8x128xf32>
    %1133 = vector.shape_cast %30 : vector<128xf32> to vector<1x1x128xf32>
    %1134 = vector.broadcast %1133 : vector<1x1x128xf32> to vector<8x8x128xf32>
    %1135 = arith.mulf %1132, %1134 : vector<8x8x128xf32>
    %1136 = arith.addf %1129, %1135 : vector<8x8x128xf32>
    %c1_762 = arith.constant 1 : index
    %1137 = arith.index_cast %1108 : i32 to index
    %c1_763 = arith.constant 1 : index
    %c0_764 = arith.constant 0 : index
    %c0_765 = arith.constant 0 : index
    %1138 = vector.load %arg7[%c1_762, %1137, %c1_763, %c0_764, %c0_765] : memref<3x10x10x8x128xf32, #tpu.memory_space<vmem>>, vector<1x1x8x8x128xf32>
    %1139 = vector.shape_cast %1138 : vector<1x1x8x8x128xf32> to vector<8x8x128xf32>
    %1140 = vector.shape_cast %32 : vector<128xf32> to vector<1x1x128xf32>
    %1141 = vector.broadcast %1140 : vector<1x1x128xf32> to vector<8x8x128xf32>
    %1142 = arith.mulf %1139, %1141 : vector<8x8x128xf32>
    %1143 = arith.addf %1136, %1142 : vector<8x8x128xf32>
    %c2_766 = arith.constant 2 : index
    %1144 = arith.index_cast %1108 : i32 to index
    %c1_767 = arith.constant 1 : index
    %c0_768 = arith.constant 0 : index
    %c0_769 = arith.constant 0 : index
    %1145 = vector.load %arg7[%c2_766, %1144, %c1_767, %c0_768, %c0_769] : memref<3x10x10x8x128xf32, #tpu.memory_space<vmem>>, vector<1x1x8x8x128xf32>
    %1146 = vector.shape_cast %1145 : vector<1x1x8x8x128xf32> to vector<8x8x128xf32>
    %1147 = vector.shape_cast %34 : vector<128xf32> to vector<1x1x128xf32>
    %1148 = vector.broadcast %1147 : vector<1x1x128xf32> to vector<8x8x128xf32>
    %1149 = arith.mulf %1146, %1148 : vector<8x8x128xf32>
    %1150 = arith.addf %1143, %1149 : vector<8x8x128xf32>
    %c0_770 = arith.constant 0 : index
    %1151 = arith.index_cast %1108 : i32 to index
    %c2_771 = arith.constant 2 : index
    %c0_772 = arith.constant 0 : index
    %c0_773 = arith.constant 0 : index
    %1152 = vector.load %arg7[%c0_770, %1151, %c2_771, %c0_772, %c0_773] : memref<3x10x10x8x128xf32, #tpu.memory_space<vmem>>, vector<1x1x8x8x128xf32>
    %1153 = vector.shape_cast %1152 : vector<1x1x8x8x128xf32> to vector<8x8x128xf32>
    %1154 = vector.shape_cast %36 : vector<128xf32> to vector<1x1x128xf32>
    %1155 = vector.broadcast %1154 : vector<1x1x128xf32> to vector<8x8x128xf32>
    %1156 = arith.mulf %1153, %1155 : vector<8x8x128xf32>
    %1157 = arith.addf %1150, %1156 : vector<8x8x128xf32>
    %c1_774 = arith.constant 1 : index
    %1158 = arith.index_cast %1108 : i32 to index
    %c2_775 = arith.constant 2 : index
    %c0_776 = arith.constant 0 : index
    %c0_777 = arith.constant 0 : index
    %1159 = vector.load %arg7[%c1_774, %1158, %c2_775, %c0_776, %c0_777] : memref<3x10x10x8x128xf32, #tpu.memory_space<vmem>>, vector<1x1x8x8x128xf32>
    %1160 = vector.shape_cast %1159 : vector<1x1x8x8x128xf32> to vector<8x8x128xf32>
    %1161 = vector.shape_cast %38 : vector<128xf32> to vector<1x1x128xf32>
    %1162 = vector.broadcast %1161 : vector<1x1x128xf32> to vector<8x8x128xf32>
    %1163 = arith.mulf %1160, %1162 : vector<8x8x128xf32>
    %1164 = arith.addf %1157, %1163 : vector<8x8x128xf32>
    %c2_778 = arith.constant 2 : index
    %1165 = arith.index_cast %1108 : i32 to index
    %c2_779 = arith.constant 2 : index
    %c0_780 = arith.constant 0 : index
    %c0_781 = arith.constant 0 : index
    %1166 = vector.load %arg7[%c2_778, %1165, %c2_779, %c0_780, %c0_781] : memref<3x10x10x8x128xf32, #tpu.memory_space<vmem>>, vector<1x1x8x8x128xf32>
    %1167 = vector.shape_cast %1166 : vector<1x1x8x8x128xf32> to vector<8x8x128xf32>
    %1168 = vector.shape_cast %40 : vector<128xf32> to vector<1x1x128xf32>
    %1169 = vector.broadcast %1168 : vector<1x1x128xf32> to vector<8x8x128xf32>
    %1170 = arith.mulf %1167, %1169 : vector<8x8x128xf32>
    %1171 = arith.addf %1164, %1170 : vector<8x8x128xf32>
    %c7_i32 = arith.constant 7 : i32
    %1172 = arith.addi %59, %c7_i32 : i32
    %c0_782 = arith.constant 0 : index
    %1173 = arith.index_cast %1172 : i32 to index
    %c0_783 = arith.constant 0 : index
    %c0_784 = arith.constant 0 : index
    %c0_785 = arith.constant 0 : index
    %1174 = vector.load %arg7[%c0_782, %1173, %c0_783, %c0_784, %c0_785] : memref<3x10x10x8x128xf32, #tpu.memory_space<vmem>>, vector<1x1x8x8x128xf32>
    %1175 = vector.shape_cast %1174 : vector<1x1x8x8x128xf32> to vector<8x8x128xf32>
    %1176 = vector.shape_cast %42 : vector<128xf32> to vector<1x1x128xf32>
    %1177 = vector.broadcast %1176 : vector<1x1x128xf32> to vector<8x8x128xf32>
    %1178 = arith.mulf %1175, %1177 : vector<8x8x128xf32>
    %1179 = arith.addf %1171, %1178 : vector<8x8x128xf32>
    %c1_786 = arith.constant 1 : index
    %1180 = arith.index_cast %1172 : i32 to index
    %c0_787 = arith.constant 0 : index
    %c0_788 = arith.constant 0 : index
    %c0_789 = arith.constant 0 : index
    %1181 = vector.load %arg7[%c1_786, %1180, %c0_787, %c0_788, %c0_789] : memref<3x10x10x8x128xf32, #tpu.memory_space<vmem>>, vector<1x1x8x8x128xf32>
    %1182 = vector.shape_cast %1181 : vector<1x1x8x8x128xf32> to vector<8x8x128xf32>
    %1183 = vector.shape_cast %44 : vector<128xf32> to vector<1x1x128xf32>
    %1184 = vector.broadcast %1183 : vector<1x1x128xf32> to vector<8x8x128xf32>
    %1185 = arith.mulf %1182, %1184 : vector<8x8x128xf32>
    %1186 = arith.addf %1179, %1185 : vector<8x8x128xf32>
    %c2_790 = arith.constant 2 : index
    %1187 = arith.index_cast %1172 : i32 to index
    %c0_791 = arith.constant 0 : index
    %c0_792 = arith.constant 0 : index
    %c0_793 = arith.constant 0 : index
    %1188 = vector.load %arg7[%c2_790, %1187, %c0_791, %c0_792, %c0_793] : memref<3x10x10x8x128xf32, #tpu.memory_space<vmem>>, vector<1x1x8x8x128xf32>
    %1189 = vector.shape_cast %1188 : vector<1x1x8x8x128xf32> to vector<8x8x128xf32>
    %1190 = vector.shape_cast %46 : vector<128xf32> to vector<1x1x128xf32>
    %1191 = vector.broadcast %1190 : vector<1x1x128xf32> to vector<8x8x128xf32>
    %1192 = arith.mulf %1189, %1191 : vector<8x8x128xf32>
    %1193 = arith.addf %1186, %1192 : vector<8x8x128xf32>
    %c0_794 = arith.constant 0 : index
    %1194 = arith.index_cast %1172 : i32 to index
    %c1_795 = arith.constant 1 : index
    %c0_796 = arith.constant 0 : index
    %c0_797 = arith.constant 0 : index
    %1195 = vector.load %arg7[%c0_794, %1194, %c1_795, %c0_796, %c0_797] : memref<3x10x10x8x128xf32, #tpu.memory_space<vmem>>, vector<1x1x8x8x128xf32>
    %1196 = vector.shape_cast %1195 : vector<1x1x8x8x128xf32> to vector<8x8x128xf32>
    %1197 = vector.shape_cast %48 : vector<128xf32> to vector<1x1x128xf32>
    %1198 = vector.broadcast %1197 : vector<1x1x128xf32> to vector<8x8x128xf32>
    %1199 = arith.mulf %1196, %1198 : vector<8x8x128xf32>
    %1200 = arith.addf %1193, %1199 : vector<8x8x128xf32>
    %c1_798 = arith.constant 1 : index
    %1201 = arith.index_cast %1172 : i32 to index
    %c1_799 = arith.constant 1 : index
    %c0_800 = arith.constant 0 : index
    %c0_801 = arith.constant 0 : index
    %1202 = vector.load %arg7[%c1_798, %1201, %c1_799, %c0_800, %c0_801] : memref<3x10x10x8x128xf32, #tpu.memory_space<vmem>>, vector<1x1x8x8x128xf32>
    %1203 = vector.shape_cast %1202 : vector<1x1x8x8x128xf32> to vector<8x8x128xf32>
    %1204 = vector.shape_cast %50 : vector<128xf32> to vector<1x1x128xf32>
    %1205 = vector.broadcast %1204 : vector<1x1x128xf32> to vector<8x8x128xf32>
    %1206 = arith.mulf %1203, %1205 : vector<8x8x128xf32>
    %1207 = arith.addf %1200, %1206 : vector<8x8x128xf32>
    %c2_802 = arith.constant 2 : index
    %1208 = arith.index_cast %1172 : i32 to index
    %c1_803 = arith.constant 1 : index
    %c0_804 = arith.constant 0 : index
    %c0_805 = arith.constant 0 : index
    %1209 = vector.load %arg7[%c2_802, %1208, %c1_803, %c0_804, %c0_805] : memref<3x10x10x8x128xf32, #tpu.memory_space<vmem>>, vector<1x1x8x8x128xf32>
    %1210 = vector.shape_cast %1209 : vector<1x1x8x8x128xf32> to vector<8x8x128xf32>
    %1211 = vector.shape_cast %52 : vector<128xf32> to vector<1x1x128xf32>
    %1212 = vector.broadcast %1211 : vector<1x1x128xf32> to vector<8x8x128xf32>
    %1213 = arith.mulf %1210, %1212 : vector<8x8x128xf32>
    %1214 = arith.addf %1207, %1213 : vector<8x8x128xf32>
    %c0_806 = arith.constant 0 : index
    %1215 = arith.index_cast %1172 : i32 to index
    %c2_807 = arith.constant 2 : index
    %c0_808 = arith.constant 0 : index
    %c0_809 = arith.constant 0 : index
    %1216 = vector.load %arg7[%c0_806, %1215, %c2_807, %c0_808, %c0_809] : memref<3x10x10x8x128xf32, #tpu.memory_space<vmem>>, vector<1x1x8x8x128xf32>
    %1217 = vector.shape_cast %1216 : vector<1x1x8x8x128xf32> to vector<8x8x128xf32>
    %1218 = vector.shape_cast %54 : vector<128xf32> to vector<1x1x128xf32>
    %1219 = vector.broadcast %1218 : vector<1x1x128xf32> to vector<8x8x128xf32>
    %1220 = arith.mulf %1217, %1219 : vector<8x8x128xf32>
    %1221 = arith.addf %1214, %1220 : vector<8x8x128xf32>
    %c1_810 = arith.constant 1 : index
    %1222 = arith.index_cast %1172 : i32 to index
    %c2_811 = arith.constant 2 : index
    %c0_812 = arith.constant 0 : index
    %c0_813 = arith.constant 0 : index
    %1223 = vector.load %arg7[%c1_810, %1222, %c2_811, %c0_812, %c0_813] : memref<3x10x10x8x128xf32, #tpu.memory_space<vmem>>, vector<1x1x8x8x128xf32>
    %1224 = vector.shape_cast %1223 : vector<1x1x8x8x128xf32> to vector<8x8x128xf32>
    %1225 = vector.shape_cast %56 : vector<128xf32> to vector<1x1x128xf32>
    %1226 = vector.broadcast %1225 : vector<1x1x128xf32> to vector<8x8x128xf32>
    %1227 = arith.mulf %1224, %1226 : vector<8x8x128xf32>
    %1228 = arith.addf %1221, %1227 : vector<8x8x128xf32>
    %c2_814 = arith.constant 2 : index
    %1229 = arith.index_cast %1172 : i32 to index
    %c2_815 = arith.constant 2 : index
    %c0_816 = arith.constant 0 : index
    %c0_817 = arith.constant 0 : index
    %1230 = vector.load %arg7[%c2_814, %1229, %c2_815, %c0_816, %c0_817] : memref<3x10x10x8x128xf32, #tpu.memory_space<vmem>>, vector<1x1x8x8x128xf32>
    %1231 = vector.shape_cast %1230 : vector<1x1x8x8x128xf32> to vector<8x8x128xf32>
    %1232 = vector.shape_cast %58 : vector<128xf32> to vector<1x1x128xf32>
    %1233 = vector.broadcast %1232 : vector<1x1x128xf32> to vector<8x8x128xf32>
    %1234 = arith.mulf %1231, %1233 : vector<8x8x128xf32>
    %1235 = arith.addf %1228, %1234 : vector<8x8x128xf32>
    %1236 = vector.shape_cast %4 : vector<128xf32> to vector<1x1x128xf32>
    %1237 = vector.broadcast %1236 : vector<1x1x128xf32> to vector<8x8x128xf32>
    %1238 = arith.addf %1235, %1237 : vector<8x8x128xf32>
    %c0_818 = arith.constant 0 : index
    %c5 = arith.constant 5 : index
    %c0_819 = arith.constant 0 : index
    %c0_820 = arith.constant 0 : index
    %c0_821 = arith.constant 0 : index
    %1239 = vector.load %arg5[%c0_818, %c5, %c0_819, %c0_820, %c0_821] : memref<1x8x8x8x128xf32, #tpu.memory_space<vmem>>, vector<1x1x8x8x128xf32>
    %1240 = vector.shape_cast %1239 : vector<1x1x8x8x128xf32> to vector<8x8x128xf32>
    %1241 = vector.shape_cast %1238 : vector<8x8x128xf32> to vector<1x1x8x8x128xf32>
    tpu.vector_store %arg5[%c0_818, %c5, %c0_819, %c0_820, %c0_821], %1241 {strides = array<i32>} : memref<1x8x8x8x128xf32, #tpu.memory_space<vmem>>, vector<1x1x8x8x128xf32>,
    %c6_i32_822 = arith.constant 6 : i32
    %1242 = arith.addi %59, %c6_i32_822 : i32
    %c0_823 = arith.constant 0 : index
    %1243 = arith.index_cast %1242 : i32 to index
    %c0_824 = arith.constant 0 : index
    %c0_825 = arith.constant 0 : index
    %c0_826 = arith.constant 0 : index
    %1244 = vector.load %arg7[%c0_823, %1243, %c0_824, %c0_825, %c0_826] : memref<3x10x10x8x128xf32, #tpu.memory_space<vmem>>, vector<1x1x8x8x128xf32>
    %1245 = vector.shape_cast %1244 : vector<1x1x8x8x128xf32> to vector<8x8x128xf32>
    %1246 = vector.shape_cast %6 : vector<128xf32> to vector<1x1x128xf32>
    %1247 = vector.broadcast %1246 : vector<1x1x128xf32> to vector<8x8x128xf32>
    %1248 = arith.mulf %1245, %1247 : vector<8x8x128xf32>
    %c1_827 = arith.constant 1 : index
    %1249 = arith.index_cast %1242 : i32 to index
    %c0_828 = arith.constant 0 : index
    %c0_829 = arith.constant 0 : index
    %c0_830 = arith.constant 0 : index
    %1250 = vector.load %arg7[%c1_827, %1249, %c0_828, %c0_829, %c0_830] : memref<3x10x10x8x128xf32, #tpu.memory_space<vmem>>, vector<1x1x8x8x128xf32>
    %1251 = vector.shape_cast %1250 : vector<1x1x8x8x128xf32> to vector<8x8x128xf32>
    %1252 = vector.shape_cast %8 : vector<128xf32> to vector<1x1x128xf32>
    %1253 = vector.broadcast %1252 : vector<1x1x128xf32> to vector<8x8x128xf32>
    %1254 = arith.mulf %1251, %1253 : vector<8x8x128xf32>
    %1255 = arith.addf %1248, %1254 : vector<8x8x128xf32>
    %c2_831 = arith.constant 2 : index
    %1256 = arith.index_cast %1242 : i32 to index
    %c0_832 = arith.constant 0 : index
    %c0_833 = arith.constant 0 : index
    %c0_834 = arith.constant 0 : index
    %1257 = vector.load %arg7[%c2_831, %1256, %c0_832, %c0_833, %c0_834] : memref<3x10x10x8x128xf32, #tpu.memory_space<vmem>>, vector<1x1x8x8x128xf32>
    %1258 = vector.shape_cast %1257 : vector<1x1x8x8x128xf32> to vector<8x8x128xf32>
    %1259 = vector.shape_cast %10 : vector<128xf32> to vector<1x1x128xf32>
    %1260 = vector.broadcast %1259 : vector<1x1x128xf32> to vector<8x8x128xf32>
    %1261 = arith.mulf %1258, %1260 : vector<8x8x128xf32>
    %1262 = arith.addf %1255, %1261 : vector<8x8x128xf32>
    %c0_835 = arith.constant 0 : index
    %1263 = arith.index_cast %1242 : i32 to index
    %c1_836 = arith.constant 1 : index
    %c0_837 = arith.constant 0 : index
    %c0_838 = arith.constant 0 : index
    %1264 = vector.load %arg7[%c0_835, %1263, %c1_836, %c0_837, %c0_838] : memref<3x10x10x8x128xf32, #tpu.memory_space<vmem>>, vector<1x1x8x8x128xf32>
    %1265 = vector.shape_cast %1264 : vector<1x1x8x8x128xf32> to vector<8x8x128xf32>
    %1266 = vector.shape_cast %12 : vector<128xf32> to vector<1x1x128xf32>
    %1267 = vector.broadcast %1266 : vector<1x1x128xf32> to vector<8x8x128xf32>
    %1268 = arith.mulf %1265, %1267 : vector<8x8x128xf32>
    %1269 = arith.addf %1262, %1268 : vector<8x8x128xf32>
    %c1_839 = arith.constant 1 : index
    %1270 = arith.index_cast %1242 : i32 to index
    %c1_840 = arith.constant 1 : index
    %c0_841 = arith.constant 0 : index
    %c0_842 = arith.constant 0 : index
    %1271 = vector.load %arg7[%c1_839, %1270, %c1_840, %c0_841, %c0_842] : memref<3x10x10x8x128xf32, #tpu.memory_space<vmem>>, vector<1x1x8x8x128xf32>
    %1272 = vector.shape_cast %1271 : vector<1x1x8x8x128xf32> to vector<8x8x128xf32>
    %1273 = vector.shape_cast %14 : vector<128xf32> to vector<1x1x128xf32>
    %1274 = vector.broadcast %1273 : vector<1x1x128xf32> to vector<8x8x128xf32>
    %1275 = arith.mulf %1272, %1274 : vector<8x8x128xf32>
    %1276 = arith.addf %1269, %1275 : vector<8x8x128xf32>
    %c2_843 = arith.constant 2 : index
    %1277 = arith.index_cast %1242 : i32 to index
    %c1_844 = arith.constant 1 : index
    %c0_845 = arith.constant 0 : index
    %c0_846 = arith.constant 0 : index
    %1278 = vector.load %arg7[%c2_843, %1277, %c1_844, %c0_845, %c0_846] : memref<3x10x10x8x128xf32, #tpu.memory_space<vmem>>, vector<1x1x8x8x128xf32>
    %1279 = vector.shape_cast %1278 : vector<1x1x8x8x128xf32> to vector<8x8x128xf32>
    %1280 = vector.shape_cast %16 : vector<128xf32> to vector<1x1x128xf32>
    %1281 = vector.broadcast %1280 : vector<1x1x128xf32> to vector<8x8x128xf32>
    %1282 = arith.mulf %1279, %1281 : vector<8x8x128xf32>
    %1283 = arith.addf %1276, %1282 : vector<8x8x128xf32>
    %c0_847 = arith.constant 0 : index
    %1284 = arith.index_cast %1242 : i32 to index
    %c2_848 = arith.constant 2 : index
    %c0_849 = arith.constant 0 : index
    %c0_850 = arith.constant 0 : index
    %1285 = vector.load %arg7[%c0_847, %1284, %c2_848, %c0_849, %c0_850] : memref<3x10x10x8x128xf32, #tpu.memory_space<vmem>>, vector<1x1x8x8x128xf32>
    %1286 = vector.shape_cast %1285 : vector<1x1x8x8x128xf32> to vector<8x8x128xf32>
    %1287 = vector.shape_cast %18 : vector<128xf32> to vector<1x1x128xf32>
    %1288 = vector.broadcast %1287 : vector<1x1x128xf32> to vector<8x8x128xf32>
    %1289 = arith.mulf %1286, %1288 : vector<8x8x128xf32>
    %1290 = arith.addf %1283, %1289 : vector<8x8x128xf32>
    %c1_851 = arith.constant 1 : index
    %1291 = arith.index_cast %1242 : i32 to index
    %c2_852 = arith.constant 2 : index
    %c0_853 = arith.constant 0 : index
    %c0_854 = arith.constant 0 : index
    %1292 = vector.load %arg7[%c1_851, %1291, %c2_852, %c0_853, %c0_854] : memref<3x10x10x8x128xf32, #tpu.memory_space<vmem>>, vector<1x1x8x8x128xf32>
    %1293 = vector.shape_cast %1292 : vector<1x1x8x8x128xf32> to vector<8x8x128xf32>
    %1294 = vector.shape_cast %20 : vector<128xf32> to vector<1x1x128xf32>
    %1295 = vector.broadcast %1294 : vector<1x1x128xf32> to vector<8x8x128xf32>
    %1296 = arith.mulf %1293, %1295 : vector<8x8x128xf32>
    %1297 = arith.addf %1290, %1296 : vector<8x8x128xf32>
    %c2_855 = arith.constant 2 : index
    %1298 = arith.index_cast %1242 : i32 to index
    %c2_856 = arith.constant 2 : index
    %c0_857 = arith.constant 0 : index
    %c0_858 = arith.constant 0 : index
    %1299 = vector.load %arg7[%c2_855, %1298, %c2_856, %c0_857, %c0_858] : memref<3x10x10x8x128xf32, #tpu.memory_space<vmem>>, vector<1x1x8x8x128xf32>
    %1300 = vector.shape_cast %1299 : vector<1x1x8x8x128xf32> to vector<8x8x128xf32>
    %1301 = vector.shape_cast %22 : vector<128xf32> to vector<1x1x128xf32>
    %1302 = vector.broadcast %1301 : vector<1x1x128xf32> to vector<8x8x128xf32>
    %1303 = arith.mulf %1300, %1302 : vector<8x8x128xf32>
    %1304 = arith.addf %1297, %1303 : vector<8x8x128xf32>
    %c7_i32_859 = arith.constant 7 : i32
    %1305 = arith.addi %59, %c7_i32_859 : i32
    %c0_860 = arith.constant 0 : index
    %1306 = arith.index_cast %1305 : i32 to index
    %c0_861 = arith.constant 0 : index
    %c0_862 = arith.constant 0 : index
    %c0_863 = arith.constant 0 : index
    %1307 = vector.load %arg7[%c0_860, %1306, %c0_861, %c0_862, %c0_863] : memref<3x10x10x8x128xf32, #tpu.memory_space<vmem>>, vector<1x1x8x8x128xf32>
    %1308 = vector.shape_cast %1307 : vector<1x1x8x8x128xf32> to vector<8x8x128xf32>
    %1309 = vector.shape_cast %24 : vector<128xf32> to vector<1x1x128xf32>
    %1310 = vector.broadcast %1309 : vector<1x1x128xf32> to vector<8x8x128xf32>
    %1311 = arith.mulf %1308, %1310 : vector<8x8x128xf32>
    %1312 = arith.addf %1304, %1311 : vector<8x8x128xf32>
    %c1_864 = arith.constant 1 : index
    %1313 = arith.index_cast %1305 : i32 to index
    %c0_865 = arith.constant 0 : index
    %c0_866 = arith.constant 0 : index
    %c0_867 = arith.constant 0 : index
    %1314 = vector.load %arg7[%c1_864, %1313, %c0_865, %c0_866, %c0_867] : memref<3x10x10x8x128xf32, #tpu.memory_space<vmem>>, vector<1x1x8x8x128xf32>
    %1315 = vector.shape_cast %1314 : vector<1x1x8x8x128xf32> to vector<8x8x128xf32>
    %1316 = vector.shape_cast %26 : vector<128xf32> to vector<1x1x128xf32>
    %1317 = vector.broadcast %1316 : vector<1x1x128xf32> to vector<8x8x128xf32>
    %1318 = arith.mulf %1315, %1317 : vector<8x8x128xf32>
    %1319 = arith.addf %1312, %1318 : vector<8x8x128xf32>
    %c2_868 = arith.constant 2 : index
    %1320 = arith.index_cast %1305 : i32 to index
    %c0_869 = arith.constant 0 : index
    %c0_870 = arith.constant 0 : index
    %c0_871 = arith.constant 0 : index
    %1321 = vector.load %arg7[%c2_868, %1320, %c0_869, %c0_870, %c0_871] : memref<3x10x10x8x128xf32, #tpu.memory_space<vmem>>, vector<1x1x8x8x128xf32>
    %1322 = vector.shape_cast %1321 : vector<1x1x8x8x128xf32> to vector<8x8x128xf32>
    %1323 = vector.shape_cast %28 : vector<128xf32> to vector<1x1x128xf32>
    %1324 = vector.broadcast %1323 : vector<1x1x128xf32> to vector<8x8x128xf32>
    %1325 = arith.mulf %1322, %1324 : vector<8x8x128xf32>
    %1326 = arith.addf %1319, %1325 : vector<8x8x128xf32>
    %c0_872 = arith.constant 0 : index
    %1327 = arith.index_cast %1305 : i32 to index
    %c1_873 = arith.constant 1 : index
    %c0_874 = arith.constant 0 : index
    %c0_875 = arith.constant 0 : index
    %1328 = vector.load %arg7[%c0_872, %1327, %c1_873, %c0_874, %c0_875] : memref<3x10x10x8x128xf32, #tpu.memory_space<vmem>>, vector<1x1x8x8x128xf32>
    %1329 = vector.shape_cast %1328 : vector<1x1x8x8x128xf32> to vector<8x8x128xf32>
    %1330 = vector.shape_cast %30 : vector<128xf32> to vector<1x1x128xf32>
    %1331 = vector.broadcast %1330 : vector<1x1x128xf32> to vector<8x8x128xf32>
    %1332 = arith.mulf %1329, %1331 : vector<8x8x128xf32>
    %1333 = arith.addf %1326, %1332 : vector<8x8x128xf32>
    %c1_876 = arith.constant 1 : index
    %1334 = arith.index_cast %1305 : i32 to index
    %c1_877 = arith.constant 1 : index
    %c0_878 = arith.constant 0 : index
    %c0_879 = arith.constant 0 : index
    %1335 = vector.load %arg7[%c1_876, %1334, %c1_877, %c0_878, %c0_879] : memref<3x10x10x8x128xf32, #tpu.memory_space<vmem>>, vector<1x1x8x8x128xf32>
    %1336 = vector.shape_cast %1335 : vector<1x1x8x8x128xf32> to vector<8x8x128xf32>
    %1337 = vector.shape_cast %32 : vector<128xf32> to vector<1x1x128xf32>
    %1338 = vector.broadcast %1337 : vector<1x1x128xf32> to vector<8x8x128xf32>
    %1339 = arith.mulf %1336, %1338 : vector<8x8x128xf32>
    %1340 = arith.addf %1333, %1339 : vector<8x8x128xf32>
    %c2_880 = arith.constant 2 : index
    %1341 = arith.index_cast %1305 : i32 to index
    %c1_881 = arith.constant 1 : index
    %c0_882 = arith.constant 0 : index
    %c0_883 = arith.constant 0 : index
    %1342 = vector.load %arg7[%c2_880, %1341, %c1_881, %c0_882, %c0_883] : memref<3x10x10x8x128xf32, #tpu.memory_space<vmem>>, vector<1x1x8x8x128xf32>
    %1343 = vector.shape_cast %1342 : vector<1x1x8x8x128xf32> to vector<8x8x128xf32>
    %1344 = vector.shape_cast %34 : vector<128xf32> to vector<1x1x128xf32>
    %1345 = vector.broadcast %1344 : vector<1x1x128xf32> to vector<8x8x128xf32>
    %1346 = arith.mulf %1343, %1345 : vector<8x8x128xf32>
    %1347 = arith.addf %1340, %1346 : vector<8x8x128xf32>
    %c0_884 = arith.constant 0 : index
    %1348 = arith.index_cast %1305 : i32 to index
    %c2_885 = arith.constant 2 : index
    %c0_886 = arith.constant 0 : index
    %c0_887 = arith.constant 0 : index
    %1349 = vector.load %arg7[%c0_884, %1348, %c2_885, %c0_886, %c0_887] : memref<3x10x10x8x128xf32, #tpu.memory_space<vmem>>, vector<1x1x8x8x128xf32>
    %1350 = vector.shape_cast %1349 : vector<1x1x8x8x128xf32> to vector<8x8x128xf32>
    %1351 = vector.shape_cast %36 : vector<128xf32> to vector<1x1x128xf32>
    %1352 = vector.broadcast %1351 : vector<1x1x128xf32> to vector<8x8x128xf32>
    %1353 = arith.mulf %1350, %1352 : vector<8x8x128xf32>
    %1354 = arith.addf %1347, %1353 : vector<8x8x128xf32>
    %c1_888 = arith.constant 1 : index
    %1355 = arith.index_cast %1305 : i32 to index
    %c2_889 = arith.constant 2 : index
    %c0_890 = arith.constant 0 : index
    %c0_891 = arith.constant 0 : index
    %1356 = vector.load %arg7[%c1_888, %1355, %c2_889, %c0_890, %c0_891] : memref<3x10x10x8x128xf32, #tpu.memory_space<vmem>>, vector<1x1x8x8x128xf32>
    %1357 = vector.shape_cast %1356 : vector<1x1x8x8x128xf32> to vector<8x8x128xf32>
    %1358 = vector.shape_cast %38 : vector<128xf32> to vector<1x1x128xf32>
    %1359 = vector.broadcast %1358 : vector<1x1x128xf32> to vector<8x8x128xf32>
    %1360 = arith.mulf %1357, %1359 : vector<8x8x128xf32>
    %1361 = arith.addf %1354, %1360 : vector<8x8x128xf32>
    %c2_892 = arith.constant 2 : index
    %1362 = arith.index_cast %1305 : i32 to index
    %c2_893 = arith.constant 2 : index
    %c0_894 = arith.constant 0 : index
    %c0_895 = arith.constant 0 : index
    %1363 = vector.load %arg7[%c2_892, %1362, %c2_893, %c0_894, %c0_895] : memref<3x10x10x8x128xf32, #tpu.memory_space<vmem>>, vector<1x1x8x8x128xf32>
    %1364 = vector.shape_cast %1363 : vector<1x1x8x8x128xf32> to vector<8x8x128xf32>
    %1365 = vector.shape_cast %40 : vector<128xf32> to vector<1x1x128xf32>
    %1366 = vector.broadcast %1365 : vector<1x1x128xf32> to vector<8x8x128xf32>
    %1367 = arith.mulf %1364, %1366 : vector<8x8x128xf32>
    %1368 = arith.addf %1361, %1367 : vector<8x8x128xf32>
    %c8_i32_896 = arith.constant 8 : i32
    %1369 = arith.addi %59, %c8_i32_896 : i32
    %c0_897 = arith.constant 0 : index
    %1370 = arith.index_cast %1369 : i32 to index
    %c0_898 = arith.constant 0 : index
    %c0_899 = arith.constant 0 : index
    %c0_900 = arith.constant 0 : index
    %1371 = vector.load %arg7[%c0_897, %1370, %c0_898, %c0_899, %c0_900] : memref<3x10x10x8x128xf32, #tpu.memory_space<vmem>>, vector<1x1x8x8x128xf32>
    %1372 = vector.shape_cast %1371 : vector<1x1x8x8x128xf32> to vector<8x8x128xf32>
    %1373 = vector.shape_cast %42 : vector<128xf32> to vector<1x1x128xf32>
    %1374 = vector.broadcast %1373 : vector<1x1x128xf32> to vector<8x8x128xf32>
    %1375 = arith.mulf %1372, %1374 : vector<8x8x128xf32>
    %1376 = arith.addf %1368, %1375 : vector<8x8x128xf32>
    %c1_901 = arith.constant 1 : index
    %1377 = arith.index_cast %1369 : i32 to index
    %c0_902 = arith.constant 0 : index
    %c0_903 = arith.constant 0 : index
    %c0_904 = arith.constant 0 : index
    %1378 = vector.load %arg7[%c1_901, %1377, %c0_902, %c0_903, %c0_904] : memref<3x10x10x8x128xf32, #tpu.memory_space<vmem>>, vector<1x1x8x8x128xf32>
    %1379 = vector.shape_cast %1378 : vector<1x1x8x8x128xf32> to vector<8x8x128xf32>
    %1380 = vector.shape_cast %44 : vector<128xf32> to vector<1x1x128xf32>
    %1381 = vector.broadcast %1380 : vector<1x1x128xf32> to vector<8x8x128xf32>
    %1382 = arith.mulf %1379, %1381 : vector<8x8x128xf32>
    %1383 = arith.addf %1376, %1382 : vector<8x8x128xf32>
    %c2_905 = arith.constant 2 : index
    %1384 = arith.index_cast %1369 : i32 to index
    %c0_906 = arith.constant 0 : index
    %c0_907 = arith.constant 0 : index
    %c0_908 = arith.constant 0 : index
    %1385 = vector.load %arg7[%c2_905, %1384, %c0_906, %c0_907, %c0_908] : memref<3x10x10x8x128xf32, #tpu.memory_space<vmem>>, vector<1x1x8x8x128xf32>
    %1386 = vector.shape_cast %1385 : vector<1x1x8x8x128xf32> to vector<8x8x128xf32>
    %1387 = vector.shape_cast %46 : vector<128xf32> to vector<1x1x128xf32>
    %1388 = vector.broadcast %1387 : vector<1x1x128xf32> to vector<8x8x128xf32>
    %1389 = arith.mulf %1386, %1388 : vector<8x8x128xf32>
    %1390 = arith.addf %1383, %1389 : vector<8x8x128xf32>
    %c0_909 = arith.constant 0 : index
    %1391 = arith.index_cast %1369 : i32 to index
    %c1_910 = arith.constant 1 : index
    %c0_911 = arith.constant 0 : index
    %c0_912 = arith.constant 0 : index
    %1392 = vector.load %arg7[%c0_909, %1391, %c1_910, %c0_911, %c0_912] : memref<3x10x10x8x128xf32, #tpu.memory_space<vmem>>, vector<1x1x8x8x128xf32>
    %1393 = vector.shape_cast %1392 : vector<1x1x8x8x128xf32> to vector<8x8x128xf32>
    %1394 = vector.shape_cast %48 : vector<128xf32> to vector<1x1x128xf32>
    %1395 = vector.broadcast %1394 : vector<1x1x128xf32> to vector<8x8x128xf32>
    %1396 = arith.mulf %1393, %1395 : vector<8x8x128xf32>
    %1397 = arith.addf %1390, %1396 : vector<8x8x128xf32>
    %c1_913 = arith.constant 1 : index
    %1398 = arith.index_cast %1369 : i32 to index
    %c1_914 = arith.constant 1 : index
    %c0_915 = arith.constant 0 : index
    %c0_916 = arith.constant 0 : index
    %1399 = vector.load %arg7[%c1_913, %1398, %c1_914, %c0_915, %c0_916] : memref<3x10x10x8x128xf32, #tpu.memory_space<vmem>>, vector<1x1x8x8x128xf32>
    %1400 = vector.shape_cast %1399 : vector<1x1x8x8x128xf32> to vector<8x8x128xf32>
    %1401 = vector.shape_cast %50 : vector<128xf32> to vector<1x1x128xf32>
    %1402 = vector.broadcast %1401 : vector<1x1x128xf32> to vector<8x8x128xf32>
    %1403 = arith.mulf %1400, %1402 : vector<8x8x128xf32>
    %1404 = arith.addf %1397, %1403 : vector<8x8x128xf32>
    %c2_917 = arith.constant 2 : index
    %1405 = arith.index_cast %1369 : i32 to index
    %c1_918 = arith.constant 1 : index
    %c0_919 = arith.constant 0 : index
    %c0_920 = arith.constant 0 : index
    %1406 = vector.load %arg7[%c2_917, %1405, %c1_918, %c0_919, %c0_920] : memref<3x10x10x8x128xf32, #tpu.memory_space<vmem>>, vector<1x1x8x8x128xf32>
    %1407 = vector.shape_cast %1406 : vector<1x1x8x8x128xf32> to vector<8x8x128xf32>
    %1408 = vector.shape_cast %52 : vector<128xf32> to vector<1x1x128xf32>
    %1409 = vector.broadcast %1408 : vector<1x1x128xf32> to vector<8x8x128xf32>
    %1410 = arith.mulf %1407, %1409 : vector<8x8x128xf32>
    %1411 = arith.addf %1404, %1410 : vector<8x8x128xf32>
    %c0_921 = arith.constant 0 : index
    %1412 = arith.index_cast %1369 : i32 to index
    %c2_922 = arith.constant 2 : index
    %c0_923 = arith.constant 0 : index
    %c0_924 = arith.constant 0 : index
    %1413 = vector.load %arg7[%c0_921, %1412, %c2_922, %c0_923, %c0_924] : memref<3x10x10x8x128xf32, #tpu.memory_space<vmem>>, vector<1x1x8x8x128xf32>
    %1414 = vector.shape_cast %1413 : vector<1x1x8x8x128xf32> to vector<8x8x128xf32>
    %1415 = vector.shape_cast %54 : vector<128xf32> to vector<1x1x128xf32>
    %1416 = vector.broadcast %1415 : vector<1x1x128xf32> to vector<8x8x128xf32>
    %1417 = arith.mulf %1414, %1416 : vector<8x8x128xf32>
    %1418 = arith.addf %1411, %1417 : vector<8x8x128xf32>
    %c1_925 = arith.constant 1 : index
    %1419 = arith.index_cast %1369 : i32 to index
    %c2_926 = arith.constant 2 : index
    %c0_927 = arith.constant 0 : index
    %c0_928 = arith.constant 0 : index
    %1420 = vector.load %arg7[%c1_925, %1419, %c2_926, %c0_927, %c0_928] : memref<3x10x10x8x128xf32, #tpu.memory_space<vmem>>, vector<1x1x8x8x128xf32>
    %1421 = vector.shape_cast %1420 : vector<1x1x8x8x128xf32> to vector<8x8x128xf32>
    %1422 = vector.shape_cast %56 : vector<128xf32> to vector<1x1x128xf32>
    %1423 = vector.broadcast %1422 : vector<1x1x128xf32> to vector<8x8x128xf32>
    %1424 = arith.mulf %1421, %1423 : vector<8x8x128xf32>
    %1425 = arith.addf %1418, %1424 : vector<8x8x128xf32>
    %c2_929 = arith.constant 2 : index
    %1426 = arith.index_cast %1369 : i32 to index
    %c2_930 = arith.constant 2 : index
    %c0_931 = arith.constant 0 : index
    %c0_932 = arith.constant 0 : index
    %1427 = vector.load %arg7[%c2_929, %1426, %c2_930, %c0_931, %c0_932] : memref<3x10x10x8x128xf32, #tpu.memory_space<vmem>>, vector<1x1x8x8x128xf32>
    %1428 = vector.shape_cast %1427 : vector<1x1x8x8x128xf32> to vector<8x8x128xf32>
    %1429 = vector.shape_cast %58 : vector<128xf32> to vector<1x1x128xf32>
    %1430 = vector.broadcast %1429 : vector<1x1x128xf32> to vector<8x8x128xf32>
    %1431 = arith.mulf %1428, %1430 : vector<8x8x128xf32>
    %1432 = arith.addf %1425, %1431 : vector<8x8x128xf32>
    %1433 = vector.shape_cast %4 : vector<128xf32> to vector<1x1x128xf32>
    %1434 = vector.broadcast %1433 : vector<1x1x128xf32> to vector<8x8x128xf32>
    %1435 = arith.addf %1432, %1434 : vector<8x8x128xf32>
    %c0_933 = arith.constant 0 : index
    %c6 = arith.constant 6 : index
    %c0_934 = arith.constant 0 : index
    %c0_935 = arith.constant 0 : index
    %c0_936 = arith.constant 0 : index
    %1436 = vector.load %arg5[%c0_933, %c6, %c0_934, %c0_935, %c0_936] : memref<1x8x8x8x128xf32, #tpu.memory_space<vmem>>, vector<1x1x8x8x128xf32>
    %1437 = vector.shape_cast %1436 : vector<1x1x8x8x128xf32> to vector<8x8x128xf32>
    %1438 = vector.shape_cast %1435 : vector<8x8x128xf32> to vector<1x1x8x8x128xf32>
    tpu.vector_store %arg5[%c0_933, %c6, %c0_934, %c0_935, %c0_936], %1438 {strides = array<i32>} : memref<1x8x8x8x128xf32, #tpu.memory_space<vmem>>, vector<1x1x8x8x128xf32>,
    %c7_i32_937 = arith.constant 7 : i32
    %1439 = arith.addi %59, %c7_i32_937 : i32
    %c0_938 = arith.constant 0 : index
    %1440 = arith.index_cast %1439 : i32 to index
    %c0_939 = arith.constant 0 : index
    %c0_940 = arith.constant 0 : index
    %c0_941 = arith.constant 0 : index
    %1441 = vector.load %arg7[%c0_938, %1440, %c0_939, %c0_940, %c0_941] : memref<3x10x10x8x128xf32, #tpu.memory_space<vmem>>, vector<1x1x8x8x128xf32>
    %1442 = vector.shape_cast %1441 : vector<1x1x8x8x128xf32> to vector<8x8x128xf32>
    %1443 = vector.shape_cast %6 : vector<128xf32> to vector<1x1x128xf32>
    %1444 = vector.broadcast %1443 : vector<1x1x128xf32> to vector<8x8x128xf32>
    %1445 = arith.mulf %1442, %1444 : vector<8x8x128xf32>
    %c1_942 = arith.constant 1 : index
    %1446 = arith.index_cast %1439 : i32 to index
    %c0_943 = arith.constant 0 : index
    %c0_944 = arith.constant 0 : index
    %c0_945 = arith.constant 0 : index
    %1447 = vector.load %arg7[%c1_942, %1446, %c0_943, %c0_944, %c0_945] : memref<3x10x10x8x128xf32, #tpu.memory_space<vmem>>, vector<1x1x8x8x128xf32>
    %1448 = vector.shape_cast %1447 : vector<1x1x8x8x128xf32> to vector<8x8x128xf32>
    %1449 = vector.shape_cast %8 : vector<128xf32> to vector<1x1x128xf32>
    %1450 = vector.broadcast %1449 : vector<1x1x128xf32> to vector<8x8x128xf32>
    %1451 = arith.mulf %1448, %1450 : vector<8x8x128xf32>
    %1452 = arith.addf %1445, %1451 : vector<8x8x128xf32>
    %c2_946 = arith.constant 2 : index
    %1453 = arith.index_cast %1439 : i32 to index
    %c0_947 = arith.constant 0 : index
    %c0_948 = arith.constant 0 : index
    %c0_949 = arith.constant 0 : index
    %1454 = vector.load %arg7[%c2_946, %1453, %c0_947, %c0_948, %c0_949] : memref<3x10x10x8x128xf32, #tpu.memory_space<vmem>>, vector<1x1x8x8x128xf32>
    %1455 = vector.shape_cast %1454 : vector<1x1x8x8x128xf32> to vector<8x8x128xf32>
    %1456 = vector.shape_cast %10 : vector<128xf32> to vector<1x1x128xf32>
    %1457 = vector.broadcast %1456 : vector<1x1x128xf32> to vector<8x8x128xf32>
    %1458 = arith.mulf %1455, %1457 : vector<8x8x128xf32>
    %1459 = arith.addf %1452, %1458 : vector<8x8x128xf32>
    %c0_950 = arith.constant 0 : index
    %1460 = arith.index_cast %1439 : i32 to index
    %c1_951 = arith.constant 1 : index
    %c0_952 = arith.constant 0 : index
    %c0_953 = arith.constant 0 : index
    %1461 = vector.load %arg7[%c0_950, %1460, %c1_951, %c0_952, %c0_953] : memref<3x10x10x8x128xf32, #tpu.memory_space<vmem>>, vector<1x1x8x8x128xf32>
    %1462 = vector.shape_cast %1461 : vector<1x1x8x8x128xf32> to vector<8x8x128xf32>
    %1463 = vector.shape_cast %12 : vector<128xf32> to vector<1x1x128xf32>
    %1464 = vector.broadcast %1463 : vector<1x1x128xf32> to vector<8x8x128xf32>
    %1465 = arith.mulf %1462, %1464 : vector<8x8x128xf32>
    %1466 = arith.addf %1459, %1465 : vector<8x8x128xf32>
    %c1_954 = arith.constant 1 : index
    %1467 = arith.index_cast %1439 : i32 to index
    %c1_955 = arith.constant 1 : index
    %c0_956 = arith.constant 0 : index
    %c0_957 = arith.constant 0 : index
    %1468 = vector.load %arg7[%c1_954, %1467, %c1_955, %c0_956, %c0_957] : memref<3x10x10x8x128xf32, #tpu.memory_space<vmem>>, vector<1x1x8x8x128xf32>
    %1469 = vector.shape_cast %1468 : vector<1x1x8x8x128xf32> to vector<8x8x128xf32>
    %1470 = vector.shape_cast %14 : vector<128xf32> to vector<1x1x128xf32>
    %1471 = vector.broadcast %1470 : vector<1x1x128xf32> to vector<8x8x128xf32>
    %1472 = arith.mulf %1469, %1471 : vector<8x8x128xf32>
    %1473 = arith.addf %1466, %1472 : vector<8x8x128xf32>
    %c2_958 = arith.constant 2 : index
    %1474 = arith.index_cast %1439 : i32 to index
    %c1_959 = arith.constant 1 : index
    %c0_960 = arith.constant 0 : index
    %c0_961 = arith.constant 0 : index
    %1475 = vector.load %arg7[%c2_958, %1474, %c1_959, %c0_960, %c0_961] : memref<3x10x10x8x128xf32, #tpu.memory_space<vmem>>, vector<1x1x8x8x128xf32>
    %1476 = vector.shape_cast %1475 : vector<1x1x8x8x128xf32> to vector<8x8x128xf32>
    %1477 = vector.shape_cast %16 : vector<128xf32> to vector<1x1x128xf32>
    %1478 = vector.broadcast %1477 : vector<1x1x128xf32> to vector<8x8x128xf32>
    %1479 = arith.mulf %1476, %1478 : vector<8x8x128xf32>
    %1480 = arith.addf %1473, %1479 : vector<8x8x128xf32>
    %c0_962 = arith.constant 0 : index
    %1481 = arith.index_cast %1439 : i32 to index
    %c2_963 = arith.constant 2 : index
    %c0_964 = arith.constant 0 : index
    %c0_965 = arith.constant 0 : index
    %1482 = vector.load %arg7[%c0_962, %1481, %c2_963, %c0_964, %c0_965] : memref<3x10x10x8x128xf32, #tpu.memory_space<vmem>>, vector<1x1x8x8x128xf32>
    %1483 = vector.shape_cast %1482 : vector<1x1x8x8x128xf32> to vector<8x8x128xf32>
    %1484 = vector.shape_cast %18 : vector<128xf32> to vector<1x1x128xf32>
    %1485 = vector.broadcast %1484 : vector<1x1x128xf32> to vector<8x8x128xf32>
    %1486 = arith.mulf %1483, %1485 : vector<8x8x128xf32>
    %1487 = arith.addf %1480, %1486 : vector<8x8x128xf32>
    %c1_966 = arith.constant 1 : index
    %1488 = arith.index_cast %1439 : i32 to index
    %c2_967 = arith.constant 2 : index
    %c0_968 = arith.constant 0 : index
    %c0_969 = arith.constant 0 : index
    %1489 = vector.load %arg7[%c1_966, %1488, %c2_967, %c0_968, %c0_969] : memref<3x10x10x8x128xf32, #tpu.memory_space<vmem>>, vector<1x1x8x8x128xf32>
    %1490 = vector.shape_cast %1489 : vector<1x1x8x8x128xf32> to vector<8x8x128xf32>
    %1491 = vector.shape_cast %20 : vector<128xf32> to vector<1x1x128xf32>
    %1492 = vector.broadcast %1491 : vector<1x1x128xf32> to vector<8x8x128xf32>
    %1493 = arith.mulf %1490, %1492 : vector<8x8x128xf32>
    %1494 = arith.addf %1487, %1493 : vector<8x8x128xf32>
    %c2_970 = arith.constant 2 : index
    %1495 = arith.index_cast %1439 : i32 to index
    %c2_971 = arith.constant 2 : index
    %c0_972 = arith.constant 0 : index
    %c0_973 = arith.constant 0 : index
    %1496 = vector.load %arg7[%c2_970, %1495, %c2_971, %c0_972, %c0_973] : memref<3x10x10x8x128xf32, #tpu.memory_space<vmem>>, vector<1x1x8x8x128xf32>
    %1497 = vector.shape_cast %1496 : vector<1x1x8x8x128xf32> to vector<8x8x128xf32>
    %1498 = vector.shape_cast %22 : vector<128xf32> to vector<1x1x128xf32>
    %1499 = vector.broadcast %1498 : vector<1x1x128xf32> to vector<8x8x128xf32>
    %1500 = arith.mulf %1497, %1499 : vector<8x8x128xf32>
    %1501 = arith.addf %1494, %1500 : vector<8x8x128xf32>
    %c8_i32_974 = arith.constant 8 : i32
    %1502 = arith.addi %59, %c8_i32_974 : i32
    %c0_975 = arith.constant 0 : index
    %1503 = arith.index_cast %1502 : i32 to index
    %c0_976 = arith.constant 0 : index
    %c0_977 = arith.constant 0 : index
    %c0_978 = arith.constant 0 : index
    %1504 = vector.load %arg7[%c0_975, %1503, %c0_976, %c0_977, %c0_978] : memref<3x10x10x8x128xf32, #tpu.memory_space<vmem>>, vector<1x1x8x8x128xf32>
    %1505 = vector.shape_cast %1504 : vector<1x1x8x8x128xf32> to vector<8x8x128xf32>
    %1506 = vector.shape_cast %24 : vector<128xf32> to vector<1x1x128xf32>
    %1507 = vector.broadcast %1506 : vector<1x1x128xf32> to vector<8x8x128xf32>
    %1508 = arith.mulf %1505, %1507 : vector<8x8x128xf32>
    %1509 = arith.addf %1501, %1508 : vector<8x8x128xf32>
    %c1_979 = arith.constant 1 : index
    %1510 = arith.index_cast %1502 : i32 to index
    %c0_980 = arith.constant 0 : index
    %c0_981 = arith.constant 0 : index
    %c0_982 = arith.constant 0 : index
    %1511 = vector.load %arg7[%c1_979, %1510, %c0_980, %c0_981, %c0_982] : memref<3x10x10x8x128xf32, #tpu.memory_space<vmem>>, vector<1x1x8x8x128xf32>
    %1512 = vector.shape_cast %1511 : vector<1x1x8x8x128xf32> to vector<8x8x128xf32>
    %1513 = vector.shape_cast %26 : vector<128xf32> to vector<1x1x128xf32>
    %1514 = vector.broadcast %1513 : vector<1x1x128xf32> to vector<8x8x128xf32>
    %1515 = arith.mulf %1512, %1514 : vector<8x8x128xf32>
    %1516 = arith.addf %1509, %1515 : vector<8x8x128xf32>
    %c2_983 = arith.constant 2 : index
    %1517 = arith.index_cast %1502 : i32 to index
    %c0_984 = arith.constant 0 : index
    %c0_985 = arith.constant 0 : index
    %c0_986 = arith.constant 0 : index
    %1518 = vector.load %arg7[%c2_983, %1517, %c0_984, %c0_985, %c0_986] : memref<3x10x10x8x128xf32, #tpu.memory_space<vmem>>, vector<1x1x8x8x128xf32>
    %1519 = vector.shape_cast %1518 : vector<1x1x8x8x128xf32> to vector<8x8x128xf32>
    %1520 = vector.shape_cast %28 : vector<128xf32> to vector<1x1x128xf32>
    %1521 = vector.broadcast %1520 : vector<1x1x128xf32> to vector<8x8x128xf32>
    %1522 = arith.mulf %1519, %1521 : vector<8x8x128xf32>
    %1523 = arith.addf %1516, %1522 : vector<8x8x128xf32>
    %c0_987 = arith.constant 0 : index
    %1524 = arith.index_cast %1502 : i32 to index
    %c1_988 = arith.constant 1 : index
    %c0_989 = arith.constant 0 : index
    %c0_990 = arith.constant 0 : index
    %1525 = vector.load %arg7[%c0_987, %1524, %c1_988, %c0_989, %c0_990] : memref<3x10x10x8x128xf32, #tpu.memory_space<vmem>>, vector<1x1x8x8x128xf32>
    %1526 = vector.shape_cast %1525 : vector<1x1x8x8x128xf32> to vector<8x8x128xf32>
    %1527 = vector.shape_cast %30 : vector<128xf32> to vector<1x1x128xf32>
    %1528 = vector.broadcast %1527 : vector<1x1x128xf32> to vector<8x8x128xf32>
    %1529 = arith.mulf %1526, %1528 : vector<8x8x128xf32>
    %1530 = arith.addf %1523, %1529 : vector<8x8x128xf32>
    %c1_991 = arith.constant 1 : index
    %1531 = arith.index_cast %1502 : i32 to index
    %c1_992 = arith.constant 1 : index
    %c0_993 = arith.constant 0 : index
    %c0_994 = arith.constant 0 : index
    %1532 = vector.load %arg7[%c1_991, %1531, %c1_992, %c0_993, %c0_994] : memref<3x10x10x8x128xf32, #tpu.memory_space<vmem>>, vector<1x1x8x8x128xf32>
    %1533 = vector.shape_cast %1532 : vector<1x1x8x8x128xf32> to vector<8x8x128xf32>
    %1534 = vector.shape_cast %32 : vector<128xf32> to vector<1x1x128xf32>
    %1535 = vector.broadcast %1534 : vector<1x1x128xf32> to vector<8x8x128xf32>
    %1536 = arith.mulf %1533, %1535 : vector<8x8x128xf32>
    %1537 = arith.addf %1530, %1536 : vector<8x8x128xf32>
    %c2_995 = arith.constant 2 : index
    %1538 = arith.index_cast %1502 : i32 to index
    %c1_996 = arith.constant 1 : index
    %c0_997 = arith.constant 0 : index
    %c0_998 = arith.constant 0 : index
    %1539 = vector.load %arg7[%c2_995, %1538, %c1_996, %c0_997, %c0_998] : memref<3x10x10x8x128xf32, #tpu.memory_space<vmem>>, vector<1x1x8x8x128xf32>
    %1540 = vector.shape_cast %1539 : vector<1x1x8x8x128xf32> to vector<8x8x128xf32>
    %1541 = vector.shape_cast %34 : vector<128xf32> to vector<1x1x128xf32>
    %1542 = vector.broadcast %1541 : vector<1x1x128xf32> to vector<8x8x128xf32>
    %1543 = arith.mulf %1540, %1542 : vector<8x8x128xf32>
    %1544 = arith.addf %1537, %1543 : vector<8x8x128xf32>
    %c0_999 = arith.constant 0 : index
    %1545 = arith.index_cast %1502 : i32 to index
    %c2_1000 = arith.constant 2 : index
    %c0_1001 = arith.constant 0 : index
    %c0_1002 = arith.constant 0 : index
    %1546 = vector.load %arg7[%c0_999, %1545, %c2_1000, %c0_1001, %c0_1002] : memref<3x10x10x8x128xf32, #tpu.memory_space<vmem>>, vector<1x1x8x8x128xf32>
    %1547 = vector.shape_cast %1546 : vector<1x1x8x8x128xf32> to vector<8x8x128xf32>
    %1548 = vector.shape_cast %36 : vector<128xf32> to vector<1x1x128xf32>
    %1549 = vector.broadcast %1548 : vector<1x1x128xf32> to vector<8x8x128xf32>
    %1550 = arith.mulf %1547, %1549 : vector<8x8x128xf32>
    %1551 = arith.addf %1544, %1550 : vector<8x8x128xf32>
    %c1_1003 = arith.constant 1 : index
    %1552 = arith.index_cast %1502 : i32 to index
    %c2_1004 = arith.constant 2 : index
    %c0_1005 = arith.constant 0 : index
    %c0_1006 = arith.constant 0 : index
    %1553 = vector.load %arg7[%c1_1003, %1552, %c2_1004, %c0_1005, %c0_1006] : memref<3x10x10x8x128xf32, #tpu.memory_space<vmem>>, vector<1x1x8x8x128xf32>
    %1554 = vector.shape_cast %1553 : vector<1x1x8x8x128xf32> to vector<8x8x128xf32>
    %1555 = vector.shape_cast %38 : vector<128xf32> to vector<1x1x128xf32>
    %1556 = vector.broadcast %1555 : vector<1x1x128xf32> to vector<8x8x128xf32>
    %1557 = arith.mulf %1554, %1556 : vector<8x8x128xf32>
    %1558 = arith.addf %1551, %1557 : vector<8x8x128xf32>
    %c2_1007 = arith.constant 2 : index
    %1559 = arith.index_cast %1502 : i32 to index
    %c2_1008 = arith.constant 2 : index
    %c0_1009 = arith.constant 0 : index
    %c0_1010 = arith.constant 0 : index
    %1560 = vector.load %arg7[%c2_1007, %1559, %c2_1008, %c0_1009, %c0_1010] : memref<3x10x10x8x128xf32, #tpu.memory_space<vmem>>, vector<1x1x8x8x128xf32>
    %1561 = vector.shape_cast %1560 : vector<1x1x8x8x128xf32> to vector<8x8x128xf32>
    %1562 = vector.shape_cast %40 : vector<128xf32> to vector<1x1x128xf32>
    %1563 = vector.broadcast %1562 : vector<1x1x128xf32> to vector<8x8x128xf32>
    %1564 = arith.mulf %1561, %1563 : vector<8x8x128xf32>
    %1565 = arith.addf %1558, %1564 : vector<8x8x128xf32>
    %c9_i32 = arith.constant 9 : i32
    %1566 = arith.addi %59, %c9_i32 : i32
    %c0_1011 = arith.constant 0 : index
    %1567 = arith.index_cast %1566 : i32 to index
    %c0_1012 = arith.constant 0 : index
    %c0_1013 = arith.constant 0 : index
    %c0_1014 = arith.constant 0 : index
    %1568 = vector.load %arg7[%c0_1011, %1567, %c0_1012, %c0_1013, %c0_1014] : memref<3x10x10x8x128xf32, #tpu.memory_space<vmem>>, vector<1x1x8x8x128xf32>
    %1569 = vector.shape_cast %1568 : vector<1x1x8x8x128xf32> to vector<8x8x128xf32>
    %1570 = vector.shape_cast %42 : vector<128xf32> to vector<1x1x128xf32>
    %1571 = vector.broadcast %1570 : vector<1x1x128xf32> to vector<8x8x128xf32>
    %1572 = arith.mulf %1569, %1571 : vector<8x8x128xf32>
    %1573 = arith.addf %1565, %1572 : vector<8x8x128xf32>
    %c1_1015 = arith.constant 1 : index
    %1574 = arith.index_cast %1566 : i32 to index
    %c0_1016 = arith.constant 0 : index
    %c0_1017 = arith.constant 0 : index
    %c0_1018 = arith.constant 0 : index
    %1575 = vector.load %arg7[%c1_1015, %1574, %c0_1016, %c0_1017, %c0_1018] : memref<3x10x10x8x128xf32, #tpu.memory_space<vmem>>, vector<1x1x8x8x128xf32>
    %1576 = vector.shape_cast %1575 : vector<1x1x8x8x128xf32> to vector<8x8x128xf32>
    %1577 = vector.shape_cast %44 : vector<128xf32> to vector<1x1x128xf32>
    %1578 = vector.broadcast %1577 : vector<1x1x128xf32> to vector<8x8x128xf32>
    %1579 = arith.mulf %1576, %1578 : vector<8x8x128xf32>
    %1580 = arith.addf %1573, %1579 : vector<8x8x128xf32>
    %c2_1019 = arith.constant 2 : index
    %1581 = arith.index_cast %1566 : i32 to index
    %c0_1020 = arith.constant 0 : index
    %c0_1021 = arith.constant 0 : index
    %c0_1022 = arith.constant 0 : index
    %1582 = vector.load %arg7[%c2_1019, %1581, %c0_1020, %c0_1021, %c0_1022] : memref<3x10x10x8x128xf32, #tpu.memory_space<vmem>>, vector<1x1x8x8x128xf32>
    %1583 = vector.shape_cast %1582 : vector<1x1x8x8x128xf32> to vector<8x8x128xf32>
    %1584 = vector.shape_cast %46 : vector<128xf32> to vector<1x1x128xf32>
    %1585 = vector.broadcast %1584 : vector<1x1x128xf32> to vector<8x8x128xf32>
    %1586 = arith.mulf %1583, %1585 : vector<8x8x128xf32>
    %1587 = arith.addf %1580, %1586 : vector<8x8x128xf32>
    %c0_1023 = arith.constant 0 : index
    %1588 = arith.index_cast %1566 : i32 to index
    %c1_1024 = arith.constant 1 : index
    %c0_1025 = arith.constant 0 : index
    %c0_1026 = arith.constant 0 : index
    %1589 = vector.load %arg7[%c0_1023, %1588, %c1_1024, %c0_1025, %c0_1026] : memref<3x10x10x8x128xf32, #tpu.memory_space<vmem>>, vector<1x1x8x8x128xf32>
    %1590 = vector.shape_cast %1589 : vector<1x1x8x8x128xf32> to vector<8x8x128xf32>
    %1591 = vector.shape_cast %48 : vector<128xf32> to vector<1x1x128xf32>
    %1592 = vector.broadcast %1591 : vector<1x1x128xf32> to vector<8x8x128xf32>
    %1593 = arith.mulf %1590, %1592 : vector<8x8x128xf32>
    %1594 = arith.addf %1587, %1593 : vector<8x8x128xf32>
    %c1_1027 = arith.constant 1 : index
    %1595 = arith.index_cast %1566 : i32 to index
    %c1_1028 = arith.constant 1 : index
    %c0_1029 = arith.constant 0 : index
    %c0_1030 = arith.constant 0 : index
    %1596 = vector.load %arg7[%c1_1027, %1595, %c1_1028, %c0_1029, %c0_1030] : memref<3x10x10x8x128xf32, #tpu.memory_space<vmem>>, vector<1x1x8x8x128xf32>
    %1597 = vector.shape_cast %1596 : vector<1x1x8x8x128xf32> to vector<8x8x128xf32>
    %1598 = vector.shape_cast %50 : vector<128xf32> to vector<1x1x128xf32>
    %1599 = vector.broadcast %1598 : vector<1x1x128xf32> to vector<8x8x128xf32>
    %1600 = arith.mulf %1597, %1599 : vector<8x8x128xf32>
    %1601 = arith.addf %1594, %1600 : vector<8x8x128xf32>
    %c2_1031 = arith.constant 2 : index
    %1602 = arith.index_cast %1566 : i32 to index
    %c1_1032 = arith.constant 1 : index
    %c0_1033 = arith.constant 0 : index
    %c0_1034 = arith.constant 0 : index
    %1603 = vector.load %arg7[%c2_1031, %1602, %c1_1032, %c0_1033, %c0_1034] : memref<3x10x10x8x128xf32, #tpu.memory_space<vmem>>, vector<1x1x8x8x128xf32>
    %1604 = vector.shape_cast %1603 : vector<1x1x8x8x128xf32> to vector<8x8x128xf32>
    %1605 = vector.shape_cast %52 : vector<128xf32> to vector<1x1x128xf32>
    %1606 = vector.broadcast %1605 : vector<1x1x128xf32> to vector<8x8x128xf32>
    %1607 = arith.mulf %1604, %1606 : vector<8x8x128xf32>
    %1608 = arith.addf %1601, %1607 : vector<8x8x128xf32>
    %c0_1035 = arith.constant 0 : index
    %1609 = arith.index_cast %1566 : i32 to index
    %c2_1036 = arith.constant 2 : index
    %c0_1037 = arith.constant 0 : index
    %c0_1038 = arith.constant 0 : index
    %1610 = vector.load %arg7[%c0_1035, %1609, %c2_1036, %c0_1037, %c0_1038] : memref<3x10x10x8x128xf32, #tpu.memory_space<vmem>>, vector<1x1x8x8x128xf32>
    %1611 = vector.shape_cast %1610 : vector<1x1x8x8x128xf32> to vector<8x8x128xf32>
    %1612 = vector.shape_cast %54 : vector<128xf32> to vector<1x1x128xf32>
    %1613 = vector.broadcast %1612 : vector<1x1x128xf32> to vector<8x8x128xf32>
    %1614 = arith.mulf %1611, %1613 : vector<8x8x128xf32>
    %1615 = arith.addf %1608, %1614 : vector<8x8x128xf32>
    %c1_1039 = arith.constant 1 : index
    %1616 = arith.index_cast %1566 : i32 to index
    %c2_1040 = arith.constant 2 : index
    %c0_1041 = arith.constant 0 : index
    %c0_1042 = arith.constant 0 : index
    %1617 = vector.load %arg7[%c1_1039, %1616, %c2_1040, %c0_1041, %c0_1042] : memref<3x10x10x8x128xf32, #tpu.memory_space<vmem>>, vector<1x1x8x8x128xf32>
    %1618 = vector.shape_cast %1617 : vector<1x1x8x8x128xf32> to vector<8x8x128xf32>
    %1619 = vector.shape_cast %56 : vector<128xf32> to vector<1x1x128xf32>
    %1620 = vector.broadcast %1619 : vector<1x1x128xf32> to vector<8x8x128xf32>
    %1621 = arith.mulf %1618, %1620 : vector<8x8x128xf32>
    %1622 = arith.addf %1615, %1621 : vector<8x8x128xf32>
    %c2_1043 = arith.constant 2 : index
    %1623 = arith.index_cast %1566 : i32 to index
    %c2_1044 = arith.constant 2 : index
    %c0_1045 = arith.constant 0 : index
    %c0_1046 = arith.constant 0 : index
    %1624 = vector.load %arg7[%c2_1043, %1623, %c2_1044, %c0_1045, %c0_1046] : memref<3x10x10x8x128xf32, #tpu.memory_space<vmem>>, vector<1x1x8x8x128xf32>
    %1625 = vector.shape_cast %1624 : vector<1x1x8x8x128xf32> to vector<8x8x128xf32>
    %1626 = vector.shape_cast %58 : vector<128xf32> to vector<1x1x128xf32>
    %1627 = vector.broadcast %1626 : vector<1x1x128xf32> to vector<8x8x128xf32>
    %1628 = arith.mulf %1625, %1627 : vector<8x8x128xf32>
    %1629 = arith.addf %1622, %1628 : vector<8x8x128xf32>
    %1630 = vector.shape_cast %4 : vector<128xf32> to vector<1x1x128xf32>
    %1631 = vector.broadcast %1630 : vector<1x1x128xf32> to vector<8x8x128xf32>
    %1632 = arith.addf %1629, %1631 : vector<8x8x128xf32>
    %c0_1047 = arith.constant 0 : index
    %c7 = arith.constant 7 : index
    %c0_1048 = arith.constant 0 : index
    %c0_1049 = arith.constant 0 : index
    %c0_1050 = arith.constant 0 : index
    %1633 = vector.load %arg5[%c0_1047, %c7, %c0_1048, %c0_1049, %c0_1050] : memref<1x8x8x8x128xf32, #tpu.memory_space<vmem>>, vector<1x1x8x8x128xf32>
    %1634 = vector.shape_cast %1633 : vector<1x1x8x8x128xf32> to vector<8x8x128xf32>
    %1635 = vector.shape_cast %1632 : vector<8x8x128xf32> to vector<1x1x8x8x128xf32>
    tpu.vector_store %arg5[%c0_1047, %c7, %c0_1048, %c0_1049, %c0_1050], %1635 {strides = array<i32>} : memref<1x8x8x8x128xf32, #tpu.memory_space<vmem>>, vector<1x1x8x8x128xf32>,
    return
  }
  func.func @transform_1(%arg0: i32, %arg1: i32) -> (i32, i32, i32, i32, i32) {
    %c0_i32 = arith.constant 0 : i32
    %c0_i32_0 = arith.constant 0 : i32
    %c0_i32_1 = arith.constant 0 : i32
    %c0_i32_2 = arith.constant 0 : i32
    %c0_i32_3 = arith.constant 0 : i32
    return %arg0, %c0_i32, %c0_i32_0, %c0_i32_1, %c0_i32_2 : i32, i32, i32, i32, i32
  }
  func.func @transform_2(%arg0: i32, %arg1: i32) -> (i32, i32, i32) {
    %c0_i32 = arith.constant 0 : i32
    %c0_i32_0 = arith.constant 0 : i32
    %c0_i32_1 = arith.constant 0 : i32
    return %arg0, %c0_i32, %c0_i32_0 : i32, i32, i32
  }
  func.func @transform_3(%arg0: i32, %arg1: i32) -> (i32, i32, i32, i32, i32) {
    %c0_i32 = arith.constant 0 : i32
    %c0_i32_0 = arith.constant 0 : i32
    %c0_i32_1 = arith.constant 0 : i32
    %c0_i32_2 = arith.constant 0 : i32
    return %arg0, %arg1, %c0_i32, %c0_i32_0, %c0_i32_1 : i32, i32, i32, i32, i32
  }
}

</mosaic_0001>

<llo_original>
// kernel: tpu_custom_call.1
$region0: #{tpu_custom_call.1}
  #allocation0 [shape = 'u32[]', space=smem, size = 0x4, offset = 0x4, fixed_abs, tag = 'smem constant byte address 0x4 - core index']
  #allocation1 [shape = 'u32[144,128]{1,0:T(1,128)}', space=vmem, size = 0x12000, scoped, tag = 'internal scratch']
  #allocation2 [shape = 'f32[10,10,10,128]{3,2,1,0:T(8,128)}', space=vmem, size = 0xc8000, scoped, tag = 'scratch operand']
  #allocation3 [shape = 'f32[3,10,10,8,128]{4,3,2,1,0:T(8,128)}', space=vmem, size = 0x12c000, scoped, tag = 'scratch operand']
  #allocation4 [shape = 's32[1]{0}', space=sflag, size = 0x4, scoped, tag = 'scratch operand']
  #allocation7 [shape = 's32[]', space=sflag, size = 0x4, offset = 0, fixed_abs, tag = 'sflag constant byte address 0x0 - dummy sync flag']
  %s0 = inlined_call_operand.vmem [shape: f32[1,8,10,10,128], index: 0, kind: input, shape index: {}]
  %s1 = inlined_call_operand.vmem [shape: f32[1,3,3,3,128], index: 1, kind: input, shape index: {}]
  %s2 = inlined_call_operand.vmem [shape: f32[1,1,128], index: 2, kind: input, shape index: {}]
  %s3 = inlined_call_operand.hbm [shape: f32[1,8,8,8,128], index: 3, kind: output, shape index: {}]
  %s4 = sld [smem:[#allocation0]]
  $region66: #{tpu_custom_call.1} parent=0
    _
  %s6 = ssub.s32 1, %s4
  %s7 = scalar_select 0, %s6, %s4
  $region1: #{tpu_custom_call.1} parent=0
    #allocation5 [shape = 'u8[262144]{0}', space=vmem, size = 0x40000, scoped, tag = 'output window, operand 0, single buffered']
    #allocation6 [shape = 's32[1]{0}', space=sflag, size = 0x4, scoped, tag = 'scoped memory for tpu_custom_call.1']
    %8 = vsyncpa [#allocation6], 0
    // Predicated region
    $region2: #{tpu_custom_call.1} parent=1 // pred_check
      _
    $region3: #{tpu_custom_call.1} parent=1 // pred_check_branch
      %10 = sbr.rel (0) target = $region5
    $region4: #{tpu_custom_call.1} parent=1 // pred_region
      _
    $region5: #{tpu_custom_call.1} parent=1 // pred_fallthru
      _
    // Predicated region
    $region6: #{tpu_custom_call.1} parent=1 // pred_check
      _
    $region7: #{tpu_custom_call.1} parent=1 // pred_check_branch
      %12 = sbr.rel (0) target = $region9
    $region8: #{tpu_custom_call.1} parent=1 // pred_region
      _
    $region9: #{tpu_custom_call.1} parent=1 // pred_fallthru
      _
    %p13 = scmp.eq.s32.totalorder 0, 0
    // Predicated region
    $region10: #{tpu_custom_call.1} parent=1 // pred_check
      %p14 = pneg %p13
    $region11: #{tpu_custom_call.1} parent=1 // pred_check_branch
      %16 = sbr.rel (%p14) target = $region13
    $region12: #{tpu_custom_call.1} parent=1 // pred_region
      %17 = vst [vmem:[#allocation2] sm:$0xff] 0.0
      %18 = vst [vmem:[#allocation2 + $0x8] sm:$0x3] 0.0
      %19 = vst [vmem:[#allocation2 + $0x10] sm:$0xff] 0.0
      %20 = vst [vmem:[#allocation2 + $0x18] sm:$0x3] 0.0
      %21 = vst [vmem:[#allocation2 + $0x20] sm:$0xff] 0.0
      %22 = vst [vmem:[#allocation2 + $0x28] sm:$0x3] 0.0
      %23 = vst [vmem:[#allocation2 + $0x30] sm:$0xff] 0.0
      %24 = vst [vmem:[#allocation2 + $0x38] sm:$0x3] 0.0
      %25 = vst [vmem:[#allocation2 + $0x40] sm:$0xff] 0.0
      %26 = vst [vmem:[#allocation2 + $0x48] sm:$0x3] 0.0
      %27 = vst [vmem:[#allocation2 + $0x50] sm:$0xff] 0.0
      %28 = vst [vmem:[#allocation2 + $0x58] sm:$0x3] 0.0
      %29 = vst [vmem:[#allocation2 + $0x60] sm:$0xff] 0.0
      %30 = vst [vmem:[#allocation2 + $0x68] sm:$0x3] 0.0
      %31 = vst [vmem:[#allocation2 + $0x70] sm:$0xff] 0.0
      %32 = vst [vmem:[#allocation2 + $0x78] sm:$0x3] 0.0
      %33 = vst [vmem:[#allocation2 + $0x80] sm:$0xff] 0.0
      %34 = vst [vmem:[#allocation2 + $0x88] sm:$0x3] 0.0
      %35 = vst [vmem:[#allocation2 + $0x90] sm:$0xff] 0.0
      %36 = vst [vmem:[#allocation2 + $0x98] sm:$0x3] 0.0
      %s37 = scalar_lea.vmem [#allocation2], 1440
      %38 = vst [vmem:[%s37] sm:$0xff] 0.0
      %39 = vst [vmem:[%s37 + $0x8] sm:$0x3] 0.0
      %40 = vst [vmem:[%s37 + $0x10] sm:$0xff] 0.0
      %41 = vst [vmem:[%s37 + $0x18] sm:$0x3] 0.0
      %42 = vst [vmem:[%s37 + $0x20] sm:$0xff] 0.0
      %43 = vst [vmem:[%s37 + $0x28] sm:$0x3] 0.0
      %44 = vst [vmem:[%s37 + $0x30] sm:$0xff] 0.0
      %45 = vst [vmem:[%s37 + $0x38] sm:$0x3] 0.0
      %46 = vst [vmem:[%s37 + $0x40] sm:$0xff] 0.0
      %47 = vst [vmem:[%s37 + $0x48] sm:$0x3] 0.0
      %48 = vst [vmem:[%s37 + $0x50] sm:$0xff] 0.0
      %49 = vst [vmem:[%s37 + $0x58] sm:$0x3] 0.0
      %50 = vst [vmem:[%s37 + $0x60] sm:$0xff] 0.0
      %51 = vst [vmem:[%s37 + $0x68] sm:$0x3] 0.0
      %52 = vst [vmem:[%s37 + $0x70] sm:$0xff] 0.0
      %53 = vst [vmem:[%s37 + $0x78] sm:$0x3] 0.0
      %54 = vst [vmem:[%s37 + $0x80] sm:$0xff] 0.0
      %55 = vst [vmem:[%s37 + $0x88] sm:$0x3] 0.0
      %56 = vst [vmem:[%s37 + $0x90] sm:$0xff] 0.0
      %57 = vst [vmem:[%s37 + $0x98] sm:$0x3] 0.0
      %s58 = smul.u32 0, 1280
      %s59 = scalar_lea.vmem %s0, %s58
      %s60 = scalar_lea.vmem [#allocation2], 160
      %p62 = scmp.lt.u32.totalorder 10, 8
      %p63 = pneg %p62
      // Predicated region
      $region14: #{tpu_custom_call.1} parent=12 // pred_check
        _
      $region15: #{tpu_custom_call.1} parent=12 // pred_check_branch
        %65 = sbr.rel (%p62) target = $region17
      $region16: #{tpu_custom_call.1} parent=12 // pred_region
        %s238 = sand.u32 10, 7
        %p239 = scmp.eq.s32.totalorder %s238, 0
        %p240 = pneg %p239
        // Predicated region
        $region29: #{tpu_custom_call.1} parent=16 // pred_check
          _
        $region30: #{tpu_custom_call.1} parent=16 // pred_check_branch
          %242 = sbr.rel (%p239) target = $region32
        $region31: #{tpu_custom_call.1} parent=16 // pred_region
          %s243 = sand.u32 10, 7
          %s244 = ssub.s32 10, %s243
          %s245 = scalar_lea.vmem %s59, %s244
          %s246 = ssub.s32 10, %s243
          %s247 = scalar_lea.vmem %s60, %s246 [#allocation2]
          loop: start=0, step=1, limit=1
          $region33: #{tpu_custom_call.1} parent=31 // loop_pre_header
            _
          $region34: #{tpu_custom_call.1} parent=31 // loop_header
            %s249 = sphi 0, %s253
            %p250 = scmp.ge.s32.totalorder %s249, 1
            %s254 = sphi %s59, %s59
            %s255 = sphi %s60, %s60
          $region35: #{tpu_custom_call.1} parent=31 // loop_header_branch
            %252 = sbr.rel (%p250) target = $region39
          $region36: #{tpu_custom_call.1} parent=31 // loop_body
            %v256 = vld [vmem:[%s254] sm:$0xff]
            %257 = vst [vmem:[%s255] sm:$0xff] %v256
            %v258 = vld [vmem:[%s254 + $0x10] sm:$0xff]
            %259 = vst [vmem:[%s255 + $0x10] sm:$0xff] %v258
            %v260 = vld [vmem:[%s254 + $0x20] sm:$0xff]
            %261 = vst [vmem:[%s255 + $0x20] sm:$0xff] %v260
            %v262 = vld [vmem:[%s254 + $0x30] sm:$0xff]
            %263 = vst [vmem:[%s255 + $0x30] sm:$0xff] %v262
            %v264 = vld [vmem:[%s254 + $0x40] sm:$0xff]
            %265 = vst [vmem:[%s255 + $0x40] sm:$0xff] %v264
            %v266 = vld [vmem:[%s254 + $0x50] sm:$0xff]
            %267 = vst [vmem:[%s255 + $0x50] sm:$0xff] %v266
            %v268 = vld [vmem:[%s254 + $0x60] sm:$0xff]
            %269 = vst [vmem:[%s255 + $0x60] sm:$0xff] %v268
            %v270 = vld [vmem:[%s254 + $0x70] sm:$0xff]
            %271 = vst [vmem:[%s255 + $0x70] sm:$0xff] %v270
            %v272 = vld [vmem:[%s254 + $0x80] sm:$0xff]
            %273 = vst [vmem:[%s255 + $0x80] sm:$0xff] %v272
            %v274 = vld [vmem:[%s254 + $0x90] sm:$0xff]
            %275 = vst [vmem:[%s255 + $0x90] sm:$0xff] %v274
            %v276 = vld [vmem:[%s254 + $0xa0] sm:$0xff]
            %277 = vst [vmem:[%s255 + $0xa0] sm:$0xff] %v276
            %v278 = vld [vmem:[%s254 + $0xb0] sm:$0xff]
            %279 = vst [vmem:[%s255 + $0xb0] sm:$0xff] %v278
            %v280 = vld [vmem:[%s254 + $0xc0] sm:$0xff]
            %281 = vst [vmem:[%s255 + $0xc0] sm:$0xff] %v280
            %v282 = vld [vmem:[%s254 + $0xd0] sm:$0xff]
            %283 = vst [vmem:[%s255 + $0xd0] sm:$0xff] %v282
            %v284 = vld [vmem:[%s254 + $0xe0] sm:$0xff]
            %285 = vst [vmem:[%s255 + $0xe0] sm:$0xff] %v284
            %v286 = vld [vmem:[%s254 + $0xf0] sm:$0xff]
            %287 = vst [vmem:[%s255 + $0xf0] sm:$0xff] %v286
            %v288 = vld [vmem:[%s254 + $0x100] sm:$0xff]
            %289 = vst [vmem:[%s255 + $0x100] sm:$0xff] %v288
            %v290 = vld [vmem:[%s254 + $0x110] sm:$0xff]
            %291 = vst [vmem:[%s255 + $0x110] sm:$0xff] %v290
            %v292 = vld [vmem:[%s254 + $0x120] sm:$0xff]
            %293 = vst [vmem:[%s255 + $0x120] sm:$0xff] %v292
            %v294 = vld [vmem:[%s254 + $0x130] sm:$0xff]
            %295 = vst [vmem:[%s255 + $0x130] sm:$0xff] %v294
            %v296 = vld [vmem:[%s254 + $0x140] sm:$0xff]
            %297 = vst [vmem:[%s255 + $0x140] sm:$0xff] %v296
            %v298 = vld [vmem:[%s254 + $0x150] sm:$0xff]
            %299 = vst [vmem:[%s255 + $0x150] sm:$0xff] %v298
            %v300 = vld [vmem:[%s254 + $0x160] sm:$0xff]
            %301 = vst [vmem:[%s255 + $0x160] sm:$0xff] %v300
            %v302 = vld [vmem:[%s254 + $0x170] sm:$0xff]
            %303 = vst [vmem:[%s255 + $0x170] sm:$0xff] %v302
            %v304 = vld [vmem:[%s254 + $0x180] sm:$0xff]
            %305 = vst [vmem:[%s255 + $0x180] sm:$0xff] %v304
            %v306 = vld [vmem:[%s254 + $0x190] sm:$0xff]
            %307 = vst [vmem:[%s255 + $0x190] sm:$0xff] %v306
            %v308 = vld [vmem:[%s254 + $0x1a0] sm:$0xff]
            %309 = vst [vmem:[%s255 + $0x1a0] sm:$0xff] %v308
            %v310 = vld [vmem:[%s254 + $0x1b0] sm:$0xff]
            %311 = vst [vmem:[%s255 + $0x1b0] sm:$0xff] %v310
            %v312 = vld [vmem:[%s254 + $0x1c0] sm:$0xff]
            %313 = vst [vmem:[%s255 + $0x1c0] sm:$0xff] %v312
            %v314 = vld [vmem:[%s254 + $0x1d0] sm:$0xff]
            %315 = vst [vmem:[%s255 + $0x1d0] sm:$0xff] %v314
            %v316 = vld [vmem:[%s254 + $0x1e0] sm:$0xff]
            %317 = vst [vmem:[%s255 + $0x1e0] sm:$0xff] %v316
            %v318 = vld [vmem:[%s254 + $0x1f0] sm:$0xff]
            %319 = vst [vmem:[%s255 + $0x1f0] sm:$0xff] %v318
            %v320 = vld [vmem:[%s254 + $0x200] sm:$0xff]
            %321 = vst [vmem:[%s255 + $0x200] sm:$0xff] %v320
            %v322 = vld [vmem:[%s254 + $0x210] sm:$0xff]
            %323 = vst [vmem:[%s255 + $0x210] sm:$0xff] %v322
            %v324 = vld [vmem:[%s254 + $0x220] sm:$0xff]
            %325 = vst [vmem:[%s255 + $0x220] sm:$0xff] %v324
            %v326 = vld [vmem:[%s254 + $0x230] sm:$0xff]
            %327 = vst [vmem:[%s255 + $0x230] sm:$0xff] %v326
            %v328 = vld [vmem:[%s254 + $0x240] sm:$0xff]
            %329 = vst [vmem:[%s255 + $0x240] sm:$0xff] %v328
            %v330 = vld [vmem:[%s254 + $0x250] sm:$0xff]
            %331 = vst [vmem:[%s255 + $0x250] sm:$0xff] %v330
            %v332 = vld [vmem:[%s254 + $0x260] sm:$0xff]
            %333 = vst [vmem:[%s255 + $0x260] sm:$0xff] %v332
            %v334 = vld [vmem:[%s254 + $0x270] sm:$0xff]
            %335 = vst [vmem:[%s255 + $0x270] sm:$0xff] %v334
            %v336 = vld [vmem:[%s254 + $0x280] sm:$0xff]
            %337 = vst [vmem:[%s255 + $0x280] sm:$0xff] %v336
            %v338 = vld [vmem:[%s254 + $0x290] sm:$0xff]
            %339 = vst [vmem:[%s255 + $0x290] sm:$0xff] %v338
            %v340 = vld [vmem:[%s254 + $0x2a0] sm:$0xff]
            %341 = vst [vmem:[%s255 + $0x2a0] sm:$0xff] %v340
            %v342 = vld [vmem:[%s254 + $0x2b0] sm:$0xff]
            %343 = vst [vmem:[%s255 + $0x2b0] sm:$0xff] %v342
            %v344 = vld [vmem:[%s254 + $0x2c0] sm:$0xff]
            %345 = vst [vmem:[%s255 + $0x2c0] sm:$0xff] %v344
            %v346 = vld [vmem:[%s254 + $0x2d0] sm:$0xff]
            %347 = vst [vmem:[%s255 + $0x2d0] sm:$0xff] %v346
            %v348 = vld [vmem:[%s254 + $0x2e0] sm:$0xff]
            %349 = vst [vmem:[%s255 + $0x2e0] sm:$0xff] %v348
            %v350 = vld [vmem:[%s254 + $0x2f0] sm:$0xff]
            %351 = vst [vmem:[%s255 + $0x2f0] sm:$0xff] %v350
            %v352 = vld [vmem:[%s254 + $0x300] sm:$0xff]
            %353 = vst [vmem:[%s255 + $0x300] sm:$0xff] %v352
            %v354 = vld [vmem:[%s254 + $0x310] sm:$0xff]
            %355 = vst [vmem:[%s255 + $0x310] sm:$0xff] %v354
            %v356 = vld [vmem:[%s254 + $0x320] sm:$0xff]
            %357 = vst [vmem:[%s255 + $0x320] sm:$0xff] %v356
            %v358 = vld [vmem:[%s254 + $0x330] sm:$0xff]
            %359 = vst [vmem:[%s255 + $0x330] sm:$0xff] %v358
            %v360 = vld [vmem:[%s254 + $0x340] sm:$0xff]
            %361 = vst [vmem:[%s255 + $0x340] sm:$0xff] %v360
            %v362 = vld [vmem:[%s254 + $0x350] sm:$0xff]
            %363 = vst [vmem:[%s255 + $0x350] sm:$0xff] %v362
            %v364 = vld [vmem:[%s254 + $0x360] sm:$0xff]
            %365 = vst [vmem:[%s255 + $0x360] sm:$0xff] %v364
            %v366 = vld [vmem:[%s254 + $0x370] sm:$0xff]
            %367 = vst [vmem:[%s255 + $0x370] sm:$0xff] %v366
            %v368 = vld [vmem:[%s254 + $0x380] sm:$0xff]
            %369 = vst [vmem:[%s255 + $0x380] sm:$0xff] %v368
            %v370 = vld [vmem:[%s254 + $0x390] sm:$0xff]
            %371 = vst [vmem:[%s255 + $0x390] sm:$0xff] %v370
            %v372 = vld [vmem:[%s254 + $0x3a0] sm:$0xff]
            %373 = vst [vmem:[%s255 + $0x3a0] sm:$0xff] %v372
            %v374 = vld [vmem:[%s254 + $0x3b0] sm:$0xff]
            %375 = vst [vmem:[%s255 + $0x3b0] sm:$0xff] %v374
            %v376 = vld [vmem:[%s254 + $0x3c0] sm:$0xff]
            %377 = vst [vmem:[%s255 + $0x3c0] sm:$0xff] %v376
            %v378 = vld [vmem:[%s254 + $0x3d0] sm:$0xff]
            %379 = vst [vmem:[%s255 + $0x3d0] sm:$0xff] %v378
            %v380 = vld [vmem:[%s254 + $0x3e0] sm:$0xff]
            %381 = vst [vmem:[%s255 + $0x3e0] sm:$0xff] %v380
            %v382 = vld [vmem:[%s254 + $0x3f0] sm:$0xff]
            %383 = vst [vmem:[%s255 + $0x3f0] sm:$0xff] %v382
            %v384 = vld [vmem:[%s254 + $0x400] sm:$0xff]
            %385 = vst [vmem:[%s255 + $0x400] sm:$0xff] %v384
            %v386 = vld [vmem:[%s254 + $0x410] sm:$0xff]
            %387 = vst [vmem:[%s255 + $0x410] sm:$0xff] %v386
            %v388 = vld [vmem:[%s254 + $0x420] sm:$0xff]
            %389 = vst [vmem:[%s255 + $0x420] sm:$0xff] %v388
            %v390 = vld [vmem:[%s254 + $0x430] sm:$0xff]
            %391 = vst [vmem:[%s255 + $0x430] sm:$0xff] %v390
            %v392 = vld [vmem:[%s254 + $0x440] sm:$0xff]
            %393 = vst [vmem:[%s255 + $0x440] sm:$0xff] %v392
            %v394 = vld [vmem:[%s254 + $0x450] sm:$0xff]
            %395 = vst [vmem:[%s255 + $0x450] sm:$0xff] %v394
            %v396 = vld [vmem:[%s254 + $0x460] sm:$0xff]
            %397 = vst [vmem:[%s255 + $0x460] sm:$0xff] %v396
            %v398 = vld [vmem:[%s254 + $0x470] sm:$0xff]
            %399 = vst [vmem:[%s255 + $0x470] sm:$0xff] %v398
            %v400 = vld [vmem:[%s254 + $0x480] sm:$0xff]
            %401 = vst [vmem:[%s255 + $0x480] sm:$0xff] %v400
            %v402 = vld [vmem:[%s254 + $0x490] sm:$0xff]
            %403 = vst [vmem:[%s255 + $0x490] sm:$0xff] %v402
            %v404 = vld [vmem:[%s254 + $0x4a0] sm:$0xff]
            %405 = vst [vmem:[%s255 + $0x4a0] sm:$0xff] %v404
            %v406 = vld [vmem:[%s254 + $0x4b0] sm:$0xff]
            %407 = vst [vmem:[%s255 + $0x4b0] sm:$0xff] %v406
            %v408 = vld [vmem:[%s254 + $0x4c0] sm:$0xff]
            %409 = vst [vmem:[%s255 + $0x4c0] sm:$0xff] %v408
            %v410 = vld [vmem:[%s254 + $0x4d0] sm:$0xff]
            %411 = vst [vmem:[%s255 + $0x4d0] sm:$0xff] %v410
            %v412 = vld [vmem:[%s254 + $0x4e0] sm:$0xff]
            %413 = vst [vmem:[%s255 + $0x4e0] sm:$0xff] %v412
            %v414 = vld [vmem:[%s254 + $0x4f0] sm:$0xff]
            %415 = vst [vmem:[%s255 + $0x4f0] sm:$0xff] %v414
          $region37: #{tpu_custom_call.1} parent=31 // loop_footer
            %s253 = sadd.s32 1, %s249
          $region38: #{tpu_custom_call.1} parent=31 // loop_footer_branch
            %248 = sbr.rel target = $region34
          $region39: #{tpu_custom_call.1} parent=31 // loop_exit
            _
          %s416 = sshllo.u32 0, %s243
          loop: start=0, step=1, limit=1
          $region40: #{tpu_custom_call.1} parent=31 // loop_pre_header
            _
          $region41: #{tpu_custom_call.1} parent=31 // loop_header
            %s418 = sphi 0, %s422
            %p419 = scmp.ge.s32.totalorder %s418, 1
            %s423 = sphi %s245, %s245
            %s424 = sphi %s247, %s247
          $region42: #{tpu_custom_call.1} parent=31 // loop_header_branch
            %421 = sbr.rel (%p419) target = $region46
          $region43: #{tpu_custom_call.1} parent=31 // loop_body
            %v425 = vld [vmem:[%s423] sm:%s416]
            %426 = vst [vmem:[%s424] sm:%s416] %v425
            %v427 = vld [vmem:[%s423 + $0x10] sm:%s416]
            %428 = vst [vmem:[%s424 + $0x10] sm:%s416] %v427
            %v429 = vld [vmem:[%s423 + $0x20] sm:%s416]
            %430 = vst [vmem:[%s424 + $0x20] sm:%s416] %v429
            %v431 = vld [vmem:[%s423 + $0x30] sm:%s416]
            %432 = vst [vmem:[%s424 + $0x30] sm:%s416] %v431
            %v433 = vld [vmem:[%s423 + $0x40] sm:%s416]
            %434 = vst [vmem:[%s424 + $0x40] sm:%s416] %v433
            %v435 = vld [vmem:[%s423 + $0x50] sm:%s416]
            %436 = vst [vmem:[%s424 + $0x50] sm:%s416] %v435
            %v437 = vld [vmem:[%s423 + $0x60] sm:%s416]
            %438 = vst [vmem:[%s424 + $0x60] sm:%s416] %v437
            %v439 = vld [vmem:[%s423 + $0x70] sm:%s416]
            %440 = vst [vmem:[%s424 + $0x70] sm:%s416] %v439
            %v441 = vld [vmem:[%s423 + $0x80] sm:%s416]
            %442 = vst [vmem:[%s424 + $0x80] sm:%s416] %v441
            %v443 = vld [vmem:[%s423 + $0x90] sm:%s416]
            %444 = vst [vmem:[%s424 + $0x90] sm:%s416] %v443
            %v445 = vld [vmem:[%s423 + $0xa0] sm:%s416]
            %446 = vst [vmem:[%s424 + $0xa0] sm:%s416] %v445
            %v447 = vld [vmem:[%s423 + $0xb0] sm:%s416]
            %448 = vst [vmem:[%s424 + $0xb0] sm:%s416] %v447
            %v449 = vld [vmem:[%s423 + $0xc0] sm:%s416]
            %450 = vst [vmem:[%s424 + $0xc0] sm:%s416] %v449
            %v451 = vld [vmem:[%s423 + $0xd0] sm:%s416]
            %452 = vst [vmem:[%s424 + $0xd0] sm:%s416] %v451
            %v453 = vld [vmem:[%s423 + $0xe0] sm:%s416]
            %454 = vst [vmem:[%s424 + $0xe0] sm:%s416] %v453
            %v455 = vld [vmem:[%s423 + $0xf0] sm:%s416]
            %456 = vst [vmem:[%s424 + $0xf0] sm:%s416] %v455
            %v457 = vld [vmem:[%s423 + $0x100] sm:%s416]
            %458 = vst [vmem:[%s424 + $0x100] sm:%s416] %v457
            %v459 = vld [vmem:[%s423 + $0x110] sm:%s416]
            %460 = vst [vmem:[%s424 + $0x110] sm:%s416] %v459
            %v461 = vld [vmem:[%s423 + $0x120] sm:%s416]
            %462 = vst [vmem:[%s424 + $0x120] sm:%s416] %v461
            %v463 = vld [vmem:[%s423 + $0x130] sm:%s416]
            %464 = vst [vmem:[%s424 + $0x130] sm:%s416] %v463
            %v465 = vld [vmem:[%s423 + $0x140] sm:%s416]
            %466 = vst [vmem:[%s424 + $0x140] sm:%s416] %v465
            %v467 = vld [vmem:[%s423 + $0x150] sm:%s416]
            %468 = vst [vmem:[%s424 + $0x150] sm:%s416] %v467
            %v469 = vld [vmem:[%s423 + $0x160] sm:%s416]
            %470 = vst [vmem:[%s424 + $0x160] sm:%s416] %v469
            %v471 = vld [vmem:[%s423 + $0x170] sm:%s416]
            %472 = vst [vmem:[%s424 + $0x170] sm:%s416] %v471
            %v473 = vld [vmem:[%s423 + $0x180] sm:%s416]
            %474 = vst [vmem:[%s424 + $0x180] sm:%s416] %v473
            %v475 = vld [vmem:[%s423 + $0x190] sm:%s416]
            %476 = vst [vmem:[%s424 + $0x190] sm:%s416] %v475
            %v477 = vld [vmem:[%s423 + $0x1a0] sm:%s416]
            %478 = vst [vmem:[%s424 + $0x1a0] sm:%s416] %v477
            %v479 = vld [vmem:[%s423 + $0x1b0] sm:%s416]
            %480 = vst [vmem:[%s424 + $0x1b0] sm:%s416] %v479
            %v481 = vld [vmem:[%s423 + $0x1c0] sm:%s416]
            %482 = vst [vmem:[%s424 + $0x1c0] sm:%s416] %v481
            %v483 = vld [vmem:[%s423 + $0x1d0] sm:%s416]
            %484 = vst [vmem:[%s424 + $0x1d0] sm:%s416] %v483
            %v485 = vld [vmem:[%s423 + $0x1e0] sm:%s416]
            %486 = vst [vmem:[%s424 + $0x1e0] sm:%s416] %v485
            %v487 = vld [vmem:[%s423 + $0x1f0] sm:%s416]
            %488 = vst [vmem:[%s424 + $0x1f0] sm:%s416] %v487
            %v489 = vld [vmem:[%s423 + $0x200] sm:%s416]
            %490 = vst [vmem:[%s424 + $0x200] sm:%s416] %v489
            %v491 = vld [vmem:[%s423 + $0x210] sm:%s416]
            %492 = vst [vmem:[%s424 + $0x210] sm:%s416] %v491
            %v493 = vld [vmem:[%s423 + $0x220] sm:%s416]
            %494 = vst [vmem:[%s424 + $0x220] sm:%s416] %v493
            %v495 = vld [vmem:[%s423 + $0x230] sm:%s416]
            %496 = vst [vmem:[%s424 + $0x230] sm:%s416] %v495
            %v497 = vld [vmem:[%s423 + $0x240] sm:%s416]
            %498 = vst [vmem:[%s424 + $0x240] sm:%s416] %v497
            %v499 = vld [vmem:[%s423 + $0x250] sm:%s416]
            %500 = vst [vmem:[%s424 + $0x250] sm:%s416] %v499
            %v501 = vld [vmem:[%s423 + $0x260] sm:%s416]
            %502 = vst [vmem:[%s424 + $0x260] sm:%s416] %v501
            %v503 = vld [vmem:[%s423 + $0x270] sm:%s416]
            %504 = vst [vmem:[%s424 + $0x270] sm:%s416] %v503
            %v505 = vld [vmem:[%s423 + $0x280] sm:%s416]
            %506 = vst [vmem:[%s424 + $0x280] sm:%s416] %v505
            %v507 = vld [vmem:[%s423 + $0x290] sm:%s416]
            %508 = vst [vmem:[%s424 + $0x290] sm:%s416] %v507
            %v509 = vld [vmem:[%s423 + $0x2a0] sm:%s416]
            %510 = vst [vmem:[%s424 + $0x2a0] sm:%s416] %v509
            %v511 = vld [vmem:[%s423 + $0x2b0] sm:%s416]
            %512 = vst [vmem:[%s424 + $0x2b0] sm:%s416] %v511
            %v513 = vld [vmem:[%s423 + $0x2c0] sm:%s416]
            %514 = vst [vmem:[%s424 + $0x2c0] sm:%s416] %v513
            %v515 = vld [vmem:[%s423 + $0x2d0] sm:%s416]
            %516 = vst [vmem:[%s424 + $0x2d0] sm:%s416] %v515
            %v517 = vld [vmem:[%s423 + $0x2e0] sm:%s416]
            %518 = vst [vmem:[%s424 + $0x2e0] sm:%s416] %v517
            %v519 = vld [vmem:[%s423 + $0x2f0] sm:%s416]
            %520 = vst [vmem:[%s424 + $0x2f0] sm:%s416] %v519
            %v521 = vld [vmem:[%s423 + $0x300] sm:%s416]
            %522 = vst [vmem:[%s424 + $0x300] sm:%s416] %v521
            %v523 = vld [vmem:[%s423 + $0x310] sm:%s416]
            %524 = vst [vmem:[%s424 + $0x310] sm:%s416] %v523
            %v525 = vld [vmem:[%s423 + $0x320] sm:%s416]
            %526 = vst [vmem:[%s424 + $0x320] sm:%s416] %v525
            %v527 = vld [vmem:[%s423 + $0x330] sm:%s416]
            %528 = vst [vmem:[%s424 + $0x330] sm:%s416] %v527
            %v529 = vld [vmem:[%s423 + $0x340] sm:%s416]
            %530 = vst [vmem:[%s424 + $0x340] sm:%s416] %v529
            %v531 = vld [vmem:[%s423 + $0x350] sm:%s416]
            %532 = vst [vmem:[%s424 + $0x350] sm:%s416] %v531
            %v533 = vld [vmem:[%s423 + $0x360] sm:%s416]
            %534 = vst [vmem:[%s424 + $0x360] sm:%s416] %v533
            %v535 = vld [vmem:[%s423 + $0x370] sm:%s416]
            %536 = vst [vmem:[%s424 + $0x370] sm:%s416] %v535
            %v537 = vld [vmem:[%s423 + $0x380] sm:%s416]
            %538 = vst [vmem:[%s424 + $0x380] sm:%s416] %v537
            %v539 = vld [vmem:[%s423 + $0x390] sm:%s416]
            %540 = vst [vmem:[%s424 + $0x390] sm:%s416] %v539
            %v541 = vld [vmem:[%s423 + $0x3a0] sm:%s416]
            %542 = vst [vmem:[%s424 + $0x3a0] sm:%s416] %v541
            %v543 = vld [vmem:[%s423 + $0x3b0] sm:%s416]
            %544 = vst [vmem:[%s424 + $0x3b0] sm:%s416] %v543
            %v545 = vld [vmem:[%s423 + $0x3c0] sm:%s416]
            %546 = vst [vmem:[%s424 + $0x3c0] sm:%s416] %v545
            %v547 = vld [vmem:[%s423 + $0x3d0] sm:%s416]
            %548 = vst [vmem:[%s424 + $0x3d0] sm:%s416] %v547
            %v549 = vld [vmem:[%s423 + $0x3e0] sm:%s416]
            %550 = vst [vmem:[%s424 + $0x3e0] sm:%s416] %v549
            %v551 = vld [vmem:[%s423 + $0x3f0] sm:%s416]
            %552 = vst [vmem:[%s424 + $0x3f0] sm:%s416] %v551
            %v553 = vld [vmem:[%s423 + $0x400] sm:%s416]
            %554 = vst [vmem:[%s424 + $0x400] sm:%s416] %v553
            %v555 = vld [vmem:[%s423 + $0x410] sm:%s416]
            %556 = vst [vmem:[%s424 + $0x410] sm:%s416] %v555
            %v557 = vld [vmem:[%s423 + $0x420] sm:%s416]
            %558 = vst [vmem:[%s424 + $0x420] sm:%s416] %v557
            %v559 = vld [vmem:[%s423 + $0x430] sm:%s416]
            %560 = vst [vmem:[%s424 + $0x430] sm:%s416] %v559
            %v561 = vld [vmem:[%s423 + $0x440] sm:%s416]
            %562 = vst [vmem:[%s424 + $0x440] sm:%s416] %v561
            %v563 = vld [vmem:[%s423 + $0x450] sm:%s416]
            %564 = vst [vmem:[%s424 + $0x450] sm:%s416] %v563
            %v565 = vld [vmem:[%s423 + $0x460] sm:%s416]
            %566 = vst [vmem:[%s424 + $0x460] sm:%s416] %v565
            %v567 = vld [vmem:[%s423 + $0x470] sm:%s416]
            %568 = vst [vmem:[%s424 + $0x470] sm:%s416] %v567
            %v569 = vld [vmem:[%s423 + $0x480] sm:%s416]
            %570 = vst [vmem:[%s424 + $0x480] sm:%s416] %v569
            %v571 = vld [vmem:[%s423 + $0x490] sm:%s416]
            %572 = vst [vmem:[%s424 + $0x490] sm:%s416] %v571
            %v573 = vld [vmem:[%s423 + $0x4a0] sm:%s416]
            %574 = vst [vmem:[%s424 + $0x4a0] sm:%s416] %v573
            %v575 = vld [vmem:[%s423 + $0x4b0] sm:%s416]
            %576 = vst [vmem:[%s424 + $0x4b0] sm:%s416] %v575
            %v577 = vld [vmem:[%s423 + $0x4c0] sm:%s416]
            %578 = vst [vmem:[%s424 + $0x4c0] sm:%s416] %v577
            %v579 = vld [vmem:[%s423 + $0x4d0] sm:%s416]
            %580 = vst [vmem:[%s424 + $0x4d0] sm:%s416] %v579
            %v581 = vld [vmem:[%s423 + $0x4e0] sm:%s416]
            %582 = vst [vmem:[%s424 + $0x4e0] sm:%s416] %v581
            %v583 = vld [vmem:[%s423 + $0x4f0] sm:%s416]
            %584 = vst [vmem:[%s424 + $0x4f0] sm:%s416] %v583
          $region44: #{tpu_custom_call.1} parent=31 // loop_footer
            %s422 = sadd.s32 1, %s418
          $region45: #{tpu_custom_call.1} parent=31 // loop_footer_branch
            %417 = sbr.rel target = $region41
          $region46: #{tpu_custom_call.1} parent=31 // loop_exit
            _
        $region32: #{tpu_custom_call.1} parent=16 // pred_fallthru
          _
      $region17: #{tpu_custom_call.1} parent=12 // pred_fallthru
        _
      // Predicated region
      $region18: #{tpu_custom_call.1} parent=12 // pred_check
        %p66 = pneg %p62
      $region19: #{tpu_custom_call.1} parent=12 // pred_check_branch
        %68 = sbr.rel (%p66) target = $region21
      $region20: #{tpu_custom_call.1} parent=12 // pred_region
        %s69 = sshllo.u32 0, 10
        loop: start=0, step=1, limit=1
        $region22: #{tpu_custom_call.1} parent=20 // loop_pre_header
          _
        $region23: #{tpu_custom_call.1} parent=20 // loop_header
          %s71 = sphi 0, %s75
          %p72 = scmp.ge.s32.totalorder %s71, 1
          %s76 = sphi %s59, %s59
          %s77 = sphi %s60, %s60
        $region24: #{tpu_custom_call.1} parent=20 // loop_header_branch
          %74 = sbr.rel (%p72) target = $region28
        $region25: #{tpu_custom_call.1} parent=20 // loop_body
          %v78 = vld [vmem:[%s76] sm:%s69]
          %79 = vst [vmem:[%s77] sm:%s69] %v78
          %v80 = vld [vmem:[%s76 + $0x10] sm:%s69]
          %81 = vst [vmem:[%s77 + $0x10] sm:%s69] %v80
          %v82 = vld [vmem:[%s76 + $0x20] sm:%s69]
          %83 = vst [vmem:[%s77 + $0x20] sm:%s69] %v82
          %v84 = vld [vmem:[%s76 + $0x30] sm:%s69]
          %85 = vst [vmem:[%s77 + $0x30] sm:%s69] %v84
          %v86 = vld [vmem:[%s76 + $0x40] sm:%s69]
          %87 = vst [vmem:[%s77 + $0x40] sm:%s69] %v86
          %v88 = vld [vmem:[%s76 + $0x50] sm:%s69]
          %89 = vst [vmem:[%s77 + $0x50] sm:%s69] %v88
          %v90 = vld [vmem:[%s76 + $0x60] sm:%s69]
          %91 = vst [vmem:[%s77 + $0x60] sm:%s69] %v90
          %v92 = vld [vmem:[%s76 + $0x70] sm:%s69]
          %93 = vst [vmem:[%s77 + $0x70] sm:%s69] %v92
          %v94 = vld [vmem:[%s76 + $0x80] sm:%s69]
          %95 = vst [vmem:[%s77 + $0x80] sm:%s69] %v94
          %v96 = vld [vmem:[%s76 + $0x90] sm:%s69]
          %97 = vst [vmem:[%s77 + $0x90] sm:%s69] %v96
          %v98 = vld [vmem:[%s76 + $0xa0] sm:%s69]
          %99 = vst [vmem:[%s77 + $0xa0] sm:%s69] %v98
          %v100 = vld [vmem:[%s76 + $0xb0] sm:%s69]
          %101 = vst [vmem:[%s77 + $0xb0] sm:%s69] %v100
          %v102 = vld [vmem:[%s76 + $0xc0] sm:%s69]
          %103 = vst [vmem:[%s77 + $0xc0] sm:%s69] %v102
          %v104 = vld [vmem:[%s76 + $0xd0] sm:%s69]
          %105 = vst [vmem:[%s77 + $0xd0] sm:%s69] %v104
          %v106 = vld [vmem:[%s76 + $0xe0] sm:%s69]
          %107 = vst [vmem:[%s77 + $0xe0] sm:%s69] %v106
          %v108 = vld [vmem:[%s76 + $0xf0] sm:%s69]
          %109 = vst [vmem:[%s77 + $0xf0] sm:%s69] %v108
          %v110 = vld [vmem:[%s76 + $0x100] sm:%s69]
          %111 = vst [vmem:[%s77 + $0x100] sm:%s69] %v110
          %v112 = vld [vmem:[%s76 + $0x110] sm:%s69]
          %113 = vst [vmem:[%s77 + $0x110] sm:%s69] %v112
          %v114 = vld [vmem:[%s76 + $0x120] sm:%s69]
          %115 = vst [vmem:[%s77 + $0x120] sm:%s69] %v114
          %v116 = vld [vmem:[%s76 + $0x130] sm:%s69]
          %117 = vst [vmem:[%s77 + $0x130] sm:%s69] %v116
          %v118 = vld [vmem:[%s76 + $0x140] sm:%s69]
          %119 = vst [vmem:[%s77 + $0x140] sm:%s69] %v118
          %v120 = vld [vmem:[%s76 + $0x150] sm:%s69]
          %121 = vst [vmem:[%s77 + $0x150] sm:%s69] %v120
          %v122 = vld [vmem:[%s76 + $0x160] sm:%s69]
          %123 = vst [vmem:[%s77 + $0x160] sm:%s69] %v122
          %v124 = vld [vmem:[%s76 + $0x170] sm:%s69]
          %125 = vst [vmem:[%s77 + $0x170] sm:%s69] %v124
          %v126 = vld [vmem:[%s76 + $0x180] sm:%s69]
          %127 = vst [vmem:[%s77 + $0x180] sm:%s69] %v126
          %v128 = vld [vmem:[%s76 + $0x190] sm:%s69]
          %129 = vst [vmem:[%s77 + $0x190] sm:%s69] %v128
          %v130 = vld [vmem:[%s76 + $0x1a0] sm:%s69]
          %131 = vst [vmem:[%s77 + $0x1a0] sm:%s69] %v130
          %v132 = vld [vmem:[%s76 + $0x1b0] sm:%s69]
          %133 = vst [vmem:[%s77 + $0x1b0] sm:%s69] %v132
          %v134 = vld [vmem:[%s76 + $0x1c0] sm:%s69]
          %135 = vst [vmem:[%s77 + $0x1c0] sm:%s69] %v134
          %v136 = vld [vmem:[%s76 + $0x1d0] sm:%s69]
          %137 = vst [vmem:[%s77 + $0x1d0] sm:%s69] %v136
          %v138 = vld [vmem:[%s76 + $0x1e0] sm:%s69]
          %139 = vst [vmem:[%s77 + $0x1e0] sm:%s69] %v138
          %v140 = vld [vmem:[%s76 + $0x1f0] sm:%s69]
          %141 = vst [vmem:[%s77 + $0x1f0] sm:%s69] %v140
          %v142 = vld [vmem:[%s76 + $0x200] sm:%s69]
          %143 = vst [vmem:[%s77 + $0x200] sm:%s69] %v142
          %v144 = vld [vmem:[%s76 + $0x210] sm:%s69]
          %145 = vst [vmem:[%s77 + $0x210] sm:%s69] %v144
          %v146 = vld [vmem:[%s76 + $0x220] sm:%s69]
          %147 = vst [vmem:[%s77 + $0x220] sm:%s69] %v146
          %v148 = vld [vmem:[%s76 + $0x230] sm:%s69]
          %149 = vst [vmem:[%s77 + $0x230] sm:%s69] %v148
          %v150 = vld [vmem:[%s76 + $0x240] sm:%s69]
          %151 = vst [vmem:[%s77 + $0x240] sm:%s69] %v150
          %v152 = vld [vmem:[%s76 + $0x250] sm:%s69]
          %153 = vst [vmem:[%s77 + $0x250] sm:%s69] %v152
          %v154 = vld [vmem:[%s76 + $0x260] sm:%s69]
          %155 = vst [vmem:[%s77 + $0x260] sm:%s69] %v154
          %v156 = vld [vmem:[%s76 + $0x270] sm:%s69]
          %157 = vst [vmem:[%s77 + $0x270] sm:%s69] %v156
          %v158 = vld [vmem:[%s76 + $0x280] sm:%s69]
          %159 = vst [vmem:[%s77 + $0x280] sm:%s69] %v158
          %v160 = vld [vmem:[%s76 + $0x290] sm:%s69]
          %161 = vst [vmem:[%s77 + $0x290] sm:%s69] %v160
          %v162 = vld [vmem:[%s76 + $0x2a0] sm:%s69]
          %163 = vst [vmem:[%s77 + $0x2a0] sm:%s69] %v162
          %v164 = vld [vmem:[%s76 + $0x2b0] sm:%s69]
          %165 = vst [vmem:[%s77 + $0x2b0] sm:%s69] %v164
          %v166 = vld [vmem:[%s76 + $0x2c0] sm:%s69]
          %167 = vst [vmem:[%s77 + $0x2c0] sm:%s69] %v166
          %v168 = vld [vmem:[%s76 + $0x2d0] sm:%s69]
          %169 = vst [vmem:[%s77 + $0x2d0] sm:%s69] %v168
          %v170 = vld [vmem:[%s76 + $0x2e0] sm:%s69]
          %171 = vst [vmem:[%s77 + $0x2e0] sm:%s69] %v170
          %v172 = vld [vmem:[%s76 + $0x2f0] sm:%s69]
          %173 = vst [vmem:[%s77 + $0x2f0] sm:%s69] %v172
          %v174 = vld [vmem:[%s76 + $0x300] sm:%s69]
          %175 = vst [vmem:[%s77 + $0x300] sm:%s69] %v174
          %v176 = vld [vmem:[%s76 + $0x310] sm:%s69]
          %177 = vst [vmem:[%s77 + $0x310] sm:%s69] %v176
          %v178 = vld [vmem:[%s76 + $0x320] sm:%s69]
          %179 = vst [vmem:[%s77 + $0x320] sm:%s69] %v178
          %v180 = vld [vmem:[%s76 + $0x330] sm:%s69]
          %181 = vst [vmem:[%s77 + $0x330] sm:%s69] %v180
          %v182 = vld [vmem:[%s76 + $0x340] sm:%s69]
          %183 = vst [vmem:[%s77 + $0x340] sm:%s69] %v182
          %v184 = vld [vmem:[%s76 + $0x350] sm:%s69]
          %185 = vst [vmem:[%s77 + $0x350] sm:%s69] %v184
          %v186 = vld [vmem:[%s76 + $0x360] sm:%s69]
          %187 = vst [vmem:[%s77 + $0x360] sm:%s69] %v186
          %v188 = vld [vmem:[%s76 + $0x370] sm:%s69]
          %189 = vst [vmem:[%s77 + $0x370] sm:%s69] %v188
          %v190 = vld [vmem:[%s76 + $0x380] sm:%s69]
          %191 = vst [vmem:[%s77 + $0x380] sm:%s69] %v190
          %v192 = vld [vmem:[%s76 + $0x390] sm:%s69]
          %193 = vst [vmem:[%s77 + $0x390] sm:%s69] %v192
          %v194 = vld [vmem:[%s76 + $0x3a0] sm:%s69]
          %195 = vst [vmem:[%s77 + $0x3a0] sm:%s69] %v194
          %v196 = vld [vmem:[%s76 + $0x3b0] sm:%s69]
          %197 = vst [vmem:[%s77 + $0x3b0] sm:%s69] %v196
          %v198 = vld [vmem:[%s76 + $0x3c0] sm:%s69]
          %199 = vst [vmem:[%s77 + $0x3c0] sm:%s69] %v198
          %v200 = vld [vmem:[%s76 + $0x3d0] sm:%s69]
          %201 = vst [vmem:[%s77 + $0x3d0] sm:%s69] %v200
          %v202 = vld [vmem:[%s76 + $0x3e0] sm:%s69]
          %203 = vst [vmem:[%s77 + $0x3e0] sm:%s69] %v202
          %v204 = vld [vmem:[%s76 + $0x3f0] sm:%s69]
          %205 = vst [vmem:[%s77 + $0x3f0] sm:%s69] %v204
          %v206 = vld [vmem:[%s76 + $0x400] sm:%s69]
          %207 = vst [vmem:[%s77 + $0x400] sm:%s69] %v206
          %v208 = vld [vmem:[%s76 + $0x410] sm:%s69]
          %209 = vst [vmem:[%s77 + $0x410] sm:%s69] %v208
          %v210 = vld [vmem:[%s76 + $0x420] sm:%s69]
          %211 = vst [vmem:[%s77 + $0x420] sm:%s69] %v210
          %v212 = vld [vmem:[%s76 + $0x430] sm:%s69]
          %213 = vst [vmem:[%s77 + $0x430] sm:%s69] %v212
          %v214 = vld [vmem:[%s76 + $0x440] sm:%s69]
          %215 = vst [vmem:[%s77 + $0x440] sm:%s69] %v214
          %v216 = vld [vmem:[%s76 + $0x450] sm:%s69]
          %217 = vst [vmem:[%s77 + $0x450] sm:%s69] %v216
          %v218 = vld [vmem:[%s76 + $0x460] sm:%s69]
          %219 = vst [vmem:[%s77 + $0x460] sm:%s69] %v218
          %v220 = vld [vmem:[%s76 + $0x470] sm:%s69]
          %221 = vst [vmem:[%s77 + $0x470] sm:%s69] %v220
          %v222 = vld [vmem:[%s76 + $0x480] sm:%s69]
          %223 = vst [vmem:[%s77 + $0x480] sm:%s69] %v222
          %v224 = vld [vmem:[%s76 + $0x490] sm:%s69]
          %225 = vst [vmem:[%s77 + $0x490] sm:%s69] %v224
          %v226 = vld [vmem:[%s76 + $0x4a0] sm:%s69]
          %227 = vst [vmem:[%s77 + $0x4a0] sm:%s69] %v226
          %v228 = vld [vmem:[%s76 + $0x4b0] sm:%s69]
          %229 = vst [vmem:[%s77 + $0x4b0] sm:%s69] %v228
          %v230 = vld [vmem:[%s76 + $0x4c0] sm:%s69]
          %231 = vst [vmem:[%s77 + $0x4c0] sm:%s69] %v230
          %v232 = vld [vmem:[%s76 + $0x4d0] sm:%s69]
          %233 = vst [vmem:[%s77 + $0x4d0] sm:%s69] %v232
          %v234 = vld [vmem:[%s76 + $0x4e0] sm:%s69]
          %235 = vst [vmem:[%s77 + $0x4e0] sm:%s69] %v234
          %v236 = vld [vmem:[%s76 + $0x4f0] sm:%s69]
          %237 = vst [vmem:[%s77 + $0x4f0] sm:%s69] %v236
        $region26: #{tpu_custom_call.1} parent=20 // loop_footer
          %s75 = sadd.s32 1, %s71
        $region27: #{tpu_custom_call.1} parent=20 // loop_footer_branch
          %70 = sbr.rel target = $region23
        $region28: #{tpu_custom_call.1} parent=20 // loop_exit
          _
      $region21: #{tpu_custom_call.1} parent=12 // pred_fallthru
        _
      // Predicated region
      $region47: #{tpu_custom_call.1} parent=12 // pred_check
        _
      $region48: #{tpu_custom_call.1} parent=12 // pred_check_branch
        %587 = sbr.rel (0) target = $region50
      $region49: #{tpu_custom_call.1} parent=12 // pred_region
        %588 = vsyncadd [#allocation4], 12800
      $region50: #{tpu_custom_call.1} parent=12 // pred_fallthru
        _
      %s589 = smul.u32 8, 10
      %s590 = smul.u32 %s589, 10
      %s591 = smul.u32 %s590, 1
      %s592 = sshll.u32 %s591, 4
      %593 = dma.done [#allocation4], %s592
      loop: start=0, step=1, limit=10
      $region51: #{tpu_custom_call.1} parent=12 // loop_pre_header
        _
      $region52: #{tpu_custom_call.1} parent=12 // loop_header
        %s595 = sphi 0, %s599
        %p596 = scmp.ge.s32.totalorder %s595, 10
      $region53: #{tpu_custom_call.1} parent=12 // loop_header_branch
        %598 = sbr.rel (%p596) target = $region57
      $region54: #{tpu_custom_call.1} parent=12 // loop_body
        %s600 = smul.u32 %s595, 160
        %s601 = scalar_lea.vmem [#allocation2], %s600
        %v602 = vld [vmem:[%s601] sm:$0xff]
        %v603 = vld [vmem:[%s601 + $0x10] sm:$0xff]
        %v604 = vld [vmem:[%s601 + $0x20] sm:$0xff]
        %v605 = vld [vmem:[%s601 + $0x30] sm:$0xff]
        %v606 = vld [vmem:[%s601 + $0x40] sm:$0xff]
        %v607 = vld [vmem:[%s601 + $0x50] sm:$0xff]
        %v608 = vld [vmem:[%s601 + $0x60] sm:$0xff]
        %v609 = vld [vmem:[%s601 + $0x70] sm:$0xff]
        %v610 = vld [vmem:[%s601 + $0x80] sm:$0xff]
        %v611 = vld [vmem:[%s601 + $0x90] sm:$0xff]
        %s612 = smul.u32 %s595, 80
        %s613 = scalar_lea.vmem [#allocation3], %s612
        %614 = vst [vmem:[%s613] sm:$0xff] %v602
        %615 = vst [vmem:[%s613 + $0x8] sm:$0xff] %v603
        %616 = vst [vmem:[%s613 + $0x10] sm:$0xff] %v604
        %617 = vst [vmem:[%s613 + $0x18] sm:$0xff] %v605
        %618 = vst [vmem:[%s613 + $0x20] sm:$0xff] %v606
        %619 = vst [vmem:[%s613 + $0x28] sm:$0xff] %v607
        %620 = vst [vmem:[%s613 + $0x30] sm:$0xff] %v608
        %621 = vst [vmem:[%s613 + $0x38] sm:$0xff] %v609
        %622 = vst [vmem:[%s613 + $0x40] sm:$0xff] %v610
        %623 = vst [vmem:[%s613 + $0x48] sm:$0xff] %v611
        %v624 = vld [vmem:[%s601 + $0x1] sm:$0xff]
        %v625 = vld [vmem:[%s601 + $0x11] sm:$0xff]
        %v626 = vld [vmem:[%s601 + $0x21] sm:$0xff]
        %v627 = vld [vmem:[%s601 + $0x31] sm:$0xff]
        %v628 = vld [vmem:[%s601 + $0x41] sm:$0xff]
        %v629 = vld [vmem:[%s601 + $0x51] sm:$0xff]
        %v630 = vld [vmem:[%s601 + $0x61] sm:$0xff]
        %v631 = vld [vmem:[%s601 + $0x71] sm:$0xff]
        %v632 = vld [vmem:[%s601 + $0x81] sm:$0xff]
        %v633 = vld [vmem:[%s601 + $0x91] sm:$0xff]
        %s634 = sadd.s32 %s612, 800
        %s635 = scalar_lea.vmem [#allocation3], %s634
        %636 = vst [vmem:[%s635] sm:$0xff] %v624
        %637 = vst [vmem:[%s635 + $0x8] sm:$0xff] %v625
        %638 = vst [vmem:[%s635 + $0x10] sm:$0xff] %v626
        %639 = vst [vmem:[%s635 + $0x18] sm:$0xff] %v627
        %640 = vst [vmem:[%s635 + $0x20] sm:$0xff] %v628
        %641 = vst [vmem:[%s635 + $0x28] sm:$0xff] %v629
        %642 = vst [vmem:[%s635 + $0x30] sm:$0xff] %v630
        %643 = vst [vmem:[%s635 + $0x38] sm:$0xff] %v631
        %644 = vst [vmem:[%s635 + $0x40] sm:$0xff] %v632
        %645 = vst [vmem:[%s635 + $0x48] sm:$0xff] %v633
        %v646 = vld [vmem:[%s601 + $0x2] sm:$0xff]
        %v647 = vld [vmem:[%s601 + $0x12] sm:$0xff]
        %v648 = vld [vmem:[%s601 + $0x22] sm:$0xff]
        %v649 = vld [vmem:[%s601 + $0x32] sm:$0xff]
        %v650 = vld [vmem:[%s601 + $0x42] sm:$0xff]
        %v651 = vld [vmem:[%s601 + $0x52] sm:$0xff]
        %v652 = vld [vmem:[%s601 + $0x62] sm:$0xff]
        %v653 = vld [vmem:[%s601 + $0x72] sm:$0xff]
        %v654 = vld [vmem:[%s601 + $0x82] sm:$0xff]
        %v655 = vld [vmem:[%s601 + $0x92] sm:$0xff]
        %s656 = sadd.s32 %s612, 1600
        %s657 = scalar_lea.vmem [#allocation3], %s656
        %658 = vst [vmem:[%s657] sm:$0xff] %v646
        %659 = vst [vmem:[%s657 + $0x8] sm:$0xff] %v647
        %660 = vst [vmem:[%s657 + $0x10] sm:$0xff] %v648
        %661 = vst [vmem:[%s657 + $0x18] sm:$0xff] %v649
        %662 = vst [vmem:[%s657 + $0x20] sm:$0xff] %v650
        %663 = vst [vmem:[%s657 + $0x28] sm:$0xff] %v651
        %664 = vst [vmem:[%s657 + $0x30] sm:$0xff] %v652
        %665 = vst [vmem:[%s657 + $0x38] sm:$0xff] %v653
        %666 = vst [vmem:[%s657 + $0x40] sm:$0xff] %v654
        %667 = vst [vmem:[%s657 + $0x48] sm:$0xff] %v655
      $region55: #{tpu_custom_call.1} parent=12 // loop_footer
        %s599 = sadd.s32 1, %s595
      $region56: #{tpu_custom_call.1} parent=12 // loop_footer_branch
        %594 = sbr.rel target = $region52
      $region57: #{tpu_custom_call.1} parent=12 // loop_exit
        _
    $region13: #{tpu_custom_call.1} parent=1 // pred_fallthru
      _
    %v668 = vld [vmem:[%s2] sm:$0x1]
    %v669 = vld [vmem:[%s1] sm:$0x1]
    %v670 = vld [vmem:[%s1 + $0x1] sm:$0x1]
    %v671 = vld [vmem:[%s1 + $0x2] sm:$0x1]
    %s672 = scalar_lea.vmem %s1, 4
    %v673 = vld [vmem:[%s672] sm:$0x1]
    %v674 = vld [vmem:[%s672 + $0x1] sm:$0x1]
    %v675 = vld [vmem:[%s672 + $0x2] sm:$0x1]
    %s676 = scalar_lea.vmem %s1, 8
    %v677 = vld [vmem:[%s676] sm:$0x1]
    %v678 = vld [vmem:[%s676 + $0x1] sm:$0x1]
    %v679 = vld [vmem:[%s676 + $0x2] sm:$0x1]
    %s680 = scalar_lea.vmem %s1, 12
    %v681 = vld [vmem:[%s680] sm:$0x1]
    %v682 = vld [vmem:[%s680 + $0x1] sm:$0x1]
    %v683 = vld [vmem:[%s680 + $0x2] sm:$0x1]
    %s684 = scalar_lea.vmem %s1, 16
    %v685 = vld [vmem:[%s684] sm:$0x1]
    %v686 = vld [vmem:[%s684 + $0x1] sm:$0x1]
    %v687 = vld [vmem:[%s684 + $0x2] sm:$0x1]
    %s688 = scalar_lea.vmem %s1, 20
    %v689 = vld [vmem:[%s688] sm:$0x1]
    %v690 = vld [vmem:[%s688 + $0x1] sm:$0x1]
    %v691 = vld [vmem:[%s688 + $0x2] sm:$0x1]
    %s692 = scalar_lea.vmem %s1, 24
    %v693 = vld [vmem:[%s692] sm:$0x1]
    %v694 = vld [vmem:[%s692 + $0x1] sm:$0x1]
    %v695 = vld [vmem:[%s692 + $0x2] sm:$0x1]
    %s696 = scalar_lea.vmem %s1, 28
    %v697 = vld [vmem:[%s696] sm:$0x1]
    %v698 = vld [vmem:[%s696 + $0x1] sm:$0x1]
    %v699 = vld [vmem:[%s696 + $0x2] sm:$0x1]
    %s700 = scalar_lea.vmem %s1, 32
    %v701 = vld [vmem:[%s700] sm:$0x1]
    %v702 = vld [vmem:[%s700 + $0x1] sm:$0x1]
    %v703 = vld [vmem:[%s700 + $0x2] sm:$0x1]
    %s704 = smul.u32 0, 8
    %s705 = smul.u32 %s704, 80
    %s706 = scalar_lea.vmem [#allocation3], %s705
    %v707 = vld [vmem:[%s706] sm:$0xff]
    %v708 = vld [vmem:[%s706 + $0x8] sm:$0xff]
    %v709 = vld [vmem:[%s706 + $0x10] sm:$0xff]
    %v710 = vld [vmem:[%s706 + $0x18] sm:$0xff]
    %v711 = vld [vmem:[%s706 + $0x20] sm:$0xff]
    %v712 = vld [vmem:[%s706 + $0x28] sm:$0xff]
    %v713 = vld [vmem:[%s706 + $0x30] sm:$0xff]
    %v714 = vld [vmem:[%s706 + $0x38] sm:$0xff]
    %v715 = vlaneseq
    %v716 = vshrl.u32 %v715, 7
    %v717 = vsub.s32 0, %v716
    %v718 = vrot.slane %v669, %v717
    %v719 = vmul.f32 %v707, %v718
    %v720 = vmul.f32 %v708, %v718
    %v721 = vmul.f32 %v709, %v718
    %v722 = vmul.f32 %v710, %v718
    %v723 = vmul.f32 %v711, %v718
    %v724 = vmul.f32 %v712, %v718
    %v725 = vmul.f32 %v713, %v718
    %v726 = vmul.f32 %v714, %v718
    %s727 = sadd.s32 %s705, 800
    %s728 = scalar_lea.vmem [#allocation3], %s727
    %v729 = vld [vmem:[%s728] sm:$0xff]
    %v730 = vld [vmem:[%s728 + $0x8] sm:$0xff]
    %v731 = vld [vmem:[%s728 + $0x10] sm:$0xff]
    %v732 = vld [vmem:[%s728 + $0x18] sm:$0xff]
    %v733 = vld [vmem:[%s728 + $0x20] sm:$0xff]
    %v734 = vld [vmem:[%s728 + $0x28] sm:$0xff]
    %v735 = vld [vmem:[%s728 + $0x30] sm:$0xff]
    %v736 = vld [vmem:[%s728 + $0x38] sm:$0xff]
    %v737 = vlaneseq
    %v738 = vshrl.u32 %v737, 7
    %v739 = vsub.s32 0, %v738
    %v740 = vrot.slane %v670, %v739
    %v741 = vmul.f32 %v729, %v740
    %v742 = vmul.f32 %v730, %v740
    %v743 = vmul.f32 %v731, %v740
    %v744 = vmul.f32 %v732, %v740
    %v745 = vmul.f32 %v733, %v740
    %v746 = vmul.f32 %v734, %v740
    %v747 = vmul.f32 %v735, %v740
    %v748 = vmul.f32 %v736, %v740
    %v749 = vadd.f32 %v719, %v741
    %v750 = vadd.f32 %v720, %v742
    %v751 = vadd.f32 %v721, %v743
    %v752 = vadd.f32 %v722, %v744
    %v753 = vadd.f32 %v723, %v745
    %v754 = vadd.f32 %v724, %v746
    %v755 = vadd.f32 %v725, %v747
    %v756 = vadd.f32 %v726, %v748
    %s757 = sadd.s32 %s705, 1600
    %s758 = scalar_lea.vmem [#allocation3], %s757
    %v759 = vld [vmem:[%s758] sm:$0xff]
    %v760 = vld [vmem:[%s758 + $0x8] sm:$0xff]
    %v761 = vld [vmem:[%s758 + $0x10] sm:$0xff]
    %v762 = vld [vmem:[%s758 + $0x18] sm:$0xff]
    %v763 = vld [vmem:[%s758 + $0x20] sm:$0xff]
    %v764 = vld [vmem:[%s758 + $0x28] sm:$0xff]
    %v765 = vld [vmem:[%s758 + $0x30] sm:$0xff]
    %v766 = vld [vmem:[%s758 + $0x38] sm:$0xff]
    %v767 = vlaneseq
    %v768 = vshrl.u32 %v767, 7
    %v769 = vsub.s32 0, %v768
    %v770 = vrot.slane %v671, %v769
    %v771 = vmul.f32 %v759, %v770
    %v772 = vmul.f32 %v760, %v770
    %v773 = vmul.f32 %v761, %v770
    %v774 = vmul.f32 %v762, %v770
    %v775 = vmul.f32 %v763, %v770
    %v776 = vmul.f32 %v764, %v770
    %v777 = vmul.f32 %v765, %v770
    %v778 = vmul.f32 %v766, %v770
    %v779 = vadd.f32 %v749, %v771
    %v780 = vadd.f32 %v750, %v772
    %v781 = vadd.f32 %v751, %v773
    %v782 = vadd.f32 %v752, %v774
    %v783 = vadd.f32 %v753, %v775
    %v784 = vadd.f32 %v754, %v776
    %v785 = vadd.f32 %v755, %v777
    %v786 = vadd.f32 %v756, %v778
    %s787 = sadd.s32 8, %s705
    %s788 = scalar_lea.vmem [#allocation3], %s787
    %v789 = vld [vmem:[%s788] sm:$0xff]
    %v790 = vld [vmem:[%s788 + $0x8] sm:$0xff]
    %v791 = vld [vmem:[%s788 + $0x10] sm:$0xff]
    %v792 = vld [vmem:[%s788 + $0x18] sm:$0xff]
    %v793 = vld [vmem:[%s788 + $0x20] sm:$0xff]
    %v794 = vld [vmem:[%s788 + $0x28] sm:$0xff]
    %v795 = vld [vmem:[%s788 + $0x30] sm:$0xff]
    %v796 = vld [vmem:[%s788 + $0x38] sm:$0xff]
    %v797 = vlaneseq
    %v798 = vshrl.u32 %v797, 7
    %v799 = vsub.s32 0, %v798
    %v800 = vrot.slane %v673, %v799
    %v801 = vmul.f32 %v789, %v800
    %v802 = vmul.f32 %v790, %v800
    %v803 = vmul.f32 %v791, %v800
    %v804 = vmul.f32 %v792, %v800
    %v805 = vmul.f32 %v793, %v800
    %v806 = vmul.f32 %v794, %v800
    %v807 = vmul.f32 %v795, %v800
    %v808 = vmul.f32 %v796, %v800
    %v809 = vadd.f32 %v779, %v801
    %v810 = vadd.f32 %v780, %v802
    %v811 = vadd.f32 %v781, %v803
    %v812 = vadd.f32 %v782, %v804
    %v813 = vadd.f32 %v783, %v805
    %v814 = vadd.f32 %v784, %v806
    %v815 = vadd.f32 %v785, %v807
    %v816 = vadd.f32 %v786, %v808
    %s817 = sadd.s32 %s787, 800
    %s818 = scalar_lea.vmem [#allocation3], %s817
    %v819 = vld [vmem:[%s818] sm:$0xff]
    %v820 = vld [vmem:[%s818 + $0x8] sm:$0xff]
    %v821 = vld [vmem:[%s818 + $0x10] sm:$0xff]
    %v822 = vld [vmem:[%s818 + $0x18] sm:$0xff]
    %v823 = vld [vmem:[%s818 + $0x20] sm:$0xff]
    %v824 = vld [vmem:[%s818 + $0x28] sm:$0xff]
    %v825 = vld [vmem:[%s818 + $0x30] sm:$0xff]
    %v826 = vld [vmem:[%s818 + $0x38] sm:$0xff]
    %v827 = vlaneseq
    %v828 = vshrl.u32 %v827, 7
    %v829 = vsub.s32 0, %v828
    %v830 = vrot.slane %v674, %v829
    %v831 = vmul.f32 %v819, %v830
    %v832 = vmul.f32 %v820, %v830
    %v833 = vmul.f32 %v821, %v830
    %v834 = vmul.f32 %v822, %v830
    %v835 = vmul.f32 %v823, %v830
    %v836 = vmul.f32 %v824, %v830
    %v837 = vmul.f32 %v825, %v830
    %v838 = vmul.f32 %v826, %v830
    %v839 = vadd.f32 %v809, %v831
    %v840 = vadd.f32 %v810, %v832
    %v841 = vadd.f32 %v811, %v833
    %v842 = vadd.f32 %v812, %v834
    %v843 = vadd.f32 %v813, %v835
    %v844 = vadd.f32 %v814, %v836
    %v845 = vadd.f32 %v815, %v837
    %v846 = vadd.f32 %v816, %v838
    %s847 = sadd.s32 %s787, 1600
    %s848 = scalar_lea.vmem [#allocation3], %s847
    %v849 = vld [vmem:[%s848] sm:$0xff]
    %v850 = vld [vmem:[%s848 + $0x8] sm:$0xff]
    %v851 = vld [vmem:[%s848 + $0x10] sm:$0xff]
    %v852 = vld [vmem:[%s848 + $0x18] sm:$0xff]
    %v853 = vld [vmem:[%s848 + $0x20] sm:$0xff]
    %v854 = vld [vmem:[%s848 + $0x28] sm:$0xff]
    %v855 = vld [vmem:[%s848 + $0x30] sm:$0xff]
    %v856 = vld [vmem:[%s848 + $0x38] sm:$0xff]
    %v857 = vlaneseq
    %v858 = vshrl.u32 %v857, 7
    %v859 = vsub.s32 0, %v858
    %v860 = vrot.slane %v675, %v859
    %v861 = vmul.f32 %v849, %v860
    %v862 = vmul.f32 %v850, %v860
    %v863 = vmul.f32 %v851, %v860
    %v864 = vmul.f32 %v852, %v860
    %v865 = vmul.f32 %v853, %v860
    %v866 = vmul.f32 %v854, %v860
    %v867 = vmul.f32 %v855, %v860
    %v868 = vmul.f32 %v856, %v860
    %v869 = vadd.f32 %v839, %v861
    %v870 = vadd.f32 %v840, %v862
    %v871 = vadd.f32 %v841, %v863
    %v872 = vadd.f32 %v842, %v864
    %v873 = vadd.f32 %v843, %v865
    %v874 = vadd.f32 %v844, %v866
    %v875 = vadd.f32 %v845, %v867
    %v876 = vadd.f32 %v846, %v868
    %s877 = sadd.s32 16, %s705
    %s878 = scalar_lea.vmem [#allocation3], %s877
    %v879 = vld [vmem:[%s878] sm:$0xff]
    %v880 = vld [vmem:[%s878 + $0x8] sm:$0xff]
    %v881 = vld [vmem:[%s878 + $0x10] sm:$0xff]
    %v882 = vld [vmem:[%s878 + $0x18] sm:$0xff]
    %v883 = vld [vmem:[%s878 + $0x20] sm:$0xff]
    %v884 = vld [vmem:[%s878 + $0x28] sm:$0xff]
    %v885 = vld [vmem:[%s878 + $0x30] sm:$0xff]
    %v886 = vld [vmem:[%s878 + $0x38] sm:$0xff]
    %v887 = vlaneseq
    %v888 = vshrl.u32 %v887, 7
    %v889 = vsub.s32 0, %v888
    %v890 = vrot.slane %v677, %v889
    %v891 = vmul.f32 %v879, %v890
    %v892 = vmul.f32 %v880, %v890
    %v893 = vmul.f32 %v881, %v890
    %v894 = vmul.f32 %v882, %v890
    %v895 = vmul.f32 %v883, %v890
    %v896 = vmul.f32 %v884, %v890
    %v897 = vmul.f32 %v885, %v890
    %v898 = vmul.f32 %v886, %v890
    %v899 = vadd.f32 %v869, %v891
    %v900 = vadd.f32 %v870, %v892
    %v901 = vadd.f32 %v871, %v893
    %v902 = vadd.f32 %v872, %v894
    %v903 = vadd.f32 %v873, %v895
    %v904 = vadd.f32 %v874, %v896
    %v905 = vadd.f32 %v875, %v897
    %v906 = vadd.f32 %v876, %v898
    %s907 = sadd.s32 %s877, 800
    %s908 = scalar_lea.vmem [#allocation3], %s907
    %v909 = vld [vmem:[%s908] sm:$0xff]
    %v910 = vld [vmem:[%s908 + $0x8] sm:$0xff]
    %v911 = vld [vmem:[%s908 + $0x10] sm:$0xff]
    %v912 = vld [vmem:[%s908 + $0x18] sm:$0xff]
    %v913 = vld [vmem:[%s908 + $0x20] sm:$0xff]
    %v914 = vld [vmem:[%s908 + $0x28] sm:$0xff]
    %v915 = vld [vmem:[%s908 + $0x30] sm:$0xff]
    %v916 = vld [vmem:[%s908 + $0x38] sm:$0xff]
    %v917 = vlaneseq
    %v918 = vshrl.u32 %v917, 7
    %v919 = vsub.s32 0, %v918
    %v920 = vrot.slane %v678, %v919
    %v921 = vmul.f32 %v909, %v920
    %v922 = vmul.f32 %v910, %v920
    %v923 = vmul.f32 %v911, %v920
    %v924 = vmul.f32 %v912, %v920
    %v925 = vmul.f32 %v913, %v920
    %v926 = vmul.f32 %v914, %v920
    %v927 = vmul.f32 %v915, %v920
    %v928 = vmul.f32 %v916, %v920
    %v929 = vadd.f32 %v899, %v921
    %v930 = vadd.f32 %v900, %v922
    %v931 = vadd.f32 %v901, %v923
    %v932 = vadd.f32 %v902, %v924
    %v933 = vadd.f32 %v903, %v925
    %v934 = vadd.f32 %v904, %v926
    %v935 = vadd.f32 %v905, %v927
    %v936 = vadd.f32 %v906, %v928
    %s937 = sadd.s32 %s877, 1600
    %s938 = scalar_lea.vmem [#allocation3], %s937
    %v939 = vld [vmem:[%s938] sm:$0xff]
    %v940 = vld [vmem:[%s938 + $0x8] sm:$0xff]
    %v941 = vld [vmem:[%s938 + $0x10] sm:$0xff]
    %v942 = vld [vmem:[%s938 + $0x18] sm:$0xff]
    %v943 = vld [vmem:[%s938 + $0x20] sm:$0xff]
    %v944 = vld [vmem:[%s938 + $0x28] sm:$0xff]
    %v945 = vld [vmem:[%s938 + $0x30] sm:$0xff]
    %v946 = vld [vmem:[%s938 + $0x38] sm:$0xff]
    %v947 = vlaneseq
    %v948 = vshrl.u32 %v947, 7
    %v949 = vsub.s32 0, %v948
    %v950 = vrot.slane %v679, %v949
    %v951 = vmul.f32 %v939, %v950
    %v952 = vmul.f32 %v940, %v950
    %v953 = vmul.f32 %v941, %v950
    %v954 = vmul.f32 %v942, %v950
    %v955 = vmul.f32 %v943, %v950
    %v956 = vmul.f32 %v944, %v950
    %v957 = vmul.f32 %v945, %v950
    %v958 = vmul.f32 %v946, %v950
    %v959 = vadd.f32 %v929, %v951
    %v960 = vadd.f32 %v930, %v952
    %v961 = vadd.f32 %v931, %v953
    %v962 = vadd.f32 %v932, %v954
    %v963 = vadd.f32 %v933, %v955
    %v964 = vadd.f32 %v934, %v956
    %v965 = vadd.f32 %v935, %v957
    %v966 = vadd.f32 %v936, %v958
    %s967 = sadd.s32 %s704, 1
    %s968 = smul.u32 %s967, 80
    %s969 = scalar_lea.vmem [#allocation3], %s968
    %v970 = vld [vmem:[%s969] sm:$0xff]
    %v971 = vld [vmem:[%s969 + $0x8] sm:$0xff]
    %v972 = vld [vmem:[%s969 + $0x10] sm:$0xff]
    %v973 = vld [vmem:[%s969 + $0x18] sm:$0xff]
    %v974 = vld [vmem:[%s969 + $0x20] sm:$0xff]
    %v975 = vld [vmem:[%s969 + $0x28] sm:$0xff]
    %v976 = vld [vmem:[%s969 + $0x30] sm:$0xff]
    %v977 = vld [vmem:[%s969 + $0x38] sm:$0xff]
    %v978 = vlaneseq
    %v979 = vshrl.u32 %v978, 7
    %v980 = vsub.s32 0, %v979
    %v981 = vrot.slane %v681, %v980
    %v982 = vmul.f32 %v970, %v981
    %v983 = vmul.f32 %v971, %v981
    %v984 = vmul.f32 %v972, %v981
    %v985 = vmul.f32 %v973, %v981
    %v986 = vmul.f32 %v974, %v981
    %v987 = vmul.f32 %v975, %v981
    %v988 = vmul.f32 %v976, %v981
    %v989 = vmul.f32 %v977, %v981
    %v990 = vadd.f32 %v959, %v982
    %v991 = vadd.f32 %v960, %v983
    %v992 = vadd.f32 %v961, %v984
    %v993 = vadd.f32 %v962, %v985
    %v994 = vadd.f32 %v963, %v986
    %v995 = vadd.f32 %v964, %v987
    %v996 = vadd.f32 %v965, %v988
    %v997 = vadd.f32 %v966, %v989
    %s998 = sadd.s32 %s968, 800
    %s999 = scalar_lea.vmem [#allocation3], %s998
    %v1000 = vld [vmem:[%s999] sm:$0xff]
    %v1001 = vld [vmem:[%s999 + $0x8] sm:$0xff]
    %v1002 = vld [vmem:[%s999 + $0x10] sm:$0xff]
    %v1003 = vld [vmem:[%s999 + $0x18] sm:$0xff]
    %v1004 = vld [vmem:[%s999 + $0x20] sm:$0xff]
    %v1005 = vld [vmem:[%s999 + $0x28] sm:$0xff]
    %v1006 = vld [vmem:[%s999 + $0x30] sm:$0xff]
    %v1007 = vld [vmem:[%s999 + $0x38] sm:$0xff]
    %v1008 = vlaneseq
    %v1009 = vshrl.u32 %v1008, 7
    %v1010 = vsub.s32 0, %v1009
    %v1011 = vrot.slane %v682, %v1010
    %v1012 = vmul.f32 %v1000, %v1011
    %v1013 = vmul.f32 %v1001, %v1011
    %v1014 = vmul.f32 %v1002, %v1011
    %v1015 = vmul.f32 %v1003, %v1011
    %v1016 = vmul.f32 %v1004, %v1011
    %v1017 = vmul.f32 %v1005, %v1011
    %v1018 = vmul.f32 %v1006, %v1011
    %v1019 = vmul.f32 %v1007, %v1011
    %v1020 = vadd.f32 %v990, %v1012
    %v1021 = vadd.f32 %v991, %v1013
    %v1022 = vadd.f32 %v992, %v1014
    %v1023 = vadd.f32 %v993, %v1015
    %v1024 = vadd.f32 %v994, %v1016
    %v1025 = vadd.f32 %v995, %v1017
    %v1026 = vadd.f32 %v996, %v1018
    %v1027 = vadd.f32 %v997, %v1019
    %s1028 = sadd.s32 %s968, 1600
    %s1029 = scalar_lea.vmem [#allocation3], %s1028
    %v1030 = vld [vmem:[%s1029] sm:$0xff]
    %v1031 = vld [vmem:[%s1029 + $0x8] sm:$0xff]
    %v1032 = vld [vmem:[%s1029 + $0x10] sm:$0xff]
    %v1033 = vld [vmem:[%s1029 + $0x18] sm:$0xff]
    %v1034 = vld [vmem:[%s1029 + $0x20] sm:$0xff]
    %v1035 = vld [vmem:[%s1029 + $0x28] sm:$0xff]
    %v1036 = vld [vmem:[%s1029 + $0x30] sm:$0xff]
    %v1037 = vld [vmem:[%s1029 + $0x38] sm:$0xff]
    %v1038 = vlaneseq
    %v1039 = vshrl.u32 %v1038, 7
    %v1040 = vsub.s32 0, %v1039
    %v1041 = vrot.slane %v683, %v1040
    %v1042 = vmul.f32 %v1030, %v1041
    %v1043 = vmul.f32 %v1031, %v1041
    %v1044 = vmul.f32 %v1032, %v1041
    %v1045 = vmul.f32 %v1033, %v1041
    %v1046 = vmul.f32 %v1034, %v1041
    %v1047 = vmul.f32 %v1035, %v1041
    %v1048 = vmul.f32 %v1036, %v1041
    %v1049 = vmul.f32 %v1037, %v1041
    %v1050 = vadd.f32 %v1020, %v1042
    %v1051 = vadd.f32 %v1021, %v1043
    %v1052 = vadd.f32 %v1022, %v1044
    %v1053 = vadd.f32 %v1023, %v1045
    %v1054 = vadd.f32 %v1024, %v1046
    %v1055 = vadd.f32 %v1025, %v1047
    %v1056 = vadd.f32 %v1026, %v1048
    %v1057 = vadd.f32 %v1027, %v1049
    %s1058 = sadd.s32 8, %s968
    %s1059 = scalar_lea.vmem [#allocation3], %s1058
    %v1060 = vld [vmem:[%s1059] sm:$0xff]
    %v1061 = vld [vmem:[%s1059 + $0x8] sm:$0xff]
    %v1062 = vld [vmem:[%s1059 + $0x10] sm:$0xff]
    %v1063 = vld [vmem:[%s1059 + $0x18] sm:$0xff]
    %v1064 = vld [vmem:[%s1059 + $0x20] sm:$0xff]
    %v1065 = vld [vmem:[%s1059 + $0x28] sm:$0xff]
    %v1066 = vld [vmem:[%s1059 + $0x30] sm:$0xff]
    %v1067 = vld [vmem:[%s1059 + $0x38] sm:$0xff]
    %v1068 = vlaneseq
    %v1069 = vshrl.u32 %v1068, 7
    %v1070 = vsub.s32 0, %v1069
    %v1071 = vrot.slane %v685, %v1070
    %v1072 = vmul.f32 %v1060, %v1071
    %v1073 = vmul.f32 %v1061, %v1071
    %v1074 = vmul.f32 %v1062, %v1071
    %v1075 = vmul.f32 %v1063, %v1071
    %v1076 = vmul.f32 %v1064, %v1071
    %v1077 = vmul.f32 %v1065, %v1071
    %v1078 = vmul.f32 %v1066, %v1071
    %v1079 = vmul.f32 %v1067, %v1071
    %v1080 = vadd.f32 %v1050, %v1072
    %v1081 = vadd.f32 %v1051, %v1073
    %v1082 = vadd.f32 %v1052, %v1074
    %v1083 = vadd.f32 %v1053, %v1075
    %v1084 = vadd.f32 %v1054, %v1076
    %v1085 = vadd.f32 %v1055, %v1077
    %v1086 = vadd.f32 %v1056, %v1078
    %v1087 = vadd.f32 %v1057, %v1079
    %s1088 = sadd.s32 %s1058, 800
    %s1089 = scalar_lea.vmem [#allocation3], %s1088
    %v1090 = vld [vmem:[%s1089] sm:$0xff]
    %v1091 = vld [vmem:[%s1089 + $0x8] sm:$0xff]
    %v1092 = vld [vmem:[%s1089 + $0x10] sm:$0xff]
    %v1093 = vld [vmem:[%s1089 + $0x18] sm:$0xff]
    %v1094 = vld [vmem:[%s1089 + $0x20] sm:$0xff]
    %v1095 = vld [vmem:[%s1089 + $0x28] sm:$0xff]
    %v1096 = vld [vmem:[%s1089 + $0x30] sm:$0xff]
    %v1097 = vld [vmem:[%s1089 + $0x38] sm:$0xff]
    %v1098 = vlaneseq
    %v1099 = vshrl.u32 %v1098, 7
    %v1100 = vsub.s32 0, %v1099
    %v1101 = vrot.slane %v686, %v1100
    %v1102 = vmul.f32 %v1090, %v1101
    %v1103 = vmul.f32 %v1091, %v1101
    %v1104 = vmul.f32 %v1092, %v1101
    %v1105 = vmul.f32 %v1093, %v1101
    %v1106 = vmul.f32 %v1094, %v1101
    %v1107 = vmul.f32 %v1095, %v1101
    %v1108 = vmul.f32 %v1096, %v1101
    %v1109 = vmul.f32 %v1097, %v1101
    %v1110 = vadd.f32 %v1080, %v1102
    %v1111 = vadd.f32 %v1081, %v1103
    %v1112 = vadd.f32 %v1082, %v1104
    %v1113 = vadd.f32 %v1083, %v1105
    %v1114 = vadd.f32 %v1084, %v1106
    %v1115 = vadd.f32 %v1085, %v1107
    %v1116 = vadd.f32 %v1086, %v1108
    %v1117 = vadd.f32 %v1087, %v1109
    %s1118 = sadd.s32 %s1058, 1600
    %s1119 = scalar_lea.vmem [#allocation3], %s1118
    %v1120 = vld [vmem:[%s1119] sm:$0xff]
    %v1121 = vld [vmem:[%s1119 + $0x8] sm:$0xff]
    %v1122 = vld [vmem:[%s1119 + $0x10] sm:$0xff]
    %v1123 = vld [vmem:[%s1119 + $0x18] sm:$0xff]
    %v1124 = vld [vmem:[%s1119 + $0x20] sm:$0xff]
    %v1125 = vld [vmem:[%s1119 + $0x28] sm:$0xff]
    %v1126 = vld [vmem:[%s1119 + $0x30] sm:$0xff]
    %v1127 = vld [vmem:[%s1119 + $0x38] sm:$0xff]
    %v1128 = vlaneseq
    %v1129 = vshrl.u32 %v1128, 7
    %v1130 = vsub.s32 0, %v1129
    %v1131 = vrot.slane %v687, %v1130
    %v1132 = vmul.f32 %v1120, %v1131
    %v1133 = vmul.f32 %v1121, %v1131
    %v1134 = vmul.f32 %v1122, %v1131
    %v1135 = vmul.f32 %v1123, %v1131
    %v1136 = vmul.f32 %v1124, %v1131
    %v1137 = vmul.f32 %v1125, %v1131
    %v1138 = vmul.f32 %v1126, %v1131
    %v1139 = vmul.f32 %v1127, %v1131
    %v1140 = vadd.f32 %v1110, %v1132
    %v1141 = vadd.f32 %v1111, %v1133
    %v1142 = vadd.f32 %v1112, %v1134
    %v1143 = vadd.f32 %v1113, %v1135
    %v1144 = vadd.f32 %v1114, %v1136
    %v1145 = vadd.f32 %v1115, %v1137
    %v1146 = vadd.f32 %v1116, %v1138
    %v1147 = vadd.f32 %v1117, %v1139
    %s1148 = sadd.s32 16, %s968
    %s1149 = scalar_lea.vmem [#allocation3], %s1148
    %v1150 = vld [vmem:[%s1149] sm:$0xff]
    %v1151 = vld [vmem:[%s1149 + $0x8] sm:$0xff]
    %v1152 = vld [vmem:[%s1149 + $0x10] sm:$0xff]
    %v1153 = vld [vmem:[%s1149 + $0x18] sm:$0xff]
    %v1154 = vld [vmem:[%s1149 + $0x20] sm:$0xff]
    %v1155 = vld [vmem:[%s1149 + $0x28] sm:$0xff]
    %v1156 = vld [vmem:[%s1149 + $0x30] sm:$0xff]
    %v1157 = vld [vmem:[%s1149 + $0x38] sm:$0xff]
    %v1158 = vlaneseq
    %v1159 = vshrl.u32 %v1158, 7
    %v1160 = vsub.s32 0, %v1159
    %v1161 = vrot.slane %v689, %v1160
    %v1162 = vmul.f32 %v1150, %v1161
    %v1163 = vmul.f32 %v1151, %v1161
    %v1164 = vmul.f32 %v1152, %v1161
    %v1165 = vmul.f32 %v1153, %v1161
    %v1166 = vmul.f32 %v1154, %v1161
    %v1167 = vmul.f32 %v1155, %v1161
    %v1168 = vmul.f32 %v1156, %v1161
    %v1169 = vmul.f32 %v1157, %v1161
    %v1170 = vadd.f32 %v1140, %v1162
    %v1171 = vadd.f32 %v1141, %v1163
    %v1172 = vadd.f32 %v1142, %v1164
    %v1173 = vadd.f32 %v1143, %v1165
    %v1174 = vadd.f32 %v1144, %v1166
    %v1175 = vadd.f32 %v1145, %v1167
    %v1176 = vadd.f32 %v1146, %v1168
    %v1177 = vadd.f32 %v1147, %v1169
    %s1178 = sadd.s32 %s1148, 800
    %s1179 = scalar_lea.vmem [#allocation3], %s1178
    %v1180 = vld [vmem:[%s1179] sm:$0xff]
    %v1181 = vld [vmem:[%s1179 + $0x8] sm:$0xff]
    %v1182 = vld [vmem:[%s1179 + $0x10] sm:$0xff]
    %v1183 = vld [vmem:[%s1179 + $0x18] sm:$0xff]
    %v1184 = vld [vmem:[%s1179 + $0x20] sm:$0xff]
    %v1185 = vld [vmem:[%s1179 + $0x28] sm:$0xff]
    %v1186 = vld [vmem:[%s1179 + $0x30] sm:$0xff]
    %v1187 = vld [vmem:[%s1179 + $0x38] sm:$0xff]
    %v1188 = vlaneseq
    %v1189 = vshrl.u32 %v1188, 7
    %v1190 = vsub.s32 0, %v1189
    %v1191 = vrot.slane %v690, %v1190
    %v1192 = vmul.f32 %v1180, %v1191
    %v1193 = vmul.f32 %v1181, %v1191
    %v1194 = vmul.f32 %v1182, %v1191
    %v1195 = vmul.f32 %v1183, %v1191
    %v1196 = vmul.f32 %v1184, %v1191
    %v1197 = vmul.f32 %v1185, %v1191
    %v1198 = vmul.f32 %v1186, %v1191
    %v1199 = vmul.f32 %v1187, %v1191
    %v1200 = vadd.f32 %v1170, %v1192
    %v1201 = vadd.f32 %v1171, %v1193
    %v1202 = vadd.f32 %v1172, %v1194
    %v1203 = vadd.f32 %v1173, %v1195
    %v1204 = vadd.f32 %v1174, %v1196
    %v1205 = vadd.f32 %v1175, %v1197
    %v1206 = vadd.f32 %v1176, %v1198
    %v1207 = vadd.f32 %v1177, %v1199
    %s1208 = sadd.s32 %s1148, 1600
    %s1209 = scalar_lea.vmem [#allocation3], %s1208
    %v1210 = vld [vmem:[%s1209] sm:$0xff]
    %v1211 = vld [vmem:[%s1209 + $0x8] sm:$0xff]
    %v1212 = vld [vmem:[%s1209 + $0x10] sm:$0xff]
    %v1213 = vld [vmem:[%s1209 + $0x18] sm:$0xff]
    %v1214 = vld [vmem:[%s1209 + $0x20] sm:$0xff]
    %v1215 = vld [vmem:[%s1209 + $0x28] sm:$0xff]
    %v1216 = vld [vmem:[%s1209 + $0x30] sm:$0xff]
    %v1217 = vld [vmem:[%s1209 + $0x38] sm:$0xff]
    %v1218 = vlaneseq
    %v1219 = vshrl.u32 %v1218, 7
    %v1220 = vsub.s32 0, %v1219
    %v1221 = vrot.slane %v691, %v1220
    %v1222 = vmul.f32 %v1210, %v1221
    %v1223 = vmul.f32 %v1211, %v1221
    %v1224 = vmul.f32 %v1212, %v1221
    %v1225 = vmul.f32 %v1213, %v1221
    %v1226 = vmul.f32 %v1214, %v1221
    %v1227 = vmul.f32 %v1215, %v1221
    %v1228 = vmul.f32 %v1216, %v1221
    %v1229 = vmul.f32 %v1217, %v1221
    %v1230 = vadd.f32 %v1200, %v1222
    %v1231 = vadd.f32 %v1201, %v1223
    %v1232 = vadd.f32 %v1202, %v1224
    %v1233 = vadd.f32 %v1203, %v1225
    %v1234 = vadd.f32 %v1204, %v1226
    %v1235 = vadd.f32 %v1205, %v1227
    %v1236 = vadd.f32 %v1206, %v1228
    %v1237 = vadd.f32 %v1207, %v1229
    %s1238 = sadd.s32 %s704, 2
    %s1239 = smul.u32 %s1238, 80
    %s1240 = scalar_lea.vmem [#allocation3], %s1239
    %v1241 = vld [vmem:[%s1240] sm:$0xff]
    %v1242 = vld [vmem:[%s1240 + $0x8] sm:$0xff]
    %v1243 = vld [vmem:[%s1240 + $0x10] sm:$0xff]
    %v1244 = vld [vmem:[%s1240 + $0x18] sm:$0xff]
    %v1245 = vld [vmem:[%s1240 + $0x20] sm:$0xff]
    %v1246 = vld [vmem:[%s1240 + $0x28] sm:$0xff]
    %v1247 = vld [vmem:[%s1240 + $0x30] sm:$0xff]
    %v1248 = vld [vmem:[%s1240 + $0x38] sm:$0xff]
    %v1249 = vlaneseq
    %v1250 = vshrl.u32 %v1249, 7
    %v1251 = vsub.s32 0, %v1250
    %v1252 = vrot.slane %v693, %v1251
    %v1253 = vmul.f32 %v1241, %v1252
    %v1254 = vmul.f32 %v1242, %v1252
    %v1255 = vmul.f32 %v1243, %v1252
    %v1256 = vmul.f32 %v1244, %v1252
    %v1257 = vmul.f32 %v1245, %v1252
    %v1258 = vmul.f32 %v1246, %v1252
    %v1259 = vmul.f32 %v1247, %v1252
    %v1260 = vmul.f32 %v1248, %v1252
    %v1261 = vadd.f32 %v1230, %v1253
    %v1262 = vadd.f32 %v1231, %v1254
    %v1263 = vadd.f32 %v1232, %v1255
    %v1264 = vadd.f32 %v1233, %v1256
    %v1265 = vadd.f32 %v1234, %v1257
    %v1266 = vadd.f32 %v1235, %v1258
    %v1267 = vadd.f32 %v1236, %v1259
    %v1268 = vadd.f32 %v1237, %v1260
    %s1269 = sadd.s32 %s1239, 800
    %s1270 = scalar_lea.vmem [#allocation3], %s1269
    %v1271 = vld [vmem:[%s1270] sm:$0xff]
    %v1272 = vld [vmem:[%s1270 + $0x8] sm:$0xff]
    %v1273 = vld [vmem:[%s1270 + $0x10] sm:$0xff]
    %v1274 = vld [vmem:[%s1270 + $0x18] sm:$0xff]
    %v1275 = vld [vmem:[%s1270 + $0x20] sm:$0xff]
    %v1276 = vld [vmem:[%s1270 + $0x28] sm:$0xff]
    %v1277 = vld [vmem:[%s1270 + $0x30] sm:$0xff]
    %v1278 = vld [vmem:[%s1270 + $0x38] sm:$0xff]
    %v1279 = vlaneseq
    %v1280 = vshrl.u32 %v1279, 7
    %v1281 = vsub.s32 0, %v1280
    %v1282 = vrot.slane %v694, %v1281
    %v1283 = vmul.f32 %v1271, %v1282
    %v1284 = vmul.f32 %v1272, %v1282
    %v1285 = vmul.f32 %v1273, %v1282
    %v1286 = vmul.f32 %v1274, %v1282
    %v1287 = vmul.f32 %v1275, %v1282
    %v1288 = vmul.f32 %v1276, %v1282
    %v1289 = vmul.f32 %v1277, %v1282
    %v1290 = vmul.f32 %v1278, %v1282
    %v1291 = vadd.f32 %v1261, %v1283
    %v1292 = vadd.f32 %v1262, %v1284
    %v1293 = vadd.f32 %v1263, %v1285
    %v1294 = vadd.f32 %v1264, %v1286
    %v1295 = vadd.f32 %v1265, %v1287
    %v1296 = vadd.f32 %v1266, %v1288
    %v1297 = vadd.f32 %v1267, %v1289
    %v1298 = vadd.f32 %v1268, %v1290
    %s1299 = sadd.s32 %s1239, 1600
    %s1300 = scalar_lea.vmem [#allocation3], %s1299
    %v1301 = vld [vmem:[%s1300] sm:$0xff]
    %v1302 = vld [vmem:[%s1300 + $0x8] sm:$0xff]
    %v1303 = vld [vmem:[%s1300 + $0x10] sm:$0xff]
    %v1304 = vld [vmem:[%s1300 + $0x18] sm:$0xff]
    %v1305 = vld [vmem:[%s1300 + $0x20] sm:$0xff]
    %v1306 = vld [vmem:[%s1300 + $0x28] sm:$0xff]
    %v1307 = vld [vmem:[%s1300 + $0x30] sm:$0xff]
    %v1308 = vld [vmem:[%s1300 + $0x38] sm:$0xff]
    %v1309 = vlaneseq
    %v1310 = vshrl.u32 %v1309, 7
    %v1311 = vsub.s32 0, %v1310
    %v1312 = vrot.slane %v695, %v1311
    %v1313 = vmul.f32 %v1301, %v1312
    %v1314 = vmul.f32 %v1302, %v1312
    %v1315 = vmul.f32 %v1303, %v1312
    %v1316 = vmul.f32 %v1304, %v1312
    %v1317 = vmul.f32 %v1305, %v1312
    %v1318 = vmul.f32 %v1306, %v1312
    %v1319 = vmul.f32 %v1307, %v1312
    %v1320 = vmul.f32 %v1308, %v1312
    %v1321 = vadd.f32 %v1291, %v1313
    %v1322 = vadd.f32 %v1292, %v1314
    %v1323 = vadd.f32 %v1293, %v1315
    %v1324 = vadd.f32 %v1294, %v1316
    %v1325 = vadd.f32 %v1295, %v1317
    %v1326 = vadd.f32 %v1296, %v1318
    %v1327 = vadd.f32 %v1297, %v1319
    %v1328 = vadd.f32 %v1298, %v1320
    %s1329 = sadd.s32 8, %s1239
    %s1330 = scalar_lea.vmem [#allocation3], %s1329
    %v1331 = vld [vmem:[%s1330] sm:$0xff]
    %v1332 = vld [vmem:[%s1330 + $0x8] sm:$0xff]
    %v1333 = vld [vmem:[%s1330 + $0x10] sm:$0xff]
    %v1334 = vld [vmem:[%s1330 + $0x18] sm:$0xff]
    %v1335 = vld [vmem:[%s1330 + $0x20] sm:$0xff]
    %v1336 = vld [vmem:[%s1330 + $0x28] sm:$0xff]
    %v1337 = vld [vmem:[%s1330 + $0x30] sm:$0xff]
    %v1338 = vld [vmem:[%s1330 + $0x38] sm:$0xff]
    %v1339 = vlaneseq
    %v1340 = vshrl.u32 %v1339, 7
    %v1341 = vsub.s32 0, %v1340
    %v1342 = vrot.slane %v697, %v1341
    %v1343 = vmul.f32 %v1331, %v1342
    %v1344 = vmul.f32 %v1332, %v1342
    %v1345 = vmul.f32 %v1333, %v1342
    %v1346 = vmul.f32 %v1334, %v1342
    %v1347 = vmul.f32 %v1335, %v1342
    %v1348 = vmul.f32 %v1336, %v1342
    %v1349 = vmul.f32 %v1337, %v1342
    %v1350 = vmul.f32 %v1338, %v1342
    %v1351 = vadd.f32 %v1321, %v1343
    %v1352 = vadd.f32 %v1322, %v1344
    %v1353 = vadd.f32 %v1323, %v1345
    %v1354 = vadd.f32 %v1324, %v1346
    %v1355 = vadd.f32 %v1325, %v1347
    %v1356 = vadd.f32 %v1326, %v1348
    %v1357 = vadd.f32 %v1327, %v1349
    %v1358 = vadd.f32 %v1328, %v1350
    %s1359 = sadd.s32 %s1329, 800
    %s1360 = scalar_lea.vmem [#allocation3], %s1359
    %v1361 = vld [vmem:[%s1360] sm:$0xff]
    %v1362 = vld [vmem:[%s1360 + $0x8] sm:$0xff]
    %v1363 = vld [vmem:[%s1360 + $0x10] sm:$0xff]
    %v1364 = vld [vmem:[%s1360 + $0x18] sm:$0xff]
    %v1365 = vld [vmem:[%s1360 + $0x20] sm:$0xff]
    %v1366 = vld [vmem:[%s1360 + $0x28] sm:$0xff]
    %v1367 = vld [vmem:[%s1360 + $0x30] sm:$0xff]
    %v1368 = vld [vmem:[%s1360 + $0x38] sm:$0xff]
    %v1369 = vlaneseq
    %v1370 = vshrl.u32 %v1369, 7
    %v1371 = vsub.s32 0, %v1370
    %v1372 = vrot.slane %v698, %v1371
    %v1373 = vmul.f32 %v1361, %v1372
    %v1374 = vmul.f32 %v1362, %v1372
    %v1375 = vmul.f32 %v1363, %v1372
    %v1376 = vmul.f32 %v1364, %v1372
    %v1377 = vmul.f32 %v1365, %v1372
    %v1378 = vmul.f32 %v1366, %v1372
    %v1379 = vmul.f32 %v1367, %v1372
    %v1380 = vmul.f32 %v1368, %v1372
    %v1381 = vadd.f32 %v1351, %v1373
    %v1382 = vadd.f32 %v1352, %v1374
    %v1383 = vadd.f32 %v1353, %v1375
    %v1384 = vadd.f32 %v1354, %v1376
    %v1385 = vadd.f32 %v1355, %v1377
    %v1386 = vadd.f32 %v1356, %v1378
    %v1387 = vadd.f32 %v1357, %v1379
    %v1388 = vadd.f32 %v1358, %v1380
    %s1389 = sadd.s32 %s1329, 1600
    %s1390 = scalar_lea.vmem [#allocation3], %s1389
    %v1391 = vld [vmem:[%s1390] sm:$0xff]
    %v1392 = vld [vmem:[%s1390 + $0x8] sm:$0xff]
    %v1393 = vld [vmem:[%s1390 + $0x10] sm:$0xff]
    %v1394 = vld [vmem:[%s1390 + $0x18] sm:$0xff]
    %v1395 = vld [vmem:[%s1390 + $0x20] sm:$0xff]
    %v1396 = vld [vmem:[%s1390 + $0x28] sm:$0xff]
    %v1397 = vld [vmem:[%s1390 + $0x30] sm:$0xff]
    %v1398 = vld [vmem:[%s1390 + $0x38] sm:$0xff]
    %v1399 = vlaneseq
    %v1400 = vshrl.u32 %v1399, 7
    %v1401 = vsub.s32 0, %v1400
    %v1402 = vrot.slane %v699, %v1401
    %v1403 = vmul.f32 %v1391, %v1402
    %v1404 = vmul.f32 %v1392, %v1402
    %v1405 = vmul.f32 %v1393, %v1402
    %v1406 = vmul.f32 %v1394, %v1402
    %v1407 = vmul.f32 %v1395, %v1402
    %v1408 = vmul.f32 %v1396, %v1402
    %v1409 = vmul.f32 %v1397, %v1402
    %v1410 = vmul.f32 %v1398, %v1402
    %v1411 = vadd.f32 %v1381, %v1403
    %v1412 = vadd.f32 %v1382, %v1404
    %v1413 = vadd.f32 %v1383, %v1405
    %v1414 = vadd.f32 %v1384, %v1406
    %v1415 = vadd.f32 %v1385, %v1407
    %v1416 = vadd.f32 %v1386, %v1408
    %v1417 = vadd.f32 %v1387, %v1409
    %v1418 = vadd.f32 %v1388, %v1410
    %s1419 = sadd.s32 16, %s1239
    %s1420 = scalar_lea.vmem [#allocation3], %s1419
    %v1421 = vld [vmem:[%s1420] sm:$0xff]
    %v1422 = vld [vmem:[%s1420 + $0x8] sm:$0xff]
    %v1423 = vld [vmem:[%s1420 + $0x10] sm:$0xff]
    %v1424 = vld [vmem:[%s1420 + $0x18] sm:$0xff]
    %v1425 = vld [vmem:[%s1420 + $0x20] sm:$0xff]
    %v1426 = vld [vmem:[%s1420 + $0x28] sm:$0xff]
    %v1427 = vld [vmem:[%s1420 + $0x30] sm:$0xff]
    %v1428 = vld [vmem:[%s1420 + $0x38] sm:$0xff]
    %v1429 = vlaneseq
    %v1430 = vshrl.u32 %v1429, 7
    %v1431 = vsub.s32 0, %v1430
    %v1432 = vrot.slane %v701, %v1431
    %v1433 = vmul.f32 %v1421, %v1432
    %v1434 = vmul.f32 %v1422, %v1432
    %v1435 = vmul.f32 %v1423, %v1432
    %v1436 = vmul.f32 %v1424, %v1432
    %v1437 = vmul.f32 %v1425, %v1432
    %v1438 = vmul.f32 %v1426, %v1432
    %v1439 = vmul.f32 %v1427, %v1432
    %v1440 = vmul.f32 %v1428, %v1432
    %v1441 = vadd.f32 %v1411, %v1433
    %v1442 = vadd.f32 %v1412, %v1434
    %v1443 = vadd.f32 %v1413, %v1435
    %v1444 = vadd.f32 %v1414, %v1436
    %v1445 = vadd.f32 %v1415, %v1437
    %v1446 = vadd.f32 %v1416, %v1438
    %v1447 = vadd.f32 %v1417, %v1439
    %v1448 = vadd.f32 %v1418, %v1440
    %s1449 = sadd.s32 %s1419, 800
    %s1450 = scalar_lea.vmem [#allocation3], %s1449
    %v1451 = vld [vmem:[%s1450] sm:$0xff]
    %v1452 = vld [vmem:[%s1450 + $0x8] sm:$0xff]
    %v1453 = vld [vmem:[%s1450 + $0x10] sm:$0xff]
    %v1454 = vld [vmem:[%s1450 + $0x18] sm:$0xff]
    %v1455 = vld [vmem:[%s1450 + $0x20] sm:$0xff]
    %v1456 = vld [vmem:[%s1450 + $0x28] sm:$0xff]
    %v1457 = vld [vmem:[%s1450 + $0x30] sm:$0xff]
    %v1458 = vld [vmem:[%s1450 + $0x38] sm:$0xff]
    %v1459 = vlaneseq
    %v1460 = vshrl.u32 %v1459, 7
    %v1461 = vsub.s32 0, %v1460
    %v1462 = vrot.slane %v702, %v1461
    %v1463 = vmul.f32 %v1451, %v1462
    %v1464 = vmul.f32 %v1452, %v1462
    %v1465 = vmul.f32 %v1453, %v1462
    %v1466 = vmul.f32 %v1454, %v1462
    %v1467 = vmul.f32 %v1455, %v1462
    %v1468 = vmul.f32 %v1456, %v1462
    %v1469 = vmul.f32 %v1457, %v1462
    %v1470 = vmul.f32 %v1458, %v1462
    %v1471 = vadd.f32 %v1441, %v1463
    %v1472 = vadd.f32 %v1442, %v1464
    %v1473 = vadd.f32 %v1443, %v1465
    %v1474 = vadd.f32 %v1444, %v1466
    %v1475 = vadd.f32 %v1445, %v1467
    %v1476 = vadd.f32 %v1446, %v1468
    %v1477 = vadd.f32 %v1447, %v1469
    %v1478 = vadd.f32 %v1448, %v1470
    %s1479 = sadd.s32 %s1419, 1600
    %s1480 = scalar_lea.vmem [#allocation3], %s1479
    %v1481 = vld [vmem:[%s1480] sm:$0xff]
    %v1482 = vld [vmem:[%s1480 + $0x8] sm:$0xff]
    %v1483 = vld [vmem:[%s1480 + $0x10] sm:$0xff]
    %v1484 = vld [vmem:[%s1480 + $0x18] sm:$0xff]
    %v1485 = vld [vmem:[%s1480 + $0x20] sm:$0xff]
    %v1486 = vld [vmem:[%s1480 + $0x28] sm:$0xff]
    %v1487 = vld [vmem:[%s1480 + $0x30] sm:$0xff]
    %v1488 = vld [vmem:[%s1480 + $0x38] sm:$0xff]
    %v1489 = vlaneseq
    %v1490 = vshrl.u32 %v1489, 7
    %v1491 = vsub.s32 0, %v1490
    %v1492 = vrot.slane %v703, %v1491
    %v1493 = vmul.f32 %v1481, %v1492
    %v1494 = vmul.f32 %v1482, %v1492
    %v1495 = vmul.f32 %v1483, %v1492
    %v1496 = vmul.f32 %v1484, %v1492
    %v1497 = vmul.f32 %v1485, %v1492
    %v1498 = vmul.f32 %v1486, %v1492
    %v1499 = vmul.f32 %v1487, %v1492
    %v1500 = vmul.f32 %v1488, %v1492
    %v1501 = vadd.f32 %v1471, %v1493
    %v1502 = vadd.f32 %v1472, %v1494
    %v1503 = vadd.f32 %v1473, %v1495
    %v1504 = vadd.f32 %v1474, %v1496
    %v1505 = vadd.f32 %v1475, %v1497
    %v1506 = vadd.f32 %v1476, %v1498
    %v1507 = vadd.f32 %v1477, %v1499
    %v1508 = vadd.f32 %v1478, %v1500
    %v1510 = vlaneseq
    %v1511 = vshrl.u32 %v1510, 7
    %v1512 = vsub.s32 0, %v1511
    %v1513 = vrot.slane %v668, %v1512
    %v1515 = vadd.f32 %v1501, %v1513
    %v1516 = vadd.f32 %v1502, %v1513
    %v1517 = vadd.f32 %v1503, %v1513
    %v1518 = vadd.f32 %v1504, %v1513
    %v1519 = vadd.f32 %v1505, %v1513
    %v1520 = vadd.f32 %v1506, %v1513
    %v1521 = vadd.f32 %v1507, %v1513
    %v1522 = vadd.f32 %v1508, %v1513
    %1523 = vst [vmem:[#allocation5] sm:$0xff] %v1515
    %1524 = vst [vmem:[#allocation5 + $0x8] sm:$0xff] %v1516
    %1525 = vst [vmem:[#allocation5 + $0x10] sm:$0xff] %v1517
    %1526 = vst [vmem:[#allocation5 + $0x18] sm:$0xff] %v1518
    %1527 = vst [vmem:[#allocation5 + $0x20] sm:$0xff] %v1519
    %1528 = vst [vmem:[#allocation5 + $0x28] sm:$0xff] %v1520
    %1529 = vst [vmem:[#allocation5 + $0x30] sm:$0xff] %v1521
    %1530 = vst [vmem:[#allocation5 + $0x38] sm:$0xff] %v1522
    %v1531 = vld [vmem:[%s969] sm:$0xff]
    %v1532 = vld [vmem:[%s969 + $0x8] sm:$0xff]
    %v1533 = vld [vmem:[%s969 + $0x10] sm:$0xff]
    %v1534 = vld [vmem:[%s969 + $0x18] sm:$0xff]
    %v1535 = vld [vmem:[%s969 + $0x20] sm:$0xff]
    %v1536 = vld [vmem:[%s969 + $0x28] sm:$0xff]
    %v1537 = vld [vmem:[%s969 + $0x30] sm:$0xff]
    %v1538 = vld [vmem:[%s969 + $0x38] sm:$0xff]
    %v1539 = vmul.f32 %v1531, %v718
    %v1540 = vmul.f32 %v1532, %v718
    %v1541 = vmul.f32 %v1533, %v718
    %v1542 = vmul.f32 %v1534, %v718
    %v1543 = vmul.f32 %v1535, %v718
    %v1544 = vmul.f32 %v1536, %v718
    %v1545 = vmul.f32 %v1537, %v718
    %v1546 = vmul.f32 %v1538, %v718
    %v1547 = vld [vmem:[%s999] sm:$0xff]
    %v1548 = vld [vmem:[%s999 + $0x8] sm:$0xff]
    %v1549 = vld [vmem:[%s999 + $0x10] sm:$0xff]
    %v1550 = vld [vmem:[%s999 + $0x18] sm:$0xff]
    %v1551 = vld [vmem:[%s999 + $0x20] sm:$0xff]
    %v1552 = vld [vmem:[%s999 + $0x28] sm:$0xff]
    %v1553 = vld [vmem:[%s999 + $0x30] sm:$0xff]
    %v1554 = vld [vmem:[%s999 + $0x38] sm:$0xff]
    %v1555 = vmul.f32 %v1547, %v740
    %v1556 = vmul.f32 %v1548, %v740
    %v1557 = vmul.f32 %v1549, %v740
    %v1558 = vmul.f32 %v1550, %v740
    %v1559 = vmul.f32 %v1551, %v740
    %v1560 = vmul.f32 %v1552, %v740
    %v1561 = vmul.f32 %v1553, %v740
    %v1562 = vmul.f32 %v1554, %v740
    %v1563 = vadd.f32 %v1539, %v1555
    %v1564 = vadd.f32 %v1540, %v1556
    %v1565 = vadd.f32 %v1541, %v1557
    %v1566 = vadd.f32 %v1542, %v1558
    %v1567 = vadd.f32 %v1543, %v1559
    %v1568 = vadd.f32 %v1544, %v1560
    %v1569 = vadd.f32 %v1545, %v1561
    %v1570 = vadd.f32 %v1546, %v1562
    %v1571 = vld [vmem:[%s1029] sm:$0xff]
    %v1572 = vld [vmem:[%s1029 + $0x8] sm:$0xff]
    %v1573 = vld [vmem:[%s1029 + $0x10] sm:$0xff]
    %v1574 = vld [vmem:[%s1029 + $0x18] sm:$0xff]
    %v1575 = vld [vmem:[%s1029 + $0x20] sm:$0xff]
    %v1576 = vld [vmem:[%s1029 + $0x28] sm:$0xff]
    %v1577 = vld [vmem:[%s1029 + $0x30] sm:$0xff]
    %v1578 = vld [vmem:[%s1029 + $0x38] sm:$0xff]
    %v1579 = vmul.f32 %v1571, %v770
    %v1580 = vmul.f32 %v1572, %v770
    %v1581 = vmul.f32 %v1573, %v770
    %v1582 = vmul.f32 %v1574, %v770
    %v1583 = vmul.f32 %v1575, %v770
    %v1584 = vmul.f32 %v1576, %v770
    %v1585 = vmul.f32 %v1577, %v770
    %v1586 = vmul.f32 %v1578, %v770
    %v1587 = vadd.f32 %v1563, %v1579
    %v1588 = vadd.f32 %v1564, %v1580
    %v1589 = vadd.f32 %v1565, %v1581
    %v1590 = vadd.f32 %v1566, %v1582
    %v1591 = vadd.f32 %v1567, %v1583
    %v1592 = vadd.f32 %v1568, %v1584
    %v1593 = vadd.f32 %v1569, %v1585
    %v1594 = vadd.f32 %v1570, %v1586
    %v1595 = vld [vmem:[%s1059] sm:$0xff]
    %v1596 = vld [vmem:[%s1059 + $0x8] sm:$0xff]
    %v1597 = vld [vmem:[%s1059 + $0x10] sm:$0xff]
    %v1598 = vld [vmem:[%s1059 + $0x18] sm:$0xff]
    %v1599 = vld [vmem:[%s1059 + $0x20] sm:$0xff]
    %v1600 = vld [vmem:[%s1059 + $0x28] sm:$0xff]
    %v1601 = vld [vmem:[%s1059 + $0x30] sm:$0xff]
    %v1602 = vld [vmem:[%s1059 + $0x38] sm:$0xff]
    %v1603 = vmul.f32 %v1595, %v800
    %v1604 = vmul.f32 %v1596, %v800
    %v1605 = vmul.f32 %v1597, %v800
    %v1606 = vmul.f32 %v1598, %v800
    %v1607 = vmul.f32 %v1599, %v800
    %v1608 = vmul.f32 %v1600, %v800
    %v1609 = vmul.f32 %v1601, %v800
    %v1610 = vmul.f32 %v1602, %v800
    %v1611 = vadd.f32 %v1587, %v1603
    %v1612 = vadd.f32 %v1588, %v1604
    %v1613 = vadd.f32 %v1589, %v1605
    %v1614 = vadd.f32 %v1590, %v1606
    %v1615 = vadd.f32 %v1591, %v1607
    %v1616 = vadd.f32 %v1592, %v1608
    %v1617 = vadd.f32 %v1593, %v1609
    %v1618 = vadd.f32 %v1594, %v1610
    %v1619 = vld [vmem:[%s1089] sm:$0xff]
    %v1620 = vld [vmem:[%s1089 + $0x8] sm:$0xff]
    %v1621 = vld [vmem:[%s1089 + $0x10] sm:$0xff]
    %v1622 = vld [vmem:[%s1089 + $0x18] sm:$0xff]
    %v1623 = vld [vmem:[%s1089 + $0x20] sm:$0xff]
    %v1624 = vld [vmem:[%s1089 + $0x28] sm:$0xff]
    %v1625 = vld [vmem:[%s1089 + $0x30] sm:$0xff]
    %v1626 = vld [vmem:[%s1089 + $0x38] sm:$0xff]
    %v1627 = vmul.f32 %v1619, %v830
    %v1628 = vmul.f32 %v1620, %v830
    %v1629 = vmul.f32 %v1621, %v830
    %v1630 = vmul.f32 %v1622, %v830
    %v1631 = vmul.f32 %v1623, %v830
    %v1632 = vmul.f32 %v1624, %v830
    %v1633 = vmul.f32 %v1625, %v830
    %v1634 = vmul.f32 %v1626, %v830
    %v1635 = vadd.f32 %v1611, %v1627
    %v1636 = vadd.f32 %v1612, %v1628
    %v1637 = vadd.f32 %v1613, %v1629
    %v1638 = vadd.f32 %v1614, %v1630
    %v1639 = vadd.f32 %v1615, %v1631
    %v1640 = vadd.f32 %v1616, %v1632
    %v1641 = vadd.f32 %v1617, %v1633
    %v1642 = vadd.f32 %v1618, %v1634
    %v1643 = vld [vmem:[%s1119] sm:$0xff]
    %v1644 = vld [vmem:[%s1119 + $0x8] sm:$0xff]
    %v1645 = vld [vmem:[%s1119 + $0x10] sm:$0xff]
    %v1646 = vld [vmem:[%s1119 + $0x18] sm:$0xff]
    %v1647 = vld [vmem:[%s1119 + $0x20] sm:$0xff]
    %v1648 = vld [vmem:[%s1119 + $0x28] sm:$0xff]
    %v1649 = vld [vmem:[%s1119 + $0x30] sm:$0xff]
    %v1650 = vld [vmem:[%s1119 + $0x38] sm:$0xff]
    %v1651 = vmul.f32 %v1643, %v860
    %v1652 = vmul.f32 %v1644, %v860
    %v1653 = vmul.f32 %v1645, %v860
    %v1654 = vmul.f32 %v1646, %v860
    %v1655 = vmul.f32 %v1647, %v860
    %v1656 = vmul.f32 %v1648, %v860
    %v1657 = vmul.f32 %v1649, %v860
    %v1658 = vmul.f32 %v1650, %v860
    %v1659 = vadd.f32 %v1635, %v1651
    %v1660 = vadd.f32 %v1636, %v1652
    %v1661 = vadd.f32 %v1637, %v1653
    %v1662 = vadd.f32 %v1638, %v1654
    %v1663 = vadd.f32 %v1639, %v1655
    %v1664 = vadd.f32 %v1640, %v1656
    %v1665 = vadd.f32 %v1641, %v1657
    %v1666 = vadd.f32 %v1642, %v1658
    %v1667 = vld [vmem:[%s1149] sm:$0xff]
    %v1668 = vld [vmem:[%s1149 + $0x8] sm:$0xff]
    %v1669 = vld [vmem:[%s1149 + $0x10] sm:$0xff]
    %v1670 = vld [vmem:[%s1149 + $0x18] sm:$0xff]
    %v1671 = vld [vmem:[%s1149 + $0x20] sm:$0xff]
    %v1672 = vld [vmem:[%s1149 + $0x28] sm:$0xff]
    %v1673 = vld [vmem:[%s1149 + $0x30] sm:$0xff]
    %v1674 = vld [vmem:[%s1149 + $0x38] sm:$0xff]
    %v1675 = vmul.f32 %v1667, %v890
    %v1676 = vmul.f32 %v1668, %v890
    %v1677 = vmul.f32 %v1669, %v890
    %v1678 = vmul.f32 %v1670, %v890
    %v1679 = vmul.f32 %v1671, %v890
    %v1680 = vmul.f32 %v1672, %v890
    %v1681 = vmul.f32 %v1673, %v890
    %v1682 = vmul.f32 %v1674, %v890
    %v1683 = vadd.f32 %v1659, %v1675
    %v1684 = vadd.f32 %v1660, %v1676
    %v1685 = vadd.f32 %v1661, %v1677
    %v1686 = vadd.f32 %v1662, %v1678
    %v1687 = vadd.f32 %v1663, %v1679
    %v1688 = vadd.f32 %v1664, %v1680
    %v1689 = vadd.f32 %v1665, %v1681
    %v1690 = vadd.f32 %v1666, %v1682
    %v1691 = vld [vmem:[%s1179] sm:$0xff]
    %v1692 = vld [vmem:[%s1179 + $0x8] sm:$0xff]
    %v1693 = vld [vmem:[%s1179 + $0x10] sm:$0xff]
    %v1694 = vld [vmem:[%s1179 + $0x18] sm:$0xff]
    %v1695 = vld [vmem:[%s1179 + $0x20] sm:$0xff]
    %v1696 = vld [vmem:[%s1179 + $0x28] sm:$0xff]
    %v1697 = vld [vmem:[%s1179 + $0x30] sm:$0xff]
    %v1698 = vld [vmem:[%s1179 + $0x38] sm:$0xff]
    %v1699 = vmul.f32 %v1691, %v920
    %v1700 = vmul.f32 %v1692, %v920
    %v1701 = vmul.f32 %v1693, %v920
    %v1702 = vmul.f32 %v1694, %v920
    %v1703 = vmul.f32 %v1695, %v920
    %v1704 = vmul.f32 %v1696, %v920
    %v1705 = vmul.f32 %v1697, %v920
    %v1706 = vmul.f32 %v1698, %v920
    %v1707 = vadd.f32 %v1683, %v1699
    %v1708 = vadd.f32 %v1684, %v1700
    %v1709 = vadd.f32 %v1685, %v1701
    %v1710 = vadd.f32 %v1686, %v1702
    %v1711 = vadd.f32 %v1687, %v1703
    %v1712 = vadd.f32 %v1688, %v1704
    %v1713 = vadd.f32 %v1689, %v1705
    %v1714 = vadd.f32 %v1690, %v1706
    %v1715 = vld [vmem:[%s1209] sm:$0xff]
    %v1716 = vld [vmem:[%s1209 + $0x8] sm:$0xff]
    %v1717 = vld [vmem:[%s1209 + $0x10] sm:$0xff]
    %v1718 = vld [vmem:[%s1209 + $0x18] sm:$0xff]
    %v1719 = vld [vmem:[%s1209 + $0x20] sm:$0xff]
    %v1720 = vld [vmem:[%s1209 + $0x28] sm:$0xff]
    %v1721 = vld [vmem:[%s1209 + $0x30] sm:$0xff]
    %v1722 = vld [vmem:[%s1209 + $0x38] sm:$0xff]
    %v1723 = vmul.f32 %v1715, %v950
    %v1724 = vmul.f32 %v1716, %v950
    %v1725 = vmul.f32 %v1717, %v950
    %v1726 = vmul.f32 %v1718, %v950
    %v1727 = vmul.f32 %v1719, %v950
    %v1728 = vmul.f32 %v1720, %v950
    %v1729 = vmul.f32 %v1721, %v950
    %v1730 = vmul.f32 %v1722, %v950
    %v1731 = vadd.f32 %v1707, %v1723
    %v1732 = vadd.f32 %v1708, %v1724
    %v1733 = vadd.f32 %v1709, %v1725
    %v1734 = vadd.f32 %v1710, %v1726
    %v1735 = vadd.f32 %v1711, %v1727
    %v1736 = vadd.f32 %v1712, %v1728
    %v1737 = vadd.f32 %v1713, %v1729
    %v1738 = vadd.f32 %v1714, %v1730
    %v1739 = vld [vmem:[%s1240] sm:$0xff]
    %v1740 = vld [vmem:[%s1240 + $0x8] sm:$0xff]
    %v1741 = vld [vmem:[%s1240 + $0x10] sm:$0xff]
    %v1742 = vld [vmem:[%s1240 + $0x18] sm:$0xff]
    %v1743 = vld [vmem:[%s1240 + $0x20] sm:$0xff]
    %v1744 = vld [vmem:[%s1240 + $0x28] sm:$0xff]
    %v1745 = vld [vmem:[%s1240 + $0x30] sm:$0xff]
    %v1746 = vld [vmem:[%s1240 + $0x38] sm:$0xff]
    %v1747 = vmul.f32 %v1739, %v981
    %v1748 = vmul.f32 %v1740, %v981
    %v1749 = vmul.f32 %v1741, %v981
    %v1750 = vmul.f32 %v1742, %v981
    %v1751 = vmul.f32 %v1743, %v981
    %v1752 = vmul.f32 %v1744, %v981
    %v1753 = vmul.f32 %v1745, %v981
    %v1754 = vmul.f32 %v1746, %v981
    %v1755 = vadd.f32 %v1731, %v1747
    %v1756 = vadd.f32 %v1732, %v1748
    %v1757 = vadd.f32 %v1733, %v1749
    %v1758 = vadd.f32 %v1734, %v1750
    %v1759 = vadd.f32 %v1735, %v1751
    %v1760 = vadd.f32 %v1736, %v1752
    %v1761 = vadd.f32 %v1737, %v1753
    %v1762 = vadd.f32 %v1738, %v1754
    %v1763 = vld [vmem:[%s1270] sm:$0xff]
    %v1764 = vld [vmem:[%s1270 + $0x8] sm:$0xff]
    %v1765 = vld [vmem:[%s1270 + $0x10] sm:$0xff]
    %v1766 = vld [vmem:[%s1270 + $0x18] sm:$0xff]
    %v1767 = vld [vmem:[%s1270 + $0x20] sm:$0xff]
    %v1768 = vld [vmem:[%s1270 + $0x28] sm:$0xff]
    %v1769 = vld [vmem:[%s1270 + $0x30] sm:$0xff]
    %v1770 = vld [vmem:[%s1270 + $0x38] sm:$0xff]
    %v1771 = vmul.f32 %v1763, %v1011
    %v1772 = vmul.f32 %v1764, %v1011
    %v1773 = vmul.f32 %v1765, %v1011
    %v1774 = vmul.f32 %v1766, %v1011
    %v1775 = vmul.f32 %v1767, %v1011
    %v1776 = vmul.f32 %v1768, %v1011
    %v1777 = vmul.f32 %v1769, %v1011
    %v1778 = vmul.f32 %v1770, %v1011
    %v1779 = vadd.f32 %v1755, %v1771
    %v1780 = vadd.f32 %v1756, %v1772
    %v1781 = vadd.f32 %v1757, %v1773
    %v1782 = vadd.f32 %v1758, %v1774
    %v1783 = vadd.f32 %v1759, %v1775
    %v1784 = vadd.f32 %v1760, %v1776
    %v1785 = vadd.f32 %v1761, %v1777
    %v1786 = vadd.f32 %v1762, %v1778
    %v1787 = vld [vmem:[%s1300] sm:$0xff]
    %v1788 = vld [vmem:[%s1300 + $0x8] sm:$0xff]
    %v1789 = vld [vmem:[%s1300 + $0x10] sm:$0xff]
    %v1790 = vld [vmem:[%s1300 + $0x18] sm:$0xff]
    %v1791 = vld [vmem:[%s1300 + $0x20] sm:$0xff]
    %v1792 = vld [vmem:[%s1300 + $0x28] sm:$0xff]
    %v1793 = vld [vmem:[%s1300 + $0x30] sm:$0xff]
    %v1794 = vld [vmem:[%s1300 + $0x38] sm:$0xff]
    %v1795 = vmul.f32 %v1787, %v1041
    %v1796 = vmul.f32 %v1788, %v1041
    %v1797 = vmul.f32 %v1789, %v1041
    %v1798 = vmul.f32 %v1790, %v1041
    %v1799 = vmul.f32 %v1791, %v1041
    %v1800 = vmul.f32 %v1792, %v1041
    %v1801 = vmul.f32 %v1793, %v1041
    %v1802 = vmul.f32 %v1794, %v1041
    %v1803 = vadd.f32 %v1779, %v1795
    %v1804 = vadd.f32 %v1780, %v1796
    %v1805 = vadd.f32 %v1781, %v1797
    %v1806 = vadd.f32 %v1782, %v1798
    %v1807 = vadd.f32 %v1783, %v1799
    %v1808 = vadd.f32 %v1784, %v1800
    %v1809 = vadd.f32 %v1785, %v1801
    %v1810 = vadd.f32 %v1786, %v1802
    %v1811 = vld [vmem:[%s1330] sm:$0xff]
    %v1812 = vld [vmem:[%s1330 + $0x8] sm:$0xff]
    %v1813 = vld [vmem:[%s1330 + $0x10] sm:$0xff]
    %v1814 = vld [vmem:[%s1330 + $0x18] sm:$0xff]
    %v1815 = vld [vmem:[%s1330 + $0x20] sm:$0xff]
    %v1816 = vld [vmem:[%s1330 + $0x28] sm:$0xff]
    %v1817 = vld [vmem:[%s1330 + $0x30] sm:$0xff]
    %v1818 = vld [vmem:[%s1330 + $0x38] sm:$0xff]
    %v1819 = vmul.f32 %v1811, %v1071
    %v1820 = vmul.f32 %v1812, %v1071
    %v1821 = vmul.f32 %v1813, %v1071
    %v1822 = vmul.f32 %v1814, %v1071
    %v1823 = vmul.f32 %v1815, %v1071
    %v1824 = vmul.f32 %v1816, %v1071
    %v1825 = vmul.f32 %v1817, %v1071
    %v1826 = vmul.f32 %v1818, %v1071
    %v1827 = vadd.f32 %v1803, %v1819
    %v1828 = vadd.f32 %v1804, %v1820
    %v1829 = vadd.f32 %v1805, %v1821
    %v1830 = vadd.f32 %v1806, %v1822
    %v1831 = vadd.f32 %v1807, %v1823
    %v1832 = vadd.f32 %v1808, %v1824
    %v1833 = vadd.f32 %v1809, %v1825
    %v1834 = vadd.f32 %v1810, %v1826
    %v1835 = vld [vmem:[%s1360] sm:$0xff]
    %v1836 = vld [vmem:[%s1360 + $0x8] sm:$0xff]
    %v1837 = vld [vmem:[%s1360 + $0x10] sm:$0xff]
    %v1838 = vld [vmem:[%s1360 + $0x18] sm:$0xff]
    %v1839 = vld [vmem:[%s1360 + $0x20] sm:$0xff]
    %v1840 = vld [vmem:[%s1360 + $0x28] sm:$0xff]
    %v1841 = vld [vmem:[%s1360 + $0x30] sm:$0xff]
    %v1842 = vld [vmem:[%s1360 + $0x38] sm:$0xff]
    %v1843 = vmul.f32 %v1835, %v1101
    %v1844 = vmul.f32 %v1836, %v1101
    %v1845 = vmul.f32 %v1837, %v1101
    %v1846 = vmul.f32 %v1838, %v1101
    %v1847 = vmul.f32 %v1839, %v1101
    %v1848 = vmul.f32 %v1840, %v1101
    %v1849 = vmul.f32 %v1841, %v1101
    %v1850 = vmul.f32 %v1842, %v1101
    %v1851 = vadd.f32 %v1827, %v1843
    %v1852 = vadd.f32 %v1828, %v1844
    %v1853 = vadd.f32 %v1829, %v1845
    %v1854 = vadd.f32 %v1830, %v1846
    %v1855 = vadd.f32 %v1831, %v1847
    %v1856 = vadd.f32 %v1832, %v1848
    %v1857 = vadd.f32 %v1833, %v1849
    %v1858 = vadd.f32 %v1834, %v1850
    %v1859 = vld [vmem:[%s1390] sm:$0xff]
    %v1860 = vld [vmem:[%s1390 + $0x8] sm:$0xff]
    %v1861 = vld [vmem:[%s1390 + $0x10] sm:$0xff]
    %v1862 = vld [vmem:[%s1390 + $0x18] sm:$0xff]
    %v1863 = vld [vmem:[%s1390 + $0x20] sm:$0xff]
    %v1864 = vld [vmem:[%s1390 + $0x28] sm:$0xff]
    %v1865 = vld [vmem:[%s1390 + $0x30] sm:$0xff]
    %v1866 = vld [vmem:[%s1390 + $0x38] sm:$0xff]
    %v1867 = vmul.f32 %v1859, %v1131
    %v1868 = vmul.f32 %v1860, %v1131
    %v1869 = vmul.f32 %v1861, %v1131
    %v1870 = vmul.f32 %v1862, %v1131
    %v1871 = vmul.f32 %v1863, %v1131
    %v1872 = vmul.f32 %v1864, %v1131
    %v1873 = vmul.f32 %v1865, %v1131
    %v1874 = vmul.f32 %v1866, %v1131
    %v1875 = vadd.f32 %v1851, %v1867
    %v1876 = vadd.f32 %v1852, %v1868
    %v1877 = vadd.f32 %v1853, %v1869
    %v1878 = vadd.f32 %v1854, %v1870
    %v1879 = vadd.f32 %v1855, %v1871
    %v1880 = vadd.f32 %v1856, %v1872
    %v1881 = vadd.f32 %v1857, %v1873
    %v1882 = vadd.f32 %v1858, %v1874
    %v1883 = vld [vmem:[%s1420] sm:$0xff]
    %v1884 = vld [vmem:[%s1420 + $0x8] sm:$0xff]
    %v1885 = vld [vmem:[%s1420 + $0x10] sm:$0xff]
    %v1886 = vld [vmem:[%s1420 + $0x18] sm:$0xff]
    %v1887 = vld [vmem:[%s1420 + $0x20] sm:$0xff]
    %v1888 = vld [vmem:[%s1420 + $0x28] sm:$0xff]
    %v1889 = vld [vmem:[%s1420 + $0x30] sm:$0xff]
    %v1890 = vld [vmem:[%s1420 + $0x38] sm:$0xff]
    %v1891 = vmul.f32 %v1883, %v1161
    %v1892 = vmul.f32 %v1884, %v1161
    %v1893 = vmul.f32 %v1885, %v1161
    %v1894 = vmul.f32 %v1886, %v1161
    %v1895 = vmul.f32 %v1887, %v1161
    %v1896 = vmul.f32 %v1888, %v1161
    %v1897 = vmul.f32 %v1889, %v1161
    %v1898 = vmul.f32 %v1890, %v1161
    %v1899 = vadd.f32 %v1875, %v1891
    %v1900 = vadd.f32 %v1876, %v1892
    %v1901 = vadd.f32 %v1877, %v1893
    %v1902 = vadd.f32 %v1878, %v1894
    %v1903 = vadd.f32 %v1879, %v1895
    %v1904 = vadd.f32 %v1880, %v1896
    %v1905 = vadd.f32 %v1881, %v1897
    %v1906 = vadd.f32 %v1882, %v1898
    %v1907 = vld [vmem:[%s1450] sm:$0xff]
    %v1908 = vld [vmem:[%s1450 + $0x8] sm:$0xff]
    %v1909 = vld [vmem:[%s1450 + $0x10] sm:$0xff]
    %v1910 = vld [vmem:[%s1450 + $0x18] sm:$0xff]
    %v1911 = vld [vmem:[%s1450 + $0x20] sm:$0xff]
    %v1912 = vld [vmem:[%s1450 + $0x28] sm:$0xff]
    %v1913 = vld [vmem:[%s1450 + $0x30] sm:$0xff]
    %v1914 = vld [vmem:[%s1450 + $0x38] sm:$0xff]
    %v1915 = vmul.f32 %v1907, %v1191
    %v1916 = vmul.f32 %v1908, %v1191
    %v1917 = vmul.f32 %v1909, %v1191
    %v1918 = vmul.f32 %v1910, %v1191
    %v1919 = vmul.f32 %v1911, %v1191
    %v1920 = vmul.f32 %v1912, %v1191
    %v1921 = vmul.f32 %v1913, %v1191
    %v1922 = vmul.f32 %v1914, %v1191
    %v1923 = vadd.f32 %v1899, %v1915
    %v1924 = vadd.f32 %v1900, %v1916
    %v1925 = vadd.f32 %v1901, %v1917
    %v1926 = vadd.f32 %v1902, %v1918
    %v1927 = vadd.f32 %v1903, %v1919
    %v1928 = vadd.f32 %v1904, %v1920
    %v1929 = vadd.f32 %v1905, %v1921
    %v1930 = vadd.f32 %v1906, %v1922
    %v1931 = vld [vmem:[%s1480] sm:$0xff]
    %v1932 = vld [vmem:[%s1480 + $0x8] sm:$0xff]
    %v1933 = vld [vmem:[%s1480 + $0x10] sm:$0xff]
    %v1934 = vld [vmem:[%s1480 + $0x18] sm:$0xff]
    %v1935 = vld [vmem:[%s1480 + $0x20] sm:$0xff]
    %v1936 = vld [vmem:[%s1480 + $0x28] sm:$0xff]
    %v1937 = vld [vmem:[%s1480 + $0x30] sm:$0xff]
    %v1938 = vld [vmem:[%s1480 + $0x38] sm:$0xff]
    %v1939 = vmul.f32 %v1931, %v1221
    %v1940 = vmul.f32 %v1932, %v1221
    %v1941 = vmul.f32 %v1933, %v1221
    %v1942 = vmul.f32 %v1934, %v1221
    %v1943 = vmul.f32 %v1935, %v1221
    %v1944 = vmul.f32 %v1936, %v1221
    %v1945 = vmul.f32 %v1937, %v1221
    %v1946 = vmul.f32 %v1938, %v1221
    %v1947 = vadd.f32 %v1923, %v1939
    %v1948 = vadd.f32 %v1924, %v1940
    %v1949 = vadd.f32 %v1925, %v1941
    %v1950 = vadd.f32 %v1926, %v1942
    %v1951 = vadd.f32 %v1927, %v1943
    %v1952 = vadd.f32 %v1928, %v1944
    %v1953 = vadd.f32 %v1929, %v1945
    %v1954 = vadd.f32 %v1930, %v1946
    %s1955 = sadd.s32 %s704, 3
    %s1956 = smul.u32 %s1955, 80
    %s1957 = scalar_lea.vmem [#allocation3], %s1956
    %v1958 = vld [vmem:[%s1957] sm:$0xff]
    %v1959 = vld [vmem:[%s1957 + $0x8] sm:$0xff]
    %v1960 = vld [vmem:[%s1957 + $0x10] sm:$0xff]
    %v1961 = vld [vmem:[%s1957 + $0x18] sm:$0xff]
    %v1962 = vld [vmem:[%s1957 + $0x20] sm:$0xff]
    %v1963 = vld [vmem:[%s1957 + $0x28] sm:$0xff]
    %v1964 = vld [vmem:[%s1957 + $0x30] sm:$0xff]
    %v1965 = vld [vmem:[%s1957 + $0x38] sm:$0xff]
    %v1966 = vmul.f32 %v1958, %v1252
    %v1967 = vmul.f32 %v1959, %v1252
    %v1968 = vmul.f32 %v1960, %v1252
    %v1969 = vmul.f32 %v1961, %v1252
    %v1970 = vmul.f32 %v1962, %v1252
    %v1971 = vmul.f32 %v1963, %v1252
    %v1972 = vmul.f32 %v1964, %v1252
    %v1973 = vmul.f32 %v1965, %v1252
    %v1974 = vadd.f32 %v1947, %v1966
    %v1975 = vadd.f32 %v1948, %v1967
    %v1976 = vadd.f32 %v1949, %v1968
    %v1977 = vadd.f32 %v1950, %v1969
    %v1978 = vadd.f32 %v1951, %v1970
    %v1979 = vadd.f32 %v1952, %v1971
    %v1980 = vadd.f32 %v1953, %v1972
    %v1981 = vadd.f32 %v1954, %v1973
    %s1982 = sadd.s32 %s1956, 800
    %s1983 = scalar_lea.vmem [#allocation3], %s1982
    %v1984 = vld [vmem:[%s1983] sm:$0xff]
    %v1985 = vld [vmem:[%s1983 + $0x8] sm:$0xff]
    %v1986 = vld [vmem:[%s1983 + $0x10] sm:$0xff]
    %v1987 = vld [vmem:[%s1983 + $0x18] sm:$0xff]
    %v1988 = vld [vmem:[%s1983 + $0x20] sm:$0xff]
    %v1989 = vld [vmem:[%s1983 + $0x28] sm:$0xff]
    %v1990 = vld [vmem:[%s1983 + $0x30] sm:$0xff]
    %v1991 = vld [vmem:[%s1983 + $0x38] sm:$0xff]
    %v1992 = vmul.f32 %v1984, %v1282
    %v1993 = vmul.f32 %v1985, %v1282
    %v1994 = vmul.f32 %v1986, %v1282
    %v1995 = vmul.f32 %v1987, %v1282
    %v1996 = vmul.f32 %v1988, %v1282
    %v1997 = vmul.f32 %v1989, %v1282
    %v1998 = vmul.f32 %v1990, %v1282
    %v1999 = vmul.f32 %v1991, %v1282
    %v2000 = vadd.f32 %v1974, %v1992
    %v2001 = vadd.f32 %v1975, %v1993
    %v2002 = vadd.f32 %v1976, %v1994
    %v2003 = vadd.f32 %v1977, %v1995
    %v2004 = vadd.f32 %v1978, %v1996
    %v2005 = vadd.f32 %v1979, %v1997
    %v2006 = vadd.f32 %v1980, %v1998
    %v2007 = vadd.f32 %v1981, %v1999
    %s2008 = sadd.s32 %s1956, 1600
    %s2009 = scalar_lea.vmem [#allocation3], %s2008
    %v2010 = vld [vmem:[%s2009] sm:$0xff]
    %v2011 = vld [vmem:[%s2009 + $0x8] sm:$0xff]
    %v2012 = vld [vmem:[%s2009 + $0x10] sm:$0xff]
    %v2013 = vld [vmem:[%s2009 + $0x18] sm:$0xff]
    %v2014 = vld [vmem:[%s2009 + $0x20] sm:$0xff]
    %v2015 = vld [vmem:[%s2009 + $0x28] sm:$0xff]
    %v2016 = vld [vmem:[%s2009 + $0x30] sm:$0xff]
    %v2017 = vld [vmem:[%s2009 + $0x38] sm:$0xff]
    %v2018 = vmul.f32 %v2010, %v1312
    %v2019 = vmul.f32 %v2011, %v1312
    %v2020 = vmul.f32 %v2012, %v1312
    %v2021 = vmul.f32 %v2013, %v1312
    %v2022 = vmul.f32 %v2014, %v1312
    %v2023 = vmul.f32 %v2015, %v1312
    %v2024 = vmul.f32 %v2016, %v1312
    %v2025 = vmul.f32 %v2017, %v1312
    %v2026 = vadd.f32 %v2000, %v2018
    %v2027 = vadd.f32 %v2001, %v2019
    %v2028 = vadd.f32 %v2002, %v2020
    %v2029 = vadd.f32 %v2003, %v2021
    %v2030 = vadd.f32 %v2004, %v2022
    %v2031 = vadd.f32 %v2005, %v2023
    %v2032 = vadd.f32 %v2006, %v2024
    %v2033 = vadd.f32 %v2007, %v2025
    %s2034 = sadd.s32 8, %s1956
    %s2035 = scalar_lea.vmem [#allocation3], %s2034
    %v2036 = vld [vmem:[%s2035] sm:$0xff]
    %v2037 = vld [vmem:[%s2035 + $0x8] sm:$0xff]
    %v2038 = vld [vmem:[%s2035 + $0x10] sm:$0xff]
    %v2039 = vld [vmem:[%s2035 + $0x18] sm:$0xff]
    %v2040 = vld [vmem:[%s2035 + $0x20] sm:$0xff]
    %v2041 = vld [vmem:[%s2035 + $0x28] sm:$0xff]
    %v2042 = vld [vmem:[%s2035 + $0x30] sm:$0xff]
    %v2043 = vld [vmem:[%s2035 + $0x38] sm:$0xff]
    %v2044 = vmul.f32 %v2036, %v1342
    %v2045 = vmul.f32 %v2037, %v1342
    %v2046 = vmul.f32 %v2038, %v1342
    %v2047 = vmul.f32 %v2039, %v1342
    %v2048 = vmul.f32 %v2040, %v1342
    %v2049 = vmul.f32 %v2041, %v1342
    %v2050 = vmul.f32 %v2042, %v1342
    %v2051 = vmul.f32 %v2043, %v1342
    %v2052 = vadd.f32 %v2026, %v2044
    %v2053 = vadd.f32 %v2027, %v2045
    %v2054 = vadd.f32 %v2028, %v2046
    %v2055 = vadd.f32 %v2029, %v2047
    %v2056 = vadd.f32 %v2030, %v2048
    %v2057 = vadd.f32 %v2031, %v2049
    %v2058 = vadd.f32 %v2032, %v2050
    %v2059 = vadd.f32 %v2033, %v2051
    %s2060 = sadd.s32 %s2034, 800
    %s2061 = scalar_lea.vmem [#allocation3], %s2060
    %v2062 = vld [vmem:[%s2061] sm:$0xff]
    %v2063 = vld [vmem:[%s2061 + $0x8] sm:$0xff]
    %v2064 = vld [vmem:[%s2061 + $0x10] sm:$0xff]
    %v2065 = vld [vmem:[%s2061 + $0x18] sm:$0xff]
    %v2066 = vld [vmem:[%s2061 + $0x20] sm:$0xff]
    %v2067 = vld [vmem:[%s2061 + $0x28] sm:$0xff]
    %v2068 = vld [vmem:[%s2061 + $0x30] sm:$0xff]
    %v2069 = vld [vmem:[%s2061 + $0x38] sm:$0xff]
    %v2070 = vmul.f32 %v2062, %v1372
    %v2071 = vmul.f32 %v2063, %v1372
    %v2072 = vmul.f32 %v2064, %v1372
    %v2073 = vmul.f32 %v2065, %v1372
    %v2074 = vmul.f32 %v2066, %v1372
    %v2075 = vmul.f32 %v2067, %v1372
    %v2076 = vmul.f32 %v2068, %v1372
    %v2077 = vmul.f32 %v2069, %v1372
    %v2078 = vadd.f32 %v2052, %v2070
    %v2079 = vadd.f32 %v2053, %v2071
    %v2080 = vadd.f32 %v2054, %v2072
    %v2081 = vadd.f32 %v2055, %v2073
    %v2082 = vadd.f32 %v2056, %v2074
    %v2083 = vadd.f32 %v2057, %v2075
    %v2084 = vadd.f32 %v2058, %v2076
    %v2085 = vadd.f32 %v2059, %v2077
    %s2086 = sadd.s32 %s2034, 1600
    %s2087 = scalar_lea.vmem [#allocation3], %s2086
    %v2088 = vld [vmem:[%s2087] sm:$0xff]
    %v2089 = vld [vmem:[%s2087 + $0x8] sm:$0xff]
    %v2090 = vld [vmem:[%s2087 + $0x10] sm:$0xff]
    %v2091 = vld [vmem:[%s2087 + $0x18] sm:$0xff]
    %v2092 = vld [vmem:[%s2087 + $0x20] sm:$0xff]
    %v2093 = vld [vmem:[%s2087 + $0x28] sm:$0xff]
    %v2094 = vld [vmem:[%s2087 + $0x30] sm:$0xff]
    %v2095 = vld [vmem:[%s2087 + $0x38] sm:$0xff]
    %v2096 = vmul.f32 %v2088, %v1402
    %v2097 = vmul.f32 %v2089, %v1402
    %v2098 = vmul.f32 %v2090, %v1402
    %v2099 = vmul.f32 %v2091, %v1402
    %v2100 = vmul.f32 %v2092, %v1402
    %v2101 = vmul.f32 %v2093, %v1402
    %v2102 = vmul.f32 %v2094, %v1402
    %v2103 = vmul.f32 %v2095, %v1402
    %v2104 = vadd.f32 %v2078, %v2096
    %v2105 = vadd.f32 %v2079, %v2097
    %v2106 = vadd.f32 %v2080, %v2098
    %v2107 = vadd.f32 %v2081, %v2099
    %v2108 = vadd.f32 %v2082, %v2100
    %v2109 = vadd.f32 %v2083, %v2101
    %v2110 = vadd.f32 %v2084, %v2102
    %v2111 = vadd.f32 %v2085, %v2103
    %s2112 = sadd.s32 16, %s1956
    %s2113 = scalar_lea.vmem [#allocation3], %s2112
    %v2114 = vld [vmem:[%s2113] sm:$0xff]
    %v2115 = vld [vmem:[%s2113 + $0x8] sm:$0xff]
    %v2116 = vld [vmem:[%s2113 + $0x10] sm:$0xff]
    %v2117 = vld [vmem:[%s2113 + $0x18] sm:$0xff]
    %v2118 = vld [vmem:[%s2113 + $0x20] sm:$0xff]
    %v2119 = vld [vmem:[%s2113 + $0x28] sm:$0xff]
    %v2120 = vld [vmem:[%s2113 + $0x30] sm:$0xff]
    %v2121 = vld [vmem:[%s2113 + $0x38] sm:$0xff]
    %v2122 = vmul.f32 %v2114, %v1432
    %v2123 = vmul.f32 %v2115, %v1432
    %v2124 = vmul.f32 %v2116, %v1432
    %v2125 = vmul.f32 %v2117, %v1432
    %v2126 = vmul.f32 %v2118, %v1432
    %v2127 = vmul.f32 %v2119, %v1432
    %v2128 = vmul.f32 %v2120, %v1432
    %v2129 = vmul.f32 %v2121, %v1432
    %v2130 = vadd.f32 %v2104, %v2122
    %v2131 = vadd.f32 %v2105, %v2123
    %v2132 = vadd.f32 %v2106, %v2124
    %v2133 = vadd.f32 %v2107, %v2125
    %v2134 = vadd.f32 %v2108, %v2126
    %v2135 = vadd.f32 %v2109, %v2127
    %v2136 = vadd.f32 %v2110, %v2128
    %v2137 = vadd.f32 %v2111, %v2129
    %s2138 = sadd.s32 %s2112, 800
    %s2139 = scalar_lea.vmem [#allocation3], %s2138
    %v2140 = vld [vmem:[%s2139] sm:$0xff]
    %v2141 = vld [vmem:[%s2139 + $0x8] sm:$0xff]
    %v2142 = vld [vmem:[%s2139 + $0x10] sm:$0xff]
    %v2143 = vld [vmem:[%s2139 + $0x18] sm:$0xff]
    %v2144 = vld [vmem:[%s2139 + $0x20] sm:$0xff]
    %v2145 = vld [vmem:[%s2139 + $0x28] sm:$0xff]
    %v2146 = vld [vmem:[%s2139 + $0x30] sm:$0xff]
    %v2147 = vld [vmem:[%s2139 + $0x38] sm:$0xff]
    %v2148 = vmul.f32 %v2140, %v1462
    %v2149 = vmul.f32 %v2141, %v1462
    %v2150 = vmul.f32 %v2142, %v1462
    %v2151 = vmul.f32 %v2143, %v1462
    %v2152 = vmul.f32 %v2144, %v1462
    %v2153 = vmul.f32 %v2145, %v1462
    %v2154 = vmul.f32 %v2146, %v1462
    %v2155 = vmul.f32 %v2147, %v1462
    %v2156 = vadd.f32 %v2130, %v2148
    %v2157 = vadd.f32 %v2131, %v2149
    %v2158 = vadd.f32 %v2132, %v2150
    %v2159 = vadd.f32 %v2133, %v2151
    %v2160 = vadd.f32 %v2134, %v2152
    %v2161 = vadd.f32 %v2135, %v2153
    %v2162 = vadd.f32 %v2136, %v2154
    %v2163 = vadd.f32 %v2137, %v2155
    %s2164 = sadd.s32 %s2112, 1600
    %s2165 = scalar_lea.vmem [#allocation3], %s2164
    %v2166 = vld [vmem:[%s2165] sm:$0xff]
    %v2167 = vld [vmem:[%s2165 + $0x8] sm:$0xff]
    %v2168 = vld [vmem:[%s2165 + $0x10] sm:$0xff]
    %v2169 = vld [vmem:[%s2165 + $0x18] sm:$0xff]
    %v2170 = vld [vmem:[%s2165 + $0x20] sm:$0xff]
    %v2171 = vld [vmem:[%s2165 + $0x28] sm:$0xff]
    %v2172 = vld [vmem:[%s2165 + $0x30] sm:$0xff]
    %v2173 = vld [vmem:[%s2165 + $0x38] sm:$0xff]
    %v2174 = vmul.f32 %v2166, %v1492
    %v2175 = vmul.f32 %v2167, %v1492
    %v2176 = vmul.f32 %v2168, %v1492
    %v2177 = vmul.f32 %v2169, %v1492
    %v2178 = vmul.f32 %v2170, %v1492
    %v2179 = vmul.f32 %v2171, %v1492
    %v2180 = vmul.f32 %v2172, %v1492
    %v2181 = vmul.f32 %v2173, %v1492
    %v2182 = vadd.f32 %v2156, %v2174
    %v2183 = vadd.f32 %v2157, %v2175
    %v2184 = vadd.f32 %v2158, %v2176
    %v2185 = vadd.f32 %v2159, %v2177
    %v2186 = vadd.f32 %v2160, %v2178
    %v2187 = vadd.f32 %v2161, %v2179
    %v2188 = vadd.f32 %v2162, %v2180
    %v2189 = vadd.f32 %v2163, %v2181
    %v2190 = vadd.f32 %v2182, %v1513
    %v2191 = vadd.f32 %v2183, %v1513
    %v2192 = vadd.f32 %v2184, %v1513
    %v2193 = vadd.f32 %v2185, %v1513
    %v2194 = vadd.f32 %v2186, %v1513
    %v2195 = vadd.f32 %v2187, %v1513
    %v2196 = vadd.f32 %v2188, %v1513
    %v2197 = vadd.f32 %v2189, %v1513
    %s2198 = scalar_lea.vmem [#allocation5], 64
    %2199 = vst [vmem:[%s2198] sm:$0xff] %v2190
    %2200 = vst [vmem:[%s2198 + $0x8] sm:$0xff] %v2191
    %2201 = vst [vmem:[%s2198 + $0x10] sm:$0xff] %v2192
    %2202 = vst [vmem:[%s2198 + $0x18] sm:$0xff] %v2193
    %2203 = vst [vmem:[%s2198 + $0x20] sm:$0xff] %v2194
    %2204 = vst [vmem:[%s2198 + $0x28] sm:$0xff] %v2195
    %2205 = vst [vmem:[%s2198 + $0x30] sm:$0xff] %v2196
    %2206 = vst [vmem:[%s2198 + $0x38] sm:$0xff] %v2197
    %v2207 = vld [vmem:[%s1240] sm:$0xff]
    %v2208 = vld [vmem:[%s1240 + $0x8] sm:$0xff]
    %v2209 = vld [vmem:[%s1240 + $0x10] sm:$0xff]
    %v2210 = vld [vmem:[%s1240 + $0x18] sm:$0xff]
    %v2211 = vld [vmem:[%s1240 + $0x20] sm:$0xff]
    %v2212 = vld [vmem:[%s1240 + $0x28] sm:$0xff]
    %v2213 = vld [vmem:[%s1240 + $0x30] sm:$0xff]
    %v2214 = vld [vmem:[%s1240 + $0x38] sm:$0xff]
    %v2215 = vmul.f32 %v2207, %v718
    %v2216 = vmul.f32 %v2208, %v718
    %v2217 = vmul.f32 %v2209, %v718
    %v2218 = vmul.f32 %v2210, %v718
    %v2219 = vmul.f32 %v2211, %v718
    %v2220 = vmul.f32 %v2212, %v718
    %v2221 = vmul.f32 %v2213, %v718
    %v2222 = vmul.f32 %v2214, %v718
    %v2223 = vld [vmem:[%s1270] sm:$0xff]
    %v2224 = vld [vmem:[%s1270 + $0x8] sm:$0xff]
    %v2225 = vld [vmem:[%s1270 + $0x10] sm:$0xff]
    %v2226 = vld [vmem:[%s1270 + $0x18] sm:$0xff]
    %v2227 = vld [vmem:[%s1270 + $0x20] sm:$0xff]
    %v2228 = vld [vmem:[%s1270 + $0x28] sm:$0xff]
    %v2229 = vld [vmem:[%s1270 + $0x30] sm:$0xff]
    %v2230 = vld [vmem:[%s1270 + $0x38] sm:$0xff]
    %v2231 = vmul.f32 %v2223, %v740
    %v2232 = vmul.f32 %v2224, %v740
    %v2233 = vmul.f32 %v2225, %v740
    %v2234 = vmul.f32 %v2226, %v740
    %v2235 = vmul.f32 %v2227, %v740
    %v2236 = vmul.f32 %v2228, %v740
    %v2237 = vmul.f32 %v2229, %v740
    %v2238 = vmul.f32 %v2230, %v740
    %v2239 = vadd.f32 %v2215, %v2231
    %v2240 = vadd.f32 %v2216, %v2232
    %v2241 = vadd.f32 %v2217, %v2233
    %v2242 = vadd.f32 %v2218, %v2234
    %v2243 = vadd.f32 %v2219, %v2235
    %v2244 = vadd.f32 %v2220, %v2236
    %v2245 = vadd.f32 %v2221, %v2237
    %v2246 = vadd.f32 %v2222, %v2238
    %v2247 = vld [vmem:[%s1300] sm:$0xff]
    %v2248 = vld [vmem:[%s1300 + $0x8] sm:$0xff]
    %v2249 = vld [vmem:[%s1300 + $0x10] sm:$0xff]
    %v2250 = vld [vmem:[%s1300 + $0x18] sm:$0xff]
    %v2251 = vld [vmem:[%s1300 + $0x20] sm:$0xff]
    %v2252 = vld [vmem:[%s1300 + $0x28] sm:$0xff]
    %v2253 = vld [vmem:[%s1300 + $0x30] sm:$0xff]
    %v2254 = vld [vmem:[%s1300 + $0x38] sm:$0xff]
    %v2255 = vmul.f32 %v2247, %v770
    %v2256 = vmul.f32 %v2248, %v770
    %v2257 = vmul.f32 %v2249, %v770
    %v2258 = vmul.f32 %v2250, %v770
    %v2259 = vmul.f32 %v2251, %v770
    %v2260 = vmul.f32 %v2252, %v770
    %v2261 = vmul.f32 %v2253, %v770
    %v2262 = vmul.f32 %v2254, %v770
    %v2263 = vadd.f32 %v2239, %v2255
    %v2264 = vadd.f32 %v2240, %v2256
    %v2265 = vadd.f32 %v2241, %v2257
    %v2266 = vadd.f32 %v2242, %v2258
    %v2267 = vadd.f32 %v2243, %v2259
    %v2268 = vadd.f32 %v2244, %v2260
    %v2269 = vadd.f32 %v2245, %v2261
    %v2270 = vadd.f32 %v2246, %v2262
    %v2271 = vld [vmem:[%s1330] sm:$0xff]
    %v2272 = vld [vmem:[%s1330 + $0x8] sm:$0xff]
    %v2273 = vld [vmem:[%s1330 + $0x10] sm:$0xff]
    %v2274 = vld [vmem:[%s1330 + $0x18] sm:$0xff]
    %v2275 = vld [vmem:[%s1330 + $0x20] sm:$0xff]
    %v2276 = vld [vmem:[%s1330 + $0x28] sm:$0xff]
    %v2277 = vld [vmem:[%s1330 + $0x30] sm:$0xff]
    %v2278 = vld [vmem:[%s1330 + $0x38] sm:$0xff]
    %v2279 = vmul.f32 %v2271, %v800
    %v2280 = vmul.f32 %v2272, %v800
    %v2281 = vmul.f32 %v2273, %v800
    %v2282 = vmul.f32 %v2274, %v800
    %v2283 = vmul.f32 %v2275, %v800
    %v2284 = vmul.f32 %v2276, %v800
    %v2285 = vmul.f32 %v2277, %v800
    %v2286 = vmul.f32 %v2278, %v800
    %v2287 = vadd.f32 %v2263, %v2279
    %v2288 = vadd.f32 %v2264, %v2280
    %v2289 = vadd.f32 %v2265, %v2281
    %v2290 = vadd.f32 %v2266, %v2282
    %v2291 = vadd.f32 %v2267, %v2283
    %v2292 = vadd.f32 %v2268, %v2284
    %v2293 = vadd.f32 %v2269, %v2285
    %v2294 = vadd.f32 %v2270, %v2286
    %v2295 = vld [vmem:[%s1360] sm:$0xff]
    %v2296 = vld [vmem:[%s1360 + $0x8] sm:$0xff]
    %v2297 = vld [vmem:[%s1360 + $0x10] sm:$0xff]
    %v2298 = vld [vmem:[%s1360 + $0x18] sm:$0xff]
    %v2299 = vld [vmem:[%s1360 + $0x20] sm:$0xff]
    %v2300 = vld [vmem:[%s1360 + $0x28] sm:$0xff]
    %v2301 = vld [vmem:[%s1360 + $0x30] sm:$0xff]
    %v2302 = vld [vmem:[%s1360 + $0x38] sm:$0xff]
    %v2303 = vmul.f32 %v2295, %v830
    %v2304 = vmul.f32 %v2296, %v830
    %v2305 = vmul.f32 %v2297, %v830
    %v2306 = vmul.f32 %v2298, %v830
    %v2307 = vmul.f32 %v2299, %v830
    %v2308 = vmul.f32 %v2300, %v830
    %v2309 = vmul.f32 %v2301, %v830
    %v2310 = vmul.f32 %v2302, %v830
    %v2311 = vadd.f32 %v2287, %v2303
    %v2312 = vadd.f32 %v2288, %v2304
    %v2313 = vadd.f32 %v2289, %v2305
    %v2314 = vadd.f32 %v2290, %v2306
    %v2315 = vadd.f32 %v2291, %v2307
    %v2316 = vadd.f32 %v2292, %v2308
    %v2317 = vadd.f32 %v2293, %v2309
    %v2318 = vadd.f32 %v2294, %v2310
    %v2319 = vld [vmem:[%s1390] sm:$0xff]
    %v2320 = vld [vmem:[%s1390 + $0x8] sm:$0xff]
    %v2321 = vld [vmem:[%s1390 + $0x10] sm:$0xff]
    %v2322 = vld [vmem:[%s1390 + $0x18] sm:$0xff]
    %v2323 = vld [vmem:[%s1390 + $0x20] sm:$0xff]
    %v2324 = vld [vmem:[%s1390 + $0x28] sm:$0xff]
    %v2325 = vld [vmem:[%s1390 + $0x30] sm:$0xff]
    %v2326 = vld [vmem:[%s1390 + $0x38] sm:$0xff]
    %v2327 = vmul.f32 %v2319, %v860
    %v2328 = vmul.f32 %v2320, %v860
    %v2329 = vmul.f32 %v2321, %v860
    %v2330 = vmul.f32 %v2322, %v860
    %v2331 = vmul.f32 %v2323, %v860
    %v2332 = vmul.f32 %v2324, %v860
    %v2333 = vmul.f32 %v2325, %v860
    %v2334 = vmul.f32 %v2326, %v860
    %v2335 = vadd.f32 %v2311, %v2327
    %v2336 = vadd.f32 %v2312, %v2328
    %v2337 = vadd.f32 %v2313, %v2329
    %v2338 = vadd.f32 %v2314, %v2330
    %v2339 = vadd.f32 %v2315, %v2331
    %v2340 = vadd.f32 %v2316, %v2332
    %v2341 = vadd.f32 %v2317, %v2333
    %v2342 = vadd.f32 %v2318, %v2334
    %v2343 = vld [vmem:[%s1420] sm:$0xff]
    %v2344 = vld [vmem:[%s1420 + $0x8] sm:$0xff]
    %v2345 = vld [vmem:[%s1420 + $0x10] sm:$0xff]
    %v2346 = vld [vmem:[%s1420 + $0x18] sm:$0xff]
    %v2347 = vld [vmem:[%s1420 + $0x20] sm:$0xff]
    %v2348 = vld [vmem:[%s1420 + $0x28] sm:$0xff]
    %v2349 = vld [vmem:[%s1420 + $0x30] sm:$0xff]
    %v2350 = vld [vmem:[%s1420 + $0x38] sm:$0xff]
    %v2351 = vmul.f32 %v2343, %v890
    %v2352 = vmul.f32 %v2344, %v890
    %v2353 = vmul.f32 %v2345, %v890
    %v2354 = vmul.f32 %v2346, %v890
    %v2355 = vmul.f32 %v2347, %v890
    %v2356 = vmul.f32 %v2348, %v890
    %v2357 = vmul.f32 %v2349, %v890
    %v2358 = vmul.f32 %v2350, %v890
    %v2359 = vadd.f32 %v2335, %v2351
    %v2360 = vadd.f32 %v2336, %v2352
    %v2361 = vadd.f32 %v2337, %v2353
    %v2362 = vadd.f32 %v2338, %v2354
    %v2363 = vadd.f32 %v2339, %v2355
    %v2364 = vadd.f32 %v2340, %v2356
    %v2365 = vadd.f32 %v2341, %v2357
    %v2366 = vadd.f32 %v2342, %v2358
    %v2367 = vld [vmem:[%s1450] sm:$0xff]
    %v2368 = vld [vmem:[%s1450 + $0x8] sm:$0xff]
    %v2369 = vld [vmem:[%s1450 + $0x10] sm:$0xff]
    %v2370 = vld [vmem:[%s1450 + $0x18] sm:$0xff]
    %v2371 = vld [vmem:[%s1450 + $0x20] sm:$0xff]
    %v2372 = vld [vmem:[%s1450 + $0x28] sm:$0xff]
    %v2373 = vld [vmem:[%s1450 + $0x30] sm:$0xff]
    %v2374 = vld [vmem:[%s1450 + $0x38] sm:$0xff]
    %v2375 = vmul.f32 %v2367, %v920
    %v2376 = vmul.f32 %v2368, %v920
    %v2377 = vmul.f32 %v2369, %v920
    %v2378 = vmul.f32 %v2370, %v920
    %v2379 = vmul.f32 %v2371, %v920
    %v2380 = vmul.f32 %v2372, %v920
    %v2381 = vmul.f32 %v2373, %v920
    %v2382 = vmul.f32 %v2374, %v920
    %v2383 = vadd.f32 %v2359, %v2375
    %v2384 = vadd.f32 %v2360, %v2376
    %v2385 = vadd.f32 %v2361, %v2377
    %v2386 = vadd.f32 %v2362, %v2378
    %v2387 = vadd.f32 %v2363, %v2379
    %v2388 = vadd.f32 %v2364, %v2380
    %v2389 = vadd.f32 %v2365, %v2381
    %v2390 = vadd.f32 %v2366, %v2382
    %v2391 = vld [vmem:[%s1480] sm:$0xff]
    %v2392 = vld [vmem:[%s1480 + $0x8] sm:$0xff]
    %v2393 = vld [vmem:[%s1480 + $0x10] sm:$0xff]
    %v2394 = vld [vmem:[%s1480 + $0x18] sm:$0xff]
    %v2395 = vld [vmem:[%s1480 + $0x20] sm:$0xff]
    %v2396 = vld [vmem:[%s1480 + $0x28] sm:$0xff]
    %v2397 = vld [vmem:[%s1480 + $0x30] sm:$0xff]
    %v2398 = vld [vmem:[%s1480 + $0x38] sm:$0xff]
    %v2399 = vmul.f32 %v2391, %v950
    %v2400 = vmul.f32 %v2392, %v950
    %v2401 = vmul.f32 %v2393, %v950
    %v2402 = vmul.f32 %v2394, %v950
    %v2403 = vmul.f32 %v2395, %v950
    %v2404 = vmul.f32 %v2396, %v950
    %v2405 = vmul.f32 %v2397, %v950
    %v2406 = vmul.f32 %v2398, %v950
    %v2407 = vadd.f32 %v2383, %v2399
    %v2408 = vadd.f32 %v2384, %v2400
    %v2409 = vadd.f32 %v2385, %v2401
    %v2410 = vadd.f32 %v2386, %v2402
    %v2411 = vadd.f32 %v2387, %v2403
    %v2412 = vadd.f32 %v2388, %v2404
    %v2413 = vadd.f32 %v2389, %v2405
    %v2414 = vadd.f32 %v2390, %v2406
    %v2415 = vld [vmem:[%s1957] sm:$0xff]
    %v2416 = vld [vmem:[%s1957 + $0x8] sm:$0xff]
    %v2417 = vld [vmem:[%s1957 + $0x10] sm:$0xff]
    %v2418 = vld [vmem:[%s1957 + $0x18] sm:$0xff]
    %v2419 = vld [vmem:[%s1957 + $0x20] sm:$0xff]
    %v2420 = vld [vmem:[%s1957 + $0x28] sm:$0xff]
    %v2421 = vld [vmem:[%s1957 + $0x30] sm:$0xff]
    %v2422 = vld [vmem:[%s1957 + $0x38] sm:$0xff]
    %v2423 = vmul.f32 %v2415, %v981
    %v2424 = vmul.f32 %v2416, %v981
    %v2425 = vmul.f32 %v2417, %v981
    %v2426 = vmul.f32 %v2418, %v981
    %v2427 = vmul.f32 %v2419, %v981
    %v2428 = vmul.f32 %v2420, %v981
    %v2429 = vmul.f32 %v2421, %v981
    %v2430 = vmul.f32 %v2422, %v981
    %v2431 = vadd.f32 %v2407, %v2423
    %v2432 = vadd.f32 %v2408, %v2424
    %v2433 = vadd.f32 %v2409, %v2425
    %v2434 = vadd.f32 %v2410, %v2426
    %v2435 = vadd.f32 %v2411, %v2427
    %v2436 = vadd.f32 %v2412, %v2428
    %v2437 = vadd.f32 %v2413, %v2429
    %v2438 = vadd.f32 %v2414, %v2430
    %v2439 = vld [vmem:[%s1983] sm:$0xff]
    %v2440 = vld [vmem:[%s1983 + $0x8] sm:$0xff]
    %v2441 = vld [vmem:[%s1983 + $0x10] sm:$0xff]
    %v2442 = vld [vmem:[%s1983 + $0x18] sm:$0xff]
    %v2443 = vld [vmem:[%s1983 + $0x20] sm:$0xff]
    %v2444 = vld [vmem:[%s1983 + $0x28] sm:$0xff]
    %v2445 = vld [vmem:[%s1983 + $0x30] sm:$0xff]
    %v2446 = vld [vmem:[%s1983 + $0x38] sm:$0xff]
    %v2447 = vmul.f32 %v2439, %v1011
    %v2448 = vmul.f32 %v2440, %v1011
    %v2449 = vmul.f32 %v2441, %v1011
    %v2450 = vmul.f32 %v2442, %v1011
    %v2451 = vmul.f32 %v2443, %v1011
    %v2452 = vmul.f32 %v2444, %v1011
    %v2453 = vmul.f32 %v2445, %v1011
    %v2454 = vmul.f32 %v2446, %v1011
    %v2455 = vadd.f32 %v2431, %v2447
    %v2456 = vadd.f32 %v2432, %v2448
    %v2457 = vadd.f32 %v2433, %v2449
    %v2458 = vadd.f32 %v2434, %v2450
    %v2459 = vadd.f32 %v2435, %v2451
    %v2460 = vadd.f32 %v2436, %v2452
    %v2461 = vadd.f32 %v2437, %v2453
    %v2462 = vadd.f32 %v2438, %v2454
    %v2463 = vld [vmem:[%s2009] sm:$0xff]
    %v2464 = vld [vmem:[%s2009 + $0x8] sm:$0xff]
    %v2465 = vld [vmem:[%s2009 + $0x10] sm:$0xff]
    %v2466 = vld [vmem:[%s2009 + $0x18] sm:$0xff]
    %v2467 = vld [vmem:[%s2009 + $0x20] sm:$0xff]
    %v2468 = vld [vmem:[%s2009 + $0x28] sm:$0xff]
    %v2469 = vld [vmem:[%s2009 + $0x30] sm:$0xff]
    %v2470 = vld [vmem:[%s2009 + $0x38] sm:$0xff]
    %v2471 = vmul.f32 %v2463, %v1041
    %v2472 = vmul.f32 %v2464, %v1041
    %v2473 = vmul.f32 %v2465, %v1041
    %v2474 = vmul.f32 %v2466, %v1041
    %v2475 = vmul.f32 %v2467, %v1041
    %v2476 = vmul.f32 %v2468, %v1041
    %v2477 = vmul.f32 %v2469, %v1041
    %v2478 = vmul.f32 %v2470, %v1041
    %v2479 = vadd.f32 %v2455, %v2471
    %v2480 = vadd.f32 %v2456, %v2472
    %v2481 = vadd.f32 %v2457, %v2473
    %v2482 = vadd.f32 %v2458, %v2474
    %v2483 = vadd.f32 %v2459, %v2475
    %v2484 = vadd.f32 %v2460, %v2476
    %v2485 = vadd.f32 %v2461, %v2477
    %v2486 = vadd.f32 %v2462, %v2478
    %v2487 = vld [vmem:[%s2035] sm:$0xff]
    %v2488 = vld [vmem:[%s2035 + $0x8] sm:$0xff]
    %v2489 = vld [vmem:[%s2035 + $0x10] sm:$0xff]
    %v2490 = vld [vmem:[%s2035 + $0x18] sm:$0xff]
    %v2491 = vld [vmem:[%s2035 + $0x20] sm:$0xff]
    %v2492 = vld [vmem:[%s2035 + $0x28] sm:$0xff]
    %v2493 = vld [vmem:[%s2035 + $0x30] sm:$0xff]
    %v2494 = vld [vmem:[%s2035 + $0x38] sm:$0xff]
    %v2495 = vmul.f32 %v2487, %v1071
    %v2496 = vmul.f32 %v2488, %v1071
    %v2497 = vmul.f32 %v2489, %v1071
    %v2498 = vmul.f32 %v2490, %v1071
    %v2499 = vmul.f32 %v2491, %v1071
    %v2500 = vmul.f32 %v2492, %v1071
    %v2501 = vmul.f32 %v2493, %v1071
    %v2502 = vmul.f32 %v2494, %v1071
    %v2503 = vadd.f32 %v2479, %v2495
    %v2504 = vadd.f32 %v2480, %v2496
    %v2505 = vadd.f32 %v2481, %v2497
    %v2506 = vadd.f32 %v2482, %v2498
    %v2507 = vadd.f32 %v2483, %v2499
    %v2508 = vadd.f32 %v2484, %v2500
    %v2509 = vadd.f32 %v2485, %v2501
    %v2510 = vadd.f32 %v2486, %v2502
    %v2511 = vld [vmem:[%s2061] sm:$0xff]
    %v2512 = vld [vmem:[%s2061 + $0x8] sm:$0xff]
    %v2513 = vld [vmem:[%s2061 + $0x10] sm:$0xff]
    %v2514 = vld [vmem:[%s2061 + $0x18] sm:$0xff]
    %v2515 = vld [vmem:[%s2061 + $0x20] sm:$0xff]
    %v2516 = vld [vmem:[%s2061 + $0x28] sm:$0xff]
    %v2517 = vld [vmem:[%s2061 + $0x30] sm:$0xff]
    %v2518 = vld [vmem:[%s2061 + $0x38] sm:$0xff]
    %v2519 = vmul.f32 %v2511, %v1101
    %v2520 = vmul.f32 %v2512, %v1101
    %v2521 = vmul.f32 %v2513, %v1101
    %v2522 = vmul.f32 %v2514, %v1101
    %v2523 = vmul.f32 %v2515, %v1101
    %v2524 = vmul.f32 %v2516, %v1101
    %v2525 = vmul.f32 %v2517, %v1101
    %v2526 = vmul.f32 %v2518, %v1101
    %v2527 = vadd.f32 %v2503, %v2519
    %v2528 = vadd.f32 %v2504, %v2520
    %v2529 = vadd.f32 %v2505, %v2521
    %v2530 = vadd.f32 %v2506, %v2522
    %v2531 = vadd.f32 %v2507, %v2523
    %v2532 = vadd.f32 %v2508, %v2524
    %v2533 = vadd.f32 %v2509, %v2525
    %v2534 = vadd.f32 %v2510, %v2526
    %v2535 = vld [vmem:[%s2087] sm:$0xff]
    %v2536 = vld [vmem:[%s2087 + $0x8] sm:$0xff]
    %v2537 = vld [vmem:[%s2087 + $0x10] sm:$0xff]
    %v2538 = vld [vmem:[%s2087 + $0x18] sm:$0xff]
    %v2539 = vld [vmem:[%s2087 + $0x20] sm:$0xff]
    %v2540 = vld [vmem:[%s2087 + $0x28] sm:$0xff]
    %v2541 = vld [vmem:[%s2087 + $0x30] sm:$0xff]
    %v2542 = vld [vmem:[%s2087 + $0x38] sm:$0xff]
    %v2543 = vmul.f32 %v2535, %v1131
    %v2544 = vmul.f32 %v2536, %v1131
    %v2545 = vmul.f32 %v2537, %v1131
    %v2546 = vmul.f32 %v2538, %v1131
    %v2547 = vmul.f32 %v2539, %v1131
    %v2548 = vmul.f32 %v2540, %v1131
    %v2549 = vmul.f32 %v2541, %v1131
    %v2550 = vmul.f32 %v2542, %v1131
    %v2551 = vadd.f32 %v2527, %v2543
    %v2552 = vadd.f32 %v2528, %v2544
    %v2553 = vadd.f32 %v2529, %v2545
    %v2554 = vadd.f32 %v2530, %v2546
    %v2555 = vadd.f32 %v2531, %v2547
    %v2556 = vadd.f32 %v2532, %v2548
    %v2557 = vadd.f32 %v2533, %v2549
    %v2558 = vadd.f32 %v2534, %v2550
    %v2559 = vld [vmem:[%s2113] sm:$0xff]
    %v2560 = vld [vmem:[%s2113 + $0x8] sm:$0xff]
    %v2561 = vld [vmem:[%s2113 + $0x10] sm:$0xff]
    %v2562 = vld [vmem:[%s2113 + $0x18] sm:$0xff]
    %v2563 = vld [vmem:[%s2113 + $0x20] sm:$0xff]
    %v2564 = vld [vmem:[%s2113 + $0x28] sm:$0xff]
    %v2565 = vld [vmem:[%s2113 + $0x30] sm:$0xff]
    %v2566 = vld [vmem:[%s2113 + $0x38] sm:$0xff]
    %v2567 = vmul.f32 %v2559, %v1161
    %v2568 = vmul.f32 %v2560, %v1161
    %v2569 = vmul.f32 %v2561, %v1161
    %v2570 = vmul.f32 %v2562, %v1161
    %v2571 = vmul.f32 %v2563, %v1161
    %v2572 = vmul.f32 %v2564, %v1161
    %v2573 = vmul.f32 %v2565, %v1161
    %v2574 = vmul.f32 %v2566, %v1161
    %v2575 = vadd.f32 %v2551, %v2567
    %v2576 = vadd.f32 %v2552, %v2568
    %v2577 = vadd.f32 %v2553, %v2569
    %v2578 = vadd.f32 %v2554, %v2570
    %v2579 = vadd.f32 %v2555, %v2571
    %v2580 = vadd.f32 %v2556, %v2572
    %v2581 = vadd.f32 %v2557, %v2573
    %v2582 = vadd.f32 %v2558, %v2574
    %v2583 = vld [vmem:[%s2139] sm:$0xff]
    %v2584 = vld [vmem:[%s2139 + $0x8] sm:$0xff]
    %v2585 = vld [vmem:[%s2139 + $0x10] sm:$0xff]
    %v2586 = vld [vmem:[%s2139 + $0x18] sm:$0xff]
    %v2587 = vld [vmem:[%s2139 + $0x20] sm:$0xff]
    %v2588 = vld [vmem:[%s2139 + $0x28] sm:$0xff]
    %v2589 = vld [vmem:[%s2139 + $0x30] sm:$0xff]
    %v2590 = vld [vmem:[%s2139 + $0x38] sm:$0xff]
    %v2591 = vmul.f32 %v2583, %v1191
    %v2592 = vmul.f32 %v2584, %v1191
    %v2593 = vmul.f32 %v2585, %v1191
    %v2594 = vmul.f32 %v2586, %v1191
    %v2595 = vmul.f32 %v2587, %v1191
    %v2596 = vmul.f32 %v2588, %v1191
    %v2597 = vmul.f32 %v2589, %v1191
    %v2598 = vmul.f32 %v2590, %v1191
    %v2599 = vadd.f32 %v2575, %v2591
    %v2600 = vadd.f32 %v2576, %v2592
    %v2601 = vadd.f32 %v2577, %v2593
    %v2602 = vadd.f32 %v2578, %v2594
    %v2603 = vadd.f32 %v2579, %v2595
    %v2604 = vadd.f32 %v2580, %v2596
    %v2605 = vadd.f32 %v2581, %v2597
    %v2606 = vadd.f32 %v2582, %v2598
    %v2607 = vld [vmem:[%s2165] sm:$0xff]
    %v2608 = vld [vmem:[%s2165 + $0x8] sm:$0xff]
    %v2609 = vld [vmem:[%s2165 + $0x10] sm:$0xff]
    %v2610 = vld [vmem:[%s2165 + $0x18] sm:$0xff]
    %v2611 = vld [vmem:[%s2165 + $0x20] sm:$0xff]
    %v2612 = vld [vmem:[%s2165 + $0x28] sm:$0xff]
    %v2613 = vld [vmem:[%s2165 + $0x30] sm:$0xff]
    %v2614 = vld [vmem:[%s2165 + $0x38] sm:$0xff]
    %v2615 = vmul.f32 %v2607, %v1221
    %v2616 = vmul.f32 %v2608, %v1221
    %v2617 = vmul.f32 %v2609, %v1221
    %v2618 = vmul.f32 %v2610, %v1221
    %v2619 = vmul.f32 %v2611, %v1221
    %v2620 = vmul.f32 %v2612, %v1221
    %v2621 = vmul.f32 %v2613, %v1221
    %v2622 = vmul.f32 %v2614, %v1221
    %v2623 = vadd.f32 %v2599, %v2615
    %v2624 = vadd.f32 %v2600, %v2616
    %v2625 = vadd.f32 %v2601, %v2617
    %v2626 = vadd.f32 %v2602, %v2618
    %v2627 = vadd.f32 %v2603, %v2619
    %v2628 = vadd.f32 %v2604, %v2620
    %v2629 = vadd.f32 %v2605, %v2621
    %v2630 = vadd.f32 %v2606, %v2622
    %s2631 = sadd.s32 %s704, 4
    %s2632 = smul.u32 %s2631, 80
    %s2633 = scalar_lea.vmem [#allocation3], %s2632
    %v2634 = vld [vmem:[%s2633] sm:$0xff]
    %v2635 = vld [vmem:[%s2633 + $0x8] sm:$0xff]
    %v2636 = vld [vmem:[%s2633 + $0x10] sm:$0xff]
    %v2637 = vld [vmem:[%s2633 + $0x18] sm:$0xff]
    %v2638 = vld [vmem:[%s2633 + $0x20] sm:$0xff]
    %v2639 = vld [vmem:[%s2633 + $0x28] sm:$0xff]
    %v2640 = vld [vmem:[%s2633 + $0x30] sm:$0xff]
    %v2641 = vld [vmem:[%s2633 + $0x38] sm:$0xff]
    %v2642 = vmul.f32 %v2634, %v1252
    %v2643 = vmul.f32 %v2635, %v1252
    %v2644 = vmul.f32 %v2636, %v1252
    %v2645 = vmul.f32 %v2637, %v1252
    %v2646 = vmul.f32 %v2638, %v1252
    %v2647 = vmul.f32 %v2639, %v1252
    %v2648 = vmul.f32 %v2640, %v1252
    %v2649 = vmul.f32 %v2641, %v1252
    %v2650 = vadd.f32 %v2623, %v2642
    %v2651 = vadd.f32 %v2624, %v2643
    %v2652 = vadd.f32 %v2625, %v2644
    %v2653 = vadd.f32 %v2626, %v2645
    %v2654 = vadd.f32 %v2627, %v2646
    %v2655 = vadd.f32 %v2628, %v2647
    %v2656 = vadd.f32 %v2629, %v2648
    %v2657 = vadd.f32 %v2630, %v2649
    %s2658 = sadd.s32 %s2632, 800
    %s2659 = scalar_lea.vmem [#allocation3], %s2658
    %v2660 = vld [vmem:[%s2659] sm:$0xff]
    %v2661 = vld [vmem:[%s2659 + $0x8] sm:$0xff]
    %v2662 = vld [vmem:[%s2659 + $0x10] sm:$0xff]
    %v2663 = vld [vmem:[%s2659 + $0x18] sm:$0xff]
    %v2664 = vld [vmem:[%s2659 + $0x20] sm:$0xff]
    %v2665 = vld [vmem:[%s2659 + $0x28] sm:$0xff]
    %v2666 = vld [vmem:[%s2659 + $0x30] sm:$0xff]
    %v2667 = vld [vmem:[%s2659 + $0x38] sm:$0xff]
    %v2668 = vmul.f32 %v2660, %v1282
    %v2669 = vmul.f32 %v2661, %v1282
    %v2670 = vmul.f32 %v2662, %v1282
    %v2671 = vmul.f32 %v2663, %v1282
    %v2672 = vmul.f32 %v2664, %v1282
    %v2673 = vmul.f32 %v2665, %v1282
    %v2674 = vmul.f32 %v2666, %v1282
    %v2675 = vmul.f32 %v2667, %v1282
    %v2676 = vadd.f32 %v2650, %v2668
    %v2677 = vadd.f32 %v2651, %v2669
    %v2678 = vadd.f32 %v2652, %v2670
    %v2679 = vadd.f32 %v2653, %v2671
    %v2680 = vadd.f32 %v2654, %v2672
    %v2681 = vadd.f32 %v2655, %v2673
    %v2682 = vadd.f32 %v2656, %v2674
    %v2683 = vadd.f32 %v2657, %v2675
    %s2684 = sadd.s32 %s2632, 1600
    %s2685 = scalar_lea.vmem [#allocation3], %s2684
    %v2686 = vld [vmem:[%s2685] sm:$0xff]
    %v2687 = vld [vmem:[%s2685 + $0x8] sm:$0xff]
    %v2688 = vld [vmem:[%s2685 + $0x10] sm:$0xff]
    %v2689 = vld [vmem:[%s2685 + $0x18] sm:$0xff]
    %v2690 = vld [vmem:[%s2685 + $0x20] sm:$0xff]
    %v2691 = vld [vmem:[%s2685 + $0x28] sm:$0xff]
    %v2692 = vld [vmem:[%s2685 + $0x30] sm:$0xff]
    %v2693 = vld [vmem:[%s2685 + $0x38] sm:$0xff]
    %v2694 = vmul.f32 %v2686, %v1312
    %v2695 = vmul.f32 %v2687, %v1312
    %v2696 = vmul.f32 %v2688, %v1312
    %v2697 = vmul.f32 %v2689, %v1312
    %v2698 = vmul.f32 %v2690, %v1312
    %v2699 = vmul.f32 %v2691, %v1312
    %v2700 = vmul.f32 %v2692, %v1312
    %v2701 = vmul.f32 %v2693, %v1312
    %v2702 = vadd.f32 %v2676, %v2694
    %v2703 = vadd.f32 %v2677, %v2695
    %v2704 = vadd.f32 %v2678, %v2696
    %v2705 = vadd.f32 %v2679, %v2697
    %v2706 = vadd.f32 %v2680, %v2698
    %v2707 = vadd.f32 %v2681, %v2699
    %v2708 = vadd.f32 %v2682, %v2700
    %v2709 = vadd.f32 %v2683, %v2701
    %s2710 = sadd.s32 8, %s2632
    %s2711 = scalar_lea.vmem [#allocation3], %s2710
    %v2712 = vld [vmem:[%s2711] sm:$0xff]
    %v2713 = vld [vmem:[%s2711 + $0x8] sm:$0xff]
    %v2714 = vld [vmem:[%s2711 + $0x10] sm:$0xff]
    %v2715 = vld [vmem:[%s2711 + $0x18] sm:$0xff]
    %v2716 = vld [vmem:[%s2711 + $0x20] sm:$0xff]
    %v2717 = vld [vmem:[%s2711 + $0x28] sm:$0xff]
    %v2718 = vld [vmem:[%s2711 + $0x30] sm:$0xff]
    %v2719 = vld [vmem:[%s2711 + $0x38] sm:$0xff]
    %v2720 = vmul.f32 %v2712, %v1342
    %v2721 = vmul.f32 %v2713, %v1342
    %v2722 = vmul.f32 %v2714, %v1342
    %v2723 = vmul.f32 %v2715, %v1342
    %v2724 = vmul.f32 %v2716, %v1342
    %v2725 = vmul.f32 %v2717, %v1342
    %v2726 = vmul.f32 %v2718, %v1342
    %v2727 = vmul.f32 %v2719, %v1342
    %v2728 = vadd.f32 %v2702, %v2720
    %v2729 = vadd.f32 %v2703, %v2721
    %v2730 = vadd.f32 %v2704, %v2722
    %v2731 = vadd.f32 %v2705, %v2723
    %v2732 = vadd.f32 %v2706, %v2724
    %v2733 = vadd.f32 %v2707, %v2725
    %v2734 = vadd.f32 %v2708, %v2726
    %v2735 = vadd.f32 %v2709, %v2727
    %s2736 = sadd.s32 %s2710, 800
    %s2737 = scalar_lea.vmem [#allocation3], %s2736
    %v2738 = vld [vmem:[%s2737] sm:$0xff]
    %v2739 = vld [vmem:[%s2737 + $0x8] sm:$0xff]
    %v2740 = vld [vmem:[%s2737 + $0x10] sm:$0xff]
    %v2741 = vld [vmem:[%s2737 + $0x18] sm:$0xff]
    %v2742 = vld [vmem:[%s2737 + $0x20] sm:$0xff]
    %v2743 = vld [vmem:[%s2737 + $0x28] sm:$0xff]
    %v2744 = vld [vmem:[%s2737 + $0x30] sm:$0xff]
    %v2745 = vld [vmem:[%s2737 + $0x38] sm:$0xff]
    %v2746 = vmul.f32 %v2738, %v1372
    %v2747 = vmul.f32 %v2739, %v1372
    %v2748 = vmul.f32 %v2740, %v1372
    %v2749 = vmul.f32 %v2741, %v1372
    %v2750 = vmul.f32 %v2742, %v1372
    %v2751 = vmul.f32 %v2743, %v1372
    %v2752 = vmul.f32 %v2744, %v1372
    %v2753 = vmul.f32 %v2745, %v1372
    %v2754 = vadd.f32 %v2728, %v2746
    %v2755 = vadd.f32 %v2729, %v2747
    %v2756 = vadd.f32 %v2730, %v2748
    %v2757 = vadd.f32 %v2731, %v2749
    %v2758 = vadd.f32 %v2732, %v2750
    %v2759 = vadd.f32 %v2733, %v2751
    %v2760 = vadd.f32 %v2734, %v2752
    %v2761 = vadd.f32 %v2735, %v2753
    %s2762 = sadd.s32 %s2710, 1600
    %s2763 = scalar_lea.vmem [#allocation3], %s2762
    %v2764 = vld [vmem:[%s2763] sm:$0xff]
    %v2765 = vld [vmem:[%s2763 + $0x8] sm:$0xff]
    %v2766 = vld [vmem:[%s2763 + $0x10] sm:$0xff]
    %v2767 = vld [vmem:[%s2763 + $0x18] sm:$0xff]
    %v2768 = vld [vmem:[%s2763 + $0x20] sm:$0xff]
    %v2769 = vld [vmem:[%s2763 + $0x28] sm:$0xff]
    %v2770 = vld [vmem:[%s2763 + $0x30] sm:$0xff]
    %v2771 = vld [vmem:[%s2763 + $0x38] sm:$0xff]
    %v2772 = vmul.f32 %v2764, %v1402
    %v2773 = vmul.f32 %v2765, %v1402
    %v2774 = vmul.f32 %v2766, %v1402
    %v2775 = vmul.f32 %v2767, %v1402
    %v2776 = vmul.f32 %v2768, %v1402
    %v2777 = vmul.f32 %v2769, %v1402
    %v2778 = vmul.f32 %v2770, %v1402
    %v2779 = vmul.f32 %v2771, %v1402
    %v2780 = vadd.f32 %v2754, %v2772
    %v2781 = vadd.f32 %v2755, %v2773
    %v2782 = vadd.f32 %v2756, %v2774
    %v2783 = vadd.f32 %v2757, %v2775
    %v2784 = vadd.f32 %v2758, %v2776
    %v2785 = vadd.f32 %v2759, %v2777
    %v2786 = vadd.f32 %v2760, %v2778
    %v2787 = vadd.f32 %v2761, %v2779
    %s2788 = sadd.s32 16, %s2632
    %s2789 = scalar_lea.vmem [#allocation3], %s2788
    %v2790 = vld [vmem:[%s2789] sm:$0xff]
    %v2791 = vld [vmem:[%s2789 + $0x8] sm:$0xff]
    %v2792 = vld [vmem:[%s2789 + $0x10] sm:$0xff]
    %v2793 = vld [vmem:[%s2789 + $0x18] sm:$0xff]
    %v2794 = vld [vmem:[%s2789 + $0x20] sm:$0xff]
    %v2795 = vld [vmem:[%s2789 + $0x28] sm:$0xff]
    %v2796 = vld [vmem:[%s2789 + $0x30] sm:$0xff]
    %v2797 = vld [vmem:[%s2789 + $0x38] sm:$0xff]
    %v2798 = vmul.f32 %v2790, %v1432
    %v2799 = vmul.f32 %v2791, %v1432
    %v2800 = vmul.f32 %v2792, %v1432
    %v2801 = vmul.f32 %v2793, %v1432
    %v2802 = vmul.f32 %v2794, %v1432
    %v2803 = vmul.f32 %v2795, %v1432
    %v2804 = vmul.f32 %v2796, %v1432
    %v2805 = vmul.f32 %v2797, %v1432
    %v2806 = vadd.f32 %v2780, %v2798
    %v2807 = vadd.f32 %v2781, %v2799
    %v2808 = vadd.f32 %v2782, %v2800
    %v2809 = vadd.f32 %v2783, %v2801
    %v2810 = vadd.f32 %v2784, %v2802
    %v2811 = vadd.f32 %v2785, %v2803
    %v2812 = vadd.f32 %v2786, %v2804
    %v2813 = vadd.f32 %v2787, %v2805
    %s2814 = sadd.s32 %s2788, 800
    %s2815 = scalar_lea.vmem [#allocation3], %s2814
    %v2816 = vld [vmem:[%s2815] sm:$0xff]
    %v2817 = vld [vmem:[%s2815 + $0x8] sm:$0xff]
    %v2818 = vld [vmem:[%s2815 + $0x10] sm:$0xff]
    %v2819 = vld [vmem:[%s2815 + $0x18] sm:$0xff]
    %v2820 = vld [vmem:[%s2815 + $0x20] sm:$0xff]
    %v2821 = vld [vmem:[%s2815 + $0x28] sm:$0xff]
    %v2822 = vld [vmem:[%s2815 + $0x30] sm:$0xff]
    %v2823 = vld [vmem:[%s2815 + $0x38] sm:$0xff]
    %v2824 = vmul.f32 %v2816, %v1462
    %v2825 = vmul.f32 %v2817, %v1462
    %v2826 = vmul.f32 %v2818, %v1462
    %v2827 = vmul.f32 %v2819, %v1462
    %v2828 = vmul.f32 %v2820, %v1462
    %v2829 = vmul.f32 %v2821, %v1462
    %v2830 = vmul.f32 %v2822, %v1462
    %v2831 = vmul.f32 %v2823, %v1462
    %v2832 = vadd.f32 %v2806, %v2824
    %v2833 = vadd.f32 %v2807, %v2825
    %v2834 = vadd.f32 %v2808, %v2826
    %v2835 = vadd.f32 %v2809, %v2827
    %v2836 = vadd.f32 %v2810, %v2828
    %v2837 = vadd.f32 %v2811, %v2829
    %v2838 = vadd.f32 %v2812, %v2830
    %v2839 = vadd.f32 %v2813, %v2831
    %s2840 = sadd.s32 %s2788, 1600
    %s2841 = scalar_lea.vmem [#allocation3], %s2840
    %v2842 = vld [vmem:[%s2841] sm:$0xff]
    %v2843 = vld [vmem:[%s2841 + $0x8] sm:$0xff]
    %v2844 = vld [vmem:[%s2841 + $0x10] sm:$0xff]
    %v2845 = vld [vmem:[%s2841 + $0x18] sm:$0xff]
    %v2846 = vld [vmem:[%s2841 + $0x20] sm:$0xff]
    %v2847 = vld [vmem:[%s2841 + $0x28] sm:$0xff]
    %v2848 = vld [vmem:[%s2841 + $0x30] sm:$0xff]
    %v2849 = vld [vmem:[%s2841 + $0x38] sm:$0xff]
    %v2850 = vmul.f32 %v2842, %v1492
    %v2851 = vmul.f32 %v2843, %v1492
    %v2852 = vmul.f32 %v2844, %v1492
    %v2853 = vmul.f32 %v2845, %v1492
    %v2854 = vmul.f32 %v2846, %v1492
    %v2855 = vmul.f32 %v2847, %v1492
    %v2856 = vmul.f32 %v2848, %v1492
    %v2857 = vmul.f32 %v2849, %v1492
    %v2858 = vadd.f32 %v2832, %v2850
    %v2859 = vadd.f32 %v2833, %v2851
    %v2860 = vadd.f32 %v2834, %v2852
    %v2861 = vadd.f32 %v2835, %v2853
    %v2862 = vadd.f32 %v2836, %v2854
    %v2863 = vadd.f32 %v2837, %v2855
    %v2864 = vadd.f32 %v2838, %v2856
    %v2865 = vadd.f32 %v2839, %v2857
    %v2866 = vadd.f32 %v2858, %v1513
    %v2867 = vadd.f32 %v2859, %v1513
    %v2868 = vadd.f32 %v2860, %v1513
    %v2869 = vadd.f32 %v2861, %v1513
    %v2870 = vadd.f32 %v2862, %v1513
    %v2871 = vadd.f32 %v2863, %v1513
    %v2872 = vadd.f32 %v2864, %v1513
    %v2873 = vadd.f32 %v2865, %v1513
    %s2874 = scalar_lea.vmem [#allocation5], 128
    %2875 = vst [vmem:[%s2874] sm:$0xff] %v2866
    %2876 = vst [vmem:[%s2874 + $0x8] sm:$0xff] %v2867
    %2877 = vst [vmem:[%s2874 + $0x10] sm:$0xff] %v2868
    %2878 = vst [vmem:[%s2874 + $0x18] sm:$0xff] %v2869
    %2879 = vst [vmem:[%s2874 + $0x20] sm:$0xff] %v2870
    %2880 = vst [vmem:[%s2874 + $0x28] sm:$0xff] %v2871
    %2881 = vst [vmem:[%s2874 + $0x30] sm:$0xff] %v2872
    %2882 = vst [vmem:[%s2874 + $0x38] sm:$0xff] %v2873
    %v2883 = vld [vmem:[%s1957] sm:$0xff]
    %v2884 = vld [vmem:[%s1957 + $0x8] sm:$0xff]
    %v2885 = vld [vmem:[%s1957 + $0x10] sm:$0xff]
    %v2886 = vld [vmem:[%s1957 + $0x18] sm:$0xff]
    %v2887 = vld [vmem:[%s1957 + $0x20] sm:$0xff]
    %v2888 = vld [vmem:[%s1957 + $0x28] sm:$0xff]
    %v2889 = vld [vmem:[%s1957 + $0x30] sm:$0xff]
    %v2890 = vld [vmem:[%s1957 + $0x38] sm:$0xff]
    %v2891 = vmul.f32 %v2883, %v718
    %v2892 = vmul.f32 %v2884, %v718
    %v2893 = vmul.f32 %v2885, %v718
    %v2894 = vmul.f32 %v2886, %v718
    %v2895 = vmul.f32 %v2887, %v718
    %v2896 = vmul.f32 %v2888, %v718
    %v2897 = vmul.f32 %v2889, %v718
    %v2898 = vmul.f32 %v2890, %v718
    %v2899 = vld [vmem:[%s1983] sm:$0xff]
    %v2900 = vld [vmem:[%s1983 + $0x8] sm:$0xff]
    %v2901 = vld [vmem:[%s1983 + $0x10] sm:$0xff]
    %v2902 = vld [vmem:[%s1983 + $0x18] sm:$0xff]
    %v2903 = vld [vmem:[%s1983 + $0x20] sm:$0xff]
    %v2904 = vld [vmem:[%s1983 + $0x28] sm:$0xff]
    %v2905 = vld [vmem:[%s1983 + $0x30] sm:$0xff]
    %v2906 = vld [vmem:[%s1983 + $0x38] sm:$0xff]
    %v2907 = vmul.f32 %v2899, %v740
    %v2908 = vmul.f32 %v2900, %v740
    %v2909 = vmul.f32 %v2901, %v740
    %v2910 = vmul.f32 %v2902, %v740
    %v2911 = vmul.f32 %v2903, %v740
    %v2912 = vmul.f32 %v2904, %v740
    %v2913 = vmul.f32 %v2905, %v740
    %v2914 = vmul.f32 %v2906, %v740
    %v2915 = vadd.f32 %v2891, %v2907
    %v2916 = vadd.f32 %v2892, %v2908
    %v2917 = vadd.f32 %v2893, %v2909
    %v2918 = vadd.f32 %v2894, %v2910
    %v2919 = vadd.f32 %v2895, %v2911
    %v2920 = vadd.f32 %v2896, %v2912
    %v2921 = vadd.f32 %v2897, %v2913
    %v2922 = vadd.f32 %v2898, %v2914
    %v2923 = vld [vmem:[%s2009] sm:$0xff]
    %v2924 = vld [vmem:[%s2009 + $0x8] sm:$0xff]
    %v2925 = vld [vmem:[%s2009 + $0x10] sm:$0xff]
    %v2926 = vld [vmem:[%s2009 + $0x18] sm:$0xff]
    %v2927 = vld [vmem:[%s2009 + $0x20] sm:$0xff]
    %v2928 = vld [vmem:[%s2009 + $0x28] sm:$0xff]
    %v2929 = vld [vmem:[%s2009 + $0x30] sm:$0xff]
    %v2930 = vld [vmem:[%s2009 + $0x38] sm:$0xff]
    %v2931 = vmul.f32 %v2923, %v770
    %v2932 = vmul.f32 %v2924, %v770
    %v2933 = vmul.f32 %v2925, %v770
    %v2934 = vmul.f32 %v2926, %v770
    %v2935 = vmul.f32 %v2927, %v770
    %v2936 = vmul.f32 %v2928, %v770
    %v2937 = vmul.f32 %v2929, %v770
    %v2938 = vmul.f32 %v2930, %v770
    %v2939 = vadd.f32 %v2915, %v2931
    %v2940 = vadd.f32 %v2916, %v2932
    %v2941 = vadd.f32 %v2917, %v2933
    %v2942 = vadd.f32 %v2918, %v2934
    %v2943 = vadd.f32 %v2919, %v2935
    %v2944 = vadd.f32 %v2920, %v2936
    %v2945 = vadd.f32 %v2921, %v2937
    %v2946 = vadd.f32 %v2922, %v2938
    %v2947 = vld [vmem:[%s2035] sm:$0xff]
    %v2948 = vld [vmem:[%s2035 + $0x8] sm:$0xff]
    %v2949 = vld [vmem:[%s2035 + $0x10] sm:$0xff]
    %v2950 = vld [vmem:[%s2035 + $0x18] sm:$0xff]
    %v2951 = vld [vmem:[%s2035 + $0x20] sm:$0xff]
    %v2952 = vld [vmem:[%s2035 + $0x28] sm:$0xff]
    %v2953 = vld [vmem:[%s2035 + $0x30] sm:$0xff]
    %v2954 = vld [vmem:[%s2035 + $0x38] sm:$0xff]
    %v2955 = vmul.f32 %v2947, %v800
    %v2956 = vmul.f32 %v2948, %v800
    %v2957 = vmul.f32 %v2949, %v800
    %v2958 = vmul.f32 %v2950, %v800
    %v2959 = vmul.f32 %v2951, %v800
    %v2960 = vmul.f32 %v2952, %v800
    %v2961 = vmul.f32 %v2953, %v800
    %v2962 = vmul.f32 %v2954, %v800
    %v2963 = vadd.f32 %v2939, %v2955
    %v2964 = vadd.f32 %v2940, %v2956
    %v2965 = vadd.f32 %v2941, %v2957
    %v2966 = vadd.f32 %v2942, %v2958
    %v2967 = vadd.f32 %v2943, %v2959
    %v2968 = vadd.f32 %v2944, %v2960
    %v2969 = vadd.f32 %v2945, %v2961
    %v2970 = vadd.f32 %v2946, %v2962
    %v2971 = vld [vmem:[%s2061] sm:$0xff]
    %v2972 = vld [vmem:[%s2061 + $0x8] sm:$0xff]
    %v2973 = vld [vmem:[%s2061 + $0x10] sm:$0xff]
    %v2974 = vld [vmem:[%s2061 + $0x18] sm:$0xff]
    %v2975 = vld [vmem:[%s2061 + $0x20] sm:$0xff]
    %v2976 = vld [vmem:[%s2061 + $0x28] sm:$0xff]
    %v2977 = vld [vmem:[%s2061 + $0x30] sm:$0xff]
    %v2978 = vld [vmem:[%s2061 + $0x38] sm:$0xff]
    %v2979 = vmul.f32 %v2971, %v830
    %v2980 = vmul.f32 %v2972, %v830
    %v2981 = vmul.f32 %v2973, %v830
    %v2982 = vmul.f32 %v2974, %v830
    %v2983 = vmul.f32 %v2975, %v830
    %v2984 = vmul.f32 %v2976, %v830
    %v2985 = vmul.f32 %v2977, %v830
    %v2986 = vmul.f32 %v2978, %v830
    %v2987 = vadd.f32 %v2963, %v2979
    %v2988 = vadd.f32 %v2964, %v2980
    %v2989 = vadd.f32 %v2965, %v2981
    %v2990 = vadd.f32 %v2966, %v2982
    %v2991 = vadd.f32 %v2967, %v2983
    %v2992 = vadd.f32 %v2968, %v2984
    %v2993 = vadd.f32 %v2969, %v2985
    %v2994 = vadd.f32 %v2970, %v2986
    %v2995 = vld [vmem:[%s2087] sm:$0xff]
    %v2996 = vld [vmem:[%s2087 + $0x8] sm:$0xff]
    %v2997 = vld [vmem:[%s2087 + $0x10] sm:$0xff]
    %v2998 = vld [vmem:[%s2087 + $0x18] sm:$0xff]
    %v2999 = vld [vmem:[%s2087 + $0x20] sm:$0xff]
    %v3000 = vld [vmem:[%s2087 + $0x28] sm:$0xff]
    %v3001 = vld [vmem:[%s2087 + $0x30] sm:$0xff]
    %v3002 = vld [vmem:[%s2087 + $0x38] sm:$0xff]
    %v3003 = vmul.f32 %v2995, %v860
    %v3004 = vmul.f32 %v2996, %v860
    %v3005 = vmul.f32 %v2997, %v860
    %v3006 = vmul.f32 %v2998, %v860
    %v3007 = vmul.f32 %v2999, %v860
    %v3008 = vmul.f32 %v3000, %v860
    %v3009 = vmul.f32 %v3001, %v860
    %v3010 = vmul.f32 %v3002, %v860
    %v3011 = vadd.f32 %v2987, %v3003
    %v3012 = vadd.f32 %v2988, %v3004
    %v3013 = vadd.f32 %v2989, %v3005
    %v3014 = vadd.f32 %v2990, %v3006
    %v3015 = vadd.f32 %v2991, %v3007
    %v3016 = vadd.f32 %v2992, %v3008
    %v3017 = vadd.f32 %v2993, %v3009
    %v3018 = vadd.f32 %v2994, %v3010
    %v3019 = vld [vmem:[%s2113] sm:$0xff]
    %v3020 = vld [vmem:[%s2113 + $0x8] sm:$0xff]
    %v3021 = vld [vmem:[%s2113 + $0x10] sm:$0xff]
    %v3022 = vld [vmem:[%s2113 + $0x18] sm:$0xff]
    %v3023 = vld [vmem:[%s2113 + $0x20] sm:$0xff]
    %v3024 = vld [vmem:[%s2113 + $0x28] sm:$0xff]
    %v3025 = vld [vmem:[%s2113 + $0x30] sm:$0xff]
    %v3026 = vld [vmem:[%s2113 + $0x38] sm:$0xff]
    %v3027 = vmul.f32 %v3019, %v890
    %v3028 = vmul.f32 %v3020, %v890
    %v3029 = vmul.f32 %v3021, %v890
    %v3030 = vmul.f32 %v3022, %v890
    %v3031 = vmul.f32 %v3023, %v890
    %v3032 = vmul.f32 %v3024, %v890
    %v3033 = vmul.f32 %v3025, %v890
    %v3034 = vmul.f32 %v3026, %v890
    %v3035 = vadd.f32 %v3011, %v3027
    %v3036 = vadd.f32 %v3012, %v3028
    %v3037 = vadd.f32 %v3013, %v3029
    %v3038 = vadd.f32 %v3014, %v3030
    %v3039 = vadd.f32 %v3015, %v3031
    %v3040 = vadd.f32 %v3016, %v3032
    %v3041 = vadd.f32 %v3017, %v3033
    %v3042 = vadd.f32 %v3018, %v3034
    %v3043 = vld [vmem:[%s2139] sm:$0xff]
    %v3044 = vld [vmem:[%s2139 + $0x8] sm:$0xff]
    %v3045 = vld [vmem:[%s2139 + $0x10] sm:$0xff]
    %v3046 = vld [vmem:[%s2139 + $0x18] sm:$0xff]
    %v3047 = vld [vmem:[%s2139 + $0x20] sm:$0xff]
    %v3048 = vld [vmem:[%s2139 + $0x28] sm:$0xff]
    %v3049 = vld [vmem:[%s2139 + $0x30] sm:$0xff]
    %v3050 = vld [vmem:[%s2139 + $0x38] sm:$0xff]
    %v3051 = vmul.f32 %v3043, %v920
    %v3052 = vmul.f32 %v3044, %v920
    %v3053 = vmul.f32 %v3045, %v920
    %v3054 = vmul.f32 %v3046, %v920
    %v3055 = vmul.f32 %v3047, %v920
    %v3056 = vmul.f32 %v3048, %v920
    %v3057 = vmul.f32 %v3049, %v920
    %v3058 = vmul.f32 %v3050, %v920
    %v3059 = vadd.f32 %v3035, %v3051
    %v3060 = vadd.f32 %v3036, %v3052
    %v3061 = vadd.f32 %v3037, %v3053
    %v3062 = vadd.f32 %v3038, %v3054
    %v3063 = vadd.f32 %v3039, %v3055
    %v3064 = vadd.f32 %v3040, %v3056
    %v3065 = vadd.f32 %v3041, %v3057
    %v3066 = vadd.f32 %v3042, %v3058
    %v3067 = vld [vmem:[%s2165] sm:$0xff]
    %v3068 = vld [vmem:[%s2165 + $0x8] sm:$0xff]
    %v3069 = vld [vmem:[%s2165 + $0x10] sm:$0xff]
    %v3070 = vld [vmem:[%s2165 + $0x18] sm:$0xff]
    %v3071 = vld [vmem:[%s2165 + $0x20] sm:$0xff]
    %v3072 = vld [vmem:[%s2165 + $0x28] sm:$0xff]
    %v3073 = vld [vmem:[%s2165 + $0x30] sm:$0xff]
    %v3074 = vld [vmem:[%s2165 + $0x38] sm:$0xff]
    %v3075 = vmul.f32 %v3067, %v950
    %v3076 = vmul.f32 %v3068, %v950
    %v3077 = vmul.f32 %v3069, %v950
    %v3078 = vmul.f32 %v3070, %v950
    %v3079 = vmul.f32 %v3071, %v950
    %v3080 = vmul.f32 %v3072, %v950
    %v3081 = vmul.f32 %v3073, %v950
    %v3082 = vmul.f32 %v3074, %v950
    %v3083 = vadd.f32 %v3059, %v3075
    %v3084 = vadd.f32 %v3060, %v3076
    %v3085 = vadd.f32 %v3061, %v3077
    %v3086 = vadd.f32 %v3062, %v3078
    %v3087 = vadd.f32 %v3063, %v3079
    %v3088 = vadd.f32 %v3064, %v3080
    %v3089 = vadd.f32 %v3065, %v3081
    %v3090 = vadd.f32 %v3066, %v3082
    %v3091 = vld [vmem:[%s2633] sm:$0xff]
    %v3092 = vld [vmem:[%s2633 + $0x8] sm:$0xff]
    %v3093 = vld [vmem:[%s2633 + $0x10] sm:$0xff]
    %v3094 = vld [vmem:[%s2633 + $0x18] sm:$0xff]
    %v3095 = vld [vmem:[%s2633 + $0x20] sm:$0xff]
    %v3096 = vld [vmem:[%s2633 + $0x28] sm:$0xff]
    %v3097 = vld [vmem:[%s2633 + $0x30] sm:$0xff]
    %v3098 = vld [vmem:[%s2633 + $0x38] sm:$0xff]
    %v3099 = vmul.f32 %v3091, %v981
    %v3100 = vmul.f32 %v3092, %v981
    %v3101 = vmul.f32 %v3093, %v981
    %v3102 = vmul.f32 %v3094, %v981
    %v3103 = vmul.f32 %v3095, %v981
    %v3104 = vmul.f32 %v3096, %v981
    %v3105 = vmul.f32 %v3097, %v981
    %v3106 = vmul.f32 %v3098, %v981
    %v3107 = vadd.f32 %v3083, %v3099
    %v3108 = vadd.f32 %v3084, %v3100
    %v3109 = vadd.f32 %v3085, %v3101
    %v3110 = vadd.f32 %v3086, %v3102
    %v3111 = vadd.f32 %v3087, %v3103
    %v3112 = vadd.f32 %v3088, %v3104
    %v3113 = vadd.f32 %v3089, %v3105
    %v3114 = vadd.f32 %v3090, %v3106
    %v3115 = vld [vmem:[%s2659] sm:$0xff]
    %v3116 = vld [vmem:[%s2659 + $0x8] sm:$0xff]
    %v3117 = vld [vmem:[%s2659 + $0x10] sm:$0xff]
    %v3118 = vld [vmem:[%s2659 + $0x18] sm:$0xff]
    %v3119 = vld [vmem:[%s2659 + $0x20] sm:$0xff]
    %v3120 = vld [vmem:[%s2659 + $0x28] sm:$0xff]
    %v3121 = vld [vmem:[%s2659 + $0x30] sm:$0xff]
    %v3122 = vld [vmem:[%s2659 + $0x38] sm:$0xff]
    %v3123 = vmul.f32 %v3115, %v1011
    %v3124 = vmul.f32 %v3116, %v1011
    %v3125 = vmul.f32 %v3117, %v1011
    %v3126 = vmul.f32 %v3118, %v1011
    %v3127 = vmul.f32 %v3119, %v1011
    %v3128 = vmul.f32 %v3120, %v1011
    %v3129 = vmul.f32 %v3121, %v1011
    %v3130 = vmul.f32 %v3122, %v1011
    %v3131 = vadd.f32 %v3107, %v3123
    %v3132 = vadd.f32 %v3108, %v3124
    %v3133 = vadd.f32 %v3109, %v3125
    %v3134 = vadd.f32 %v3110, %v3126
    %v3135 = vadd.f32 %v3111, %v3127
    %v3136 = vadd.f32 %v3112, %v3128
    %v3137 = vadd.f32 %v3113, %v3129
    %v3138 = vadd.f32 %v3114, %v3130
    %v3139 = vld [vmem:[%s2685] sm:$0xff]
    %v3140 = vld [vmem:[%s2685 + $0x8] sm:$0xff]
    %v3141 = vld [vmem:[%s2685 + $0x10] sm:$0xff]
    %v3142 = vld [vmem:[%s2685 + $0x18] sm:$0xff]
    %v3143 = vld [vmem:[%s2685 + $0x20] sm:$0xff]
    %v3144 = vld [vmem:[%s2685 + $0x28] sm:$0xff]
    %v3145 = vld [vmem:[%s2685 + $0x30] sm:$0xff]
    %v3146 = vld [vmem:[%s2685 + $0x38] sm:$0xff]
    %v3147 = vmul.f32 %v3139, %v1041
    %v3148 = vmul.f32 %v3140, %v1041
    %v3149 = vmul.f32 %v3141, %v1041
    %v3150 = vmul.f32 %v3142, %v1041
    %v3151 = vmul.f32 %v3143, %v1041
    %v3152 = vmul.f32 %v3144, %v1041
    %v3153 = vmul.f32 %v3145, %v1041
    %v3154 = vmul.f32 %v3146, %v1041
    %v3155 = vadd.f32 %v3131, %v3147
    %v3156 = vadd.f32 %v3132, %v3148
    %v3157 = vadd.f32 %v3133, %v3149
    %v3158 = vadd.f32 %v3134, %v3150
    %v3159 = vadd.f32 %v3135, %v3151
    %v3160 = vadd.f32 %v3136, %v3152
    %v3161 = vadd.f32 %v3137, %v3153
    %v3162 = vadd.f32 %v3138, %v3154
    %v3163 = vld [vmem:[%s2711] sm:$0xff]
    %v3164 = vld [vmem:[%s2711 + $0x8] sm:$0xff]
    %v3165 = vld [vmem:[%s2711 + $0x10] sm:$0xff]
    %v3166 = vld [vmem:[%s2711 + $0x18] sm:$0xff]
    %v3167 = vld [vmem:[%s2711 + $0x20] sm:$0xff]
    %v3168 = vld [vmem:[%s2711 + $0x28] sm:$0xff]
    %v3169 = vld [vmem:[%s2711 + $0x30] sm:$0xff]
    %v3170 = vld [vmem:[%s2711 + $0x38] sm:$0xff]
    %v3171 = vmul.f32 %v3163, %v1071
    %v3172 = vmul.f32 %v3164, %v1071
    %v3173 = vmul.f32 %v3165, %v1071
    %v3174 = vmul.f32 %v3166, %v1071
    %v3175 = vmul.f32 %v3167, %v1071
    %v3176 = vmul.f32 %v3168, %v1071
    %v3177 = vmul.f32 %v3169, %v1071
    %v3178 = vmul.f32 %v3170, %v1071
    %v3179 = vadd.f32 %v3155, %v3171
    %v3180 = vadd.f32 %v3156, %v3172
    %v3181 = vadd.f32 %v3157, %v3173
    %v3182 = vadd.f32 %v3158, %v3174
    %v3183 = vadd.f32 %v3159, %v3175
    %v3184 = vadd.f32 %v3160, %v3176
    %v3185 = vadd.f32 %v3161, %v3177
    %v3186 = vadd.f32 %v3162, %v3178
    %v3187 = vld [vmem:[%s2737] sm:$0xff]
    %v3188 = vld [vmem:[%s2737 + $0x8] sm:$0xff]
    %v3189 = vld [vmem:[%s2737 + $0x10] sm:$0xff]
    %v3190 = vld [vmem:[%s2737 + $0x18] sm:$0xff]
    %v3191 = vld [vmem:[%s2737 + $0x20] sm:$0xff]
    %v3192 = vld [vmem:[%s2737 + $0x28] sm:$0xff]
    %v3193 = vld [vmem:[%s2737 + $0x30] sm:$0xff]
    %v3194 = vld [vmem:[%s2737 + $0x38] sm:$0xff]
    %v3195 = vmul.f32 %v3187, %v1101
    %v3196 = vmul.f32 %v3188, %v1101
    %v3197 = vmul.f32 %v3189, %v1101
    %v3198 = vmul.f32 %v3190, %v1101
    %v3199 = vmul.f32 %v3191, %v1101
    %v3200 = vmul.f32 %v3192, %v1101
    %v3201 = vmul.f32 %v3193, %v1101
    %v3202 = vmul.f32 %v3194, %v1101
    %v3203 = vadd.f32 %v3179, %v3195
    %v3204 = vadd.f32 %v3180, %v3196
    %v3205 = vadd.f32 %v3181, %v3197
    %v3206 = vadd.f32 %v3182, %v3198
    %v3207 = vadd.f32 %v3183, %v3199
    %v3208 = vadd.f32 %v3184, %v3200
    %v3209 = vadd.f32 %v3185, %v3201
    %v3210 = vadd.f32 %v3186, %v3202
    %v3211 = vld [vmem:[%s2763] sm:$0xff]
    %v3212 = vld [vmem:[%s2763 + $0x8] sm:$0xff]
    %v3213 = vld [vmem:[%s2763 + $0x10] sm:$0xff]
    %v3214 = vld [vmem:[%s2763 + $0x18] sm:$0xff]
    %v3215 = vld [vmem:[%s2763 + $0x20] sm:$0xff]
    %v3216 = vld [vmem:[%s2763 + $0x28] sm:$0xff]
    %v3217 = vld [vmem:[%s2763 + $0x30] sm:$0xff]
    %v3218 = vld [vmem:[%s2763 + $0x38] sm:$0xff]
    %v3219 = vmul.f32 %v3211, %v1131
    %v3220 = vmul.f32 %v3212, %v1131
    %v3221 = vmul.f32 %v3213, %v1131
    %v3222 = vmul.f32 %v3214, %v1131
    %v3223 = vmul.f32 %v3215, %v1131
    %v3224 = vmul.f32 %v3216, %v1131
    %v3225 = vmul.f32 %v3217, %v1131
    %v3226 = vmul.f32 %v3218, %v1131
    %v3227 = vadd.f32 %v3203, %v3219
    %v3228 = vadd.f32 %v3204, %v3220
    %v3229 = vadd.f32 %v3205, %v3221
    %v3230 = vadd.f32 %v3206, %v3222
    %v3231 = vadd.f32 %v3207, %v3223
    %v3232 = vadd.f32 %v3208, %v3224
    %v3233 = vadd.f32 %v3209, %v3225
    %v3234 = vadd.f32 %v3210, %v3226
    %v3235 = vld [vmem:[%s2789] sm:$0xff]
    %v3236 = vld [vmem:[%s2789 + $0x8] sm:$0xff]
    %v3237 = vld [vmem:[%s2789 + $0x10] sm:$0xff]
    %v3238 = vld [vmem:[%s2789 + $0x18] sm:$0xff]
    %v3239 = vld [vmem:[%s2789 + $0x20] sm:$0xff]
    %v3240 = vld [vmem:[%s2789 + $0x28] sm:$0xff]
    %v3241 = vld [vmem:[%s2789 + $0x30] sm:$0xff]
    %v3242 = vld [vmem:[%s2789 + $0x38] sm:$0xff]
    %v3243 = vmul.f32 %v3235, %v1161
    %v3244 = vmul.f32 %v3236, %v1161
    %v3245 = vmul.f32 %v3237, %v1161
    %v3246 = vmul.f32 %v3238, %v1161
    %v3247 = vmul.f32 %v3239, %v1161
    %v3248 = vmul.f32 %v3240, %v1161
    %v3249 = vmul.f32 %v3241, %v1161
    %v3250 = vmul.f32 %v3242, %v1161
    %v3251 = vadd.f32 %v3227, %v3243
    %v3252 = vadd.f32 %v3228, %v3244
    %v3253 = vadd.f32 %v3229, %v3245
    %v3254 = vadd.f32 %v3230, %v3246
    %v3255 = vadd.f32 %v3231, %v3247
    %v3256 = vadd.f32 %v3232, %v3248
    %v3257 = vadd.f32 %v3233, %v3249
    %v3258 = vadd.f32 %v3234, %v3250
    %v3259 = vld [vmem:[%s2815] sm:$0xff]
    %v3260 = vld [vmem:[%s2815 + $0x8] sm:$0xff]
    %v3261 = vld [vmem:[%s2815 + $0x10] sm:$0xff]
    %v3262 = vld [vmem:[%s2815 + $0x18] sm:$0xff]
    %v3263 = vld [vmem:[%s2815 + $0x20] sm:$0xff]
    %v3264 = vld [vmem:[%s2815 + $0x28] sm:$0xff]
    %v3265 = vld [vmem:[%s2815 + $0x30] sm:$0xff]
    %v3266 = vld [vmem:[%s2815 + $0x38] sm:$0xff]
    %v3267 = vmul.f32 %v3259, %v1191
    %v3268 = vmul.f32 %v3260, %v1191
    %v3269 = vmul.f32 %v3261, %v1191
    %v3270 = vmul.f32 %v3262, %v1191
    %v3271 = vmul.f32 %v3263, %v1191
    %v3272 = vmul.f32 %v3264, %v1191
    %v3273 = vmul.f32 %v3265, %v1191
    %v3274 = vmul.f32 %v3266, %v1191
    %v3275 = vadd.f32 %v3251, %v3267
    %v3276 = vadd.f32 %v3252, %v3268
    %v3277 = vadd.f32 %v3253, %v3269
    %v3278 = vadd.f32 %v3254, %v3270
    %v3279 = vadd.f32 %v3255, %v3271
    %v3280 = vadd.f32 %v3256, %v3272
    %v3281 = vadd.f32 %v3257, %v3273
    %v3282 = vadd.f32 %v3258, %v3274
    %v3283 = vld [vmem:[%s2841] sm:$0xff]
    %v3284 = vld [vmem:[%s2841 + $0x8] sm:$0xff]
    %v3285 = vld [vmem:[%s2841 + $0x10] sm:$0xff]
    %v3286 = vld [vmem:[%s2841 + $0x18] sm:$0xff]
    %v3287 = vld [vmem:[%s2841 + $0x20] sm:$0xff]
    %v3288 = vld [vmem:[%s2841 + $0x28] sm:$0xff]
    %v3289 = vld [vmem:[%s2841 + $0x30] sm:$0xff]
    %v3290 = vld [vmem:[%s2841 + $0x38] sm:$0xff]
    %v3291 = vmul.f32 %v3283, %v1221
    %v3292 = vmul.f32 %v3284, %v1221
    %v3293 = vmul.f32 %v3285, %v1221
    %v3294 = vmul.f32 %v3286, %v1221
    %v3295 = vmul.f32 %v3287, %v1221
    %v3296 = vmul.f32 %v3288, %v1221
    %v3297 = vmul.f32 %v3289, %v1221
    %v3298 = vmul.f32 %v3290, %v1221
    %v3299 = vadd.f32 %v3275, %v3291
    %v3300 = vadd.f32 %v3276, %v3292
    %v3301 = vadd.f32 %v3277, %v3293
    %v3302 = vadd.f32 %v3278, %v3294
    %v3303 = vadd.f32 %v3279, %v3295
    %v3304 = vadd.f32 %v3280, %v3296
    %v3305 = vadd.f32 %v3281, %v3297
    %v3306 = vadd.f32 %v3282, %v3298
    %s3307 = sadd.s32 %s704, 5
    %s3308 = smul.u32 %s3307, 80
    %s3309 = scalar_lea.vmem [#allocation3], %s3308
    %v3310 = vld [vmem:[%s3309] sm:$0xff]
    %v3311 = vld [vmem:[%s3309 + $0x8] sm:$0xff]
    %v3312 = vld [vmem:[%s3309 + $0x10] sm:$0xff]
    %v3313 = vld [vmem:[%s3309 + $0x18] sm:$0xff]
    %v3314 = vld [vmem:[%s3309 + $0x20] sm:$0xff]
    %v3315 = vld [vmem:[%s3309 + $0x28] sm:$0xff]
    %v3316 = vld [vmem:[%s3309 + $0x30] sm:$0xff]
    %v3317 = vld [vmem:[%s3309 + $0x38] sm:$0xff]
    %v3318 = vmul.f32 %v3310, %v1252
    %v3319 = vmul.f32 %v3311, %v1252
    %v3320 = vmul.f32 %v3312, %v1252
    %v3321 = vmul.f32 %v3313, %v1252
    %v3322 = vmul.f32 %v3314, %v1252
    %v3323 = vmul.f32 %v3315, %v1252
    %v3324 = vmul.f32 %v3316, %v1252
    %v3325 = vmul.f32 %v3317, %v1252
    %v3326 = vadd.f32 %v3299, %v3318
    %v3327 = vadd.f32 %v3300, %v3319
    %v3328 = vadd.f32 %v3301, %v3320
    %v3329 = vadd.f32 %v3302, %v3321
    %v3330 = vadd.f32 %v3303, %v3322
    %v3331 = vadd.f32 %v3304, %v3323
    %v3332 = vadd.f32 %v3305, %v3324
    %v3333 = vadd.f32 %v3306, %v3325
    %s3334 = sadd.s32 %s3308, 800
    %s3335 = scalar_lea.vmem [#allocation3], %s3334
    %v3336 = vld [vmem:[%s3335] sm:$0xff]
    %v3337 = vld [vmem:[%s3335 + $0x8] sm:$0xff]
    %v3338 = vld [vmem:[%s3335 + $0x10] sm:$0xff]
    %v3339 = vld [vmem:[%s3335 + $0x18] sm:$0xff]
    %v3340 = vld [vmem:[%s3335 + $0x20] sm:$0xff]
    %v3341 = vld [vmem:[%s3335 + $0x28] sm:$0xff]
    %v3342 = vld [vmem:[%s3335 + $0x30] sm:$0xff]
    %v3343 = vld [vmem:[%s3335 + $0x38] sm:$0xff]
    %v3344 = vmul.f32 %v3336, %v1282
    %v3345 = vmul.f32 %v3337, %v1282
    %v3346 = vmul.f32 %v3338, %v1282
    %v3347 = vmul.f32 %v3339, %v1282
    %v3348 = vmul.f32 %v3340, %v1282
    %v3349 = vmul.f32 %v3341, %v1282
    %v3350 = vmul.f32 %v3342, %v1282
    %v3351 = vmul.f32 %v3343, %v1282
    %v3352 = vadd.f32 %v3326, %v3344
    %v3353 = vadd.f32 %v3327, %v3345
    %v3354 = vadd.f32 %v3328, %v3346
    %v3355 = vadd.f32 %v3329, %v3347
    %v3356 = vadd.f32 %v3330, %v3348
    %v3357 = vadd.f32 %v3331, %v3349
    %v3358 = vadd.f32 %v3332, %v3350
    %v3359 = vadd.f32 %v3333, %v3351
    %s3360 = sadd.s32 %s3308, 1600
    %s3361 = scalar_lea.vmem [#allocation3], %s3360
    %v3362 = vld [vmem:[%s3361] sm:$0xff]
    %v3363 = vld [vmem:[%s3361 + $0x8] sm:$0xff]
    %v3364 = vld [vmem:[%s3361 + $0x10] sm:$0xff]
    %v3365 = vld [vmem:[%s3361 + $0x18] sm:$0xff]
    %v3366 = vld [vmem:[%s3361 + $0x20] sm:$0xff]
    %v3367 = vld [vmem:[%s3361 + $0x28] sm:$0xff]
    %v3368 = vld [vmem:[%s3361 + $0x30] sm:$0xff]
    %v3369 = vld [vmem:[%s3361 + $0x38] sm:$0xff]
    %v3370 = vmul.f32 %v3362, %v1312
    %v3371 = vmul.f32 %v3363, %v1312
    %v3372 = vmul.f32 %v3364, %v1312
    %v3373 = vmul.f32 %v3365, %v1312
    %v3374 = vmul.f32 %v3366, %v1312
    %v3375 = vmul.f32 %v3367, %v1312
    %v3376 = vmul.f32 %v3368, %v1312
    %v3377 = vmul.f32 %v3369, %v1312
    %v3378 = vadd.f32 %v3352, %v3370
    %v3379 = vadd.f32 %v3353, %v3371
    %v3380 = vadd.f32 %v3354, %v3372
    %v3381 = vadd.f32 %v3355, %v3373
    %v3382 = vadd.f32 %v3356, %v3374
    %v3383 = vadd.f32 %v3357, %v3375
    %v3384 = vadd.f32 %v3358, %v3376
    %v3385 = vadd.f32 %v3359, %v3377
    %s3386 = sadd.s32 8, %s3308
    %s3387 = scalar_lea.vmem [#allocation3], %s3386
    %v3388 = vld [vmem:[%s3387] sm:$0xff]
    %v3389 = vld [vmem:[%s3387 + $0x8] sm:$0xff]
    %v3390 = vld [vmem:[%s3387 + $0x10] sm:$0xff]
    %v3391 = vld [vmem:[%s3387 + $0x18] sm:$0xff]
    %v3392 = vld [vmem:[%s3387 + $0x20] sm:$0xff]
    %v3393 = vld [vmem:[%s3387 + $0x28] sm:$0xff]
    %v3394 = vld [vmem:[%s3387 + $0x30] sm:$0xff]
    %v3395 = vld [vmem:[%s3387 + $0x38] sm:$0xff]
    %v3396 = vmul.f32 %v3388, %v1342
    %v3397 = vmul.f32 %v3389, %v1342
    %v3398 = vmul.f32 %v3390, %v1342
    %v3399 = vmul.f32 %v3391, %v1342
    %v3400 = vmul.f32 %v3392, %v1342
    %v3401 = vmul.f32 %v3393, %v1342
    %v3402 = vmul.f32 %v3394, %v1342
    %v3403 = vmul.f32 %v3395, %v1342
    %v3404 = vadd.f32 %v3378, %v3396
    %v3405 = vadd.f32 %v3379, %v3397
    %v3406 = vadd.f32 %v3380, %v3398
    %v3407 = vadd.f32 %v3381, %v3399
    %v3408 = vadd.f32 %v3382, %v3400
    %v3409 = vadd.f32 %v3383, %v3401
    %v3410 = vadd.f32 %v3384, %v3402
    %v3411 = vadd.f32 %v3385, %v3403
    %s3412 = sadd.s32 %s3386, 800
    %s3413 = scalar_lea.vmem [#allocation3], %s3412
    %v3414 = vld [vmem:[%s3413] sm:$0xff]
    %v3415 = vld [vmem:[%s3413 + $0x8] sm:$0xff]
    %v3416 = vld [vmem:[%s3413 + $0x10] sm:$0xff]
    %v3417 = vld [vmem:[%s3413 + $0x18] sm:$0xff]
    %v3418 = vld [vmem:[%s3413 + $0x20] sm:$0xff]
    %v3419 = vld [vmem:[%s3413 + $0x28] sm:$0xff]
    %v3420 = vld [vmem:[%s3413 + $0x30] sm:$0xff]
    %v3421 = vld [vmem:[%s3413 + $0x38] sm:$0xff]
    %v3422 = vmul.f32 %v3414, %v1372
    %v3423 = vmul.f32 %v3415, %v1372
    %v3424 = vmul.f32 %v3416, %v1372
    %v3425 = vmul.f32 %v3417, %v1372
    %v3426 = vmul.f32 %v3418, %v1372
    %v3427 = vmul.f32 %v3419, %v1372
    %v3428 = vmul.f32 %v3420, %v1372
    %v3429 = vmul.f32 %v3421, %v1372
    %v3430 = vadd.f32 %v3404, %v3422
    %v3431 = vadd.f32 %v3405, %v3423
    %v3432 = vadd.f32 %v3406, %v3424
    %v3433 = vadd.f32 %v3407, %v3425
    %v3434 = vadd.f32 %v3408, %v3426
    %v3435 = vadd.f32 %v3409, %v3427
    %v3436 = vadd.f32 %v3410, %v3428
    %v3437 = vadd.f32 %v3411, %v3429
    %s3438 = sadd.s32 %s3386, 1600
    %s3439 = scalar_lea.vmem [#allocation3], %s3438
    %v3440 = vld [vmem:[%s3439] sm:$0xff]
    %v3441 = vld [vmem:[%s3439 + $0x8] sm:$0xff]
    %v3442 = vld [vmem:[%s3439 + $0x10] sm:$0xff]
    %v3443 = vld [vmem:[%s3439 + $0x18] sm:$0xff]
    %v3444 = vld [vmem:[%s3439 + $0x20] sm:$0xff]
    %v3445 = vld [vmem:[%s3439 + $0x28] sm:$0xff]
    %v3446 = vld [vmem:[%s3439 + $0x30] sm:$0xff]
    %v3447 = vld [vmem:[%s3439 + $0x38] sm:$0xff]
    %v3448 = vmul.f32 %v3440, %v1402
    %v3449 = vmul.f32 %v3441, %v1402
    %v3450 = vmul.f32 %v3442, %v1402
    %v3451 = vmul.f32 %v3443, %v1402
    %v3452 = vmul.f32 %v3444, %v1402
    %v3453 = vmul.f32 %v3445, %v1402
    %v3454 = vmul.f32 %v3446, %v1402
    %v3455 = vmul.f32 %v3447, %v1402
    %v3456 = vadd.f32 %v3430, %v3448
    %v3457 = vadd.f32 %v3431, %v3449
    %v3458 = vadd.f32 %v3432, %v3450
    %v3459 = vadd.f32 %v3433, %v3451
    %v3460 = vadd.f32 %v3434, %v3452
    %v3461 = vadd.f32 %v3435, %v3453
    %v3462 = vadd.f32 %v3436, %v3454
    %v3463 = vadd.f32 %v3437, %v3455
    %s3464 = sadd.s32 16, %s3308
    %s3465 = scalar_lea.vmem [#allocation3], %s3464
    %v3466 = vld [vmem:[%s3465] sm:$0xff]
    %v3467 = vld [vmem:[%s3465 + $0x8] sm:$0xff]
    %v3468 = vld [vmem:[%s3465 + $0x10] sm:$0xff]
    %v3469 = vld [vmem:[%s3465 + $0x18] sm:$0xff]
    %v3470 = vld [vmem:[%s3465 + $0x20] sm:$0xff]
    %v3471 = vld [vmem:[%s3465 + $0x28] sm:$0xff]
    %v3472 = vld [vmem:[%s3465 + $0x30] sm:$0xff]
    %v3473 = vld [vmem:[%s3465 + $0x38] sm:$0xff]
    %v3474 = vmul.f32 %v3466, %v1432
    %v3475 = vmul.f32 %v3467, %v1432
    %v3476 = vmul.f32 %v3468, %v1432
    %v3477 = vmul.f32 %v3469, %v1432
    %v3478 = vmul.f32 %v3470, %v1432
    %v3479 = vmul.f32 %v3471, %v1432
    %v3480 = vmul.f32 %v3472, %v1432
    %v3481 = vmul.f32 %v3473, %v1432
    %v3482 = vadd.f32 %v3456, %v3474
    %v3483 = vadd.f32 %v3457, %v3475
    %v3484 = vadd.f32 %v3458, %v3476
    %v3485 = vadd.f32 %v3459, %v3477
    %v3486 = vadd.f32 %v3460, %v3478
    %v3487 = vadd.f32 %v3461, %v3479
    %v3488 = vadd.f32 %v3462, %v3480
    %v3489 = vadd.f32 %v3463, %v3481
    %s3490 = sadd.s32 %s3464, 800
    %s3491 = scalar_lea.vmem [#allocation3], %s3490
    %v3492 = vld [vmem:[%s3491] sm:$0xff]
    %v3493 = vld [vmem:[%s3491 + $0x8] sm:$0xff]
    %v3494 = vld [vmem:[%s3491 + $0x10] sm:$0xff]
    %v3495 = vld [vmem:[%s3491 + $0x18] sm:$0xff]
    %v3496 = vld [vmem:[%s3491 + $0x20] sm:$0xff]
    %v3497 = vld [vmem:[%s3491 + $0x28] sm:$0xff]
    %v3498 = vld [vmem:[%s3491 + $0x30] sm:$0xff]
    %v3499 = vld [vmem:[%s3491 + $0x38] sm:$0xff]
    %v3500 = vmul.f32 %v3492, %v1462
    %v3501 = vmul.f32 %v3493, %v1462
    %v3502 = vmul.f32 %v3494, %v1462
    %v3503 = vmul.f32 %v3495, %v1462
    %v3504 = vmul.f32 %v3496, %v1462
    %v3505 = vmul.f32 %v3497, %v1462
    %v3506 = vmul.f32 %v3498, %v1462
    %v3507 = vmul.f32 %v3499, %v1462
    %v3508 = vadd.f32 %v3482, %v3500
    %v3509 = vadd.f32 %v3483, %v3501
    %v3510 = vadd.f32 %v3484, %v3502
    %v3511 = vadd.f32 %v3485, %v3503
    %v3512 = vadd.f32 %v3486, %v3504
    %v3513 = vadd.f32 %v3487, %v3505
    %v3514 = vadd.f32 %v3488, %v3506
    %v3515 = vadd.f32 %v3489, %v3507
    %s3516 = sadd.s32 %s3464, 1600
    %s3517 = scalar_lea.vmem [#allocation3], %s3516
    %v3518 = vld [vmem:[%s3517] sm:$0xff]
    %v3519 = vld [vmem:[%s3517 + $0x8] sm:$0xff]
    %v3520 = vld [vmem:[%s3517 + $0x10] sm:$0xff]
    %v3521 = vld [vmem:[%s3517 + $0x18] sm:$0xff]
    %v3522 = vld [vmem:[%s3517 + $0x20] sm:$0xff]
    %v3523 = vld [vmem:[%s3517 + $0x28] sm:$0xff]
    %v3524 = vld [vmem:[%s3517 + $0x30] sm:$0xff]
    %v3525 = vld [vmem:[%s3517 + $0x38] sm:$0xff]
    %v3526 = vmul.f32 %v3518, %v1492
    %v3527 = vmul.f32 %v3519, %v1492
    %v3528 = vmul.f32 %v3520, %v1492
    %v3529 = vmul.f32 %v3521, %v1492
    %v3530 = vmul.f32 %v3522, %v1492
    %v3531 = vmul.f32 %v3523, %v1492
    %v3532 = vmul.f32 %v3524, %v1492
    %v3533 = vmul.f32 %v3525, %v1492
    %v3534 = vadd.f32 %v3508, %v3526
    %v3535 = vadd.f32 %v3509, %v3527
    %v3536 = vadd.f32 %v3510, %v3528
    %v3537 = vadd.f32 %v3511, %v3529
    %v3538 = vadd.f32 %v3512, %v3530
    %v3539 = vadd.f32 %v3513, %v3531
    %v3540 = vadd.f32 %v3514, %v3532
    %v3541 = vadd.f32 %v3515, %v3533
    %v3542 = vadd.f32 %v3534, %v1513
    %v3543 = vadd.f32 %v3535, %v1513
    %v3544 = vadd.f32 %v3536, %v1513
    %v3545 = vadd.f32 %v3537, %v1513
    %v3546 = vadd.f32 %v3538, %v1513
    %v3547 = vadd.f32 %v3539, %v1513
    %v3548 = vadd.f32 %v3540, %v1513
    %v3549 = vadd.f32 %v3541, %v1513
    %s3550 = scalar_lea.vmem [#allocation5], 192
    %3551 = vst [vmem:[%s3550] sm:$0xff] %v3542
    %3552 = vst [vmem:[%s3550 + $0x8] sm:$0xff] %v3543
    %3553 = vst [vmem:[%s3550 + $0x10] sm:$0xff] %v3544
    %3554 = vst [vmem:[%s3550 + $0x18] sm:$0xff] %v3545
    %3555 = vst [vmem:[%s3550 + $0x20] sm:$0xff] %v3546
    %3556 = vst [vmem:[%s3550 + $0x28] sm:$0xff] %v3547
    %3557 = vst [vmem:[%s3550 + $0x30] sm:$0xff] %v3548
    %3558 = vst [vmem:[%s3550 + $0x38] sm:$0xff] %v3549
    %v3559 = vld [vmem:[%s2633] sm:$0xff]
    %v3560 = vld [vmem:[%s2633 + $0x8] sm:$0xff]
    %v3561 = vld [vmem:[%s2633 + $0x10] sm:$0xff]
    %v3562 = vld [vmem:[%s2633 + $0x18] sm:$0xff]
    %v3563 = vld [vmem:[%s2633 + $0x20] sm:$0xff]
    %v3564 = vld [vmem:[%s2633 + $0x28] sm:$0xff]
    %v3565 = vld [vmem:[%s2633 + $0x30] sm:$0xff]
    %v3566 = vld [vmem:[%s2633 + $0x38] sm:$0xff]
    %v3567 = vmul.f32 %v3559, %v718
    %v3568 = vmul.f32 %v3560, %v718
    %v3569 = vmul.f32 %v3561, %v718
    %v3570 = vmul.f32 %v3562, %v718
    %v3571 = vmul.f32 %v3563, %v718
    %v3572 = vmul.f32 %v3564, %v718
    %v3573 = vmul.f32 %v3565, %v718
    %v3574 = vmul.f32 %v3566, %v718
    %v3575 = vld [vmem:[%s2659] sm:$0xff]
    %v3576 = vld [vmem:[%s2659 + $0x8] sm:$0xff]
    %v3577 = vld [vmem:[%s2659 + $0x10] sm:$0xff]
    %v3578 = vld [vmem:[%s2659 + $0x18] sm:$0xff]
    %v3579 = vld [vmem:[%s2659 + $0x20] sm:$0xff]
    %v3580 = vld [vmem:[%s2659 + $0x28] sm:$0xff]
    %v3581 = vld [vmem:[%s2659 + $0x30] sm:$0xff]
    %v3582 = vld [vmem:[%s2659 + $0x38] sm:$0xff]
    %v3583 = vmul.f32 %v3575, %v740
    %v3584 = vmul.f32 %v3576, %v740
    %v3585 = vmul.f32 %v3577, %v740
    %v3586 = vmul.f32 %v3578, %v740
    %v3587 = vmul.f32 %v3579, %v740
    %v3588 = vmul.f32 %v3580, %v740
    %v3589 = vmul.f32 %v3581, %v740
    %v3590 = vmul.f32 %v3582, %v740
    %v3591 = vadd.f32 %v3567, %v3583
    %v3592 = vadd.f32 %v3568, %v3584
    %v3593 = vadd.f32 %v3569, %v3585
    %v3594 = vadd.f32 %v3570, %v3586
    %v3595 = vadd.f32 %v3571, %v3587
    %v3596 = vadd.f32 %v3572, %v3588
    %v3597 = vadd.f32 %v3573, %v3589
    %v3598 = vadd.f32 %v3574, %v3590
    %v3599 = vld [vmem:[%s2685] sm:$0xff]
    %v3600 = vld [vmem:[%s2685 + $0x8] sm:$0xff]
    %v3601 = vld [vmem:[%s2685 + $0x10] sm:$0xff]
    %v3602 = vld [vmem:[%s2685 + $0x18] sm:$0xff]
    %v3603 = vld [vmem:[%s2685 + $0x20] sm:$0xff]
    %v3604 = vld [vmem:[%s2685 + $0x28] sm:$0xff]
    %v3605 = vld [vmem:[%s2685 + $0x30] sm:$0xff]
    %v3606 = vld [vmem:[%s2685 + $0x38] sm:$0xff]
    %v3607 = vmul.f32 %v3599, %v770
    %v3608 = vmul.f32 %v3600, %v770
    %v3609 = vmul.f32 %v3601, %v770
    %v3610 = vmul.f32 %v3602, %v770
    %v3611 = vmul.f32 %v3603, %v770
    %v3612 = vmul.f32 %v3604, %v770
    %v3613 = vmul.f32 %v3605, %v770
    %v3614 = vmul.f32 %v3606, %v770
    %v3615 = vadd.f32 %v3591, %v3607
    %v3616 = vadd.f32 %v3592, %v3608
    %v3617 = vadd.f32 %v3593, %v3609
    %v3618 = vadd.f32 %v3594, %v3610
    %v3619 = vadd.f32 %v3595, %v3611
    %v3620 = vadd.f32 %v3596, %v3612
    %v3621 = vadd.f32 %v3597, %v3613
    %v3622 = vadd.f32 %v3598, %v3614
    %v3623 = vld [vmem:[%s2711] sm:$0xff]
    %v3624 = vld [vmem:[%s2711 + $0x8] sm:$0xff]
    %v3625 = vld [vmem:[%s2711 + $0x10] sm:$0xff]
    %v3626 = vld [vmem:[%s2711 + $0x18] sm:$0xff]
    %v3627 = vld [vmem:[%s2711 + $0x20] sm:$0xff]
    %v3628 = vld [vmem:[%s2711 + $0x28] sm:$0xff]
    %v3629 = vld [vmem:[%s2711 + $0x30] sm:$0xff]
    %v3630 = vld [vmem:[%s2711 + $0x38] sm:$0xff]
    %v3631 = vmul.f32 %v3623, %v800
    %v3632 = vmul.f32 %v3624, %v800
    %v3633 = vmul.f32 %v3625, %v800
    %v3634 = vmul.f32 %v3626, %v800
    %v3635 = vmul.f32 %v3627, %v800
    %v3636 = vmul.f32 %v3628, %v800
    %v3637 = vmul.f32 %v3629, %v800
    %v3638 = vmul.f32 %v3630, %v800
    %v3639 = vadd.f32 %v3615, %v3631
    %v3640 = vadd.f32 %v3616, %v3632
    %v3641 = vadd.f32 %v3617, %v3633
    %v3642 = vadd.f32 %v3618, %v3634
    %v3643 = vadd.f32 %v3619, %v3635
    %v3644 = vadd.f32 %v3620, %v3636
    %v3645 = vadd.f32 %v3621, %v3637
    %v3646 = vadd.f32 %v3622, %v3638
    %v3647 = vld [vmem:[%s2737] sm:$0xff]
    %v3648 = vld [vmem:[%s2737 + $0x8] sm:$0xff]
    %v3649 = vld [vmem:[%s2737 + $0x10] sm:$0xff]
    %v3650 = vld [vmem:[%s2737 + $0x18] sm:$0xff]
    %v3651 = vld [vmem:[%s2737 + $0x20] sm:$0xff]
    %v3652 = vld [vmem:[%s2737 + $0x28] sm:$0xff]
    %v3653 = vld [vmem:[%s2737 + $0x30] sm:$0xff]
    %v3654 = vld [vmem:[%s2737 + $0x38] sm:$0xff]
    %v3655 = vmul.f32 %v3647, %v830
    %v3656 = vmul.f32 %v3648, %v830
    %v3657 = vmul.f32 %v3649, %v830
    %v3658 = vmul.f32 %v3650, %v830
    %v3659 = vmul.f32 %v3651, %v830
    %v3660 = vmul.f32 %v3652, %v830
    %v3661 = vmul.f32 %v3653, %v830
    %v3662 = vmul.f32 %v3654, %v830
    %v3663 = vadd.f32 %v3639, %v3655
    %v3664 = vadd.f32 %v3640, %v3656
    %v3665 = vadd.f32 %v3641, %v3657
    %v3666 = vadd.f32 %v3642, %v3658
    %v3667 = vadd.f32 %v3643, %v3659
    %v3668 = vadd.f32 %v3644, %v3660
    %v3669 = vadd.f32 %v3645, %v3661
    %v3670 = vadd.f32 %v3646, %v3662
    %v3671 = vld [vmem:[%s2763] sm:$0xff]
    %v3672 = vld [vmem:[%s2763 + $0x8] sm:$0xff]
    %v3673 = vld [vmem:[%s2763 + $0x10] sm:$0xff]
    %v3674 = vld [vmem:[%s2763 + $0x18] sm:$0xff]
    %v3675 = vld [vmem:[%s2763 + $0x20] sm:$0xff]
    %v3676 = vld [vmem:[%s2763 + $0x28] sm:$0xff]
    %v3677 = vld [vmem:[%s2763 + $0x30] sm:$0xff]
    %v3678 = vld [vmem:[%s2763 + $0x38] sm:$0xff]
    %v3679 = vmul.f32 %v3671, %v860
    %v3680 = vmul.f32 %v3672, %v860
    %v3681 = vmul.f32 %v3673, %v860
    %v3682 = vmul.f32 %v3674, %v860
    %v3683 = vmul.f32 %v3675, %v860
    %v3684 = vmul.f32 %v3676, %v860
    %v3685 = vmul.f32 %v3677, %v860
    %v3686 = vmul.f32 %v3678, %v860
    %v3687 = vadd.f32 %v3663, %v3679
    %v3688 = vadd.f32 %v3664, %v3680
    %v3689 = vadd.f32 %v3665, %v3681
    %v3690 = vadd.f32 %v3666, %v3682
    %v3691 = vadd.f32 %v3667, %v3683
    %v3692 = vadd.f32 %v3668, %v3684
    %v3693 = vadd.f32 %v3669, %v3685
    %v3694 = vadd.f32 %v3670, %v3686
    %v3695 = vld [vmem:[%s2789] sm:$0xff]
    %v3696 = vld [vmem:[%s2789 + $0x8] sm:$0xff]
    %v3697 = vld [vmem:[%s2789 + $0x10] sm:$0xff]
    %v3698 = vld [vmem:[%s2789 + $0x18] sm:$0xff]
    %v3699 = vld [vmem:[%s2789 + $0x20] sm:$0xff]
    %v3700 = vld [vmem:[%s2789 + $0x28] sm:$0xff]
    %v3701 = vld [vmem:[%s2789 + $0x30] sm:$0xff]
    %v3702 = vld [vmem:[%s2789 + $0x38] sm:$0xff]
    %v3703 = vmul.f32 %v3695, %v890
    %v3704 = vmul.f32 %v3696, %v890
    %v3705 = vmul.f32 %v3697, %v890
    %v3706 = vmul.f32 %v3698, %v890
    %v3707 = vmul.f32 %v3699, %v890
    %v3708 = vmul.f32 %v3700, %v890
    %v3709 = vmul.f32 %v3701, %v890
    %v3710 = vmul.f32 %v3702, %v890
    %v3711 = vadd.f32 %v3687, %v3703
    %v3712 = vadd.f32 %v3688, %v3704
    %v3713 = vadd.f32 %v3689, %v3705
    %v3714 = vadd.f32 %v3690, %v3706
    %v3715 = vadd.f32 %v3691, %v3707
    %v3716 = vadd.f32 %v3692, %v3708
    %v3717 = vadd.f32 %v3693, %v3709
    %v3718 = vadd.f32 %v3694, %v3710
    %v3719 = vld [vmem:[%s2815] sm:$0xff]
    %v3720 = vld [vmem:[%s2815 + $0x8] sm:$0xff]
    %v3721 = vld [vmem:[%s2815 + $0x10] sm:$0xff]
    %v3722 = vld [vmem:[%s2815 + $0x18] sm:$0xff]
    %v3723 = vld [vmem:[%s2815 + $0x20] sm:$0xff]
    %v3724 = vld [vmem:[%s2815 + $0x28] sm:$0xff]
    %v3725 = vld [vmem:[%s2815 + $0x30] sm:$0xff]
    %v3726 = vld [vmem:[%s2815 + $0x38] sm:$0xff]
    %v3727 = vmul.f32 %v3719, %v920
    %v3728 = vmul.f32 %v3720, %v920
    %v3729 = vmul.f32 %v3721, %v920
    %v3730 = vmul.f32 %v3722, %v920
    %v3731 = vmul.f32 %v3723, %v920
    %v3732 = vmul.f32 %v3724, %v920
    %v3733 = vmul.f32 %v3725, %v920
    %v3734 = vmul.f32 %v3726, %v920
    %v3735 = vadd.f32 %v3711, %v3727
    %v3736 = vadd.f32 %v3712, %v3728
    %v3737 = vadd.f32 %v3713, %v3729
    %v3738 = vadd.f32 %v3714, %v3730
    %v3739 = vadd.f32 %v3715, %v3731
    %v3740 = vadd.f32 %v3716, %v3732
    %v3741 = vadd.f32 %v3717, %v3733
    %v3742 = vadd.f32 %v3718, %v3734
    %v3743 = vld [vmem:[%s2841] sm:$0xff]
    %v3744 = vld [vmem:[%s2841 + $0x8] sm:$0xff]
    %v3745 = vld [vmem:[%s2841 + $0x10] sm:$0xff]
    %v3746 = vld [vmem:[%s2841 + $0x18] sm:$0xff]
    %v3747 = vld [vmem:[%s2841 + $0x20] sm:$0xff]
    %v3748 = vld [vmem:[%s2841 + $0x28] sm:$0xff]
    %v3749 = vld [vmem:[%s2841 + $0x30] sm:$0xff]
    %v3750 = vld [vmem:[%s2841 + $0x38] sm:$0xff]
    %v3751 = vmul.f32 %v3743, %v950
    %v3752 = vmul.f32 %v3744, %v950
    %v3753 = vmul.f32 %v3745, %v950
    %v3754 = vmul.f32 %v3746, %v950
    %v3755 = vmul.f32 %v3747, %v950
    %v3756 = vmul.f32 %v3748, %v950
    %v3757 = vmul.f32 %v3749, %v950
    %v3758 = vmul.f32 %v3750, %v950
    %v3759 = vadd.f32 %v3735, %v3751
    %v3760 = vadd.f32 %v3736, %v3752
    %v3761 = vadd.f32 %v3737, %v3753
    %v3762 = vadd.f32 %v3738, %v3754
    %v3763 = vadd.f32 %v3739, %v3755
    %v3764 = vadd.f32 %v3740, %v3756
    %v3765 = vadd.f32 %v3741, %v3757
    %v3766 = vadd.f32 %v3742, %v3758
    %v3767 = vld [vmem:[%s3309] sm:$0xff]
    %v3768 = vld [vmem:[%s3309 + $0x8] sm:$0xff]
    %v3769 = vld [vmem:[%s3309 + $0x10] sm:$0xff]
    %v3770 = vld [vmem:[%s3309 + $0x18] sm:$0xff]
    %v3771 = vld [vmem:[%s3309 + $0x20] sm:$0xff]
    %v3772 = vld [vmem:[%s3309 + $0x28] sm:$0xff]
    %v3773 = vld [vmem:[%s3309 + $0x30] sm:$0xff]
    %v3774 = vld [vmem:[%s3309 + $0x38] sm:$0xff]
    %v3775 = vmul.f32 %v3767, %v981
    %v3776 = vmul.f32 %v3768, %v981
    %v3777 = vmul.f32 %v3769, %v981
    %v3778 = vmul.f32 %v3770, %v981
    %v3779 = vmul.f32 %v3771, %v981
    %v3780 = vmul.f32 %v3772, %v981
    %v3781 = vmul.f32 %v3773, %v981
    %v3782 = vmul.f32 %v3774, %v981
    %v3783 = vadd.f32 %v3759, %v3775
    %v3784 = vadd.f32 %v3760, %v3776
    %v3785 = vadd.f32 %v3761, %v3777
    %v3786 = vadd.f32 %v3762, %v3778
    %v3787 = vadd.f32 %v3763, %v3779
    %v3788 = vadd.f32 %v3764, %v3780
    %v3789 = vadd.f32 %v3765, %v3781
    %v3790 = vadd.f32 %v3766, %v3782
    %v3791 = vld [vmem:[%s3335] sm:$0xff]
    %v3792 = vld [vmem:[%s3335 + $0x8] sm:$0xff]
    %v3793 = vld [vmem:[%s3335 + $0x10] sm:$0xff]
    %v3794 = vld [vmem:[%s3335 + $0x18] sm:$0xff]
    %v3795 = vld [vmem:[%s3335 + $0x20] sm:$0xff]
    %v3796 = vld [vmem:[%s3335 + $0x28] sm:$0xff]
    %v3797 = vld [vmem:[%s3335 + $0x30] sm:$0xff]
    %v3798 = vld [vmem:[%s3335 + $0x38] sm:$0xff]
    %v3799 = vmul.f32 %v3791, %v1011
    %v3800 = vmul.f32 %v3792, %v1011
    %v3801 = vmul.f32 %v3793, %v1011
    %v3802 = vmul.f32 %v3794, %v1011
    %v3803 = vmul.f32 %v3795, %v1011
    %v3804 = vmul.f32 %v3796, %v1011
    %v3805 = vmul.f32 %v3797, %v1011
    %v3806 = vmul.f32 %v3798, %v1011
    %v3807 = vadd.f32 %v3783, %v3799
    %v3808 = vadd.f32 %v3784, %v3800
    %v3809 = vadd.f32 %v3785, %v3801
    %v3810 = vadd.f32 %v3786, %v3802
    %v3811 = vadd.f32 %v3787, %v3803
    %v3812 = vadd.f32 %v3788, %v3804
    %v3813 = vadd.f32 %v3789, %v3805
    %v3814 = vadd.f32 %v3790, %v3806
    %v3815 = vld [vmem:[%s3361] sm:$0xff]
    %v3816 = vld [vmem:[%s3361 + $0x8] sm:$0xff]
    %v3817 = vld [vmem:[%s3361 + $0x10] sm:$0xff]
    %v3818 = vld [vmem:[%s3361 + $0x18] sm:$0xff]
    %v3819 = vld [vmem:[%s3361 + $0x20] sm:$0xff]
    %v3820 = vld [vmem:[%s3361 + $0x28] sm:$0xff]
    %v3821 = vld [vmem:[%s3361 + $0x30] sm:$0xff]
    %v3822 = vld [vmem:[%s3361 + $0x38] sm:$0xff]
    %v3823 = vmul.f32 %v3815, %v1041
    %v3824 = vmul.f32 %v3816, %v1041
    %v3825 = vmul.f32 %v3817, %v1041
    %v3826 = vmul.f32 %v3818, %v1041
    %v3827 = vmul.f32 %v3819, %v1041
    %v3828 = vmul.f32 %v3820, %v1041
    %v3829 = vmul.f32 %v3821, %v1041
    %v3830 = vmul.f32 %v3822, %v1041
    %v3831 = vadd.f32 %v3807, %v3823
    %v3832 = vadd.f32 %v3808, %v3824
    %v3833 = vadd.f32 %v3809, %v3825
    %v3834 = vadd.f32 %v3810, %v3826
    %v3835 = vadd.f32 %v3811, %v3827
    %v3836 = vadd.f32 %v3812, %v3828
    %v3837 = vadd.f32 %v3813, %v3829
    %v3838 = vadd.f32 %v3814, %v3830
    %v3839 = vld [vmem:[%s3387] sm:$0xff]
    %v3840 = vld [vmem:[%s3387 + $0x8] sm:$0xff]
    %v3841 = vld [vmem:[%s3387 + $0x10] sm:$0xff]
    %v3842 = vld [vmem:[%s3387 + $0x18] sm:$0xff]
    %v3843 = vld [vmem:[%s3387 + $0x20] sm:$0xff]
    %v3844 = vld [vmem:[%s3387 + $0x28] sm:$0xff]
    %v3845 = vld [vmem:[%s3387 + $0x30] sm:$0xff]
    %v3846 = vld [vmem:[%s3387 + $0x38] sm:$0xff]
    %v3847 = vmul.f32 %v3839, %v1071
    %v3848 = vmul.f32 %v3840, %v1071
    %v3849 = vmul.f32 %v3841, %v1071
    %v3850 = vmul.f32 %v3842, %v1071
    %v3851 = vmul.f32 %v3843, %v1071
    %v3852 = vmul.f32 %v3844, %v1071
    %v3853 = vmul.f32 %v3845, %v1071
    %v3854 = vmul.f32 %v3846, %v1071
    %v3855 = vadd.f32 %v3831, %v3847
    %v3856 = vadd.f32 %v3832, %v3848
    %v3857 = vadd.f32 %v3833, %v3849
    %v3858 = vadd.f32 %v3834, %v3850
    %v3859 = vadd.f32 %v3835, %v3851
    %v3860 = vadd.f32 %v3836, %v3852
    %v3861 = vadd.f32 %v3837, %v3853
    %v3862 = vadd.f32 %v3838, %v3854
    %v3863 = vld [vmem:[%s3413] sm:$0xff]
    %v3864 = vld [vmem:[%s3413 + $0x8] sm:$0xff]
    %v3865 = vld [vmem:[%s3413 + $0x10] sm:$0xff]
    %v3866 = vld [vmem:[%s3413 + $0x18] sm:$0xff]
    %v3867 = vld [vmem:[%s3413 + $0x20] sm:$0xff]
    %v3868 = vld [vmem:[%s3413 + $0x28] sm:$0xff]
    %v3869 = vld [vmem:[%s3413 + $0x30] sm:$0xff]
    %v3870 = vld [vmem:[%s3413 + $0x38] sm:$0xff]
    %v3871 = vmul.f32 %v3863, %v1101
    %v3872 = vmul.f32 %v3864, %v1101
    %v3873 = vmul.f32 %v3865, %v1101
    %v3874 = vmul.f32 %v3866, %v1101
    %v3875 = vmul.f32 %v3867, %v1101
    %v3876 = vmul.f32 %v3868, %v1101
    %v3877 = vmul.f32 %v3869, %v1101
    %v3878 = vmul.f32 %v3870, %v1101
    %v3879 = vadd.f32 %v3855, %v3871
    %v3880 = vadd.f32 %v3856, %v3872
    %v3881 = vadd.f32 %v3857, %v3873
    %v3882 = vadd.f32 %v3858, %v3874
    %v3883 = vadd.f32 %v3859, %v3875
    %v3884 = vadd.f32 %v3860, %v3876
    %v3885 = vadd.f32 %v3861, %v3877
    %v3886 = vadd.f32 %v3862, %v3878
    %v3887 = vld [vmem:[%s3439] sm:$0xff]
    %v3888 = vld [vmem:[%s3439 + $0x8] sm:$0xff]
    %v3889 = vld [vmem:[%s3439 + $0x10] sm:$0xff]
    %v3890 = vld [vmem:[%s3439 + $0x18] sm:$0xff]
    %v3891 = vld [vmem:[%s3439 + $0x20] sm:$0xff]
    %v3892 = vld [vmem:[%s3439 + $0x28] sm:$0xff]
    %v3893 = vld [vmem:[%s3439 + $0x30] sm:$0xff]
    %v3894 = vld [vmem:[%s3439 + $0x38] sm:$0xff]
    %v3895 = vmul.f32 %v3887, %v1131
    %v3896 = vmul.f32 %v3888, %v1131
    %v3897 = vmul.f32 %v3889, %v1131
    %v3898 = vmul.f32 %v3890, %v1131
    %v3899 = vmul.f32 %v3891, %v1131
    %v3900 = vmul.f32 %v3892, %v1131
    %v3901 = vmul.f32 %v3893, %v1131
    %v3902 = vmul.f32 %v3894, %v1131
    %v3903 = vadd.f32 %v3879, %v3895
    %v3904 = vadd.f32 %v3880, %v3896
    %v3905 = vadd.f32 %v3881, %v3897
    %v3906 = vadd.f32 %v3882, %v3898
    %v3907 = vadd.f32 %v3883, %v3899
    %v3908 = vadd.f32 %v3884, %v3900
    %v3909 = vadd.f32 %v3885, %v3901
    %v3910 = vadd.f32 %v3886, %v3902
    %v3911 = vld [vmem:[%s3465] sm:$0xff]
    %v3912 = vld [vmem:[%s3465 + $0x8] sm:$0xff]
    %v3913 = vld [vmem:[%s3465 + $0x10] sm:$0xff]
    %v3914 = vld [vmem:[%s3465 + $0x18] sm:$0xff]
    %v3915 = vld [vmem:[%s3465 + $0x20] sm:$0xff]
    %v3916 = vld [vmem:[%s3465 + $0x28] sm:$0xff]
    %v3917 = vld [vmem:[%s3465 + $0x30] sm:$0xff]
    %v3918 = vld [vmem:[%s3465 + $0x38] sm:$0xff]
    %v3919 = vmul.f32 %v3911, %v1161
    %v3920 = vmul.f32 %v3912, %v1161
    %v3921 = vmul.f32 %v3913, %v1161
    %v3922 = vmul.f32 %v3914, %v1161
    %v3923 = vmul.f32 %v3915, %v1161
    %v3924 = vmul.f32 %v3916, %v1161
    %v3925 = vmul.f32 %v3917, %v1161
    %v3926 = vmul.f32 %v3918, %v1161
    %v3927 = vadd.f32 %v3903, %v3919
    %v3928 = vadd.f32 %v3904, %v3920
    %v3929 = vadd.f32 %v3905, %v3921
    %v3930 = vadd.f32 %v3906, %v3922
    %v3931 = vadd.f32 %v3907, %v3923
    %v3932 = vadd.f32 %v3908, %v3924
    %v3933 = vadd.f32 %v3909, %v3925
    %v3934 = vadd.f32 %v3910, %v3926
    %v3935 = vld [vmem:[%s3491] sm:$0xff]
    %v3936 = vld [vmem:[%s3491 + $0x8] sm:$0xff]
    %v3937 = vld [vmem:[%s3491 + $0x10] sm:$0xff]
    %v3938 = vld [vmem:[%s3491 + $0x18] sm:$0xff]
    %v3939 = vld [vmem:[%s3491 + $0x20] sm:$0xff]
    %v3940 = vld [vmem:[%s3491 + $0x28] sm:$0xff]
    %v3941 = vld [vmem:[%s3491 + $0x30] sm:$0xff]
    %v3942 = vld [vmem:[%s3491 + $0x38] sm:$0xff]
    %v3943 = vmul.f32 %v3935, %v1191
    %v3944 = vmul.f32 %v3936, %v1191
    %v3945 = vmul.f32 %v3937, %v1191
    %v3946 = vmul.f32 %v3938, %v1191
    %v3947 = vmul.f32 %v3939, %v1191
    %v3948 = vmul.f32 %v3940, %v1191
    %v3949 = vmul.f32 %v3941, %v1191
    %v3950 = vmul.f32 %v3942, %v1191
    %v3951 = vadd.f32 %v3927, %v3943
    %v3952 = vadd.f32 %v3928, %v3944
    %v3953 = vadd.f32 %v3929, %v3945
    %v3954 = vadd.f32 %v3930, %v3946
    %v3955 = vadd.f32 %v3931, %v3947
    %v3956 = vadd.f32 %v3932, %v3948
    %v3957 = vadd.f32 %v3933, %v3949
    %v3958 = vadd.f32 %v3934, %v3950
    %v3959 = vld [vmem:[%s3517] sm:$0xff]
    %v3960 = vld [vmem:[%s3517 + $0x8] sm:$0xff]
    %v3961 = vld [vmem:[%s3517 + $0x10] sm:$0xff]
    %v3962 = vld [vmem:[%s3517 + $0x18] sm:$0xff]
    %v3963 = vld [vmem:[%s3517 + $0x20] sm:$0xff]
    %v3964 = vld [vmem:[%s3517 + $0x28] sm:$0xff]
    %v3965 = vld [vmem:[%s3517 + $0x30] sm:$0xff]
    %v3966 = vld [vmem:[%s3517 + $0x38] sm:$0xff]
    %v3967 = vmul.f32 %v3959, %v1221
    %v3968 = vmul.f32 %v3960, %v1221
    %v3969 = vmul.f32 %v3961, %v1221
    %v3970 = vmul.f32 %v3962, %v1221
    %v3971 = vmul.f32 %v3963, %v1221
    %v3972 = vmul.f32 %v3964, %v1221
    %v3973 = vmul.f32 %v3965, %v1221
    %v3974 = vmul.f32 %v3966, %v1221
    %v3975 = vadd.f32 %v3951, %v3967
    %v3976 = vadd.f32 %v3952, %v3968
    %v3977 = vadd.f32 %v3953, %v3969
    %v3978 = vadd.f32 %v3954, %v3970
    %v3979 = vadd.f32 %v3955, %v3971
    %v3980 = vadd.f32 %v3956, %v3972
    %v3981 = vadd.f32 %v3957, %v3973
    %v3982 = vadd.f32 %v3958, %v3974
    %s3983 = sadd.s32 %s704, 6
    %s3984 = smul.u32 %s3983, 80
    %s3985 = scalar_lea.vmem [#allocation3], %s3984
    %v3986 = vld [vmem:[%s3985] sm:$0xff]
    %v3987 = vld [vmem:[%s3985 + $0x8] sm:$0xff]
    %v3988 = vld [vmem:[%s3985 + $0x10] sm:$0xff]
    %v3989 = vld [vmem:[%s3985 + $0x18] sm:$0xff]
    %v3990 = vld [vmem:[%s3985 + $0x20] sm:$0xff]
    %v3991 = vld [vmem:[%s3985 + $0x28] sm:$0xff]
    %v3992 = vld [vmem:[%s3985 + $0x30] sm:$0xff]
    %v3993 = vld [vmem:[%s3985 + $0x38] sm:$0xff]
    %v3994 = vmul.f32 %v3986, %v1252
    %v3995 = vmul.f32 %v3987, %v1252
    %v3996 = vmul.f32 %v3988, %v1252
    %v3997 = vmul.f32 %v3989, %v1252
    %v3998 = vmul.f32 %v3990, %v1252
    %v3999 = vmul.f32 %v3991, %v1252
    %v4000 = vmul.f32 %v3992, %v1252
    %v4001 = vmul.f32 %v3993, %v1252
    %v4002 = vadd.f32 %v3975, %v3994
    %v4003 = vadd.f32 %v3976, %v3995
    %v4004 = vadd.f32 %v3977, %v3996
    %v4005 = vadd.f32 %v3978, %v3997
    %v4006 = vadd.f32 %v3979, %v3998
    %v4007 = vadd.f32 %v3980, %v3999
    %v4008 = vadd.f32 %v3981, %v4000
    %v4009 = vadd.f32 %v3982, %v4001
    %s4010 = sadd.s32 %s3984, 800
    %s4011 = scalar_lea.vmem [#allocation3], %s4010
    %v4012 = vld [vmem:[%s4011] sm:$0xff]
    %v4013 = vld [vmem:[%s4011 + $0x8] sm:$0xff]
    %v4014 = vld [vmem:[%s4011 + $0x10] sm:$0xff]
    %v4015 = vld [vmem:[%s4011 + $0x18] sm:$0xff]
    %v4016 = vld [vmem:[%s4011 + $0x20] sm:$0xff]
    %v4017 = vld [vmem:[%s4011 + $0x28] sm:$0xff]
    %v4018 = vld [vmem:[%s4011 + $0x30] sm:$0xff]
    %v4019 = vld [vmem:[%s4011 + $0x38] sm:$0xff]
    %v4020 = vmul.f32 %v4012, %v1282
    %v4021 = vmul.f32 %v4013, %v1282
    %v4022 = vmul.f32 %v4014, %v1282
    %v4023 = vmul.f32 %v4015, %v1282
    %v4024 = vmul.f32 %v4016, %v1282
    %v4025 = vmul.f32 %v4017, %v1282
    %v4026 = vmul.f32 %v4018, %v1282
    %v4027 = vmul.f32 %v4019, %v1282
    %v4028 = vadd.f32 %v4002, %v4020
    %v4029 = vadd.f32 %v4003, %v4021
    %v4030 = vadd.f32 %v4004, %v4022
    %v4031 = vadd.f32 %v4005, %v4023
    %v4032 = vadd.f32 %v4006, %v4024
    %v4033 = vadd.f32 %v4007, %v4025
    %v4034 = vadd.f32 %v4008, %v4026
    %v4035 = vadd.f32 %v4009, %v4027
    %s4036 = sadd.s32 %s3984, 1600
    %s4037 = scalar_lea.vmem [#allocation3], %s4036
    %v4038 = vld [vmem:[%s4037] sm:$0xff]
    %v4039 = vld [vmem:[%s4037 + $0x8] sm:$0xff]
    %v4040 = vld [vmem:[%s4037 + $0x10] sm:$0xff]
    %v4041 = vld [vmem:[%s4037 + $0x18] sm:$0xff]
    %v4042 = vld [vmem:[%s4037 + $0x20] sm:$0xff]
    %v4043 = vld [vmem:[%s4037 + $0x28] sm:$0xff]
    %v4044 = vld [vmem:[%s4037 + $0x30] sm:$0xff]
    %v4045 = vld [vmem:[%s4037 + $0x38] sm:$0xff]
    %v4046 = vmul.f32 %v4038, %v1312
    %v4047 = vmul.f32 %v4039, %v1312
    %v4048 = vmul.f32 %v4040, %v1312
    %v4049 = vmul.f32 %v4041, %v1312
    %v4050 = vmul.f32 %v4042, %v1312
    %v4051 = vmul.f32 %v4043, %v1312
    %v4052 = vmul.f32 %v4044, %v1312
    %v4053 = vmul.f32 %v4045, %v1312
    %v4054 = vadd.f32 %v4028, %v4046
    %v4055 = vadd.f32 %v4029, %v4047
    %v4056 = vadd.f32 %v4030, %v4048
    %v4057 = vadd.f32 %v4031, %v4049
    %v4058 = vadd.f32 %v4032, %v4050
    %v4059 = vadd.f32 %v4033, %v4051
    %v4060 = vadd.f32 %v4034, %v4052
    %v4061 = vadd.f32 %v4035, %v4053
    %s4062 = sadd.s32 8, %s3984
    %s4063 = scalar_lea.vmem [#allocation3], %s4062
    %v4064 = vld [vmem:[%s4063] sm:$0xff]
    %v4065 = vld [vmem:[%s4063 + $0x8] sm:$0xff]
    %v4066 = vld [vmem:[%s4063 + $0x10] sm:$0xff]
    %v4067 = vld [vmem:[%s4063 + $0x18] sm:$0xff]
    %v4068 = vld [vmem:[%s4063 + $0x20] sm:$0xff]
    %v4069 = vld [vmem:[%s4063 + $0x28] sm:$0xff]
    %v4070 = vld [vmem:[%s4063 + $0x30] sm:$0xff]
    %v4071 = vld [vmem:[%s4063 + $0x38] sm:$0xff]
    %v4072 = vmul.f32 %v4064, %v1342
    %v4073 = vmul.f32 %v4065, %v1342
    %v4074 = vmul.f32 %v4066, %v1342
    %v4075 = vmul.f32 %v4067, %v1342
    %v4076 = vmul.f32 %v4068, %v1342
    %v4077 = vmul.f32 %v4069, %v1342
    %v4078 = vmul.f32 %v4070, %v1342
    %v4079 = vmul.f32 %v4071, %v1342
    %v4080 = vadd.f32 %v4054, %v4072
    %v4081 = vadd.f32 %v4055, %v4073
    %v4082 = vadd.f32 %v4056, %v4074
    %v4083 = vadd.f32 %v4057, %v4075
    %v4084 = vadd.f32 %v4058, %v4076
    %v4085 = vadd.f32 %v4059, %v4077
    %v4086 = vadd.f32 %v4060, %v4078
    %v4087 = vadd.f32 %v4061, %v4079
    %s4088 = sadd.s32 %s4062, 800
    %s4089 = scalar_lea.vmem [#allocation3], %s4088
    %v4090 = vld [vmem:[%s4089] sm:$0xff]
    %v4091 = vld [vmem:[%s4089 + $0x8] sm:$0xff]
    %v4092 = vld [vmem:[%s4089 + $0x10] sm:$0xff]
    %v4093 = vld [vmem:[%s4089 + $0x18] sm:$0xff]
    %v4094 = vld [vmem:[%s4089 + $0x20] sm:$0xff]
    %v4095 = vld [vmem:[%s4089 + $0x28] sm:$0xff]
    %v4096 = vld [vmem:[%s4089 + $0x30] sm:$0xff]
    %v4097 = vld [vmem:[%s4089 + $0x38] sm:$0xff]
    %v4098 = vmul.f32 %v4090, %v1372
    %v4099 = vmul.f32 %v4091, %v1372
    %v4100 = vmul.f32 %v4092, %v1372
    %v4101 = vmul.f32 %v4093, %v1372
    %v4102 = vmul.f32 %v4094, %v1372
    %v4103 = vmul.f32 %v4095, %v1372
    %v4104 = vmul.f32 %v4096, %v1372
    %v4105 = vmul.f32 %v4097, %v1372
    %v4106 = vadd.f32 %v4080, %v4098
    %v4107 = vadd.f32 %v4081, %v4099
    %v4108 = vadd.f32 %v4082, %v4100
    %v4109 = vadd.f32 %v4083, %v4101
    %v4110 = vadd.f32 %v4084, %v4102
    %v4111 = vadd.f32 %v4085, %v4103
    %v4112 = vadd.f32 %v4086, %v4104
    %v4113 = vadd.f32 %v4087, %v4105
    %s4114 = sadd.s32 %s4062, 1600
    %s4115 = scalar_lea.vmem [#allocation3], %s4114
    %v4116 = vld [vmem:[%s4115] sm:$0xff]
    %v4117 = vld [vmem:[%s4115 + $0x8] sm:$0xff]
    %v4118 = vld [vmem:[%s4115 + $0x10] sm:$0xff]
    %v4119 = vld [vmem:[%s4115 + $0x18] sm:$0xff]
    %v4120 = vld [vmem:[%s4115 + $0x20] sm:$0xff]
    %v4121 = vld [vmem:[%s4115 + $0x28] sm:$0xff]
    %v4122 = vld [vmem:[%s4115 + $0x30] sm:$0xff]
    %v4123 = vld [vmem:[%s4115 + $0x38] sm:$0xff]
    %v4124 = vmul.f32 %v4116, %v1402
    %v4125 = vmul.f32 %v4117, %v1402
    %v4126 = vmul.f32 %v4118, %v1402
    %v4127 = vmul.f32 %v4119, %v1402
    %v4128 = vmul.f32 %v4120, %v1402
    %v4129 = vmul.f32 %v4121, %v1402
    %v4130 = vmul.f32 %v4122, %v1402
    %v4131 = vmul.f32 %v4123, %v1402
    %v4132 = vadd.f32 %v4106, %v4124
    %v4133 = vadd.f32 %v4107, %v4125
    %v4134 = vadd.f32 %v4108, %v4126
    %v4135 = vadd.f32 %v4109, %v4127
    %v4136 = vadd.f32 %v4110, %v4128
    %v4137 = vadd.f32 %v4111, %v4129
    %v4138 = vadd.f32 %v4112, %v4130
    %v4139 = vadd.f32 %v4113, %v4131
    %s4140 = sadd.s32 16, %s3984
    %s4141 = scalar_lea.vmem [#allocation3], %s4140
    %v4142 = vld [vmem:[%s4141] sm:$0xff]
    %v4143 = vld [vmem:[%s4141 + $0x8] sm:$0xff]
    %v4144 = vld [vmem:[%s4141 + $0x10] sm:$0xff]
    %v4145 = vld [vmem:[%s4141 + $0x18] sm:$0xff]
    %v4146 = vld [vmem:[%s4141 + $0x20] sm:$0xff]
    %v4147 = vld [vmem:[%s4141 + $0x28] sm:$0xff]
    %v4148 = vld [vmem:[%s4141 + $0x30] sm:$0xff]
    %v4149 = vld [vmem:[%s4141 + $0x38] sm:$0xff]
    %v4150 = vmul.f32 %v4142, %v1432
    %v4151 = vmul.f32 %v4143, %v1432
    %v4152 = vmul.f32 %v4144, %v1432
    %v4153 = vmul.f32 %v4145, %v1432
    %v4154 = vmul.f32 %v4146, %v1432
    %v4155 = vmul.f32 %v4147, %v1432
    %v4156 = vmul.f32 %v4148, %v1432
    %v4157 = vmul.f32 %v4149, %v1432
    %v4158 = vadd.f32 %v4132, %v4150
    %v4159 = vadd.f32 %v4133, %v4151
    %v4160 = vadd.f32 %v4134, %v4152
    %v4161 = vadd.f32 %v4135, %v4153
    %v4162 = vadd.f32 %v4136, %v4154
    %v4163 = vadd.f32 %v4137, %v4155
    %v4164 = vadd.f32 %v4138, %v4156
    %v4165 = vadd.f32 %v4139, %v4157
    %s4166 = sadd.s32 %s4140, 800
    %s4167 = scalar_lea.vmem [#allocation3], %s4166
    %v4168 = vld [vmem:[%s4167] sm:$0xff]
    %v4169 = vld [vmem:[%s4167 + $0x8] sm:$0xff]
    %v4170 = vld [vmem:[%s4167 + $0x10] sm:$0xff]
    %v4171 = vld [vmem:[%s4167 + $0x18] sm:$0xff]
    %v4172 = vld [vmem:[%s4167 + $0x20] sm:$0xff]
    %v4173 = vld [vmem:[%s4167 + $0x28] sm:$0xff]
    %v4174 = vld [vmem:[%s4167 + $0x30] sm:$0xff]
    %v4175 = vld [vmem:[%s4167 + $0x38] sm:$0xff]
    %v4176 = vmul.f32 %v4168, %v1462
    %v4177 = vmul.f32 %v4169, %v1462
    %v4178 = vmul.f32 %v4170, %v1462
    %v4179 = vmul.f32 %v4171, %v1462
    %v4180 = vmul.f32 %v4172, %v1462
    %v4181 = vmul.f32 %v4173, %v1462
    %v4182 = vmul.f32 %v4174, %v1462
    %v4183 = vmul.f32 %v4175, %v1462
    %v4184 = vadd.f32 %v4158, %v4176
    %v4185 = vadd.f32 %v4159, %v4177
    %v4186 = vadd.f32 %v4160, %v4178
    %v4187 = vadd.f32 %v4161, %v4179
    %v4188 = vadd.f32 %v4162, %v4180
    %v4189 = vadd.f32 %v4163, %v4181
    %v4190 = vadd.f32 %v4164, %v4182
    %v4191 = vadd.f32 %v4165, %v4183
    %s4192 = sadd.s32 %s4140, 1600
    %s4193 = scalar_lea.vmem [#allocation3], %s4192
    %v4194 = vld [vmem:[%s4193] sm:$0xff]
    %v4195 = vld [vmem:[%s4193 + $0x8] sm:$0xff]
    %v4196 = vld [vmem:[%s4193 + $0x10] sm:$0xff]
    %v4197 = vld [vmem:[%s4193 + $0x18] sm:$0xff]
    %v4198 = vld [vmem:[%s4193 + $0x20] sm:$0xff]
    %v4199 = vld [vmem:[%s4193 + $0x28] sm:$0xff]
    %v4200 = vld [vmem:[%s4193 + $0x30] sm:$0xff]
    %v4201 = vld [vmem:[%s4193 + $0x38] sm:$0xff]
    %v4202 = vmul.f32 %v4194, %v1492
    %v4203 = vmul.f32 %v4195, %v1492
    %v4204 = vmul.f32 %v4196, %v1492
    %v4205 = vmul.f32 %v4197, %v1492
    %v4206 = vmul.f32 %v4198, %v1492
    %v4207 = vmul.f32 %v4199, %v1492
    %v4208 = vmul.f32 %v4200, %v1492
    %v4209 = vmul.f32 %v4201, %v1492
    %v4210 = vadd.f32 %v4184, %v4202
    %v4211 = vadd.f32 %v4185, %v4203
    %v4212 = vadd.f32 %v4186, %v4204
    %v4213 = vadd.f32 %v4187, %v4205
    %v4214 = vadd.f32 %v4188, %v4206
    %v4215 = vadd.f32 %v4189, %v4207
    %v4216 = vadd.f32 %v4190, %v4208
    %v4217 = vadd.f32 %v4191, %v4209
    %v4218 = vadd.f32 %v4210, %v1513
    %v4219 = vadd.f32 %v4211, %v1513
    %v4220 = vadd.f32 %v4212, %v1513
    %v4221 = vadd.f32 %v4213, %v1513
    %v4222 = vadd.f32 %v4214, %v1513
    %v4223 = vadd.f32 %v4215, %v1513
    %v4224 = vadd.f32 %v4216, %v1513
    %v4225 = vadd.f32 %v4217, %v1513
    %s4226 = scalar_lea.vmem [#allocation5], 256
    %4227 = vst [vmem:[%s4226] sm:$0xff] %v4218
    %4228 = vst [vmem:[%s4226 + $0x8] sm:$0xff] %v4219
    %4229 = vst [vmem:[%s4226 + $0x10] sm:$0xff] %v4220
    %4230 = vst [vmem:[%s4226 + $0x18] sm:$0xff] %v4221
    %4231 = vst [vmem:[%s4226 + $0x20] sm:$0xff] %v4222
    %4232 = vst [vmem:[%s4226 + $0x28] sm:$0xff] %v4223
    %4233 = vst [vmem:[%s4226 + $0x30] sm:$0xff] %v4224
    %4234 = vst [vmem:[%s4226 + $0x38] sm:$0xff] %v4225
    %v4235 = vld [vmem:[%s3309] sm:$0xff]
    %v4236 = vld [vmem:[%s3309 + $0x8] sm:$0xff]
    %v4237 = vld [vmem:[%s3309 + $0x10] sm:$0xff]
    %v4238 = vld [vmem:[%s3309 + $0x18] sm:$0xff]
    %v4239 = vld [vmem:[%s3309 + $0x20] sm:$0xff]
    %v4240 = vld [vmem:[%s3309 + $0x28] sm:$0xff]
    %v4241 = vld [vmem:[%s3309 + $0x30] sm:$0xff]
    %v4242 = vld [vmem:[%s3309 + $0x38] sm:$0xff]
    %v4243 = vmul.f32 %v4235, %v718
    %v4244 = vmul.f32 %v4236, %v718
    %v4245 = vmul.f32 %v4237, %v718
    %v4246 = vmul.f32 %v4238, %v718
    %v4247 = vmul.f32 %v4239, %v718
    %v4248 = vmul.f32 %v4240, %v718
    %v4249 = vmul.f32 %v4241, %v718
    %v4250 = vmul.f32 %v4242, %v718
    %v4251 = vld [vmem:[%s3335] sm:$0xff]
    %v4252 = vld [vmem:[%s3335 + $0x8] sm:$0xff]
    %v4253 = vld [vmem:[%s3335 + $0x10] sm:$0xff]
    %v4254 = vld [vmem:[%s3335 + $0x18] sm:$0xff]
    %v4255 = vld [vmem:[%s3335 + $0x20] sm:$0xff]
    %v4256 = vld [vmem:[%s3335 + $0x28] sm:$0xff]
    %v4257 = vld [vmem:[%s3335 + $0x30] sm:$0xff]
    %v4258 = vld [vmem:[%s3335 + $0x38] sm:$0xff]
    %v4259 = vmul.f32 %v4251, %v740
    %v4260 = vmul.f32 %v4252, %v740
    %v4261 = vmul.f32 %v4253, %v740
    %v4262 = vmul.f32 %v4254, %v740
    %v4263 = vmul.f32 %v4255, %v740
    %v4264 = vmul.f32 %v4256, %v740
    %v4265 = vmul.f32 %v4257, %v740
    %v4266 = vmul.f32 %v4258, %v740
    %v4267 = vadd.f32 %v4243, %v4259
    %v4268 = vadd.f32 %v4244, %v4260
    %v4269 = vadd.f32 %v4245, %v4261
    %v4270 = vadd.f32 %v4246, %v4262
    %v4271 = vadd.f32 %v4247, %v4263
    %v4272 = vadd.f32 %v4248, %v4264
    %v4273 = vadd.f32 %v4249, %v4265
    %v4274 = vadd.f32 %v4250, %v4266
    %v4275 = vld [vmem:[%s3361] sm:$0xff]
    %v4276 = vld [vmem:[%s3361 + $0x8] sm:$0xff]
    %v4277 = vld [vmem:[%s3361 + $0x10] sm:$0xff]
    %v4278 = vld [vmem:[%s3361 + $0x18] sm:$0xff]
    %v4279 = vld [vmem:[%s3361 + $0x20] sm:$0xff]
    %v4280 = vld [vmem:[%s3361 + $0x28] sm:$0xff]
    %v4281 = vld [vmem:[%s3361 + $0x30] sm:$0xff]
    %v4282 = vld [vmem:[%s3361 + $0x38] sm:$0xff]
    %v4283 = vmul.f32 %v4275, %v770
    %v4284 = vmul.f32 %v4276, %v770
    %v4285 = vmul.f32 %v4277, %v770
    %v4286 = vmul.f32 %v4278, %v770
    %v4287 = vmul.f32 %v4279, %v770
    %v4288 = vmul.f32 %v4280, %v770
    %v4289 = vmul.f32 %v4281, %v770
    %v4290 = vmul.f32 %v4282, %v770
    %v4291 = vadd.f32 %v4267, %v4283
    %v4292 = vadd.f32 %v4268, %v4284
    %v4293 = vadd.f32 %v4269, %v4285
    %v4294 = vadd.f32 %v4270, %v4286
    %v4295 = vadd.f32 %v4271, %v4287
    %v4296 = vadd.f32 %v4272, %v4288
    %v4297 = vadd.f32 %v4273, %v4289
    %v4298 = vadd.f32 %v4274, %v4290
    %v4299 = vld [vmem:[%s3387] sm:$0xff]
    %v4300 = vld [vmem:[%s3387 + $0x8] sm:$0xff]
    %v4301 = vld [vmem:[%s3387 + $0x10] sm:$0xff]
    %v4302 = vld [vmem:[%s3387 + $0x18] sm:$0xff]
    %v4303 = vld [vmem:[%s3387 + $0x20] sm:$0xff]
    %v4304 = vld [vmem:[%s3387 + $0x28] sm:$0xff]
    %v4305 = vld [vmem:[%s3387 + $0x30] sm:$0xff]
    %v4306 = vld [vmem:[%s3387 + $0x38] sm:$0xff]
    %v4307 = vmul.f32 %v4299, %v800
    %v4308 = vmul.f32 %v4300, %v800
    %v4309 = vmul.f32 %v4301, %v800
    %v4310 = vmul.f32 %v4302, %v800
    %v4311 = vmul.f32 %v4303, %v800
    %v4312 = vmul.f32 %v4304, %v800
    %v4313 = vmul.f32 %v4305, %v800
    %v4314 = vmul.f32 %v4306, %v800
    %v4315 = vadd.f32 %v4291, %v4307
    %v4316 = vadd.f32 %v4292, %v4308
    %v4317 = vadd.f32 %v4293, %v4309
    %v4318 = vadd.f32 %v4294, %v4310
    %v4319 = vadd.f32 %v4295, %v4311
    %v4320 = vadd.f32 %v4296, %v4312
    %v4321 = vadd.f32 %v4297, %v4313
    %v4322 = vadd.f32 %v4298, %v4314
    %v4323 = vld [vmem:[%s3413] sm:$0xff]
    %v4324 = vld [vmem:[%s3413 + $0x8] sm:$0xff]
    %v4325 = vld [vmem:[%s3413 + $0x10] sm:$0xff]
    %v4326 = vld [vmem:[%s3413 + $0x18] sm:$0xff]
    %v4327 = vld [vmem:[%s3413 + $0x20] sm:$0xff]
    %v4328 = vld [vmem:[%s3413 + $0x28] sm:$0xff]
    %v4329 = vld [vmem:[%s3413 + $0x30] sm:$0xff]
    %v4330 = vld [vmem:[%s3413 + $0x38] sm:$0xff]
    %v4331 = vmul.f32 %v4323, %v830
    %v4332 = vmul.f32 %v4324, %v830
    %v4333 = vmul.f32 %v4325, %v830
    %v4334 = vmul.f32 %v4326, %v830
    %v4335 = vmul.f32 %v4327, %v830
    %v4336 = vmul.f32 %v4328, %v830
    %v4337 = vmul.f32 %v4329, %v830
    %v4338 = vmul.f32 %v4330, %v830
    %v4339 = vadd.f32 %v4315, %v4331
    %v4340 = vadd.f32 %v4316, %v4332
    %v4341 = vadd.f32 %v4317, %v4333
    %v4342 = vadd.f32 %v4318, %v4334
    %v4343 = vadd.f32 %v4319, %v4335
    %v4344 = vadd.f32 %v4320, %v4336
    %v4345 = vadd.f32 %v4321, %v4337
    %v4346 = vadd.f32 %v4322, %v4338
    %v4347 = vld [vmem:[%s3439] sm:$0xff]
    %v4348 = vld [vmem:[%s3439 + $0x8] sm:$0xff]
    %v4349 = vld [vmem:[%s3439 + $0x10] sm:$0xff]
    %v4350 = vld [vmem:[%s3439 + $0x18] sm:$0xff]
    %v4351 = vld [vmem:[%s3439 + $0x20] sm:$0xff]
    %v4352 = vld [vmem:[%s3439 + $0x28] sm:$0xff]
    %v4353 = vld [vmem:[%s3439 + $0x30] sm:$0xff]
    %v4354 = vld [vmem:[%s3439 + $0x38] sm:$0xff]
    %v4355 = vmul.f32 %v4347, %v860
    %v4356 = vmul.f32 %v4348, %v860
    %v4357 = vmul.f32 %v4349, %v860
    %v4358 = vmul.f32 %v4350, %v860
    %v4359 = vmul.f32 %v4351, %v860
    %v4360 = vmul.f32 %v4352, %v860
    %v4361 = vmul.f32 %v4353, %v860
    %v4362 = vmul.f32 %v4354, %v860
    %v4363 = vadd.f32 %v4339, %v4355
    %v4364 = vadd.f32 %v4340, %v4356
    %v4365 = vadd.f32 %v4341, %v4357
    %v4366 = vadd.f32 %v4342, %v4358
    %v4367 = vadd.f32 %v4343, %v4359
    %v4368 = vadd.f32 %v4344, %v4360
    %v4369 = vadd.f32 %v4345, %v4361
    %v4370 = vadd.f32 %v4346, %v4362
    %v4371 = vld [vmem:[%s3465] sm:$0xff]
    %v4372 = vld [vmem:[%s3465 + $0x8] sm:$0xff]
    %v4373 = vld [vmem:[%s3465 + $0x10] sm:$0xff]
    %v4374 = vld [vmem:[%s3465 + $0x18] sm:$0xff]
    %v4375 = vld [vmem:[%s3465 + $0x20] sm:$0xff]
    %v4376 = vld [vmem:[%s3465 + $0x28] sm:$0xff]
    %v4377 = vld [vmem:[%s3465 + $0x30] sm:$0xff]
    %v4378 = vld [vmem:[%s3465 + $0x38] sm:$0xff]
    %v4379 = vmul.f32 %v4371, %v890
    %v4380 = vmul.f32 %v4372, %v890
    %v4381 = vmul.f32 %v4373, %v890
    %v4382 = vmul.f32 %v4374, %v890
    %v4383 = vmul.f32 %v4375, %v890
    %v4384 = vmul.f32 %v4376, %v890
    %v4385 = vmul.f32 %v4377, %v890
    %v4386 = vmul.f32 %v4378, %v890
    %v4387 = vadd.f32 %v4363, %v4379
    %v4388 = vadd.f32 %v4364, %v4380
    %v4389 = vadd.f32 %v4365, %v4381
    %v4390 = vadd.f32 %v4366, %v4382
    %v4391 = vadd.f32 %v4367, %v4383
    %v4392 = vadd.f32 %v4368, %v4384
    %v4393 = vadd.f32 %v4369, %v4385
    %v4394 = vadd.f32 %v4370, %v4386
    %v4395 = vld [vmem:[%s3491] sm:$0xff]
    %v4396 = vld [vmem:[%s3491 + $0x8] sm:$0xff]
    %v4397 = vld [vmem:[%s3491 + $0x10] sm:$0xff]
    %v4398 = vld [vmem:[%s3491 + $0x18] sm:$0xff]
    %v4399 = vld [vmem:[%s3491 + $0x20] sm:$0xff]
    %v4400 = vld [vmem:[%s3491 + $0x28] sm:$0xff]
    %v4401 = vld [vmem:[%s3491 + $0x30] sm:$0xff]
    %v4402 = vld [vmem:[%s3491 + $0x38] sm:$0xff]
    %v4403 = vmul.f32 %v4395, %v920
    %v4404 = vmul.f32 %v4396, %v920
    %v4405 = vmul.f32 %v4397, %v920
    %v4406 = vmul.f32 %v4398, %v920
    %v4407 = vmul.f32 %v4399, %v920
    %v4408 = vmul.f32 %v4400, %v920
    %v4409 = vmul.f32 %v4401, %v920
    %v4410 = vmul.f32 %v4402, %v920
    %v4411 = vadd.f32 %v4387, %v4403
    %v4412 = vadd.f32 %v4388, %v4404
    %v4413 = vadd.f32 %v4389, %v4405
    %v4414 = vadd.f32 %v4390, %v4406
    %v4415 = vadd.f32 %v4391, %v4407
    %v4416 = vadd.f32 %v4392, %v4408
    %v4417 = vadd.f32 %v4393, %v4409
    %v4418 = vadd.f32 %v4394, %v4410
    %v4419 = vld [vmem:[%s3517] sm:$0xff]
    %v4420 = vld [vmem:[%s3517 + $0x8] sm:$0xff]
    %v4421 = vld [vmem:[%s3517 + $0x10] sm:$0xff]
    %v4422 = vld [vmem:[%s3517 + $0x18] sm:$0xff]
    %v4423 = vld [vmem:[%s3517 + $0x20] sm:$0xff]
    %v4424 = vld [vmem:[%s3517 + $0x28] sm:$0xff]
    %v4425 = vld [vmem:[%s3517 + $0x30] sm:$0xff]
    %v4426 = vld [vmem:[%s3517 + $0x38] sm:$0xff]
    %v4427 = vmul.f32 %v4419, %v950
    %v4428 = vmul.f32 %v4420, %v950
    %v4429 = vmul.f32 %v4421, %v950
    %v4430 = vmul.f32 %v4422, %v950
    %v4431 = vmul.f32 %v4423, %v950
    %v4432 = vmul.f32 %v4424, %v950
    %v4433 = vmul.f32 %v4425, %v950
    %v4434 = vmul.f32 %v4426, %v950
    %v4435 = vadd.f32 %v4411, %v4427
    %v4436 = vadd.f32 %v4412, %v4428
    %v4437 = vadd.f32 %v4413, %v4429
    %v4438 = vadd.f32 %v4414, %v4430
    %v4439 = vadd.f32 %v4415, %v4431
    %v4440 = vadd.f32 %v4416, %v4432
    %v4441 = vadd.f32 %v4417, %v4433
    %v4442 = vadd.f32 %v4418, %v4434
    %v4443 = vld [vmem:[%s3985] sm:$0xff]
    %v4444 = vld [vmem:[%s3985 + $0x8] sm:$0xff]
    %v4445 = vld [vmem:[%s3985 + $0x10] sm:$0xff]
    %v4446 = vld [vmem:[%s3985 + $0x18] sm:$0xff]
    %v4447 = vld [vmem:[%s3985 + $0x20] sm:$0xff]
    %v4448 = vld [vmem:[%s3985 + $0x28] sm:$0xff]
    %v4449 = vld [vmem:[%s3985 + $0x30] sm:$0xff]
    %v4450 = vld [vmem:[%s3985 + $0x38] sm:$0xff]
    %v4451 = vmul.f32 %v4443, %v981
    %v4452 = vmul.f32 %v4444, %v981
    %v4453 = vmul.f32 %v4445, %v981
    %v4454 = vmul.f32 %v4446, %v981
    %v4455 = vmul.f32 %v4447, %v981
    %v4456 = vmul.f32 %v4448, %v981
    %v4457 = vmul.f32 %v4449, %v981
    %v4458 = vmul.f32 %v4450, %v981
    %v4459 = vadd.f32 %v4435, %v4451
    %v4460 = vadd.f32 %v4436, %v4452
    %v4461 = vadd.f32 %v4437, %v4453
    %v4462 = vadd.f32 %v4438, %v4454
    %v4463 = vadd.f32 %v4439, %v4455
    %v4464 = vadd.f32 %v4440, %v4456
    %v4465 = vadd.f32 %v4441, %v4457
    %v4466 = vadd.f32 %v4442, %v4458
    %v4467 = vld [vmem:[%s4011] sm:$0xff]
    %v4468 = vld [vmem:[%s4011 + $0x8] sm:$0xff]
    %v4469 = vld [vmem:[%s4011 + $0x10] sm:$0xff]
    %v4470 = vld [vmem:[%s4011 + $0x18] sm:$0xff]
    %v4471 = vld [vmem:[%s4011 + $0x20] sm:$0xff]
    %v4472 = vld [vmem:[%s4011 + $0x28] sm:$0xff]
    %v4473 = vld [vmem:[%s4011 + $0x30] sm:$0xff]
    %v4474 = vld [vmem:[%s4011 + $0x38] sm:$0xff]
    %v4475 = vmul.f32 %v4467, %v1011
    %v4476 = vmul.f32 %v4468, %v1011
    %v4477 = vmul.f32 %v4469, %v1011
    %v4478 = vmul.f32 %v4470, %v1011
    %v4479 = vmul.f32 %v4471, %v1011
    %v4480 = vmul.f32 %v4472, %v1011
    %v4481 = vmul.f32 %v4473, %v1011
    %v4482 = vmul.f32 %v4474, %v1011
    %v4483 = vadd.f32 %v4459, %v4475
    %v4484 = vadd.f32 %v4460, %v4476
    %v4485 = vadd.f32 %v4461, %v4477
    %v4486 = vadd.f32 %v4462, %v4478
    %v4487 = vadd.f32 %v4463, %v4479
    %v4488 = vadd.f32 %v4464, %v4480
    %v4489 = vadd.f32 %v4465, %v4481
    %v4490 = vadd.f32 %v4466, %v4482
    %v4491 = vld [vmem:[%s4037] sm:$0xff]
    %v4492 = vld [vmem:[%s4037 + $0x8] sm:$0xff]
    %v4493 = vld [vmem:[%s4037 + $0x10] sm:$0xff]
    %v4494 = vld [vmem:[%s4037 + $0x18] sm:$0xff]
    %v4495 = vld [vmem:[%s4037 + $0x20] sm:$0xff]
    %v4496 = vld [vmem:[%s4037 + $0x28] sm:$0xff]
    %v4497 = vld [vmem:[%s4037 + $0x30] sm:$0xff]
    %v4498 = vld [vmem:[%s4037 + $0x38] sm:$0xff]
    %v4499 = vmul.f32 %v4491, %v1041
    %v4500 = vmul.f32 %v4492, %v1041
    %v4501 = vmul.f32 %v4493, %v1041
    %v4502 = vmul.f32 %v4494, %v1041
    %v4503 = vmul.f32 %v4495, %v1041
    %v4504 = vmul.f32 %v4496, %v1041
    %v4505 = vmul.f32 %v4497, %v1041
    %v4506 = vmul.f32 %v4498, %v1041
    %v4507 = vadd.f32 %v4483, %v4499
    %v4508 = vadd.f32 %v4484, %v4500
    %v4509 = vadd.f32 %v4485, %v4501
    %v4510 = vadd.f32 %v4486, %v4502
    %v4511 = vadd.f32 %v4487, %v4503
    %v4512 = vadd.f32 %v4488, %v4504
    %v4513 = vadd.f32 %v4489, %v4505
    %v4514 = vadd.f32 %v4490, %v4506
    %v4515 = vld [vmem:[%s4063] sm:$0xff]
    %v4516 = vld [vmem:[%s4063 + $0x8] sm:$0xff]
    %v4517 = vld [vmem:[%s4063 + $0x10] sm:$0xff]
    %v4518 = vld [vmem:[%s4063 + $0x18] sm:$0xff]
    %v4519 = vld [vmem:[%s4063 + $0x20] sm:$0xff]
    %v4520 = vld [vmem:[%s4063 + $0x28] sm:$0xff]
    %v4521 = vld [vmem:[%s4063 + $0x30] sm:$0xff]
    %v4522 = vld [vmem:[%s4063 + $0x38] sm:$0xff]
    %v4523 = vmul.f32 %v4515, %v1071
    %v4524 = vmul.f32 %v4516, %v1071
    %v4525 = vmul.f32 %v4517, %v1071
    %v4526 = vmul.f32 %v4518, %v1071
    %v4527 = vmul.f32 %v4519, %v1071
    %v4528 = vmul.f32 %v4520, %v1071
    %v4529 = vmul.f32 %v4521, %v1071
    %v4530 = vmul.f32 %v4522, %v1071
    %v4531 = vadd.f32 %v4507, %v4523
    %v4532 = vadd.f32 %v4508, %v4524
    %v4533 = vadd.f32 %v4509, %v4525
    %v4534 = vadd.f32 %v4510, %v4526
    %v4535 = vadd.f32 %v4511, %v4527
    %v4536 = vadd.f32 %v4512, %v4528
    %v4537 = vadd.f32 %v4513, %v4529
    %v4538 = vadd.f32 %v4514, %v4530
    %v4539 = vld [vmem:[%s4089] sm:$0xff]
    %v4540 = vld [vmem:[%s4089 + $0x8] sm:$0xff]
    %v4541 = vld [vmem:[%s4089 + $0x10] sm:$0xff]
    %v4542 = vld [vmem:[%s4089 + $0x18] sm:$0xff]
    %v4543 = vld [vmem:[%s4089 + $0x20] sm:$0xff]
    %v4544 = vld [vmem:[%s4089 + $0x28] sm:$0xff]
    %v4545 = vld [vmem:[%s4089 + $0x30] sm:$0xff]
    %v4546 = vld [vmem:[%s4089 + $0x38] sm:$0xff]
    %v4547 = vmul.f32 %v4539, %v1101
    %v4548 = vmul.f32 %v4540, %v1101
    %v4549 = vmul.f32 %v4541, %v1101
    %v4550 = vmul.f32 %v4542, %v1101
    %v4551 = vmul.f32 %v4543, %v1101
    %v4552 = vmul.f32 %v4544, %v1101
    %v4553 = vmul.f32 %v4545, %v1101
    %v4554 = vmul.f32 %v4546, %v1101
    %v4555 = vadd.f32 %v4531, %v4547
    %v4556 = vadd.f32 %v4532, %v4548
    %v4557 = vadd.f32 %v4533, %v4549
    %v4558 = vadd.f32 %v4534, %v4550
    %v4559 = vadd.f32 %v4535, %v4551
    %v4560 = vadd.f32 %v4536, %v4552
    %v4561 = vadd.f32 %v4537, %v4553
    %v4562 = vadd.f32 %v4538, %v4554
    %v4563 = vld [vmem:[%s4115] sm:$0xff]
    %v4564 = vld [vmem:[%s4115 + $0x8] sm:$0xff]
    %v4565 = vld [vmem:[%s4115 + $0x10] sm:$0xff]
    %v4566 = vld [vmem:[%s4115 + $0x18] sm:$0xff]
    %v4567 = vld [vmem:[%s4115 + $0x20] sm:$0xff]
    %v4568 = vld [vmem:[%s4115 + $0x28] sm:$0xff]
    %v4569 = vld [vmem:[%s4115 + $0x30] sm:$0xff]
    %v4570 = vld [vmem:[%s4115 + $0x38] sm:$0xff]
    %v4571 = vmul.f32 %v4563, %v1131
    %v4572 = vmul.f32 %v4564, %v1131
    %v4573 = vmul.f32 %v4565, %v1131
    %v4574 = vmul.f32 %v4566, %v1131
    %v4575 = vmul.f32 %v4567, %v1131
    %v4576 = vmul.f32 %v4568, %v1131
    %v4577 = vmul.f32 %v4569, %v1131
    %v4578 = vmul.f32 %v4570, %v1131
    %v4579 = vadd.f32 %v4555, %v4571
    %v4580 = vadd.f32 %v4556, %v4572
    %v4581 = vadd.f32 %v4557, %v4573
    %v4582 = vadd.f32 %v4558, %v4574
    %v4583 = vadd.f32 %v4559, %v4575
    %v4584 = vadd.f32 %v4560, %v4576
    %v4585 = vadd.f32 %v4561, %v4577
    %v4586 = vadd.f32 %v4562, %v4578
    %v4587 = vld [vmem:[%s4141] sm:$0xff]
    %v4588 = vld [vmem:[%s4141 + $0x8] sm:$0xff]
    %v4589 = vld [vmem:[%s4141 + $0x10] sm:$0xff]
    %v4590 = vld [vmem:[%s4141 + $0x18] sm:$0xff]
    %v4591 = vld [vmem:[%s4141 + $0x20] sm:$0xff]
    %v4592 = vld [vmem:[%s4141 + $0x28] sm:$0xff]
    %v4593 = vld [vmem:[%s4141 + $0x30] sm:$0xff]
    %v4594 = vld [vmem:[%s4141 + $0x38] sm:$0xff]
    %v4595 = vmul.f32 %v4587, %v1161
    %v4596 = vmul.f32 %v4588, %v1161
    %v4597 = vmul.f32 %v4589, %v1161
    %v4598 = vmul.f32 %v4590, %v1161
    %v4599 = vmul.f32 %v4591, %v1161
    %v4600 = vmul.f32 %v4592, %v1161
    %v4601 = vmul.f32 %v4593, %v1161
    %v4602 = vmul.f32 %v4594, %v1161
    %v4603 = vadd.f32 %v4579, %v4595
    %v4604 = vadd.f32 %v4580, %v4596
    %v4605 = vadd.f32 %v4581, %v4597
    %v4606 = vadd.f32 %v4582, %v4598
    %v4607 = vadd.f32 %v4583, %v4599
    %v4608 = vadd.f32 %v4584, %v4600
    %v4609 = vadd.f32 %v4585, %v4601
    %v4610 = vadd.f32 %v4586, %v4602
    %v4611 = vld [vmem:[%s4167] sm:$0xff]
    %v4612 = vld [vmem:[%s4167 + $0x8] sm:$0xff]
    %v4613 = vld [vmem:[%s4167 + $0x10] sm:$0xff]
    %v4614 = vld [vmem:[%s4167 + $0x18] sm:$0xff]
    %v4615 = vld [vmem:[%s4167 + $0x20] sm:$0xff]
    %v4616 = vld [vmem:[%s4167 + $0x28] sm:$0xff]
    %v4617 = vld [vmem:[%s4167 + $0x30] sm:$0xff]
    %v4618 = vld [vmem:[%s4167 + $0x38] sm:$0xff]
    %v4619 = vmul.f32 %v4611, %v1191
    %v4620 = vmul.f32 %v4612, %v1191
    %v4621 = vmul.f32 %v4613, %v1191
    %v4622 = vmul.f32 %v4614, %v1191
    %v4623 = vmul.f32 %v4615, %v1191
    %v4624 = vmul.f32 %v4616, %v1191
    %v4625 = vmul.f32 %v4617, %v1191
    %v4626 = vmul.f32 %v4618, %v1191
    %v4627 = vadd.f32 %v4603, %v4619
    %v4628 = vadd.f32 %v4604, %v4620
    %v4629 = vadd.f32 %v4605, %v4621
    %v4630 = vadd.f32 %v4606, %v4622
    %v4631 = vadd.f32 %v4607, %v4623
    %v4632 = vadd.f32 %v4608, %v4624
    %v4633 = vadd.f32 %v4609, %v4625
    %v4634 = vadd.f32 %v4610, %v4626
    %v4635 = vld [vmem:[%s4193] sm:$0xff]
    %v4636 = vld [vmem:[%s4193 + $0x8] sm:$0xff]
    %v4637 = vld [vmem:[%s4193 + $0x10] sm:$0xff]
    %v4638 = vld [vmem:[%s4193 + $0x18] sm:$0xff]
    %v4639 = vld [vmem:[%s4193 + $0x20] sm:$0xff]
    %v4640 = vld [vmem:[%s4193 + $0x28] sm:$0xff]
    %v4641 = vld [vmem:[%s4193 + $0x30] sm:$0xff]
    %v4642 = vld [vmem:[%s4193 + $0x38] sm:$0xff]
    %v4643 = vmul.f32 %v4635, %v1221
    %v4644 = vmul.f32 %v4636, %v1221
    %v4645 = vmul.f32 %v4637, %v1221
    %v4646 = vmul.f32 %v4638, %v1221
    %v4647 = vmul.f32 %v4639, %v1221
    %v4648 = vmul.f32 %v4640, %v1221
    %v4649 = vmul.f32 %v4641, %v1221
    %v4650 = vmul.f32 %v4642, %v1221
    %v4651 = vadd.f32 %v4627, %v4643
    %v4652 = vadd.f32 %v4628, %v4644
    %v4653 = vadd.f32 %v4629, %v4645
    %v4654 = vadd.f32 %v4630, %v4646
    %v4655 = vadd.f32 %v4631, %v4647
    %v4656 = vadd.f32 %v4632, %v4648
    %v4657 = vadd.f32 %v4633, %v4649
    %v4658 = vadd.f32 %v4634, %v4650
    %s4659 = sadd.s32 %s704, 7
    %s4660 = smul.u32 %s4659, 80
    %s4661 = scalar_lea.vmem [#allocation3], %s4660
    %v4662 = vld [vmem:[%s4661] sm:$0xff]
    %v4663 = vld [vmem:[%s4661 + $0x8] sm:$0xff]
    %v4664 = vld [vmem:[%s4661 + $0x10] sm:$0xff]
    %v4665 = vld [vmem:[%s4661 + $0x18] sm:$0xff]
    %v4666 = vld [vmem:[%s4661 + $0x20] sm:$0xff]
    %v4667 = vld [vmem:[%s4661 + $0x28] sm:$0xff]
    %v4668 = vld [vmem:[%s4661 + $0x30] sm:$0xff]
    %v4669 = vld [vmem:[%s4661 + $0x38] sm:$0xff]
    %v4670 = vmul.f32 %v4662, %v1252
    %v4671 = vmul.f32 %v4663, %v1252
    %v4672 = vmul.f32 %v4664, %v1252
    %v4673 = vmul.f32 %v4665, %v1252
    %v4674 = vmul.f32 %v4666, %v1252
    %v4675 = vmul.f32 %v4667, %v1252
    %v4676 = vmul.f32 %v4668, %v1252
    %v4677 = vmul.f32 %v4669, %v1252
    %v4678 = vadd.f32 %v4651, %v4670
    %v4679 = vadd.f32 %v4652, %v4671
    %v4680 = vadd.f32 %v4653, %v4672
    %v4681 = vadd.f32 %v4654, %v4673
    %v4682 = vadd.f32 %v4655, %v4674
    %v4683 = vadd.f32 %v4656, %v4675
    %v4684 = vadd.f32 %v4657, %v4676
    %v4685 = vadd.f32 %v4658, %v4677
    %s4686 = sadd.s32 %s4660, 800
    %s4687 = scalar_lea.vmem [#allocation3], %s4686
    %v4688 = vld [vmem:[%s4687] sm:$0xff]
    %v4689 = vld [vmem:[%s4687 + $0x8] sm:$0xff]
    %v4690 = vld [vmem:[%s4687 + $0x10] sm:$0xff]
    %v4691 = vld [vmem:[%s4687 + $0x18] sm:$0xff]
    %v4692 = vld [vmem:[%s4687 + $0x20] sm:$0xff]
    %v4693 = vld [vmem:[%s4687 + $0x28] sm:$0xff]
    %v4694 = vld [vmem:[%s4687 + $0x30] sm:$0xff]
    %v4695 = vld [vmem:[%s4687 + $0x38] sm:$0xff]
    %v4696 = vmul.f32 %v4688, %v1282
    %v4697 = vmul.f32 %v4689, %v1282
    %v4698 = vmul.f32 %v4690, %v1282
    %v4699 = vmul.f32 %v4691, %v1282
    %v4700 = vmul.f32 %v4692, %v1282
    %v4701 = vmul.f32 %v4693, %v1282
    %v4702 = vmul.f32 %v4694, %v1282
    %v4703 = vmul.f32 %v4695, %v1282
    %v4704 = vadd.f32 %v4678, %v4696
    %v4705 = vadd.f32 %v4679, %v4697
    %v4706 = vadd.f32 %v4680, %v4698
    %v4707 = vadd.f32 %v4681, %v4699
    %v4708 = vadd.f32 %v4682, %v4700
    %v4709 = vadd.f32 %v4683, %v4701
    %v4710 = vadd.f32 %v4684, %v4702
    %v4711 = vadd.f32 %v4685, %v4703
    %s4712 = sadd.s32 %s4660, 1600
    %s4713 = scalar_lea.vmem [#allocation3], %s4712
    %v4714 = vld [vmem:[%s4713] sm:$0xff]
    %v4715 = vld [vmem:[%s4713 + $0x8] sm:$0xff]
    %v4716 = vld [vmem:[%s4713 + $0x10] sm:$0xff]
    %v4717 = vld [vmem:[%s4713 + $0x18] sm:$0xff]
    %v4718 = vld [vmem:[%s4713 + $0x20] sm:$0xff]
    %v4719 = vld [vmem:[%s4713 + $0x28] sm:$0xff]
    %v4720 = vld [vmem:[%s4713 + $0x30] sm:$0xff]
    %v4721 = vld [vmem:[%s4713 + $0x38] sm:$0xff]
    %v4722 = vmul.f32 %v4714, %v1312
    %v4723 = vmul.f32 %v4715, %v1312
    %v4724 = vmul.f32 %v4716, %v1312
    %v4725 = vmul.f32 %v4717, %v1312
    %v4726 = vmul.f32 %v4718, %v1312
    %v4727 = vmul.f32 %v4719, %v1312
    %v4728 = vmul.f32 %v4720, %v1312
    %v4729 = vmul.f32 %v4721, %v1312
    %v4730 = vadd.f32 %v4704, %v4722
    %v4731 = vadd.f32 %v4705, %v4723
    %v4732 = vadd.f32 %v4706, %v4724
    %v4733 = vadd.f32 %v4707, %v4725
    %v4734 = vadd.f32 %v4708, %v4726
    %v4735 = vadd.f32 %v4709, %v4727
    %v4736 = vadd.f32 %v4710, %v4728
    %v4737 = vadd.f32 %v4711, %v4729
    %s4738 = sadd.s32 8, %s4660
    %s4739 = scalar_lea.vmem [#allocation3], %s4738
    %v4740 = vld [vmem:[%s4739] sm:$0xff]
    %v4741 = vld [vmem:[%s4739 + $0x8] sm:$0xff]
    %v4742 = vld [vmem:[%s4739 + $0x10] sm:$0xff]
    %v4743 = vld [vmem:[%s4739 + $0x18] sm:$0xff]
    %v4744 = vld [vmem:[%s4739 + $0x20] sm:$0xff]
    %v4745 = vld [vmem:[%s4739 + $0x28] sm:$0xff]
    %v4746 = vld [vmem:[%s4739 + $0x30] sm:$0xff]
    %v4747 = vld [vmem:[%s4739 + $0x38] sm:$0xff]
    %v4748 = vmul.f32 %v4740, %v1342
    %v4749 = vmul.f32 %v4741, %v1342
    %v4750 = vmul.f32 %v4742, %v1342
    %v4751 = vmul.f32 %v4743, %v1342
    %v4752 = vmul.f32 %v4744, %v1342
    %v4753 = vmul.f32 %v4745, %v1342
    %v4754 = vmul.f32 %v4746, %v1342
    %v4755 = vmul.f32 %v4747, %v1342
    %v4756 = vadd.f32 %v4730, %v4748
    %v4757 = vadd.f32 %v4731, %v4749
    %v4758 = vadd.f32 %v4732, %v4750
    %v4759 = vadd.f32 %v4733, %v4751
    %v4760 = vadd.f32 %v4734, %v4752
    %v4761 = vadd.f32 %v4735, %v4753
    %v4762 = vadd.f32 %v4736, %v4754
    %v4763 = vadd.f32 %v4737, %v4755
    %s4764 = sadd.s32 %s4738, 800
    %s4765 = scalar_lea.vmem [#allocation3], %s4764
    %v4766 = vld [vmem:[%s4765] sm:$0xff]
    %v4767 = vld [vmem:[%s4765 + $0x8] sm:$0xff]
    %v4768 = vld [vmem:[%s4765 + $0x10] sm:$0xff]
    %v4769 = vld [vmem:[%s4765 + $0x18] sm:$0xff]
    %v4770 = vld [vmem:[%s4765 + $0x20] sm:$0xff]
    %v4771 = vld [vmem:[%s4765 + $0x28] sm:$0xff]
    %v4772 = vld [vmem:[%s4765 + $0x30] sm:$0xff]
    %v4773 = vld [vmem:[%s4765 + $0x38] sm:$0xff]
    %v4774 = vmul.f32 %v4766, %v1372
    %v4775 = vmul.f32 %v4767, %v1372
    %v4776 = vmul.f32 %v4768, %v1372
    %v4777 = vmul.f32 %v4769, %v1372
    %v4778 = vmul.f32 %v4770, %v1372
    %v4779 = vmul.f32 %v4771, %v1372
    %v4780 = vmul.f32 %v4772, %v1372
    %v4781 = vmul.f32 %v4773, %v1372
    %v4782 = vadd.f32 %v4756, %v4774
    %v4783 = vadd.f32 %v4757, %v4775
    %v4784 = vadd.f32 %v4758, %v4776
    %v4785 = vadd.f32 %v4759, %v4777
    %v4786 = vadd.f32 %v4760, %v4778
    %v4787 = vadd.f32 %v4761, %v4779
    %v4788 = vadd.f32 %v4762, %v4780
    %v4789 = vadd.f32 %v4763, %v4781
    %s4790 = sadd.s32 %s4738, 1600
    %s4791 = scalar_lea.vmem [#allocation3], %s4790
    %v4792 = vld [vmem:[%s4791] sm:$0xff]
    %v4793 = vld [vmem:[%s4791 + $0x8] sm:$0xff]
    %v4794 = vld [vmem:[%s4791 + $0x10] sm:$0xff]
    %v4795 = vld [vmem:[%s4791 + $0x18] sm:$0xff]
    %v4796 = vld [vmem:[%s4791 + $0x20] sm:$0xff]
    %v4797 = vld [vmem:[%s4791 + $0x28] sm:$0xff]
    %v4798 = vld [vmem:[%s4791 + $0x30] sm:$0xff]
    %v4799 = vld [vmem:[%s4791 + $0x38] sm:$0xff]
    %v4800 = vmul.f32 %v4792, %v1402
    %v4801 = vmul.f32 %v4793, %v1402
    %v4802 = vmul.f32 %v4794, %v1402
    %v4803 = vmul.f32 %v4795, %v1402
    %v4804 = vmul.f32 %v4796, %v1402
    %v4805 = vmul.f32 %v4797, %v1402
    %v4806 = vmul.f32 %v4798, %v1402
    %v4807 = vmul.f32 %v4799, %v1402
    %v4808 = vadd.f32 %v4782, %v4800
    %v4809 = vadd.f32 %v4783, %v4801
    %v4810 = vadd.f32 %v4784, %v4802
    %v4811 = vadd.f32 %v4785, %v4803
    %v4812 = vadd.f32 %v4786, %v4804
    %v4813 = vadd.f32 %v4787, %v4805
    %v4814 = vadd.f32 %v4788, %v4806
    %v4815 = vadd.f32 %v4789, %v4807
    %s4816 = sadd.s32 16, %s4660
    %s4817 = scalar_lea.vmem [#allocation3], %s4816
    %v4818 = vld [vmem:[%s4817] sm:$0xff]
    %v4819 = vld [vmem:[%s4817 + $0x8] sm:$0xff]
    %v4820 = vld [vmem:[%s4817 + $0x10] sm:$0xff]
    %v4821 = vld [vmem:[%s4817 + $0x18] sm:$0xff]
    %v4822 = vld [vmem:[%s4817 + $0x20] sm:$0xff]
    %v4823 = vld [vmem:[%s4817 + $0x28] sm:$0xff]
    %v4824 = vld [vmem:[%s4817 + $0x30] sm:$0xff]
    %v4825 = vld [vmem:[%s4817 + $0x38] sm:$0xff]
    %v4826 = vmul.f32 %v4818, %v1432
    %v4827 = vmul.f32 %v4819, %v1432
    %v4828 = vmul.f32 %v4820, %v1432
    %v4829 = vmul.f32 %v4821, %v1432
    %v4830 = vmul.f32 %v4822, %v1432
    %v4831 = vmul.f32 %v4823, %v1432
    %v4832 = vmul.f32 %v4824, %v1432
    %v4833 = vmul.f32 %v4825, %v1432
    %v4834 = vadd.f32 %v4808, %v4826
    %v4835 = vadd.f32 %v4809, %v4827
    %v4836 = vadd.f32 %v4810, %v4828
    %v4837 = vadd.f32 %v4811, %v4829
    %v4838 = vadd.f32 %v4812, %v4830
    %v4839 = vadd.f32 %v4813, %v4831
    %v4840 = vadd.f32 %v4814, %v4832
    %v4841 = vadd.f32 %v4815, %v4833
    %s4842 = sadd.s32 %s4816, 800
    %s4843 = scalar_lea.vmem [#allocation3], %s4842
    %v4844 = vld [vmem:[%s4843] sm:$0xff]
    %v4845 = vld [vmem:[%s4843 + $0x8] sm:$0xff]
    %v4846 = vld [vmem:[%s4843 + $0x10] sm:$0xff]
    %v4847 = vld [vmem:[%s4843 + $0x18] sm:$0xff]
    %v4848 = vld [vmem:[%s4843 + $0x20] sm:$0xff]
    %v4849 = vld [vmem:[%s4843 + $0x28] sm:$0xff]
    %v4850 = vld [vmem:[%s4843 + $0x30] sm:$0xff]
    %v4851 = vld [vmem:[%s4843 + $0x38] sm:$0xff]
    %v4852 = vmul.f32 %v4844, %v1462
    %v4853 = vmul.f32 %v4845, %v1462
    %v4854 = vmul.f32 %v4846, %v1462
    %v4855 = vmul.f32 %v4847, %v1462
    %v4856 = vmul.f32 %v4848, %v1462
    %v4857 = vmul.f32 %v4849, %v1462
    %v4858 = vmul.f32 %v4850, %v1462
    %v4859 = vmul.f32 %v4851, %v1462
    %v4860 = vadd.f32 %v4834, %v4852
    %v4861 = vadd.f32 %v4835, %v4853
    %v4862 = vadd.f32 %v4836, %v4854
    %v4863 = vadd.f32 %v4837, %v4855
    %v4864 = vadd.f32 %v4838, %v4856
    %v4865 = vadd.f32 %v4839, %v4857
    %v4866 = vadd.f32 %v4840, %v4858
    %v4867 = vadd.f32 %v4841, %v4859
    %s4868 = sadd.s32 %s4816, 1600
    %s4869 = scalar_lea.vmem [#allocation3], %s4868
    %v4870 = vld [vmem:[%s4869] sm:$0xff]
    %v4871 = vld [vmem:[%s4869 + $0x8] sm:$0xff]
    %v4872 = vld [vmem:[%s4869 + $0x10] sm:$0xff]
    %v4873 = vld [vmem:[%s4869 + $0x18] sm:$0xff]
    %v4874 = vld [vmem:[%s4869 + $0x20] sm:$0xff]
    %v4875 = vld [vmem:[%s4869 + $0x28] sm:$0xff]
    %v4876 = vld [vmem:[%s4869 + $0x30] sm:$0xff]
    %v4877 = vld [vmem:[%s4869 + $0x38] sm:$0xff]
    %v4878 = vmul.f32 %v4870, %v1492
    %v4879 = vmul.f32 %v4871, %v1492
    %v4880 = vmul.f32 %v4872, %v1492
    %v4881 = vmul.f32 %v4873, %v1492
    %v4882 = vmul.f32 %v4874, %v1492
    %v4883 = vmul.f32 %v4875, %v1492
    %v4884 = vmul.f32 %v4876, %v1492
    %v4885 = vmul.f32 %v4877, %v1492
    %v4886 = vadd.f32 %v4860, %v4878
    %v4887 = vadd.f32 %v4861, %v4879
    %v4888 = vadd.f32 %v4862, %v4880
    %v4889 = vadd.f32 %v4863, %v4881
    %v4890 = vadd.f32 %v4864, %v4882
    %v4891 = vadd.f32 %v4865, %v4883
    %v4892 = vadd.f32 %v4866, %v4884
    %v4893 = vadd.f32 %v4867, %v4885
    %v4894 = vadd.f32 %v4886, %v1513
    %v4895 = vadd.f32 %v4887, %v1513
    %v4896 = vadd.f32 %v4888, %v1513
    %v4897 = vadd.f32 %v4889, %v1513
    %v4898 = vadd.f32 %v4890, %v1513
    %v4899 = vadd.f32 %v4891, %v1513
    %v4900 = vadd.f32 %v4892, %v1513
    %v4901 = vadd.f32 %v4893, %v1513
    %s4902 = scalar_lea.vmem [#allocation5], 320
    %4903 = vst [vmem:[%s4902] sm:$0xff] %v4894
    %4904 = vst [vmem:[%s4902 + $0x8] sm:$0xff] %v4895
    %4905 = vst [vmem:[%s4902 + $0x10] sm:$0xff] %v4896
    %4906 = vst [vmem:[%s4902 + $0x18] sm:$0xff] %v4897
    %4907 = vst [vmem:[%s4902 + $0x20] sm:$0xff] %v4898
    %4908 = vst [vmem:[%s4902 + $0x28] sm:$0xff] %v4899
    %4909 = vst [vmem:[%s4902 + $0x30] sm:$0xff] %v4900
    %4910 = vst [vmem:[%s4902 + $0x38] sm:$0xff] %v4901
    %v4911 = vld [vmem:[%s3985] sm:$0xff]
    %v4912 = vld [vmem:[%s3985 + $0x8] sm:$0xff]
    %v4913 = vld [vmem:[%s3985 + $0x10] sm:$0xff]
    %v4914 = vld [vmem:[%s3985 + $0x18] sm:$0xff]
    %v4915 = vld [vmem:[%s3985 + $0x20] sm:$0xff]
    %v4916 = vld [vmem:[%s3985 + $0x28] sm:$0xff]
    %v4917 = vld [vmem:[%s3985 + $0x30] sm:$0xff]
    %v4918 = vld [vmem:[%s3985 + $0x38] sm:$0xff]
    %v4919 = vmul.f32 %v4911, %v718
    %v4920 = vmul.f32 %v4912, %v718
    %v4921 = vmul.f32 %v4913, %v718
    %v4922 = vmul.f32 %v4914, %v718
    %v4923 = vmul.f32 %v4915, %v718
    %v4924 = vmul.f32 %v4916, %v718
    %v4925 = vmul.f32 %v4917, %v718
    %v4926 = vmul.f32 %v4918, %v718
    %v4927 = vld [vmem:[%s4011] sm:$0xff]
    %v4928 = vld [vmem:[%s4011 + $0x8] sm:$0xff]
    %v4929 = vld [vmem:[%s4011 + $0x10] sm:$0xff]
    %v4930 = vld [vmem:[%s4011 + $0x18] sm:$0xff]
    %v4931 = vld [vmem:[%s4011 + $0x20] sm:$0xff]
    %v4932 = vld [vmem:[%s4011 + $0x28] sm:$0xff]
    %v4933 = vld [vmem:[%s4011 + $0x30] sm:$0xff]
    %v4934 = vld [vmem:[%s4011 + $0x38] sm:$0xff]
    %v4935 = vmul.f32 %v4927, %v740
    %v4936 = vmul.f32 %v4928, %v740
    %v4937 = vmul.f32 %v4929, %v740
    %v4938 = vmul.f32 %v4930, %v740
    %v4939 = vmul.f32 %v4931, %v740
    %v4940 = vmul.f32 %v4932, %v740
    %v4941 = vmul.f32 %v4933, %v740
    %v4942 = vmul.f32 %v4934, %v740
    %v4943 = vadd.f32 %v4919, %v4935
    %v4944 = vadd.f32 %v4920, %v4936
    %v4945 = vadd.f32 %v4921, %v4937
    %v4946 = vadd.f32 %v4922, %v4938
    %v4947 = vadd.f32 %v4923, %v4939
    %v4948 = vadd.f32 %v4924, %v4940
    %v4949 = vadd.f32 %v4925, %v4941
    %v4950 = vadd.f32 %v4926, %v4942
    %v4951 = vld [vmem:[%s4037] sm:$0xff]
    %v4952 = vld [vmem:[%s4037 + $0x8] sm:$0xff]
    %v4953 = vld [vmem:[%s4037 + $0x10] sm:$0xff]
    %v4954 = vld [vmem:[%s4037 + $0x18] sm:$0xff]
    %v4955 = vld [vmem:[%s4037 + $0x20] sm:$0xff]
    %v4956 = vld [vmem:[%s4037 + $0x28] sm:$0xff]
    %v4957 = vld [vmem:[%s4037 + $0x30] sm:$0xff]
    %v4958 = vld [vmem:[%s4037 + $0x38] sm:$0xff]
    %v4959 = vmul.f32 %v4951, %v770
    %v4960 = vmul.f32 %v4952, %v770
    %v4961 = vmul.f32 %v4953, %v770
    %v4962 = vmul.f32 %v4954, %v770
    %v4963 = vmul.f32 %v4955, %v770
    %v4964 = vmul.f32 %v4956, %v770
    %v4965 = vmul.f32 %v4957, %v770
    %v4966 = vmul.f32 %v4958, %v770
    %v4967 = vadd.f32 %v4943, %v4959
    %v4968 = vadd.f32 %v4944, %v4960
    %v4969 = vadd.f32 %v4945, %v4961
    %v4970 = vadd.f32 %v4946, %v4962
    %v4971 = vadd.f32 %v4947, %v4963
    %v4972 = vadd.f32 %v4948, %v4964
    %v4973 = vadd.f32 %v4949, %v4965
    %v4974 = vadd.f32 %v4950, %v4966
    %v4975 = vld [vmem:[%s4063] sm:$0xff]
    %v4976 = vld [vmem:[%s4063 + $0x8] sm:$0xff]
    %v4977 = vld [vmem:[%s4063 + $0x10] sm:$0xff]
    %v4978 = vld [vmem:[%s4063 + $0x18] sm:$0xff]
    %v4979 = vld [vmem:[%s4063 + $0x20] sm:$0xff]
    %v4980 = vld [vmem:[%s4063 + $0x28] sm:$0xff]
    %v4981 = vld [vmem:[%s4063 + $0x30] sm:$0xff]
    %v4982 = vld [vmem:[%s4063 + $0x38] sm:$0xff]
    %v4983 = vmul.f32 %v4975, %v800
    %v4984 = vmul.f32 %v4976, %v800
    %v4985 = vmul.f32 %v4977, %v800
    %v4986 = vmul.f32 %v4978, %v800
    %v4987 = vmul.f32 %v4979, %v800
    %v4988 = vmul.f32 %v4980, %v800
    %v4989 = vmul.f32 %v4981, %v800
    %v4990 = vmul.f32 %v4982, %v800
    %v4991 = vadd.f32 %v4967, %v4983
    %v4992 = vadd.f32 %v4968, %v4984
    %v4993 = vadd.f32 %v4969, %v4985
    %v4994 = vadd.f32 %v4970, %v4986
    %v4995 = vadd.f32 %v4971, %v4987
    %v4996 = vadd.f32 %v4972, %v4988
    %v4997 = vadd.f32 %v4973, %v4989
    %v4998 = vadd.f32 %v4974, %v4990
    %v4999 = vld [vmem:[%s4089] sm:$0xff]
    %v5000 = vld [vmem:[%s4089 + $0x8] sm:$0xff]
    %v5001 = vld [vmem:[%s4089 + $0x10] sm:$0xff]
    %v5002 = vld [vmem:[%s4089 + $0x18] sm:$0xff]
    %v5003 = vld [vmem:[%s4089 + $0x20] sm:$0xff]
    %v5004 = vld [vmem:[%s4089 + $0x28] sm:$0xff]
    %v5005 = vld [vmem:[%s4089 + $0x30] sm:$0xff]
    %v5006 = vld [vmem:[%s4089 + $0x38] sm:$0xff]
    %v5007 = vmul.f32 %v4999, %v830
    %v5008 = vmul.f32 %v5000, %v830
    %v5009 = vmul.f32 %v5001, %v830
    %v5010 = vmul.f32 %v5002, %v830
    %v5011 = vmul.f32 %v5003, %v830
    %v5012 = vmul.f32 %v5004, %v830
    %v5013 = vmul.f32 %v5005, %v830
    %v5014 = vmul.f32 %v5006, %v830
    %v5015 = vadd.f32 %v4991, %v5007
    %v5016 = vadd.f32 %v4992, %v5008
    %v5017 = vadd.f32 %v4993, %v5009
    %v5018 = vadd.f32 %v4994, %v5010
    %v5019 = vadd.f32 %v4995, %v5011
    %v5020 = vadd.f32 %v4996, %v5012
    %v5021 = vadd.f32 %v4997, %v5013
    %v5022 = vadd.f32 %v4998, %v5014
    %v5023 = vld [vmem:[%s4115] sm:$0xff]
    %v5024 = vld [vmem:[%s4115 + $0x8] sm:$0xff]
    %v5025 = vld [vmem:[%s4115 + $0x10] sm:$0xff]
    %v5026 = vld [vmem:[%s4115 + $0x18] sm:$0xff]
    %v5027 = vld [vmem:[%s4115 + $0x20] sm:$0xff]
    %v5028 = vld [vmem:[%s4115 + $0x28] sm:$0xff]
    %v5029 = vld [vmem:[%s4115 + $0x30] sm:$0xff]
    %v5030 = vld [vmem:[%s4115 + $0x38] sm:$0xff]
    %v5031 = vmul.f32 %v5023, %v860
    %v5032 = vmul.f32 %v5024, %v860
    %v5033 = vmul.f32 %v5025, %v860
    %v5034 = vmul.f32 %v5026, %v860
    %v5035 = vmul.f32 %v5027, %v860
    %v5036 = vmul.f32 %v5028, %v860
    %v5037 = vmul.f32 %v5029, %v860
    %v5038 = vmul.f32 %v5030, %v860
    %v5039 = vadd.f32 %v5015, %v5031
    %v5040 = vadd.f32 %v5016, %v5032
    %v5041 = vadd.f32 %v5017, %v5033
    %v5042 = vadd.f32 %v5018, %v5034
    %v5043 = vadd.f32 %v5019, %v5035
    %v5044 = vadd.f32 %v5020, %v5036
    %v5045 = vadd.f32 %v5021, %v5037
    %v5046 = vadd.f32 %v5022, %v5038
    %v5047 = vld [vmem:[%s4141] sm:$0xff]
    %v5048 = vld [vmem:[%s4141 + $0x8] sm:$0xff]
    %v5049 = vld [vmem:[%s4141 + $0x10] sm:$0xff]
    %v5050 = vld [vmem:[%s4141 + $0x18] sm:$0xff]
    %v5051 = vld [vmem:[%s4141 + $0x20] sm:$0xff]
    %v5052 = vld [vmem:[%s4141 + $0x28] sm:$0xff]
    %v5053 = vld [vmem:[%s4141 + $0x30] sm:$0xff]
    %v5054 = vld [vmem:[%s4141 + $0x38] sm:$0xff]
    %v5055 = vmul.f32 %v5047, %v890
    %v5056 = vmul.f32 %v5048, %v890
    %v5057 = vmul.f32 %v5049, %v890
    %v5058 = vmul.f32 %v5050, %v890
    %v5059 = vmul.f32 %v5051, %v890
    %v5060 = vmul.f32 %v5052, %v890
    %v5061 = vmul.f32 %v5053, %v890
    %v5062 = vmul.f32 %v5054, %v890
    %v5063 = vadd.f32 %v5039, %v5055
    %v5064 = vadd.f32 %v5040, %v5056
    %v5065 = vadd.f32 %v5041, %v5057
    %v5066 = vadd.f32 %v5042, %v5058
    %v5067 = vadd.f32 %v5043, %v5059
    %v5068 = vadd.f32 %v5044, %v5060
    %v5069 = vadd.f32 %v5045, %v5061
    %v5070 = vadd.f32 %v5046, %v5062
    %v5071 = vld [vmem:[%s4167] sm:$0xff]
    %v5072 = vld [vmem:[%s4167 + $0x8] sm:$0xff]
    %v5073 = vld [vmem:[%s4167 + $0x10] sm:$0xff]
    %v5074 = vld [vmem:[%s4167 + $0x18] sm:$0xff]
    %v5075 = vld [vmem:[%s4167 + $0x20] sm:$0xff]
    %v5076 = vld [vmem:[%s4167 + $0x28] sm:$0xff]
    %v5077 = vld [vmem:[%s4167 + $0x30] sm:$0xff]
    %v5078 = vld [vmem:[%s4167 + $0x38] sm:$0xff]
    %v5079 = vmul.f32 %v5071, %v920
    %v5080 = vmul.f32 %v5072, %v920
    %v5081 = vmul.f32 %v5073, %v920
    %v5082 = vmul.f32 %v5074, %v920
    %v5083 = vmul.f32 %v5075, %v920
    %v5084 = vmul.f32 %v5076, %v920
    %v5085 = vmul.f32 %v5077, %v920
    %v5086 = vmul.f32 %v5078, %v920
    %v5087 = vadd.f32 %v5063, %v5079
    %v5088 = vadd.f32 %v5064, %v5080
    %v5089 = vadd.f32 %v5065, %v5081
    %v5090 = vadd.f32 %v5066, %v5082
    %v5091 = vadd.f32 %v5067, %v5083
    %v5092 = vadd.f32 %v5068, %v5084
    %v5093 = vadd.f32 %v5069, %v5085
    %v5094 = vadd.f32 %v5070, %v5086
    %v5095 = vld [vmem:[%s4193] sm:$0xff]
    %v5096 = vld [vmem:[%s4193 + $0x8] sm:$0xff]
    %v5097 = vld [vmem:[%s4193 + $0x10] sm:$0xff]
    %v5098 = vld [vmem:[%s4193 + $0x18] sm:$0xff]
    %v5099 = vld [vmem:[%s4193 + $0x20] sm:$0xff]
    %v5100 = vld [vmem:[%s4193 + $0x28] sm:$0xff]
    %v5101 = vld [vmem:[%s4193 + $0x30] sm:$0xff]
    %v5102 = vld [vmem:[%s4193 + $0x38] sm:$0xff]
    %v5103 = vmul.f32 %v5095, %v950
    %v5104 = vmul.f32 %v5096, %v950
    %v5105 = vmul.f32 %v5097, %v950
    %v5106 = vmul.f32 %v5098, %v950
    %v5107 = vmul.f32 %v5099, %v950
    %v5108 = vmul.f32 %v5100, %v950
    %v5109 = vmul.f32 %v5101, %v950
    %v5110 = vmul.f32 %v5102, %v950
    %v5111 = vadd.f32 %v5087, %v5103
    %v5112 = vadd.f32 %v5088, %v5104
    %v5113 = vadd.f32 %v5089, %v5105
    %v5114 = vadd.f32 %v5090, %v5106
    %v5115 = vadd.f32 %v5091, %v5107
    %v5116 = vadd.f32 %v5092, %v5108
    %v5117 = vadd.f32 %v5093, %v5109
    %v5118 = vadd.f32 %v5094, %v5110
    %v5119 = vld [vmem:[%s4661] sm:$0xff]
    %v5120 = vld [vmem:[%s4661 + $0x8] sm:$0xff]
    %v5121 = vld [vmem:[%s4661 + $0x10] sm:$0xff]
    %v5122 = vld [vmem:[%s4661 + $0x18] sm:$0xff]
    %v5123 = vld [vmem:[%s4661 + $0x20] sm:$0xff]
    %v5124 = vld [vmem:[%s4661 + $0x28] sm:$0xff]
    %v5125 = vld [vmem:[%s4661 + $0x30] sm:$0xff]
    %v5126 = vld [vmem:[%s4661 + $0x38] sm:$0xff]
    %v5127 = vmul.f32 %v5119, %v981
    %v5128 = vmul.f32 %v5120, %v981
    %v5129 = vmul.f32 %v5121, %v981
    %v5130 = vmul.f32 %v5122, %v981
    %v5131 = vmul.f32 %v5123, %v981
    %v5132 = vmul.f32 %v5124, %v981
    %v5133 = vmul.f32 %v5125, %v981
    %v5134 = vmul.f32 %v5126, %v981
    %v5135 = vadd.f32 %v5111, %v5127
    %v5136 = vadd.f32 %v5112, %v5128
    %v5137 = vadd.f32 %v5113, %v5129
    %v5138 = vadd.f32 %v5114, %v5130
    %v5139 = vadd.f32 %v5115, %v5131
    %v5140 = vadd.f32 %v5116, %v5132
    %v5141 = vadd.f32 %v5117, %v5133
    %v5142 = vadd.f32 %v5118, %v5134
    %v5143 = vld [vmem:[%s4687] sm:$0xff]
    %v5144 = vld [vmem:[%s4687 + $0x8] sm:$0xff]
    %v5145 = vld [vmem:[%s4687 + $0x10] sm:$0xff]
    %v5146 = vld [vmem:[%s4687 + $0x18] sm:$0xff]
    %v5147 = vld [vmem:[%s4687 + $0x20] sm:$0xff]
    %v5148 = vld [vmem:[%s4687 + $0x28] sm:$0xff]
    %v5149 = vld [vmem:[%s4687 + $0x30] sm:$0xff]
    %v5150 = vld [vmem:[%s4687 + $0x38] sm:$0xff]
    %v5151 = vmul.f32 %v5143, %v1011
    %v5152 = vmul.f32 %v5144, %v1011
    %v5153 = vmul.f32 %v5145, %v1011
    %v5154 = vmul.f32 %v5146, %v1011
    %v5155 = vmul.f32 %v5147, %v1011
    %v5156 = vmul.f32 %v5148, %v1011
    %v5157 = vmul.f32 %v5149, %v1011
    %v5158 = vmul.f32 %v5150, %v1011
    %v5159 = vadd.f32 %v5135, %v5151
    %v5160 = vadd.f32 %v5136, %v5152
    %v5161 = vadd.f32 %v5137, %v5153
    %v5162 = vadd.f32 %v5138, %v5154
    %v5163 = vadd.f32 %v5139, %v5155
    %v5164 = vadd.f32 %v5140, %v5156
    %v5165 = vadd.f32 %v5141, %v5157
    %v5166 = vadd.f32 %v5142, %v5158
    %v5167 = vld [vmem:[%s4713] sm:$0xff]
    %v5168 = vld [vmem:[%s4713 + $0x8] sm:$0xff]
    %v5169 = vld [vmem:[%s4713 + $0x10] sm:$0xff]
    %v5170 = vld [vmem:[%s4713 + $0x18] sm:$0xff]
    %v5171 = vld [vmem:[%s4713 + $0x20] sm:$0xff]
    %v5172 = vld [vmem:[%s4713 + $0x28] sm:$0xff]
    %v5173 = vld [vmem:[%s4713 + $0x30] sm:$0xff]
    %v5174 = vld [vmem:[%s4713 + $0x38] sm:$0xff]
    %v5175 = vmul.f32 %v5167, %v1041
    %v5176 = vmul.f32 %v5168, %v1041
    %v5177 = vmul.f32 %v5169, %v1041
    %v5178 = vmul.f32 %v5170, %v1041
    %v5179 = vmul.f32 %v5171, %v1041
    %v5180 = vmul.f32 %v5172, %v1041
    %v5181 = vmul.f32 %v5173, %v1041
    %v5182 = vmul.f32 %v5174, %v1041
    %v5183 = vadd.f32 %v5159, %v5175
    %v5184 = vadd.f32 %v5160, %v5176
    %v5185 = vadd.f32 %v5161, %v5177
    %v5186 = vadd.f32 %v5162, %v5178
    %v5187 = vadd.f32 %v5163, %v5179
    %v5188 = vadd.f32 %v5164, %v5180
    %v5189 = vadd.f32 %v5165, %v5181
    %v5190 = vadd.f32 %v5166, %v5182
    %v5191 = vld [vmem:[%s4739] sm:$0xff]
    %v5192 = vld [vmem:[%s4739 + $0x8] sm:$0xff]
    %v5193 = vld [vmem:[%s4739 + $0x10] sm:$0xff]
    %v5194 = vld [vmem:[%s4739 + $0x18] sm:$0xff]
    %v5195 = vld [vmem:[%s4739 + $0x20] sm:$0xff]
    %v5196 = vld [vmem:[%s4739 + $0x28] sm:$0xff]
    %v5197 = vld [vmem:[%s4739 + $0x30] sm:$0xff]
    %v5198 = vld [vmem:[%s4739 + $0x38] sm:$0xff]
    %v5199 = vmul.f32 %v5191, %v1071
    %v5200 = vmul.f32 %v5192, %v1071
    %v5201 = vmul.f32 %v5193, %v1071
    %v5202 = vmul.f32 %v5194, %v1071
    %v5203 = vmul.f32 %v5195, %v1071
    %v5204 = vmul.f32 %v5196, %v1071
    %v5205 = vmul.f32 %v5197, %v1071
    %v5206 = vmul.f32 %v5198, %v1071
    %v5207 = vadd.f32 %v5183, %v5199
    %v5208 = vadd.f32 %v5184, %v5200
    %v5209 = vadd.f32 %v5185, %v5201
    %v5210 = vadd.f32 %v5186, %v5202
    %v5211 = vadd.f32 %v5187, %v5203
    %v5212 = vadd.f32 %v5188, %v5204
    %v5213 = vadd.f32 %v5189, %v5205
    %v5214 = vadd.f32 %v5190, %v5206
    %v5215 = vld [vmem:[%s4765] sm:$0xff]
    %v5216 = vld [vmem:[%s4765 + $0x8] sm:$0xff]
    %v5217 = vld [vmem:[%s4765 + $0x10] sm:$0xff]
    %v5218 = vld [vmem:[%s4765 + $0x18] sm:$0xff]
    %v5219 = vld [vmem:[%s4765 + $0x20] sm:$0xff]
    %v5220 = vld [vmem:[%s4765 + $0x28] sm:$0xff]
    %v5221 = vld [vmem:[%s4765 + $0x30] sm:$0xff]
    %v5222 = vld [vmem:[%s4765 + $0x38] sm:$0xff]
    %v5223 = vmul.f32 %v5215, %v1101
    %v5224 = vmul.f32 %v5216, %v1101
    %v5225 = vmul.f32 %v5217, %v1101
    %v5226 = vmul.f32 %v5218, %v1101
    %v5227 = vmul.f32 %v5219, %v1101
    %v5228 = vmul.f32 %v5220, %v1101
    %v5229 = vmul.f32 %v5221, %v1101
    %v5230 = vmul.f32 %v5222, %v1101
    %v5231 = vadd.f32 %v5207, %v5223
    %v5232 = vadd.f32 %v5208, %v5224
    %v5233 = vadd.f32 %v5209, %v5225
    %v5234 = vadd.f32 %v5210, %v5226
    %v5235 = vadd.f32 %v5211, %v5227
    %v5236 = vadd.f32 %v5212, %v5228
    %v5237 = vadd.f32 %v5213, %v5229
    %v5238 = vadd.f32 %v5214, %v5230
    %v5239 = vld [vmem:[%s4791] sm:$0xff]
    %v5240 = vld [vmem:[%s4791 + $0x8] sm:$0xff]
    %v5241 = vld [vmem:[%s4791 + $0x10] sm:$0xff]
    %v5242 = vld [vmem:[%s4791 + $0x18] sm:$0xff]
    %v5243 = vld [vmem:[%s4791 + $0x20] sm:$0xff]
    %v5244 = vld [vmem:[%s4791 + $0x28] sm:$0xff]
    %v5245 = vld [vmem:[%s4791 + $0x30] sm:$0xff]
    %v5246 = vld [vmem:[%s4791 + $0x38] sm:$0xff]
    %v5247 = vmul.f32 %v5239, %v1131
    %v5248 = vmul.f32 %v5240, %v1131
    %v5249 = vmul.f32 %v5241, %v1131
    %v5250 = vmul.f32 %v5242, %v1131
    %v5251 = vmul.f32 %v5243, %v1131
    %v5252 = vmul.f32 %v5244, %v1131
    %v5253 = vmul.f32 %v5245, %v1131
    %v5254 = vmul.f32 %v5246, %v1131
    %v5255 = vadd.f32 %v5231, %v5247
    %v5256 = vadd.f32 %v5232, %v5248
    %v5257 = vadd.f32 %v5233, %v5249
    %v5258 = vadd.f32 %v5234, %v5250
    %v5259 = vadd.f32 %v5235, %v5251
    %v5260 = vadd.f32 %v5236, %v5252
    %v5261 = vadd.f32 %v5237, %v5253
    %v5262 = vadd.f32 %v5238, %v5254
    %v5263 = vld [vmem:[%s4817] sm:$0xff]
    %v5264 = vld [vmem:[%s4817 + $0x8] sm:$0xff]
    %v5265 = vld [vmem:[%s4817 + $0x10] sm:$0xff]
    %v5266 = vld [vmem:[%s4817 + $0x18] sm:$0xff]
    %v5267 = vld [vmem:[%s4817 + $0x20] sm:$0xff]
    %v5268 = vld [vmem:[%s4817 + $0x28] sm:$0xff]
    %v5269 = vld [vmem:[%s4817 + $0x30] sm:$0xff]
    %v5270 = vld [vmem:[%s4817 + $0x38] sm:$0xff]
    %v5271 = vmul.f32 %v5263, %v1161
    %v5272 = vmul.f32 %v5264, %v1161
    %v5273 = vmul.f32 %v5265, %v1161
    %v5274 = vmul.f32 %v5266, %v1161
    %v5275 = vmul.f32 %v5267, %v1161
    %v5276 = vmul.f32 %v5268, %v1161
    %v5277 = vmul.f32 %v5269, %v1161
    %v5278 = vmul.f32 %v5270, %v1161
    %v5279 = vadd.f32 %v5255, %v5271
    %v5280 = vadd.f32 %v5256, %v5272
    %v5281 = vadd.f32 %v5257, %v5273
    %v5282 = vadd.f32 %v5258, %v5274
    %v5283 = vadd.f32 %v5259, %v5275
    %v5284 = vadd.f32 %v5260, %v5276
    %v5285 = vadd.f32 %v5261, %v5277
    %v5286 = vadd.f32 %v5262, %v5278
    %v5287 = vld [vmem:[%s4843] sm:$0xff]
    %v5288 = vld [vmem:[%s4843 + $0x8] sm:$0xff]
    %v5289 = vld [vmem:[%s4843 + $0x10] sm:$0xff]
    %v5290 = vld [vmem:[%s4843 + $0x18] sm:$0xff]
    %v5291 = vld [vmem:[%s4843 + $0x20] sm:$0xff]
    %v5292 = vld [vmem:[%s4843 + $0x28] sm:$0xff]
    %v5293 = vld [vmem:[%s4843 + $0x30] sm:$0xff]
    %v5294 = vld [vmem:[%s4843 + $0x38] sm:$0xff]
    %v5295 = vmul.f32 %v5287, %v1191
    %v5296 = vmul.f32 %v5288, %v1191
    %v5297 = vmul.f32 %v5289, %v1191
    %v5298 = vmul.f32 %v5290, %v1191
    %v5299 = vmul.f32 %v5291, %v1191
    %v5300 = vmul.f32 %v5292, %v1191
    %v5301 = vmul.f32 %v5293, %v1191
    %v5302 = vmul.f32 %v5294, %v1191
    %v5303 = vadd.f32 %v5279, %v5295
    %v5304 = vadd.f32 %v5280, %v5296
    %v5305 = vadd.f32 %v5281, %v5297
    %v5306 = vadd.f32 %v5282, %v5298
    %v5307 = vadd.f32 %v5283, %v5299
    %v5308 = vadd.f32 %v5284, %v5300
    %v5309 = vadd.f32 %v5285, %v5301
    %v5310 = vadd.f32 %v5286, %v5302
    %v5311 = vld [vmem:[%s4869] sm:$0xff]
    %v5312 = vld [vmem:[%s4869 + $0x8] sm:$0xff]
    %v5313 = vld [vmem:[%s4869 + $0x10] sm:$0xff]
    %v5314 = vld [vmem:[%s4869 + $0x18] sm:$0xff]
    %v5315 = vld [vmem:[%s4869 + $0x20] sm:$0xff]
    %v5316 = vld [vmem:[%s4869 + $0x28] sm:$0xff]
    %v5317 = vld [vmem:[%s4869 + $0x30] sm:$0xff]
    %v5318 = vld [vmem:[%s4869 + $0x38] sm:$0xff]
    %v5319 = vmul.f32 %v5311, %v1221
    %v5320 = vmul.f32 %v5312, %v1221
    %v5321 = vmul.f32 %v5313, %v1221
    %v5322 = vmul.f32 %v5314, %v1221
    %v5323 = vmul.f32 %v5315, %v1221
    %v5324 = vmul.f32 %v5316, %v1221
    %v5325 = vmul.f32 %v5317, %v1221
    %v5326 = vmul.f32 %v5318, %v1221
    %v5327 = vadd.f32 %v5303, %v5319
    %v5328 = vadd.f32 %v5304, %v5320
    %v5329 = vadd.f32 %v5305, %v5321
    %v5330 = vadd.f32 %v5306, %v5322
    %v5331 = vadd.f32 %v5307, %v5323
    %v5332 = vadd.f32 %v5308, %v5324
    %v5333 = vadd.f32 %v5309, %v5325
    %v5334 = vadd.f32 %v5310, %v5326
    %s5335 = sadd.s32 %s704, 8
    %s5336 = smul.u32 %s5335, 80
    %s5337 = scalar_lea.vmem [#allocation3], %s5336
    %v5338 = vld [vmem:[%s5337] sm:$0xff]
    %v5339 = vld [vmem:[%s5337 + $0x8] sm:$0xff]
    %v5340 = vld [vmem:[%s5337 + $0x10] sm:$0xff]
    %v5341 = vld [vmem:[%s5337 + $0x18] sm:$0xff]
    %v5342 = vld [vmem:[%s5337 + $0x20] sm:$0xff]
    %v5343 = vld [vmem:[%s5337 + $0x28] sm:$0xff]
    %v5344 = vld [vmem:[%s5337 + $0x30] sm:$0xff]
    %v5345 = vld [vmem:[%s5337 + $0x38] sm:$0xff]
    %v5346 = vmul.f32 %v5338, %v1252
    %v5347 = vmul.f32 %v5339, %v1252
    %v5348 = vmul.f32 %v5340, %v1252
    %v5349 = vmul.f32 %v5341, %v1252
    %v5350 = vmul.f32 %v5342, %v1252
    %v5351 = vmul.f32 %v5343, %v1252
    %v5352 = vmul.f32 %v5344, %v1252
    %v5353 = vmul.f32 %v5345, %v1252
    %v5354 = vadd.f32 %v5327, %v5346
    %v5355 = vadd.f32 %v5328, %v5347
    %v5356 = vadd.f32 %v5329, %v5348
    %v5357 = vadd.f32 %v5330, %v5349
    %v5358 = vadd.f32 %v5331, %v5350
    %v5359 = vadd.f32 %v5332, %v5351
    %v5360 = vadd.f32 %v5333, %v5352
    %v5361 = vadd.f32 %v5334, %v5353
    %s5362 = sadd.s32 %s5336, 800
    %s5363 = scalar_lea.vmem [#allocation3], %s5362
    %v5364 = vld [vmem:[%s5363] sm:$0xff]
    %v5365 = vld [vmem:[%s5363 + $0x8] sm:$0xff]
    %v5366 = vld [vmem:[%s5363 + $0x10] sm:$0xff]
    %v5367 = vld [vmem:[%s5363 + $0x18] sm:$0xff]
    %v5368 = vld [vmem:[%s5363 + $0x20] sm:$0xff]
    %v5369 = vld [vmem:[%s5363 + $0x28] sm:$0xff]
    %v5370 = vld [vmem:[%s5363 + $0x30] sm:$0xff]
    %v5371 = vld [vmem:[%s5363 + $0x38] sm:$0xff]
    %v5372 = vmul.f32 %v5364, %v1282
    %v5373 = vmul.f32 %v5365, %v1282
    %v5374 = vmul.f32 %v5366, %v1282
    %v5375 = vmul.f32 %v5367, %v1282
    %v5376 = vmul.f32 %v5368, %v1282
    %v5377 = vmul.f32 %v5369, %v1282
    %v5378 = vmul.f32 %v5370, %v1282
    %v5379 = vmul.f32 %v5371, %v1282
    %v5380 = vadd.f32 %v5354, %v5372
    %v5381 = vadd.f32 %v5355, %v5373
    %v5382 = vadd.f32 %v5356, %v5374
    %v5383 = vadd.f32 %v5357, %v5375
    %v5384 = vadd.f32 %v5358, %v5376
    %v5385 = vadd.f32 %v5359, %v5377
    %v5386 = vadd.f32 %v5360, %v5378
    %v5387 = vadd.f32 %v5361, %v5379
    %s5388 = sadd.s32 %s5336, 1600
    %s5389 = scalar_lea.vmem [#allocation3], %s5388
    %v5390 = vld [vmem:[%s5389] sm:$0xff]
    %v5391 = vld [vmem:[%s5389 + $0x8] sm:$0xff]
    %v5392 = vld [vmem:[%s5389 + $0x10] sm:$0xff]
    %v5393 = vld [vmem:[%s5389 + $0x18] sm:$0xff]
    %v5394 = vld [vmem:[%s5389 + $0x20] sm:$0xff]
    %v5395 = vld [vmem:[%s5389 + $0x28] sm:$0xff]
    %v5396 = vld [vmem:[%s5389 + $0x30] sm:$0xff]
    %v5397 = vld [vmem:[%s5389 + $0x38] sm:$0xff]
    %v5398 = vmul.f32 %v5390, %v1312
    %v5399 = vmul.f32 %v5391, %v1312
    %v5400 = vmul.f32 %v5392, %v1312
    %v5401 = vmul.f32 %v5393, %v1312
    %v5402 = vmul.f32 %v5394, %v1312
    %v5403 = vmul.f32 %v5395, %v1312
    %v5404 = vmul.f32 %v5396, %v1312
    %v5405 = vmul.f32 %v5397, %v1312
    %v5406 = vadd.f32 %v5380, %v5398
    %v5407 = vadd.f32 %v5381, %v5399
    %v5408 = vadd.f32 %v5382, %v5400
    %v5409 = vadd.f32 %v5383, %v5401
    %v5410 = vadd.f32 %v5384, %v5402
    %v5411 = vadd.f32 %v5385, %v5403
    %v5412 = vadd.f32 %v5386, %v5404
    %v5413 = vadd.f32 %v5387, %v5405
    %s5414 = sadd.s32 8, %s5336
    %s5415 = scalar_lea.vmem [#allocation3], %s5414
    %v5416 = vld [vmem:[%s5415] sm:$0xff]
    %v5417 = vld [vmem:[%s5415 + $0x8] sm:$0xff]
    %v5418 = vld [vmem:[%s5415 + $0x10] sm:$0xff]
    %v5419 = vld [vmem:[%s5415 + $0x18] sm:$0xff]
    %v5420 = vld [vmem:[%s5415 + $0x20] sm:$0xff]
    %v5421 = vld [vmem:[%s5415 + $0x28] sm:$0xff]
    %v5422 = vld [vmem:[%s5415 + $0x30] sm:$0xff]
    %v5423 = vld [vmem:[%s5415 + $0x38] sm:$0xff]
    %v5424 = vmul.f32 %v5416, %v1342
    %v5425 = vmul.f32 %v5417, %v1342
    %v5426 = vmul.f32 %v5418, %v1342
    %v5427 = vmul.f32 %v5419, %v1342
    %v5428 = vmul.f32 %v5420, %v1342
    %v5429 = vmul.f32 %v5421, %v1342
    %v5430 = vmul.f32 %v5422, %v1342
    %v5431 = vmul.f32 %v5423, %v1342
    %v5432 = vadd.f32 %v5406, %v5424
    %v5433 = vadd.f32 %v5407, %v5425
    %v5434 = vadd.f32 %v5408, %v5426
    %v5435 = vadd.f32 %v5409, %v5427
    %v5436 = vadd.f32 %v5410, %v5428
    %v5437 = vadd.f32 %v5411, %v5429
    %v5438 = vadd.f32 %v5412, %v5430
    %v5439 = vadd.f32 %v5413, %v5431
    %s5440 = sadd.s32 %s5414, 800
    %s5441 = scalar_lea.vmem [#allocation3], %s5440
    %v5442 = vld [vmem:[%s5441] sm:$0xff]
    %v5443 = vld [vmem:[%s5441 + $0x8] sm:$0xff]
    %v5444 = vld [vmem:[%s5441 + $0x10] sm:$0xff]
    %v5445 = vld [vmem:[%s5441 + $0x18] sm:$0xff]
    %v5446 = vld [vmem:[%s5441 + $0x20] sm:$0xff]
    %v5447 = vld [vmem:[%s5441 + $0x28] sm:$0xff]
    %v5448 = vld [vmem:[%s5441 + $0x30] sm:$0xff]
    %v5449 = vld [vmem:[%s5441 + $0x38] sm:$0xff]
    %v5450 = vmul.f32 %v5442, %v1372
    %v5451 = vmul.f32 %v5443, %v1372
    %v5452 = vmul.f32 %v5444, %v1372
    %v5453 = vmul.f32 %v5445, %v1372
    %v5454 = vmul.f32 %v5446, %v1372
    %v5455 = vmul.f32 %v5447, %v1372
    %v5456 = vmul.f32 %v5448, %v1372
    %v5457 = vmul.f32 %v5449, %v1372
    %v5458 = vadd.f32 %v5432, %v5450
    %v5459 = vadd.f32 %v5433, %v5451
    %v5460 = vadd.f32 %v5434, %v5452
    %v5461 = vadd.f32 %v5435, %v5453
    %v5462 = vadd.f32 %v5436, %v5454
    %v5463 = vadd.f32 %v5437, %v5455
    %v5464 = vadd.f32 %v5438, %v5456
    %v5465 = vadd.f32 %v5439, %v5457
    %s5466 = sadd.s32 %s5414, 1600
    %s5467 = scalar_lea.vmem [#allocation3], %s5466
    %v5468 = vld [vmem:[%s5467] sm:$0xff]
    %v5469 = vld [vmem:[%s5467 + $0x8] sm:$0xff]
    %v5470 = vld [vmem:[%s5467 + $0x10] sm:$0xff]
    %v5471 = vld [vmem:[%s5467 + $0x18] sm:$0xff]
    %v5472 = vld [vmem:[%s5467 + $0x20] sm:$0xff]
    %v5473 = vld [vmem:[%s5467 + $0x28] sm:$0xff]
    %v5474 = vld [vmem:[%s5467 + $0x30] sm:$0xff]
    %v5475 = vld [vmem:[%s5467 + $0x38] sm:$0xff]
    %v5476 = vmul.f32 %v5468, %v1402
    %v5477 = vmul.f32 %v5469, %v1402
    %v5478 = vmul.f32 %v5470, %v1402
    %v5479 = vmul.f32 %v5471, %v1402
    %v5480 = vmul.f32 %v5472, %v1402
    %v5481 = vmul.f32 %v5473, %v1402
    %v5482 = vmul.f32 %v5474, %v1402
    %v5483 = vmul.f32 %v5475, %v1402
    %v5484 = vadd.f32 %v5458, %v5476
    %v5485 = vadd.f32 %v5459, %v5477
    %v5486 = vadd.f32 %v5460, %v5478
    %v5487 = vadd.f32 %v5461, %v5479
    %v5488 = vadd.f32 %v5462, %v5480
    %v5489 = vadd.f32 %v5463, %v5481
    %v5490 = vadd.f32 %v5464, %v5482
    %v5491 = vadd.f32 %v5465, %v5483
    %s5492 = sadd.s32 16, %s5336
    %s5493 = scalar_lea.vmem [#allocation3], %s5492
    %v5494 = vld [vmem:[%s5493] sm:$0xff]
    %v5495 = vld [vmem:[%s5493 + $0x8] sm:$0xff]
    %v5496 = vld [vmem:[%s5493 + $0x10] sm:$0xff]
    %v5497 = vld [vmem:[%s5493 + $0x18] sm:$0xff]
    %v5498 = vld [vmem:[%s5493 + $0x20] sm:$0xff]
    %v5499 = vld [vmem:[%s5493 + $0x28] sm:$0xff]
    %v5500 = vld [vmem:[%s5493 + $0x30] sm:$0xff]
    %v5501 = vld [vmem:[%s5493 + $0x38] sm:$0xff]
    %v5502 = vmul.f32 %v5494, %v1432
    %v5503 = vmul.f32 %v5495, %v1432
    %v5504 = vmul.f32 %v5496, %v1432
    %v5505 = vmul.f32 %v5497, %v1432
    %v5506 = vmul.f32 %v5498, %v1432
    %v5507 = vmul.f32 %v5499, %v1432
    %v5508 = vmul.f32 %v5500, %v1432
    %v5509 = vmul.f32 %v5501, %v1432
    %v5510 = vadd.f32 %v5484, %v5502
    %v5511 = vadd.f32 %v5485, %v5503
    %v5512 = vadd.f32 %v5486, %v5504
    %v5513 = vadd.f32 %v5487, %v5505
    %v5514 = vadd.f32 %v5488, %v5506
    %v5515 = vadd.f32 %v5489, %v5507
    %v5516 = vadd.f32 %v5490, %v5508
    %v5517 = vadd.f32 %v5491, %v5509
    %s5518 = sadd.s32 %s5492, 800
    %s5519 = scalar_lea.vmem [#allocation3], %s5518
    %v5520 = vld [vmem:[%s5519] sm:$0xff]
    %v5521 = vld [vmem:[%s5519 + $0x8] sm:$0xff]
    %v5522 = vld [vmem:[%s5519 + $0x10] sm:$0xff]
    %v5523 = vld [vmem:[%s5519 + $0x18] sm:$0xff]
    %v5524 = vld [vmem:[%s5519 + $0x20] sm:$0xff]
    %v5525 = vld [vmem:[%s5519 + $0x28] sm:$0xff]
    %v5526 = vld [vmem:[%s5519 + $0x30] sm:$0xff]
    %v5527 = vld [vmem:[%s5519 + $0x38] sm:$0xff]
    %v5528 = vmul.f32 %v5520, %v1462
    %v5529 = vmul.f32 %v5521, %v1462
    %v5530 = vmul.f32 %v5522, %v1462
    %v5531 = vmul.f32 %v5523, %v1462
    %v5532 = vmul.f32 %v5524, %v1462
    %v5533 = vmul.f32 %v5525, %v1462
    %v5534 = vmul.f32 %v5526, %v1462
    %v5535 = vmul.f32 %v5527, %v1462
    %v5536 = vadd.f32 %v5510, %v5528
    %v5537 = vadd.f32 %v5511, %v5529
    %v5538 = vadd.f32 %v5512, %v5530
    %v5539 = vadd.f32 %v5513, %v5531
    %v5540 = vadd.f32 %v5514, %v5532
    %v5541 = vadd.f32 %v5515, %v5533
    %v5542 = vadd.f32 %v5516, %v5534
    %v5543 = vadd.f32 %v5517, %v5535
    %s5544 = sadd.s32 %s5492, 1600
    %s5545 = scalar_lea.vmem [#allocation3], %s5544
    %v5546 = vld [vmem:[%s5545] sm:$0xff]
    %v5547 = vld [vmem:[%s5545 + $0x8] sm:$0xff]
    %v5548 = vld [vmem:[%s5545 + $0x10] sm:$0xff]
    %v5549 = vld [vmem:[%s5545 + $0x18] sm:$0xff]
    %v5550 = vld [vmem:[%s5545 + $0x20] sm:$0xff]
    %v5551 = vld [vmem:[%s5545 + $0x28] sm:$0xff]
    %v5552 = vld [vmem:[%s5545 + $0x30] sm:$0xff]
    %v5553 = vld [vmem:[%s5545 + $0x38] sm:$0xff]
    %v5554 = vmul.f32 %v5546, %v1492
    %v5555 = vmul.f32 %v5547, %v1492
    %v5556 = vmul.f32 %v5548, %v1492
    %v5557 = vmul.f32 %v5549, %v1492
    %v5558 = vmul.f32 %v5550, %v1492
    %v5559 = vmul.f32 %v5551, %v1492
    %v5560 = vmul.f32 %v5552, %v1492
    %v5561 = vmul.f32 %v5553, %v1492
    %v5562 = vadd.f32 %v5536, %v5554
    %v5563 = vadd.f32 %v5537, %v5555
    %v5564 = vadd.f32 %v5538, %v5556
    %v5565 = vadd.f32 %v5539, %v5557
    %v5566 = vadd.f32 %v5540, %v5558
    %v5567 = vadd.f32 %v5541, %v5559
    %v5568 = vadd.f32 %v5542, %v5560
    %v5569 = vadd.f32 %v5543, %v5561
    %v5570 = vadd.f32 %v5562, %v1513
    %v5571 = vadd.f32 %v5563, %v1513
    %v5572 = vadd.f32 %v5564, %v1513
    %v5573 = vadd.f32 %v5565, %v1513
    %v5574 = vadd.f32 %v5566, %v1513
    %v5575 = vadd.f32 %v5567, %v1513
    %v5576 = vadd.f32 %v5568, %v1513
    %v5577 = vadd.f32 %v5569, %v1513
    %s5578 = scalar_lea.vmem [#allocation5], 384
    %5579 = vst [vmem:[%s5578] sm:$0xff] %v5570
    %5580 = vst [vmem:[%s5578 + $0x8] sm:$0xff] %v5571
    %5581 = vst [vmem:[%s5578 + $0x10] sm:$0xff] %v5572
    %5582 = vst [vmem:[%s5578 + $0x18] sm:$0xff] %v5573
    %5583 = vst [vmem:[%s5578 + $0x20] sm:$0xff] %v5574
    %5584 = vst [vmem:[%s5578 + $0x28] sm:$0xff] %v5575
    %5585 = vst [vmem:[%s5578 + $0x30] sm:$0xff] %v5576
    %5586 = vst [vmem:[%s5578 + $0x38] sm:$0xff] %v5577
    %v5587 = vld [vmem:[%s4661] sm:$0xff]
    %v5588 = vld [vmem:[%s4661 + $0x8] sm:$0xff]
    %v5589 = vld [vmem:[%s4661 + $0x10] sm:$0xff]
    %v5590 = vld [vmem:[%s4661 + $0x18] sm:$0xff]
    %v5591 = vld [vmem:[%s4661 + $0x20] sm:$0xff]
    %v5592 = vld [vmem:[%s4661 + $0x28] sm:$0xff]
    %v5593 = vld [vmem:[%s4661 + $0x30] sm:$0xff]
    %v5594 = vld [vmem:[%s4661 + $0x38] sm:$0xff]
    %v5595 = vmul.f32 %v5587, %v718
    %v5596 = vmul.f32 %v5588, %v718
    %v5597 = vmul.f32 %v5589, %v718
    %v5598 = vmul.f32 %v5590, %v718
    %v5599 = vmul.f32 %v5591, %v718
    %v5600 = vmul.f32 %v5592, %v718
    %v5601 = vmul.f32 %v5593, %v718
    %v5602 = vmul.f32 %v5594, %v718
    %v5603 = vld [vmem:[%s4687] sm:$0xff]
    %v5604 = vld [vmem:[%s4687 + $0x8] sm:$0xff]
    %v5605 = vld [vmem:[%s4687 + $0x10] sm:$0xff]
    %v5606 = vld [vmem:[%s4687 + $0x18] sm:$0xff]
    %v5607 = vld [vmem:[%s4687 + $0x20] sm:$0xff]
    %v5608 = vld [vmem:[%s4687 + $0x28] sm:$0xff]
    %v5609 = vld [vmem:[%s4687 + $0x30] sm:$0xff]
    %v5610 = vld [vmem:[%s4687 + $0x38] sm:$0xff]
    %v5611 = vmul.f32 %v5603, %v740
    %v5612 = vmul.f32 %v5604, %v740
    %v5613 = vmul.f32 %v5605, %v740
    %v5614 = vmul.f32 %v5606, %v740
    %v5615 = vmul.f32 %v5607, %v740
    %v5616 = vmul.f32 %v5608, %v740
    %v5617 = vmul.f32 %v5609, %v740
    %v5618 = vmul.f32 %v5610, %v740
    %v5619 = vadd.f32 %v5595, %v5611
    %v5620 = vadd.f32 %v5596, %v5612
    %v5621 = vadd.f32 %v5597, %v5613
    %v5622 = vadd.f32 %v5598, %v5614
    %v5623 = vadd.f32 %v5599, %v5615
    %v5624 = vadd.f32 %v5600, %v5616
    %v5625 = vadd.f32 %v5601, %v5617
    %v5626 = vadd.f32 %v5602, %v5618
    %v5627 = vld [vmem:[%s4713] sm:$0xff]
    %v5628 = vld [vmem:[%s4713 + $0x8] sm:$0xff]
    %v5629 = vld [vmem:[%s4713 + $0x10] sm:$0xff]
    %v5630 = vld [vmem:[%s4713 + $0x18] sm:$0xff]
    %v5631 = vld [vmem:[%s4713 + $0x20] sm:$0xff]
    %v5632 = vld [vmem:[%s4713 + $0x28] sm:$0xff]
    %v5633 = vld [vmem:[%s4713 + $0x30] sm:$0xff]
    %v5634 = vld [vmem:[%s4713 + $0x38] sm:$0xff]
    %v5635 = vmul.f32 %v5627, %v770
    %v5636 = vmul.f32 %v5628, %v770
    %v5637 = vmul.f32 %v5629, %v770
    %v5638 = vmul.f32 %v5630, %v770
    %v5639 = vmul.f32 %v5631, %v770
    %v5640 = vmul.f32 %v5632, %v770
    %v5641 = vmul.f32 %v5633, %v770
    %v5642 = vmul.f32 %v5634, %v770
    %v5643 = vadd.f32 %v5619, %v5635
    %v5644 = vadd.f32 %v5620, %v5636
    %v5645 = vadd.f32 %v5621, %v5637
    %v5646 = vadd.f32 %v5622, %v5638
    %v5647 = vadd.f32 %v5623, %v5639
    %v5648 = vadd.f32 %v5624, %v5640
    %v5649 = vadd.f32 %v5625, %v5641
    %v5650 = vadd.f32 %v5626, %v5642
    %v5651 = vld [vmem:[%s4739] sm:$0xff]
    %v5652 = vld [vmem:[%s4739 + $0x8] sm:$0xff]
    %v5653 = vld [vmem:[%s4739 + $0x10] sm:$0xff]
    %v5654 = vld [vmem:[%s4739 + $0x18] sm:$0xff]
    %v5655 = vld [vmem:[%s4739 + $0x20] sm:$0xff]
    %v5656 = vld [vmem:[%s4739 + $0x28] sm:$0xff]
    %v5657 = vld [vmem:[%s4739 + $0x30] sm:$0xff]
    %v5658 = vld [vmem:[%s4739 + $0x38] sm:$0xff]
    %v5659 = vmul.f32 %v5651, %v800
    %v5660 = vmul.f32 %v5652, %v800
    %v5661 = vmul.f32 %v5653, %v800
    %v5662 = vmul.f32 %v5654, %v800
    %v5663 = vmul.f32 %v5655, %v800
    %v5664 = vmul.f32 %v5656, %v800
    %v5665 = vmul.f32 %v5657, %v800
    %v5666 = vmul.f32 %v5658, %v800
    %v5667 = vadd.f32 %v5643, %v5659
    %v5668 = vadd.f32 %v5644, %v5660
    %v5669 = vadd.f32 %v5645, %v5661
    %v5670 = vadd.f32 %v5646, %v5662
    %v5671 = vadd.f32 %v5647, %v5663
    %v5672 = vadd.f32 %v5648, %v5664
    %v5673 = vadd.f32 %v5649, %v5665
    %v5674 = vadd.f32 %v5650, %v5666
    %v5675 = vld [vmem:[%s4765] sm:$0xff]
    %v5676 = vld [vmem:[%s4765 + $0x8] sm:$0xff]
    %v5677 = vld [vmem:[%s4765 + $0x10] sm:$0xff]
    %v5678 = vld [vmem:[%s4765 + $0x18] sm:$0xff]
    %v5679 = vld [vmem:[%s4765 + $0x20] sm:$0xff]
    %v5680 = vld [vmem:[%s4765 + $0x28] sm:$0xff]
    %v5681 = vld [vmem:[%s4765 + $0x30] sm:$0xff]
    %v5682 = vld [vmem:[%s4765 + $0x38] sm:$0xff]
    %v5683 = vmul.f32 %v5675, %v830
    %v5684 = vmul.f32 %v5676, %v830
    %v5685 = vmul.f32 %v5677, %v830
    %v5686 = vmul.f32 %v5678, %v830
    %v5687 = vmul.f32 %v5679, %v830
    %v5688 = vmul.f32 %v5680, %v830
    %v5689 = vmul.f32 %v5681, %v830
    %v5690 = vmul.f32 %v5682, %v830
    %v5691 = vadd.f32 %v5667, %v5683
    %v5692 = vadd.f32 %v5668, %v5684
    %v5693 = vadd.f32 %v5669, %v5685
    %v5694 = vadd.f32 %v5670, %v5686
    %v5695 = vadd.f32 %v5671, %v5687
    %v5696 = vadd.f32 %v5672, %v5688
    %v5697 = vadd.f32 %v5673, %v5689
    %v5698 = vadd.f32 %v5674, %v5690
    %v5699 = vld [vmem:[%s4791] sm:$0xff]
    %v5700 = vld [vmem:[%s4791 + $0x8] sm:$0xff]
    %v5701 = vld [vmem:[%s4791 + $0x10] sm:$0xff]
    %v5702 = vld [vmem:[%s4791 + $0x18] sm:$0xff]
    %v5703 = vld [vmem:[%s4791 + $0x20] sm:$0xff]
    %v5704 = vld [vmem:[%s4791 + $0x28] sm:$0xff]
    %v5705 = vld [vmem:[%s4791 + $0x30] sm:$0xff]
    %v5706 = vld [vmem:[%s4791 + $0x38] sm:$0xff]
    %v5707 = vmul.f32 %v5699, %v860
    %v5708 = vmul.f32 %v5700, %v860
    %v5709 = vmul.f32 %v5701, %v860
    %v5710 = vmul.f32 %v5702, %v860
    %v5711 = vmul.f32 %v5703, %v860
    %v5712 = vmul.f32 %v5704, %v860
    %v5713 = vmul.f32 %v5705, %v860
    %v5714 = vmul.f32 %v5706, %v860
    %v5715 = vadd.f32 %v5691, %v5707
    %v5716 = vadd.f32 %v5692, %v5708
    %v5717 = vadd.f32 %v5693, %v5709
    %v5718 = vadd.f32 %v5694, %v5710
    %v5719 = vadd.f32 %v5695, %v5711
    %v5720 = vadd.f32 %v5696, %v5712
    %v5721 = vadd.f32 %v5697, %v5713
    %v5722 = vadd.f32 %v5698, %v5714
    %v5723 = vld [vmem:[%s4817] sm:$0xff]
    %v5724 = vld [vmem:[%s4817 + $0x8] sm:$0xff]
    %v5725 = vld [vmem:[%s4817 + $0x10] sm:$0xff]
    %v5726 = vld [vmem:[%s4817 + $0x18] sm:$0xff]
    %v5727 = vld [vmem:[%s4817 + $0x20] sm:$0xff]
    %v5728 = vld [vmem:[%s4817 + $0x28] sm:$0xff]
    %v5729 = vld [vmem:[%s4817 + $0x30] sm:$0xff]
    %v5730 = vld [vmem:[%s4817 + $0x38] sm:$0xff]
    %v5731 = vmul.f32 %v5723, %v890
    %v5732 = vmul.f32 %v5724, %v890
    %v5733 = vmul.f32 %v5725, %v890
    %v5734 = vmul.f32 %v5726, %v890
    %v5735 = vmul.f32 %v5727, %v890
    %v5736 = vmul.f32 %v5728, %v890
    %v5737 = vmul.f32 %v5729, %v890
    %v5738 = vmul.f32 %v5730, %v890
    %v5739 = vadd.f32 %v5715, %v5731
    %v5740 = vadd.f32 %v5716, %v5732
    %v5741 = vadd.f32 %v5717, %v5733
    %v5742 = vadd.f32 %v5718, %v5734
    %v5743 = vadd.f32 %v5719, %v5735
    %v5744 = vadd.f32 %v5720, %v5736
    %v5745 = vadd.f32 %v5721, %v5737
    %v5746 = vadd.f32 %v5722, %v5738
    %v5747 = vld [vmem:[%s4843] sm:$0xff]
    %v5748 = vld [vmem:[%s4843 + $0x8] sm:$0xff]
    %v5749 = vld [vmem:[%s4843 + $0x10] sm:$0xff]
    %v5750 = vld [vmem:[%s4843 + $0x18] sm:$0xff]
    %v5751 = vld [vmem:[%s4843 + $0x20] sm:$0xff]
    %v5752 = vld [vmem:[%s4843 + $0x28] sm:$0xff]
    %v5753 = vld [vmem:[%s4843 + $0x30] sm:$0xff]
    %v5754 = vld [vmem:[%s4843 + $0x38] sm:$0xff]
    %v5755 = vmul.f32 %v5747, %v920
    %v5756 = vmul.f32 %v5748, %v920
    %v5757 = vmul.f32 %v5749, %v920
    %v5758 = vmul.f32 %v5750, %v920
    %v5759 = vmul.f32 %v5751, %v920
    %v5760 = vmul.f32 %v5752, %v920
    %v5761 = vmul.f32 %v5753, %v920
    %v5762 = vmul.f32 %v5754, %v920
    %v5763 = vadd.f32 %v5739, %v5755
    %v5764 = vadd.f32 %v5740, %v5756
    %v5765 = vadd.f32 %v5741, %v5757
    %v5766 = vadd.f32 %v5742, %v5758
    %v5767 = vadd.f32 %v5743, %v5759
    %v5768 = vadd.f32 %v5744, %v5760
    %v5769 = vadd.f32 %v5745, %v5761
    %v5770 = vadd.f32 %v5746, %v5762
    %v5771 = vld [vmem:[%s4869] sm:$0xff]
    %v5772 = vld [vmem:[%s4869 + $0x8] sm:$0xff]
    %v5773 = vld [vmem:[%s4869 + $0x10] sm:$0xff]
    %v5774 = vld [vmem:[%s4869 + $0x18] sm:$0xff]
    %v5775 = vld [vmem:[%s4869 + $0x20] sm:$0xff]
    %v5776 = vld [vmem:[%s4869 + $0x28] sm:$0xff]
    %v5777 = vld [vmem:[%s4869 + $0x30] sm:$0xff]
    %v5778 = vld [vmem:[%s4869 + $0x38] sm:$0xff]
    %v5779 = vmul.f32 %v5771, %v950
    %v5780 = vmul.f32 %v5772, %v950
    %v5781 = vmul.f32 %v5773, %v950
    %v5782 = vmul.f32 %v5774, %v950
    %v5783 = vmul.f32 %v5775, %v950
    %v5784 = vmul.f32 %v5776, %v950
    %v5785 = vmul.f32 %v5777, %v950
    %v5786 = vmul.f32 %v5778, %v950
    %v5787 = vadd.f32 %v5763, %v5779
    %v5788 = vadd.f32 %v5764, %v5780
    %v5789 = vadd.f32 %v5765, %v5781
    %v5790 = vadd.f32 %v5766, %v5782
    %v5791 = vadd.f32 %v5767, %v5783
    %v5792 = vadd.f32 %v5768, %v5784
    %v5793 = vadd.f32 %v5769, %v5785
    %v5794 = vadd.f32 %v5770, %v5786
    %v5795 = vld [vmem:[%s5337] sm:$0xff]
    %v5796 = vld [vmem:[%s5337 + $0x8] sm:$0xff]
    %v5797 = vld [vmem:[%s5337 + $0x10] sm:$0xff]
    %v5798 = vld [vmem:[%s5337 + $0x18] sm:$0xff]
    %v5799 = vld [vmem:[%s5337 + $0x20] sm:$0xff]
    %v5800 = vld [vmem:[%s5337 + $0x28] sm:$0xff]
    %v5801 = vld [vmem:[%s5337 + $0x30] sm:$0xff]
    %v5802 = vld [vmem:[%s5337 + $0x38] sm:$0xff]
    %v5803 = vmul.f32 %v5795, %v981
    %v5804 = vmul.f32 %v5796, %v981
    %v5805 = vmul.f32 %v5797, %v981
    %v5806 = vmul.f32 %v5798, %v981
    %v5807 = vmul.f32 %v5799, %v981
    %v5808 = vmul.f32 %v5800, %v981
    %v5809 = vmul.f32 %v5801, %v981
    %v5810 = vmul.f32 %v5802, %v981
    %v5811 = vadd.f32 %v5787, %v5803
    %v5812 = vadd.f32 %v5788, %v5804
    %v5813 = vadd.f32 %v5789, %v5805
    %v5814 = vadd.f32 %v5790, %v5806
    %v5815 = vadd.f32 %v5791, %v5807
    %v5816 = vadd.f32 %v5792, %v5808
    %v5817 = vadd.f32 %v5793, %v5809
    %v5818 = vadd.f32 %v5794, %v5810
    %v5819 = vld [vmem:[%s5363] sm:$0xff]
    %v5820 = vld [vmem:[%s5363 + $0x8] sm:$0xff]
    %v5821 = vld [vmem:[%s5363 + $0x10] sm:$0xff]
    %v5822 = vld [vmem:[%s5363 + $0x18] sm:$0xff]
    %v5823 = vld [vmem:[%s5363 + $0x20] sm:$0xff]
    %v5824 = vld [vmem:[%s5363 + $0x28] sm:$0xff]
    %v5825 = vld [vmem:[%s5363 + $0x30] sm:$0xff]
    %v5826 = vld [vmem:[%s5363 + $0x38] sm:$0xff]
    %v5827 = vmul.f32 %v5819, %v1011
    %v5828 = vmul.f32 %v5820, %v1011
    %v5829 = vmul.f32 %v5821, %v1011
    %v5830 = vmul.f32 %v5822, %v1011
    %v5831 = vmul.f32 %v5823, %v1011
    %v5832 = vmul.f32 %v5824, %v1011
    %v5833 = vmul.f32 %v5825, %v1011
    %v5834 = vmul.f32 %v5826, %v1011
    %v5835 = vadd.f32 %v5811, %v5827
    %v5836 = vadd.f32 %v5812, %v5828
    %v5837 = vadd.f32 %v5813, %v5829
    %v5838 = vadd.f32 %v5814, %v5830
    %v5839 = vadd.f32 %v5815, %v5831
    %v5840 = vadd.f32 %v5816, %v5832
    %v5841 = vadd.f32 %v5817, %v5833
    %v5842 = vadd.f32 %v5818, %v5834
    %v5843 = vld [vmem:[%s5389] sm:$0xff]
    %v5844 = vld [vmem:[%s5389 + $0x8] sm:$0xff]
    %v5845 = vld [vmem:[%s5389 + $0x10] sm:$0xff]
    %v5846 = vld [vmem:[%s5389 + $0x18] sm:$0xff]
    %v5847 = vld [vmem:[%s5389 + $0x20] sm:$0xff]
    %v5848 = vld [vmem:[%s5389 + $0x28] sm:$0xff]
    %v5849 = vld [vmem:[%s5389 + $0x30] sm:$0xff]
    %v5850 = vld [vmem:[%s5389 + $0x38] sm:$0xff]
    %v5851 = vmul.f32 %v5843, %v1041
    %v5852 = vmul.f32 %v5844, %v1041
    %v5853 = vmul.f32 %v5845, %v1041
    %v5854 = vmul.f32 %v5846, %v1041
    %v5855 = vmul.f32 %v5847, %v1041
    %v5856 = vmul.f32 %v5848, %v1041
    %v5857 = vmul.f32 %v5849, %v1041
    %v5858 = vmul.f32 %v5850, %v1041
    %v5859 = vadd.f32 %v5835, %v5851
    %v5860 = vadd.f32 %v5836, %v5852
    %v5861 = vadd.f32 %v5837, %v5853
    %v5862 = vadd.f32 %v5838, %v5854
    %v5863 = vadd.f32 %v5839, %v5855
    %v5864 = vadd.f32 %v5840, %v5856
    %v5865 = vadd.f32 %v5841, %v5857
    %v5866 = vadd.f32 %v5842, %v5858
    %v5867 = vld [vmem:[%s5415] sm:$0xff]
    %v5868 = vld [vmem:[%s5415 + $0x8] sm:$0xff]
    %v5869 = vld [vmem:[%s5415 + $0x10] sm:$0xff]
    %v5870 = vld [vmem:[%s5415 + $0x18] sm:$0xff]
    %v5871 = vld [vmem:[%s5415 + $0x20] sm:$0xff]
    %v5872 = vld [vmem:[%s5415 + $0x28] sm:$0xff]
    %v5873 = vld [vmem:[%s5415 + $0x30] sm:$0xff]
    %v5874 = vld [vmem:[%s5415 + $0x38] sm:$0xff]
    %v5875 = vmul.f32 %v5867, %v1071
    %v5876 = vmul.f32 %v5868, %v1071
    %v5877 = vmul.f32 %v5869, %v1071
    %v5878 = vmul.f32 %v5870, %v1071
    %v5879 = vmul.f32 %v5871, %v1071
    %v5880 = vmul.f32 %v5872, %v1071
    %v5881 = vmul.f32 %v5873, %v1071
    %v5882 = vmul.f32 %v5874, %v1071
    %v5883 = vadd.f32 %v5859, %v5875
    %v5884 = vadd.f32 %v5860, %v5876
    %v5885 = vadd.f32 %v5861, %v5877
    %v5886 = vadd.f32 %v5862, %v5878
    %v5887 = vadd.f32 %v5863, %v5879
    %v5888 = vadd.f32 %v5864, %v5880
    %v5889 = vadd.f32 %v5865, %v5881
    %v5890 = vadd.f32 %v5866, %v5882
    %v5891 = vld [vmem:[%s5441] sm:$0xff]
    %v5892 = vld [vmem:[%s5441 + $0x8] sm:$0xff]
    %v5893 = vld [vmem:[%s5441 + $0x10] sm:$0xff]
    %v5894 = vld [vmem:[%s5441 + $0x18] sm:$0xff]
    %v5895 = vld [vmem:[%s5441 + $0x20] sm:$0xff]
    %v5896 = vld [vmem:[%s5441 + $0x28] sm:$0xff]
    %v5897 = vld [vmem:[%s5441 + $0x30] sm:$0xff]
    %v5898 = vld [vmem:[%s5441 + $0x38] sm:$0xff]
    %v5899 = vmul.f32 %v5891, %v1101
    %v5900 = vmul.f32 %v5892, %v1101
    %v5901 = vmul.f32 %v5893, %v1101
    %v5902 = vmul.f32 %v5894, %v1101
    %v5903 = vmul.f32 %v5895, %v1101
    %v5904 = vmul.f32 %v5896, %v1101
    %v5905 = vmul.f32 %v5897, %v1101
    %v5906 = vmul.f32 %v5898, %v1101
    %v5907 = vadd.f32 %v5883, %v5899
    %v5908 = vadd.f32 %v5884, %v5900
    %v5909 = vadd.f32 %v5885, %v5901
    %v5910 = vadd.f32 %v5886, %v5902
    %v5911 = vadd.f32 %v5887, %v5903
    %v5912 = vadd.f32 %v5888, %v5904
    %v5913 = vadd.f32 %v5889, %v5905
    %v5914 = vadd.f32 %v5890, %v5906
    %v5915 = vld [vmem:[%s5467] sm:$0xff]
    %v5916 = vld [vmem:[%s5467 + $0x8] sm:$0xff]
    %v5917 = vld [vmem:[%s5467 + $0x10] sm:$0xff]
    %v5918 = vld [vmem:[%s5467 + $0x18] sm:$0xff]
    %v5919 = vld [vmem:[%s5467 + $0x20] sm:$0xff]
    %v5920 = vld [vmem:[%s5467 + $0x28] sm:$0xff]
    %v5921 = vld [vmem:[%s5467 + $0x30] sm:$0xff]
    %v5922 = vld [vmem:[%s5467 + $0x38] sm:$0xff]
    %v5923 = vmul.f32 %v5915, %v1131
    %v5924 = vmul.f32 %v5916, %v1131
    %v5925 = vmul.f32 %v5917, %v1131
    %v5926 = vmul.f32 %v5918, %v1131
    %v5927 = vmul.f32 %v5919, %v1131
    %v5928 = vmul.f32 %v5920, %v1131
    %v5929 = vmul.f32 %v5921, %v1131
    %v5930 = vmul.f32 %v5922, %v1131
    %v5931 = vadd.f32 %v5907, %v5923
    %v5932 = vadd.f32 %v5908, %v5924
    %v5933 = vadd.f32 %v5909, %v5925
    %v5934 = vadd.f32 %v5910, %v5926
    %v5935 = vadd.f32 %v5911, %v5927
    %v5936 = vadd.f32 %v5912, %v5928
    %v5937 = vadd.f32 %v5913, %v5929
    %v5938 = vadd.f32 %v5914, %v5930
    %v5939 = vld [vmem:[%s5493] sm:$0xff]
    %v5940 = vld [vmem:[%s5493 + $0x8] sm:$0xff]
    %v5941 = vld [vmem:[%s5493 + $0x10] sm:$0xff]
    %v5942 = vld [vmem:[%s5493 + $0x18] sm:$0xff]
    %v5943 = vld [vmem:[%s5493 + $0x20] sm:$0xff]
    %v5944 = vld [vmem:[%s5493 + $0x28] sm:$0xff]
    %v5945 = vld [vmem:[%s5493 + $0x30] sm:$0xff]
    %v5946 = vld [vmem:[%s5493 + $0x38] sm:$0xff]
    %v5947 = vmul.f32 %v5939, %v1161
    %v5948 = vmul.f32 %v5940, %v1161
    %v5949 = vmul.f32 %v5941, %v1161
    %v5950 = vmul.f32 %v5942, %v1161
    %v5951 = vmul.f32 %v5943, %v1161
    %v5952 = vmul.f32 %v5944, %v1161
    %v5953 = vmul.f32 %v5945, %v1161
    %v5954 = vmul.f32 %v5946, %v1161
    %v5955 = vadd.f32 %v5931, %v5947
    %v5956 = vadd.f32 %v5932, %v5948
    %v5957 = vadd.f32 %v5933, %v5949
    %v5958 = vadd.f32 %v5934, %v5950
    %v5959 = vadd.f32 %v5935, %v5951
    %v5960 = vadd.f32 %v5936, %v5952
    %v5961 = vadd.f32 %v5937, %v5953
    %v5962 = vadd.f32 %v5938, %v5954
    %v5963 = vld [vmem:[%s5519] sm:$0xff]
    %v5964 = vld [vmem:[%s5519 + $0x8] sm:$0xff]
    %v5965 = vld [vmem:[%s5519 + $0x10] sm:$0xff]
    %v5966 = vld [vmem:[%s5519 + $0x18] sm:$0xff]
    %v5967 = vld [vmem:[%s5519 + $0x20] sm:$0xff]
    %v5968 = vld [vmem:[%s5519 + $0x28] sm:$0xff]
    %v5969 = vld [vmem:[%s5519 + $0x30] sm:$0xff]
    %v5970 = vld [vmem:[%s5519 + $0x38] sm:$0xff]
    %v5971 = vmul.f32 %v5963, %v1191
    %v5972 = vmul.f32 %v5964, %v1191
    %v5973 = vmul.f32 %v5965, %v1191
    %v5974 = vmul.f32 %v5966, %v1191
    %v5975 = vmul.f32 %v5967, %v1191
    %v5976 = vmul.f32 %v5968, %v1191
    %v5977 = vmul.f32 %v5969, %v1191
    %v5978 = vmul.f32 %v5970, %v1191
    %v5979 = vadd.f32 %v5955, %v5971
    %v5980 = vadd.f32 %v5956, %v5972
    %v5981 = vadd.f32 %v5957, %v5973
    %v5982 = vadd.f32 %v5958, %v5974
    %v5983 = vadd.f32 %v5959, %v5975
    %v5984 = vadd.f32 %v5960, %v5976
    %v5985 = vadd.f32 %v5961, %v5977
    %v5986 = vadd.f32 %v5962, %v5978
    %v5987 = vld [vmem:[%s5545] sm:$0xff]
    %v5988 = vld [vmem:[%s5545 + $0x8] sm:$0xff]
    %v5989 = vld [vmem:[%s5545 + $0x10] sm:$0xff]
    %v5990 = vld [vmem:[%s5545 + $0x18] sm:$0xff]
    %v5991 = vld [vmem:[%s5545 + $0x20] sm:$0xff]
    %v5992 = vld [vmem:[%s5545 + $0x28] sm:$0xff]
    %v5993 = vld [vmem:[%s5545 + $0x30] sm:$0xff]
    %v5994 = vld [vmem:[%s5545 + $0x38] sm:$0xff]
    %v5995 = vmul.f32 %v5987, %v1221
    %v5996 = vmul.f32 %v5988, %v1221
    %v5997 = vmul.f32 %v5989, %v1221
    %v5998 = vmul.f32 %v5990, %v1221
    %v5999 = vmul.f32 %v5991, %v1221
    %v6000 = vmul.f32 %v5992, %v1221
    %v6001 = vmul.f32 %v5993, %v1221
    %v6002 = vmul.f32 %v5994, %v1221
    %v6003 = vadd.f32 %v5979, %v5995
    %v6004 = vadd.f32 %v5980, %v5996
    %v6005 = vadd.f32 %v5981, %v5997
    %v6006 = vadd.f32 %v5982, %v5998
    %v6007 = vadd.f32 %v5983, %v5999
    %v6008 = vadd.f32 %v5984, %v6000
    %v6009 = vadd.f32 %v5985, %v6001
    %v6010 = vadd.f32 %v5986, %v6002
    %s6011 = sadd.s32 %s704, 9
    %s6012 = smul.u32 %s6011, 80
    %s6013 = scalar_lea.vmem [#allocation3], %s6012
    %v6014 = vld [vmem:[%s6013] sm:$0xff]
    %v6015 = vld [vmem:[%s6013 + $0x8] sm:$0xff]
    %v6016 = vld [vmem:[%s6013 + $0x10] sm:$0xff]
    %v6017 = vld [vmem:[%s6013 + $0x18] sm:$0xff]
    %v6018 = vld [vmem:[%s6013 + $0x20] sm:$0xff]
    %v6019 = vld [vmem:[%s6013 + $0x28] sm:$0xff]
    %v6020 = vld [vmem:[%s6013 + $0x30] sm:$0xff]
    %v6021 = vld [vmem:[%s6013 + $0x38] sm:$0xff]
    %v6022 = vmul.f32 %v6014, %v1252
    %v6023 = vmul.f32 %v6015, %v1252
    %v6024 = vmul.f32 %v6016, %v1252
    %v6025 = vmul.f32 %v6017, %v1252
    %v6026 = vmul.f32 %v6018, %v1252
    %v6027 = vmul.f32 %v6019, %v1252
    %v6028 = vmul.f32 %v6020, %v1252
    %v6029 = vmul.f32 %v6021, %v1252
    %v6030 = vadd.f32 %v6003, %v6022
    %v6031 = vadd.f32 %v6004, %v6023
    %v6032 = vadd.f32 %v6005, %v6024
    %v6033 = vadd.f32 %v6006, %v6025
    %v6034 = vadd.f32 %v6007, %v6026
    %v6035 = vadd.f32 %v6008, %v6027
    %v6036 = vadd.f32 %v6009, %v6028
    %v6037 = vadd.f32 %v6010, %v6029
    %s6038 = sadd.s32 %s6012, 800
    %s6039 = scalar_lea.vmem [#allocation3], %s6038
    %v6040 = vld [vmem:[%s6039] sm:$0xff]
    %v6041 = vld [vmem:[%s6039 + $0x8] sm:$0xff]
    %v6042 = vld [vmem:[%s6039 + $0x10] sm:$0xff]
    %v6043 = vld [vmem:[%s6039 + $0x18] sm:$0xff]
    %v6044 = vld [vmem:[%s6039 + $0x20] sm:$0xff]
    %v6045 = vld [vmem:[%s6039 + $0x28] sm:$0xff]
    %v6046 = vld [vmem:[%s6039 + $0x30] sm:$0xff]
    %v6047 = vld [vmem:[%s6039 + $0x38] sm:$0xff]
    %v6048 = vmul.f32 %v6040, %v1282
    %v6049 = vmul.f32 %v6041, %v1282
    %v6050 = vmul.f32 %v6042, %v1282
    %v6051 = vmul.f32 %v6043, %v1282
    %v6052 = vmul.f32 %v6044, %v1282
    %v6053 = vmul.f32 %v6045, %v1282
    %v6054 = vmul.f32 %v6046, %v1282
    %v6055 = vmul.f32 %v6047, %v1282
    %v6056 = vadd.f32 %v6030, %v6048
    %v6057 = vadd.f32 %v6031, %v6049
    %v6058 = vadd.f32 %v6032, %v6050
    %v6059 = vadd.f32 %v6033, %v6051
    %v6060 = vadd.f32 %v6034, %v6052
    %v6061 = vadd.f32 %v6035, %v6053
    %v6062 = vadd.f32 %v6036, %v6054
    %v6063 = vadd.f32 %v6037, %v6055
    %s6064 = sadd.s32 %s6012, 1600
    %s6065 = scalar_lea.vmem [#allocation3], %s6064
    %v6066 = vld [vmem:[%s6065] sm:$0xff]
    %v6067 = vld [vmem:[%s6065 + $0x8] sm:$0xff]
    %v6068 = vld [vmem:[%s6065 + $0x10] sm:$0xff]
    %v6069 = vld [vmem:[%s6065 + $0x18] sm:$0xff]
    %v6070 = vld [vmem:[%s6065 + $0x20] sm:$0xff]
    %v6071 = vld [vmem:[%s6065 + $0x28] sm:$0xff]
    %v6072 = vld [vmem:[%s6065 + $0x30] sm:$0xff]
    %v6073 = vld [vmem:[%s6065 + $0x38] sm:$0xff]
    %v6074 = vmul.f32 %v6066, %v1312
    %v6075 = vmul.f32 %v6067, %v1312
    %v6076 = vmul.f32 %v6068, %v1312
    %v6077 = vmul.f32 %v6069, %v1312
    %v6078 = vmul.f32 %v6070, %v1312
    %v6079 = vmul.f32 %v6071, %v1312
    %v6080 = vmul.f32 %v6072, %v1312
    %v6081 = vmul.f32 %v6073, %v1312
    %v6082 = vadd.f32 %v6056, %v6074
    %v6083 = vadd.f32 %v6057, %v6075
    %v6084 = vadd.f32 %v6058, %v6076
    %v6085 = vadd.f32 %v6059, %v6077
    %v6086 = vadd.f32 %v6060, %v6078
    %v6087 = vadd.f32 %v6061, %v6079
    %v6088 = vadd.f32 %v6062, %v6080
    %v6089 = vadd.f32 %v6063, %v6081
    %s6090 = sadd.s32 8, %s6012
    %s6091 = scalar_lea.vmem [#allocation3], %s6090
    %v6092 = vld [vmem:[%s6091] sm:$0xff]
    %v6093 = vld [vmem:[%s6091 + $0x8] sm:$0xff]
    %v6094 = vld [vmem:[%s6091 + $0x10] sm:$0xff]
    %v6095 = vld [vmem:[%s6091 + $0x18] sm:$0xff]
    %v6096 = vld [vmem:[%s6091 + $0x20] sm:$0xff]
    %v6097 = vld [vmem:[%s6091 + $0x28] sm:$0xff]
    %v6098 = vld [vmem:[%s6091 + $0x30] sm:$0xff]
    %v6099 = vld [vmem:[%s6091 + $0x38] sm:$0xff]
    %v6100 = vmul.f32 %v6092, %v1342
    %v6101 = vmul.f32 %v6093, %v1342
    %v6102 = vmul.f32 %v6094, %v1342
    %v6103 = vmul.f32 %v6095, %v1342
    %v6104 = vmul.f32 %v6096, %v1342
    %v6105 = vmul.f32 %v6097, %v1342
    %v6106 = vmul.f32 %v6098, %v1342
    %v6107 = vmul.f32 %v6099, %v1342
    %v6108 = vadd.f32 %v6082, %v6100
    %v6109 = vadd.f32 %v6083, %v6101
    %v6110 = vadd.f32 %v6084, %v6102
    %v6111 = vadd.f32 %v6085, %v6103
    %v6112 = vadd.f32 %v6086, %v6104
    %v6113 = vadd.f32 %v6087, %v6105
    %v6114 = vadd.f32 %v6088, %v6106
    %v6115 = vadd.f32 %v6089, %v6107
    %s6116 = sadd.s32 %s6090, 800
    %s6117 = scalar_lea.vmem [#allocation3], %s6116
    %v6118 = vld [vmem:[%s6117] sm:$0xff]
    %v6119 = vld [vmem:[%s6117 + $0x8] sm:$0xff]
    %v6120 = vld [vmem:[%s6117 + $0x10] sm:$0xff]
    %v6121 = vld [vmem:[%s6117 + $0x18] sm:$0xff]
    %v6122 = vld [vmem:[%s6117 + $0x20] sm:$0xff]
    %v6123 = vld [vmem:[%s6117 + $0x28] sm:$0xff]
    %v6124 = vld [vmem:[%s6117 + $0x30] sm:$0xff]
    %v6125 = vld [vmem:[%s6117 + $0x38] sm:$0xff]
    %v6126 = vmul.f32 %v6118, %v1372
    %v6127 = vmul.f32 %v6119, %v1372
    %v6128 = vmul.f32 %v6120, %v1372
    %v6129 = vmul.f32 %v6121, %v1372
    %v6130 = vmul.f32 %v6122, %v1372
    %v6131 = vmul.f32 %v6123, %v1372
    %v6132 = vmul.f32 %v6124, %v1372
    %v6133 = vmul.f32 %v6125, %v1372
    %v6134 = vadd.f32 %v6108, %v6126
    %v6135 = vadd.f32 %v6109, %v6127
    %v6136 = vadd.f32 %v6110, %v6128
    %v6137 = vadd.f32 %v6111, %v6129
    %v6138 = vadd.f32 %v6112, %v6130
    %v6139 = vadd.f32 %v6113, %v6131
    %v6140 = vadd.f32 %v6114, %v6132
    %v6141 = vadd.f32 %v6115, %v6133
    %s6142 = sadd.s32 %s6090, 1600
    %s6143 = scalar_lea.vmem [#allocation3], %s6142
    %v6144 = vld [vmem:[%s6143] sm:$0xff]
    %v6145 = vld [vmem:[%s6143 + $0x8] sm:$0xff]
    %v6146 = vld [vmem:[%s6143 + $0x10] sm:$0xff]
    %v6147 = vld [vmem:[%s6143 + $0x18] sm:$0xff]
    %v6148 = vld [vmem:[%s6143 + $0x20] sm:$0xff]
    %v6149 = vld [vmem:[%s6143 + $0x28] sm:$0xff]
    %v6150 = vld [vmem:[%s6143 + $0x30] sm:$0xff]
    %v6151 = vld [vmem:[%s6143 + $0x38] sm:$0xff]
    %v6152 = vmul.f32 %v6144, %v1402
    %v6153 = vmul.f32 %v6145, %v1402
    %v6154 = vmul.f32 %v6146, %v1402
    %v6155 = vmul.f32 %v6147, %v1402
    %v6156 = vmul.f32 %v6148, %v1402
    %v6157 = vmul.f32 %v6149, %v1402
    %v6158 = vmul.f32 %v6150, %v1402
    %v6159 = vmul.f32 %v6151, %v1402
    %v6160 = vadd.f32 %v6134, %v6152
    %v6161 = vadd.f32 %v6135, %v6153
    %v6162 = vadd.f32 %v6136, %v6154
    %v6163 = vadd.f32 %v6137, %v6155
    %v6164 = vadd.f32 %v6138, %v6156
    %v6165 = vadd.f32 %v6139, %v6157
    %v6166 = vadd.f32 %v6140, %v6158
    %v6167 = vadd.f32 %v6141, %v6159
    %s6168 = sadd.s32 16, %s6012
    %s6169 = scalar_lea.vmem [#allocation3], %s6168
    %v6170 = vld [vmem:[%s6169] sm:$0xff]
    %v6171 = vld [vmem:[%s6169 + $0x8] sm:$0xff]
    %v6172 = vld [vmem:[%s6169 + $0x10] sm:$0xff]
    %v6173 = vld [vmem:[%s6169 + $0x18] sm:$0xff]
    %v6174 = vld [vmem:[%s6169 + $0x20] sm:$0xff]
    %v6175 = vld [vmem:[%s6169 + $0x28] sm:$0xff]
    %v6176 = vld [vmem:[%s6169 + $0x30] sm:$0xff]
    %v6177 = vld [vmem:[%s6169 + $0x38] sm:$0xff]
    %v6178 = vmul.f32 %v6170, %v1432
    %v6179 = vmul.f32 %v6171, %v1432
    %v6180 = vmul.f32 %v6172, %v1432
    %v6181 = vmul.f32 %v6173, %v1432
    %v6182 = vmul.f32 %v6174, %v1432
    %v6183 = vmul.f32 %v6175, %v1432
    %v6184 = vmul.f32 %v6176, %v1432
    %v6185 = vmul.f32 %v6177, %v1432
    %v6186 = vadd.f32 %v6160, %v6178
    %v6187 = vadd.f32 %v6161, %v6179
    %v6188 = vadd.f32 %v6162, %v6180
    %v6189 = vadd.f32 %v6163, %v6181
    %v6190 = vadd.f32 %v6164, %v6182
    %v6191 = vadd.f32 %v6165, %v6183
    %v6192 = vadd.f32 %v6166, %v6184
    %v6193 = vadd.f32 %v6167, %v6185
    %s6194 = sadd.s32 %s6168, 800
    %s6195 = scalar_lea.vmem [#allocation3], %s6194
    %v6196 = vld [vmem:[%s6195] sm:$0xff]
    %v6197 = vld [vmem:[%s6195 + $0x8] sm:$0xff]
    %v6198 = vld [vmem:[%s6195 + $0x10] sm:$0xff]
    %v6199 = vld [vmem:[%s6195 + $0x18] sm:$0xff]
    %v6200 = vld [vmem:[%s6195 + $0x20] sm:$0xff]
    %v6201 = vld [vmem:[%s6195 + $0x28] sm:$0xff]
    %v6202 = vld [vmem:[%s6195 + $0x30] sm:$0xff]
    %v6203 = vld [vmem:[%s6195 + $0x38] sm:$0xff]
    %v6204 = vmul.f32 %v6196, %v1462
    %v6205 = vmul.f32 %v6197, %v1462
    %v6206 = vmul.f32 %v6198, %v1462
    %v6207 = vmul.f32 %v6199, %v1462
    %v6208 = vmul.f32 %v6200, %v1462
    %v6209 = vmul.f32 %v6201, %v1462
    %v6210 = vmul.f32 %v6202, %v1462
    %v6211 = vmul.f32 %v6203, %v1462
    %v6212 = vadd.f32 %v6186, %v6204
    %v6213 = vadd.f32 %v6187, %v6205
    %v6214 = vadd.f32 %v6188, %v6206
    %v6215 = vadd.f32 %v6189, %v6207
    %v6216 = vadd.f32 %v6190, %v6208
    %v6217 = vadd.f32 %v6191, %v6209
    %v6218 = vadd.f32 %v6192, %v6210
    %v6219 = vadd.f32 %v6193, %v6211
    %s6220 = sadd.s32 %s6168, 1600
    %s6221 = scalar_lea.vmem [#allocation3], %s6220
    %v6222 = vld [vmem:[%s6221] sm:$0xff]
    %v6223 = vld [vmem:[%s6221 + $0x8] sm:$0xff]
    %v6224 = vld [vmem:[%s6221 + $0x10] sm:$0xff]
    %v6225 = vld [vmem:[%s6221 + $0x18] sm:$0xff]
    %v6226 = vld [vmem:[%s6221 + $0x20] sm:$0xff]
    %v6227 = vld [vmem:[%s6221 + $0x28] sm:$0xff]
    %v6228 = vld [vmem:[%s6221 + $0x30] sm:$0xff]
    %v6229 = vld [vmem:[%s6221 + $0x38] sm:$0xff]
    %v6230 = vmul.f32 %v6222, %v1492
    %v6231 = vmul.f32 %v6223, %v1492
    %v6232 = vmul.f32 %v6224, %v1492
    %v6233 = vmul.f32 %v6225, %v1492
    %v6234 = vmul.f32 %v6226, %v1492
    %v6235 = vmul.f32 %v6227, %v1492
    %v6236 = vmul.f32 %v6228, %v1492
    %v6237 = vmul.f32 %v6229, %v1492
    %v6238 = vadd.f32 %v6212, %v6230
    %v6239 = vadd.f32 %v6213, %v6231
    %v6240 = vadd.f32 %v6214, %v6232
    %v6241 = vadd.f32 %v6215, %v6233
    %v6242 = vadd.f32 %v6216, %v6234
    %v6243 = vadd.f32 %v6217, %v6235
    %v6244 = vadd.f32 %v6218, %v6236
    %v6245 = vadd.f32 %v6219, %v6237
    %v6246 = vadd.f32 %v6238, %v1513
    %v6247 = vadd.f32 %v6239, %v1513
    %v6248 = vadd.f32 %v6240, %v1513
    %v6249 = vadd.f32 %v6241, %v1513
    %v6250 = vadd.f32 %v6242, %v1513
    %v6251 = vadd.f32 %v6243, %v1513
    %v6252 = vadd.f32 %v6244, %v1513
    %v6253 = vadd.f32 %v6245, %v1513
    %s6254 = scalar_lea.vmem [#allocation5], 448
    %6255 = vst [vmem:[%s6254] sm:$0xff] %v6246
    %6256 = vst [vmem:[%s6254 + $0x8] sm:$0xff] %v6247
    %6257 = vst [vmem:[%s6254 + $0x10] sm:$0xff] %v6248
    %6258 = vst [vmem:[%s6254 + $0x18] sm:$0xff] %v6249
    %6259 = vst [vmem:[%s6254 + $0x20] sm:$0xff] %v6250
    %6260 = vst [vmem:[%s6254 + $0x28] sm:$0xff] %v6251
    %6261 = vst [vmem:[%s6254 + $0x30] sm:$0xff] %v6252
    %6262 = vst [vmem:[%s6254 + $0x38] sm:$0xff] %v6253
    // Predicated region
    $region58: #{tpu_custom_call.1} parent=1 // pred_check
      _
    $region59: #{tpu_custom_call.1} parent=1 // pred_check_branch
      %6264 = sbr.rel (0) target = $region61
    $region60: #{tpu_custom_call.1} parent=1 // pred_region
      %s6266 = ssub.s32 8192, 8192
      %6267 = vsyncadd [#allocation6], %s6266
      %s6268 = sshll.u32 [#allocation5], 4
      %s6269 = int_to_ptr.vmem [resolvable:$true] %s6268
      %6274 = dma.vmem_to_hbm [thread:$0]  %s6269, 8192, %s3, [#allocation6], 128, 128, 8
    $region61: #{tpu_custom_call.1} parent=1 // pred_fallthru
      _
    // Predicated region
    $region62: #{tpu_custom_call.1} parent=1 // pred_check
      _
    $region63: #{tpu_custom_call.1} parent=1 // pred_check_branch
      %6276 = sbr.rel (0) target = $region65
    $region64: #{tpu_custom_call.1} parent=1 // pred_region
      %6277 = dma.done [#allocation6], 8192
    $region65: #{tpu_custom_call.1} parent=1 // pred_fallthru
      _
    %6278 = vsyncpa [#allocation6], 1
  %6279 = vsyncmov [#allocation4]
  %s6280 = vpop.sfrf %6279
  %p6281 = scmp.eq.s32.totalorder %s6280, 0
  %p6282 = pneg %p6281
  %6284 = shalt.err (%p6282)

</llo_original>
